<compile_context>
chip_gen: v7x
topology: tpu7x:2x2x1
jax: 0.10.0
libtpu: 0.0.40
codegen_flags: <defaults>
</compile_context>

<pallas_src>
import functools
import numpy as np
import jax
import jax.numpy as jnp
from jax import lax
from jax.experimental import pallas as pl
from jax.experimental.pallas import tpu as pltpu

VMEM_LIMIT = 32 * 1024 * 1024


# ----------------------------- Pallas kernels ------------------------------

def _spatial_branch_kernel(patches_ref, w2c_ref, b2c_ref, pbias_ref, tmat_ref,
                           wmax_ref, bmax_ref, w3a_ref, b3a_ref, w3b_ref, b3b_ref,
                           c3_ref, *, n_taps):
    # conv2 o conv1 (composite weights) on im2col patches: (f, 9*nf) x (9*nf, PQ)
    c2 = jnp.dot(w2c_ref[...], patches_ref[0],
                 preferred_element_type=jnp.float32) + b2c_ref[...]          # (f, PQ)

    # 7x7 / stride-3 max pool: additive -1e30 mask per pooled pixel, lane reduce.
    pooled = jnp.max(c2[:, None, :] + pbias_ref[...][None, :, :], axis=2)    # (f, KQ)

    # 3x3 / pad-1 convs on the tiny pooled map: per-tap (f,f) matmul on the
    # channel axis and a constant (KQ,KQ) shift matrix on the pixel axis.
    def conv3x3_tiny(v, wt_ref, b_ref):
        acc = None
        for t in range(n_taps):
            term = jnp.dot(
                jnp.dot(wt_ref[t], v, preferred_element_type=jnp.float32),
                tmat_ref[t], preferred_element_type=jnp.float32)
            acc = term if acc is None else acc + term
        return acc + b_ref[...]

    v = jnp.maximum(conv3x3_tiny(pooled, wmax_ref, bmax_ref), 0.0)
    v = jnp.maximum(conv3x3_tiny(v, w3a_ref, b3a_ref), 0.0)
    c3_ref[0] = conv3x3_tiny(v, w3b_ref, b3b_ref)


def _gate_kernel(x_ref, wmt_ref, c3_ref, w1_ref, b1_ref, wf_ref, bf_ref,
                 w4_ref, b4_ref, o_ref):
    xv = x_ref[0]                                                            # (nf, LT)
    c1 = jnp.dot(w1_ref[...], xv, preferred_element_type=jnp.float32) + b1_ref[...]
    cf = jnp.dot(wf_ref[...], c1, preferred_element_type=jnp.float32) + bf_ref[...]
    # bilinear upsample of the tiny c3 map: (f, KQ) x (KQ, LT), pixels on lanes
    up = jnp.dot(c3_ref[0], wmt_ref[...], preferred_element_type=jnp.float32)
    c4 = jnp.dot(w4_ref[...], up + cf,
                 preferred_element_type=jnp.float32) + b4_ref[...]           # (nf, LT)
    o_ref[0] = xv * jax.nn.sigmoid(c4)


# --------------------------- static helper tables ---------------------------

def _bilinear_matrix(in_size, out_size):
    # PyTorch F.interpolate(mode='bilinear', align_corners=False) weights.
    scale = in_size / out_size
    i = np.arange(out_size, dtype=np.float64)
    src = np.maximum((i + 0.5) * scale - 0.5, 0.0)
    x0 = np.minimum(np.floor(src).astype(np.int64), in_size - 1)
    lam = (src - x0).astype(np.float32)
    x1 = np.minimum(x0 + 1, in_size - 1)
    M = np.zeros((out_size, in_size), dtype=np.float32)
    np.add.at(M, (np.arange(out_size), x0), 1.0 - lam)
    np.add.at(M, (np.arange(out_size), x1), lam)
    return M


def _shift_matrices(hp, wp):
    # T[t, p, q] = 1 iff input pixel p feeds output pixel q under tap t of a
    # 3x3 pad-1 conv on an (hp, wp) grid (zero padding outside).
    kq = hp * wp
    T = np.zeros((9, kq, kq), dtype=np.float32)
    for t in range(9):
        dh, dw = t // 3 - 1, t % 3 - 1
        for qh in range(hp):
            for qw in range(wp):
                ih, iw = qh + dh, qw + dw
                if 0 <= ih < hp and 0 <= iw < wp:
                    T[t, ih * wp + iw, qh * wp + qw] = 1.0
    return T


def _pool_bias(ho, wo, k, s):
    # Additive mask: 0 inside window q, -1e30 outside.  Shape (KQ, Ho*Wo).
    hp = (ho - k) // s + 1
    wp = (wo - k) // s + 1
    m = np.zeros((hp * wp, ho * wo), dtype=np.float32)
    for qh in range(hp):
        for qw in range(wp):
            q = qh * wp + qw
            for dh in range(k):
                for dw in range(k):
                    m[q, (qh * s + dh) * wo + (qw * s + dw)] = 1.0
    return ((m - 1.0) * np.float32(1e30)).astype(np.float32), hp, wp


def _im2col_s2(x4):
    # x4: (N, C, H, W) -> patches (N, 9*C, Ho*Wo), tap-major (kh, kw), channel inner.
    N, C, H, W = x4.shape
    Ho = (H - 3) // 2 + 1
    Wo = (W - 3) // 2 + 1
    taps = []
    for kh in range(3):
        for kw in range(3):
            taps.append(x4[:, :, kh: kh + 2 * (Ho - 1) + 1: 2,
                              kw: kw + 2 * (Wo - 1) + 1: 2])
    p = jnp.stack(taps, axis=1)                           # (N, 9, C, Ho, Wo)
    return p.reshape(N, 9 * C, Ho * Wo), Ho, Wo


def _pick_lane_tile(hw, cap=16384):
    if hw % 128 != 0:
        return hw
    t = hw
    while t > cap and t % 2 == 0 and (t // 2) % 128 == 0:
        t //= 2
    return t


# ------------------------------- ESA forward --------------------------------

def esa_forward(params, x):
    N, nf, H, W = x.shape
    f = params["conv1_w"].shape[0]
    HW = H * W

    w1 = params["conv1_w"].reshape(f, nf)
    b1 = params["conv1_b"]
    wf = params["conv_f_w"].reshape(f, f)
    bf = params["conv_f_b"]
    w2 = params["conv2_w"]
    b2 = params["conv2_b"]
    w4 = params["conv4_w"].reshape(nf, f)
    b4 = params["conv4_b"]

    # composite conv2 o conv1 (both linear, conv1 is 1x1, conv2 has no padding)
    w2c = jnp.einsum("ochw,cj->ohwj", w2, w1).reshape(f, 9 * nf)
    b2c = b2 + jnp.einsum("ochw,c->o", w2, b1)

    patches, Ho, Wo = _im2col_s2(x)                       # (N, 9*nf, PQ)
    PQ = Ho * Wo
    pbias_np, Hp, Wp = _pool_bias(Ho, Wo, 7, 3)
    KQ = Hp * Wp
    pbias = jnp.asarray(pbias_np)
    tmat = jnp.asarray(_shift_matrices(Hp, Wp))

    def taps_of(wkey):
        return params[wkey].transpose(2, 3, 0, 1).reshape(9, f, f)

    c3 = pl.pallas_call(
        functools.partial(_spatial_branch_kernel, n_taps=9),
        out_shape=jax.ShapeDtypeStruct((N, f, KQ), jnp.float32),
        grid=(N,),
        in_specs=[
            pl.BlockSpec((1, 9 * nf, PQ), lambda n: (n, 0, 0)),
            pl.BlockSpec((f, 9 * nf), lambda n: (0, 0)),
            pl.BlockSpec((f, 1), lambda n: (0, 0)),
            pl.BlockSpec((KQ, PQ), lambda n: (0, 0)),
            pl.BlockSpec((9, KQ, KQ), lambda n: (0, 0, 0)),
            pl.BlockSpec((9, f, f), lambda n: (0, 0, 0)),
            pl.BlockSpec((f, 1), lambda n: (0, 0)),
            pl.BlockSpec((9, f, f), lambda n: (0, 0, 0)),
            pl.BlockSpec((f, 1), lambda n: (0, 0)),
            pl.BlockSpec((9, f, f), lambda n: (0, 0, 0)),
            pl.BlockSpec((f, 1), lambda n: (0, 0)),
        ],
        out_specs=pl.BlockSpec((1, f, KQ), lambda n: (n, 0, 0)),
        compiler_params=pltpu.CompilerParams(
            dimension_semantics=("parallel",), vmem_limit_bytes=VMEM_LIMIT),
    )(patches, w2c, b2c.reshape(f, 1), pbias, tmat,
      taps_of("conv_max_w"), params["conv_max_b"].reshape(f, 1),
      taps_of("conv3_w"), params["conv3_b"].reshape(f, 1),
      taps_of("conv3__w"), params["conv3__b"].reshape(f, 1))

    # bilinear (Hp,Wp)->(H,W) weights, transposed so output pixels sit on lanes
    Mh = _bilinear_matrix(Hp, H)                          # (H, Hp)
    Mw = _bilinear_matrix(Wp, W)                          # (W, Wp)
    wmt = jnp.asarray(
        (Mh.T[:, None, :, None] * Mw.T[None, :, None, :]).reshape(KQ, HW))

    x3 = x.reshape(N, nf, HW)                             # free: NCHW == channels x pixels
    LT = _pick_lane_tile(HW)
    grid = (N, HW // LT)

    out = pl.pallas_call(
        _gate_kernel,
        out_shape=jax.ShapeDtypeStruct((N, nf, HW), jnp.float32),
        grid=grid,
        in_specs=[
            pl.BlockSpec((1, nf, LT), lambda n, t: (n, 0, t)),
            pl.BlockSpec((KQ, LT), lambda n, t: (0, t)),
            pl.BlockSpec((1, f, KQ), lambda n, t: (n, 0, 0)),
            pl.BlockSpec((f, nf), lambda n, t: (0, 0)),
            pl.BlockSpec((f, 1), lambda n, t: (0, 0)),
            pl.BlockSpec((f, f), lambda n, t: (0, 0)),
            pl.BlockSpec((f, 1), lambda n, t: (0, 0)),
            pl.BlockSpec((nf, f), lambda n, t: (0, 0)),
            pl.BlockSpec((nf, 1), lambda n, t: (0, 0)),
        ],
        out_specs=pl.BlockSpec((1, nf, LT), lambda n, t: (n, 0, t)),
        compiler_params=pltpu.CompilerParams(
            dimension_semantics=("parallel", "parallel"),
            vmem_limit_bytes=VMEM_LIMIT),
    )(x3, wmt, c3, w1, b1.reshape(f, 1), wf, bf.reshape(f, 1),
      w4, b4.reshape(nf, 1))

    return out.reshape(N, nf, H, W)


# ---------------------------- pure-JAX reference -----------------------------

def _conv2d(x, w, b, stride=1, padding=0):
    out = lax.conv_general_dilated(
        x, w, window_strides=(stride, stride),
        padding=[(padding, padding), (padding, padding)],
        dimension_numbers=("NCHW", "OIHW", "NCHW"),
        precision=lax.Precision.HIGHEST)
    return out + b.reshape(1, -1, 1, 1)


def esa_reference(params, x):
    N, nf, H, W = x.shape
    c1_ = _conv2d(x, params["conv1_w"], params["conv1_b"])
    c1 = _conv2d(c1_, params["conv2_w"], params["conv2_b"], stride=2, padding=0)
    v_max = lax.reduce_window(c1, -jnp.inf, lax.max,
                              (1, 1, 7, 7), (1, 1, 3, 3), "VALID")
    v_range = jax.nn.relu(_conv2d(v_max, params["conv_max_w"],
                                  params["conv_max_b"], padding=1))
    c3 = jax.nn.relu(_conv2d(v_range, params["conv3_w"],
                             params["conv3_b"], padding=1))
    c3 = _conv2d(c3, params["conv3__w"], params["conv3__b"], padding=1)
    Hp, Wp = c3.shape[2], c3.shape[3]
    Mh = jnp.asarray(_bilinear_matrix(Hp, H))
    Mw = jnp.asarray(_bilinear_matrix(Wp, W))
    c3u = jnp.einsum("hp,wq,ncpq->nchw", Mh, Mw, c3,
                     precision=lax.Precision.HIGHEST)
    cf = _conv2d(c1_, params["conv_f_w"], params["conv_f_b"])
    c4 = _conv2d(c3u + cf, params["conv4_w"], params["conv4_b"])
    return x * jax.nn.sigmoid(c4)


# ----------------------------------- init ------------------------------------

def init_params(key, n_feats):
    f = n_feats // 4
    shapes = {
        "conv1": (f, n_feats, 1, 1),
        "conv_f": (f, f, 1, 1),
        "conv_max": (f, f, 3, 3),
        "conv2": (f, f, 3, 3),
        "conv3": (f, f, 3, 3),
        "conv3_": (f, f, 3, 3),
        "conv4": (n_feats, f, 1, 1),
    }
    params = {}
    for i, (name, shp) in enumerate(shapes.items()):
        kw, kb = jax.random.split(jax.random.fold_in(key, i))
        fan_in = shp[1] * shp[2] * shp[3]
        params[name + "_w"] = jax.random.normal(kw, shp, jnp.float32) / np.sqrt(fan_in)
        params[name + "_b"] = 0.1 * jax.random.normal(kb, (shp[0],), jnp.float32)
    return params


if __name__ == "__main__":
    key = jax.random.PRNGKey(0)
    n_feats, N, H, W = 16, 2, 32, 32
    params = init_params(jax.random.fold_in(key, 123), n_feats)
    x = jax.random.normal(jax.random.fold_in(key, 7), (N, n_feats, H, W), jnp.float32)

    fwd = jax.jit(esa_forward)
    out = jax.block_until_ready(fwd(params, x))

    ref = jax.block_until_ready(jax.jit(esa_reference)(params, x))

    assert out.shape == x.shape and out.dtype == x.dtype
    err = float(jnp.max(jnp.abs(out - ref)))
    if err > 5e-3:
        raise AssertionError(f"Pallas output mismatch vs reference: max abs err {err}")
    print("KERNEL_OK")
</pallas_src>

<mosaic_0001>
module attributes {stable_mosaic.version = 11 : i64} {
  func.func @_spatial_branch_kernel(%arg0: i32, %arg1: memref<1x144x225xf32, #tpu.memory_space<vmem>>, %arg2: memref<4x144xf32, #tpu.memory_space<vmem>>, %arg3: memref<4x1xf32, #tpu.memory_space<vmem>>, %arg4: memref<9x225xf32, #tpu.memory_space<vmem>>, %arg5: memref<9x9x9xf32, #tpu.memory_space<vmem>>, %arg6: memref<9x4x4xf32, #tpu.memory_space<vmem>>, %arg7: memref<4x1xf32, #tpu.memory_space<vmem>>, %arg8: memref<9x4x4xf32, #tpu.memory_space<vmem>>, %arg9: memref<4x1xf32, #tpu.memory_space<vmem>>, %arg10: memref<9x4x4xf32, #tpu.memory_space<vmem>>, %arg11: memref<4x1xf32, #tpu.memory_space<vmem>>, %arg12: memref<1x4x9xf32, #tpu.memory_space<vmem>>) attributes {dimension_semantics = [#tpu.dimension_semantics<parallel>], iteration_bounds = array<i64: 2>, scalar_prefetch = 0 : i64, scratch_operands = 0 : i64, tpu.core_type = #tpu.core_type<tc>, window_params = [{transform_indices = @transform_0, window_bounds = array<i64: 1, 144, 225>}, {pipeline_mode = #tpu.pipeline_mode<synchronous>, transform_indices = @transform_1, window_bounds = array<i64: 4, 144>}, {pipeline_mode = #tpu.pipeline_mode<synchronous>, transform_indices = @transform_2, window_bounds = array<i64: 4, 1>}, {pipeline_mode = #tpu.pipeline_mode<synchronous>, transform_indices = @transform_3, window_bounds = array<i64: 9, 225>}, {pipeline_mode = #tpu.pipeline_mode<synchronous>, transform_indices = @transform_4, window_bounds = array<i64: 9, 9, 9>}, {pipeline_mode = #tpu.pipeline_mode<synchronous>, transform_indices = @transform_5, window_bounds = array<i64: 9, 4, 4>}, {pipeline_mode = #tpu.pipeline_mode<synchronous>, transform_indices = @transform_6, window_bounds = array<i64: 4, 1>}, {pipeline_mode = #tpu.pipeline_mode<synchronous>, transform_indices = @transform_7, window_bounds = array<i64: 9, 4, 4>}, {pipeline_mode = #tpu.pipeline_mode<synchronous>, transform_indices = @transform_8, window_bounds = array<i64: 4, 1>}, {pipeline_mode = #tpu.pipeline_mode<synchronous>, transform_indices = @transform_9, window_bounds = array<i64: 9, 4, 4>}, {pipeline_mode = #tpu.pipeline_mode<synchronous>, transform_indices = @transform_10, window_bounds = array<i64: 4, 1>}, {transform_indices = @transform_11, window_bounds = array<i64: 1, 4, 9>}]} {
    %c0 = arith.constant 0 : index
    %c0_0 = arith.constant 0 : index
    %0 = vector.load %arg2[%c0, %c0_0] : memref<4x144xf32, #tpu.memory_space<vmem>>, vector<4x144xf32>
    %c0_1 = arith.constant 0 : index
    %c0_2 = arith.constant 0 : index
    %c0_3 = arith.constant 0 : index
    %1 = vector.load %arg1[%c0_1, %c0_2, %c0_3] : memref<1x144x225xf32, #tpu.memory_space<vmem>>, vector<1x144x225xf32>
    %2 = vector.shape_cast %1 : vector<1x144x225xf32> to vector<144x225xf32>
    %cst = arith.constant dense<0.000000e+00> : vector<4x225xf32>
    %3 = tpu.matmul %0, %2, %cst {dimension_numbers = #tpu.dot_dimension_numbers<[1], [0], [0], [1], [0, 0, 1, 1], [], []>} : vector<4x144xf32>, vector<144x225xf32>, vector<4x225xf32> -> vector<4x225xf32>
    %c0_4 = arith.constant 0 : index
    %c0_5 = arith.constant 0 : index
    %4 = vector.load %arg3[%c0_4, %c0_5] : memref<4x1xf32, #tpu.memory_space<vmem>>, vector<4x1xf32>
    %5 = vector.broadcast %4 : vector<4x1xf32> to vector<4x225xf32>
    %6 = arith.addf %3, %5 : vector<4x225xf32>
    %7 = vector.shape_cast %6 : vector<4x225xf32> to vector<4x1x225xf32>
    %c0_6 = arith.constant 0 : index
    %c0_7 = arith.constant 0 : index
    %8 = vector.load %arg4[%c0_6, %c0_7] : memref<9x225xf32, #tpu.memory_space<vmem>>, vector<9x225xf32>
    %9 = vector.shape_cast %8 : vector<9x225xf32> to vector<1x9x225xf32>
    %10 = vector.broadcast %7 : vector<4x1x225xf32> to vector<4x9x225xf32>
    %11 = vector.broadcast %9 : vector<1x9x225xf32> to vector<4x9x225xf32>
    %12 = arith.addf %10, %11 : vector<4x9x225xf32>
    %cst_8 = arith.constant dense<0xFF800000> : vector<4x9xf32>
    %13 = vector.multi_reduction <maximumf>, %12, %cst_8 [2] : vector<4x9x225xf32> to vector<4x9xf32>
    %c0_9 = arith.constant 0 : index
    %c0_10 = arith.constant 0 : index
    %c0_11 = arith.constant 0 : index
    %14 = vector.load %arg6[%c0_9, %c0_10, %c0_11] : memref<9x4x4xf32, #tpu.memory_space<vmem>>, vector<1x4x4xf32>
    %15 = vector.shape_cast %14 : vector<1x4x4xf32> to vector<4x4xf32>
    %cst_12 = arith.constant dense<0.000000e+00> : vector<4x9xf32>
    %16 = tpu.matmul %15, %13, %cst_12 {dimension_numbers = #tpu.dot_dimension_numbers<[1], [0], [0], [1], [0, 0, 1, 1], [], []>} : vector<4x4xf32>, vector<4x9xf32>, vector<4x9xf32> -> vector<4x9xf32>
    %c0_13 = arith.constant 0 : index
    %c0_14 = arith.constant 0 : index
    %c0_15 = arith.constant 0 : index
    %17 = vector.load %arg5[%c0_13, %c0_14, %c0_15] : memref<9x9x9xf32, #tpu.memory_space<vmem>>, vector<1x9x9xf32>
    %18 = vector.shape_cast %17 : vector<1x9x9xf32> to vector<9x9xf32>
    %cst_16 = arith.constant dense<0.000000e+00> : vector<4x9xf32>
    %19 = tpu.matmul %16, %18, %cst_16 {dimension_numbers = #tpu.dot_dimension_numbers<[1], [0], [0], [1], [0, 0, 1, 1], [], []>} : vector<4x9xf32>, vector<9x9xf32>, vector<4x9xf32> -> vector<4x9xf32>
    %c1 = arith.constant 1 : index
    %c0_17 = arith.constant 0 : index
    %c0_18 = arith.constant 0 : index
    %20 = vector.load %arg6[%c1, %c0_17, %c0_18] : memref<9x4x4xf32, #tpu.memory_space<vmem>>, vector<1x4x4xf32>
    %21 = vector.shape_cast %20 : vector<1x4x4xf32> to vector<4x4xf32>
    %cst_19 = arith.constant dense<0.000000e+00> : vector<4x9xf32>
    %22 = tpu.matmul %21, %13, %cst_19 {dimension_numbers = #tpu.dot_dimension_numbers<[1], [0], [0], [1], [0, 0, 1, 1], [], []>} : vector<4x4xf32>, vector<4x9xf32>, vector<4x9xf32> -> vector<4x9xf32>
    %c1_20 = arith.constant 1 : index
    %c0_21 = arith.constant 0 : index
    %c0_22 = arith.constant 0 : index
    %23 = vector.load %arg5[%c1_20, %c0_21, %c0_22] : memref<9x9x9xf32, #tpu.memory_space<vmem>>, vector<1x9x9xf32>
    %24 = vector.shape_cast %23 : vector<1x9x9xf32> to vector<9x9xf32>
    %cst_23 = arith.constant dense<0.000000e+00> : vector<4x9xf32>
    %25 = tpu.matmul %22, %24, %cst_23 {dimension_numbers = #tpu.dot_dimension_numbers<[1], [0], [0], [1], [0, 0, 1, 1], [], []>} : vector<4x9xf32>, vector<9x9xf32>, vector<4x9xf32> -> vector<4x9xf32>
    %26 = arith.addf %19, %25 : vector<4x9xf32>
    %c2 = arith.constant 2 : index
    %c0_24 = arith.constant 0 : index
    %c0_25 = arith.constant 0 : index
    %27 = vector.load %arg6[%c2, %c0_24, %c0_25] : memref<9x4x4xf32, #tpu.memory_space<vmem>>, vector<1x4x4xf32>
    %28 = vector.shape_cast %27 : vector<1x4x4xf32> to vector<4x4xf32>
    %cst_26 = arith.constant dense<0.000000e+00> : vector<4x9xf32>
    %29 = tpu.matmul %28, %13, %cst_26 {dimension_numbers = #tpu.dot_dimension_numbers<[1], [0], [0], [1], [0, 0, 1, 1], [], []>} : vector<4x4xf32>, vector<4x9xf32>, vector<4x9xf32> -> vector<4x9xf32>
    %c2_27 = arith.constant 2 : index
    %c0_28 = arith.constant 0 : index
    %c0_29 = arith.constant 0 : index
    %30 = vector.load %arg5[%c2_27, %c0_28, %c0_29] : memref<9x9x9xf32, #tpu.memory_space<vmem>>, vector<1x9x9xf32>
    %31 = vector.shape_cast %30 : vector<1x9x9xf32> to vector<9x9xf32>
    %cst_30 = arith.constant dense<0.000000e+00> : vector<4x9xf32>
    %32 = tpu.matmul %29, %31, %cst_30 {dimension_numbers = #tpu.dot_dimension_numbers<[1], [0], [0], [1], [0, 0, 1, 1], [], []>} : vector<4x9xf32>, vector<9x9xf32>, vector<4x9xf32> -> vector<4x9xf32>
    %33 = arith.addf %26, %32 : vector<4x9xf32>
    %c3 = arith.constant 3 : index
    %c0_31 = arith.constant 0 : index
    %c0_32 = arith.constant 0 : index
    %34 = vector.load %arg6[%c3, %c0_31, %c0_32] : memref<9x4x4xf32, #tpu.memory_space<vmem>>, vector<1x4x4xf32>
    %35 = vector.shape_cast %34 : vector<1x4x4xf32> to vector<4x4xf32>
    %cst_33 = arith.constant dense<0.000000e+00> : vector<4x9xf32>
    %36 = tpu.matmul %35, %13, %cst_33 {dimension_numbers = #tpu.dot_dimension_numbers<[1], [0], [0], [1], [0, 0, 1, 1], [], []>} : vector<4x4xf32>, vector<4x9xf32>, vector<4x9xf32> -> vector<4x9xf32>
    %c3_34 = arith.constant 3 : index
    %c0_35 = arith.constant 0 : index
    %c0_36 = arith.constant 0 : index
    %37 = vector.load %arg5[%c3_34, %c0_35, %c0_36] : memref<9x9x9xf32, #tpu.memory_space<vmem>>, vector<1x9x9xf32>
    %38 = vector.shape_cast %37 : vector<1x9x9xf32> to vector<9x9xf32>
    %cst_37 = arith.constant dense<0.000000e+00> : vector<4x9xf32>
    %39 = tpu.matmul %36, %38, %cst_37 {dimension_numbers = #tpu.dot_dimension_numbers<[1], [0], [0], [1], [0, 0, 1, 1], [], []>} : vector<4x9xf32>, vector<9x9xf32>, vector<4x9xf32> -> vector<4x9xf32>
    %40 = arith.addf %33, %39 : vector<4x9xf32>
    %c4 = arith.constant 4 : index
    %c0_38 = arith.constant 0 : index
    %c0_39 = arith.constant 0 : index
    %41 = vector.load %arg6[%c4, %c0_38, %c0_39] : memref<9x4x4xf32, #tpu.memory_space<vmem>>, vector<1x4x4xf32>
    %42 = vector.shape_cast %41 : vector<1x4x4xf32> to vector<4x4xf32>
    %cst_40 = arith.constant dense<0.000000e+00> : vector<4x9xf32>
    %43 = tpu.matmul %42, %13, %cst_40 {dimension_numbers = #tpu.dot_dimension_numbers<[1], [0], [0], [1], [0, 0, 1, 1], [], []>} : vector<4x4xf32>, vector<4x9xf32>, vector<4x9xf32> -> vector<4x9xf32>
    %c4_41 = arith.constant 4 : index
    %c0_42 = arith.constant 0 : index
    %c0_43 = arith.constant 0 : index
    %44 = vector.load %arg5[%c4_41, %c0_42, %c0_43] : memref<9x9x9xf32, #tpu.memory_space<vmem>>, vector<1x9x9xf32>
    %45 = vector.shape_cast %44 : vector<1x9x9xf32> to vector<9x9xf32>
    %cst_44 = arith.constant dense<0.000000e+00> : vector<4x9xf32>
    %46 = tpu.matmul %43, %45, %cst_44 {dimension_numbers = #tpu.dot_dimension_numbers<[1], [0], [0], [1], [0, 0, 1, 1], [], []>} : vector<4x9xf32>, vector<9x9xf32>, vector<4x9xf32> -> vector<4x9xf32>
    %47 = arith.addf %40, %46 : vector<4x9xf32>
    %c5 = arith.constant 5 : index
    %c0_45 = arith.constant 0 : index
    %c0_46 = arith.constant 0 : index
    %48 = vector.load %arg6[%c5, %c0_45, %c0_46] : memref<9x4x4xf32, #tpu.memory_space<vmem>>, vector<1x4x4xf32>
    %49 = vector.shape_cast %48 : vector<1x4x4xf32> to vector<4x4xf32>
    %cst_47 = arith.constant dense<0.000000e+00> : vector<4x9xf32>
    %50 = tpu.matmul %49, %13, %cst_47 {dimension_numbers = #tpu.dot_dimension_numbers<[1], [0], [0], [1], [0, 0, 1, 1], [], []>} : vector<4x4xf32>, vector<4x9xf32>, vector<4x9xf32> -> vector<4x9xf32>
    %c5_48 = arith.constant 5 : index
    %c0_49 = arith.constant 0 : index
    %c0_50 = arith.constant 0 : index
    %51 = vector.load %arg5[%c5_48, %c0_49, %c0_50] : memref<9x9x9xf32, #tpu.memory_space<vmem>>, vector<1x9x9xf32>
    %52 = vector.shape_cast %51 : vector<1x9x9xf32> to vector<9x9xf32>
    %cst_51 = arith.constant dense<0.000000e+00> : vector<4x9xf32>
    %53 = tpu.matmul %50, %52, %cst_51 {dimension_numbers = #tpu.dot_dimension_numbers<[1], [0], [0], [1], [0, 0, 1, 1], [], []>} : vector<4x9xf32>, vector<9x9xf32>, vector<4x9xf32> -> vector<4x9xf32>
    %54 = arith.addf %47, %53 : vector<4x9xf32>
    %c6 = arith.constant 6 : index
    %c0_52 = arith.constant 0 : index
    %c0_53 = arith.constant 0 : index
    %55 = vector.load %arg6[%c6, %c0_52, %c0_53] : memref<9x4x4xf32, #tpu.memory_space<vmem>>, vector<1x4x4xf32>
    %56 = vector.shape_cast %55 : vector<1x4x4xf32> to vector<4x4xf32>
    %cst_54 = arith.constant dense<0.000000e+00> : vector<4x9xf32>
    %57 = tpu.matmul %56, %13, %cst_54 {dimension_numbers = #tpu.dot_dimension_numbers<[1], [0], [0], [1], [0, 0, 1, 1], [], []>} : vector<4x4xf32>, vector<4x9xf32>, vector<4x9xf32> -> vector<4x9xf32>
    %c6_55 = arith.constant 6 : index
    %c0_56 = arith.constant 0 : index
    %c0_57 = arith.constant 0 : index
    %58 = vector.load %arg5[%c6_55, %c0_56, %c0_57] : memref<9x9x9xf32, #tpu.memory_space<vmem>>, vector<1x9x9xf32>
    %59 = vector.shape_cast %58 : vector<1x9x9xf32> to vector<9x9xf32>
    %cst_58 = arith.constant dense<0.000000e+00> : vector<4x9xf32>
    %60 = tpu.matmul %57, %59, %cst_58 {dimension_numbers = #tpu.dot_dimension_numbers<[1], [0], [0], [1], [0, 0, 1, 1], [], []>} : vector<4x9xf32>, vector<9x9xf32>, vector<4x9xf32> -> vector<4x9xf32>
    %61 = arith.addf %54, %60 : vector<4x9xf32>
    %c7 = arith.constant 7 : index
    %c0_59 = arith.constant 0 : index
    %c0_60 = arith.constant 0 : index
    %62 = vector.load %arg6[%c7, %c0_59, %c0_60] : memref<9x4x4xf32, #tpu.memory_space<vmem>>, vector<1x4x4xf32>
    %63 = vector.shape_cast %62 : vector<1x4x4xf32> to vector<4x4xf32>
    %cst_61 = arith.constant dense<0.000000e+00> : vector<4x9xf32>
    %64 = tpu.matmul %63, %13, %cst_61 {dimension_numbers = #tpu.dot_dimension_numbers<[1], [0], [0], [1], [0, 0, 1, 1], [], []>} : vector<4x4xf32>, vector<4x9xf32>, vector<4x9xf32> -> vector<4x9xf32>
    %c7_62 = arith.constant 7 : index
    %c0_63 = arith.constant 0 : index
    %c0_64 = arith.constant 0 : index
    %65 = vector.load %arg5[%c7_62, %c0_63, %c0_64] : memref<9x9x9xf32, #tpu.memory_space<vmem>>, vector<1x9x9xf32>
    %66 = vector.shape_cast %65 : vector<1x9x9xf32> to vector<9x9xf32>
    %cst_65 = arith.constant dense<0.000000e+00> : vector<4x9xf32>
    %67 = tpu.matmul %64, %66, %cst_65 {dimension_numbers = #tpu.dot_dimension_numbers<[1], [0], [0], [1], [0, 0, 1, 1], [], []>} : vector<4x9xf32>, vector<9x9xf32>, vector<4x9xf32> -> vector<4x9xf32>
    %68 = arith.addf %61, %67 : vector<4x9xf32>
    %c8 = arith.constant 8 : index
    %c0_66 = arith.constant 0 : index
    %c0_67 = arith.constant 0 : index
    %69 = vector.load %arg6[%c8, %c0_66, %c0_67] : memref<9x4x4xf32, #tpu.memory_space<vmem>>, vector<1x4x4xf32>
    %70 = vector.shape_cast %69 : vector<1x4x4xf32> to vector<4x4xf32>
    %cst_68 = arith.constant dense<0.000000e+00> : vector<4x9xf32>
    %71 = tpu.matmul %70, %13, %cst_68 {dimension_numbers = #tpu.dot_dimension_numbers<[1], [0], [0], [1], [0, 0, 1, 1], [], []>} : vector<4x4xf32>, vector<4x9xf32>, vector<4x9xf32> -> vector<4x9xf32>
    %c8_69 = arith.constant 8 : index
    %c0_70 = arith.constant 0 : index
    %c0_71 = arith.constant 0 : index
    %72 = vector.load %arg5[%c8_69, %c0_70, %c0_71] : memref<9x9x9xf32, #tpu.memory_space<vmem>>, vector<1x9x9xf32>
    %73 = vector.shape_cast %72 : vector<1x9x9xf32> to vector<9x9xf32>
    %cst_72 = arith.constant dense<0.000000e+00> : vector<4x9xf32>
    %74 = tpu.matmul %71, %73, %cst_72 {dimension_numbers = #tpu.dot_dimension_numbers<[1], [0], [0], [1], [0, 0, 1, 1], [], []>} : vector<4x9xf32>, vector<9x9xf32>, vector<4x9xf32> -> vector<4x9xf32>
    %75 = arith.addf %68, %74 : vector<4x9xf32>
    %c0_73 = arith.constant 0 : index
    %c0_74 = arith.constant 0 : index
    %76 = vector.load %arg7[%c0_73, %c0_74] : memref<4x1xf32, #tpu.memory_space<vmem>>, vector<4x1xf32>
    %77 = vector.broadcast %76 : vector<4x1xf32> to vector<4x9xf32>
    %78 = arith.addf %75, %77 : vector<4x9xf32>
    %cst_75 = arith.constant 0.000000e+00 : f32
    %79 = vector.broadcast %cst_75 : f32 to vector<4x9xf32>
    %80 = arith.maximumf %78, %79 : vector<4x9xf32>
    %c0_76 = arith.constant 0 : index
    %c0_77 = arith.constant 0 : index
    %c0_78 = arith.constant 0 : index
    %81 = vector.load %arg8[%c0_76, %c0_77, %c0_78] : memref<9x4x4xf32, #tpu.memory_space<vmem>>, vector<1x4x4xf32>
    %82 = vector.shape_cast %81 : vector<1x4x4xf32> to vector<4x4xf32>
    %cst_79 = arith.constant dense<0.000000e+00> : vector<4x9xf32>
    %83 = tpu.matmul %82, %80, %cst_79 {dimension_numbers = #tpu.dot_dimension_numbers<[1], [0], [0], [1], [0, 0, 1, 1], [], []>} : vector<4x4xf32>, vector<4x9xf32>, vector<4x9xf32> -> vector<4x9xf32>
    %c0_80 = arith.constant 0 : index
    %c0_81 = arith.constant 0 : index
    %c0_82 = arith.constant 0 : index
    %84 = vector.load %arg5[%c0_80, %c0_81, %c0_82] : memref<9x9x9xf32, #tpu.memory_space<vmem>>, vector<1x9x9xf32>
    %85 = vector.shape_cast %84 : vector<1x9x9xf32> to vector<9x9xf32>
    %cst_83 = arith.constant dense<0.000000e+00> : vector<4x9xf32>
    %86 = tpu.matmul %83, %85, %cst_83 {dimension_numbers = #tpu.dot_dimension_numbers<[1], [0], [0], [1], [0, 0, 1, 1], [], []>} : vector<4x9xf32>, vector<9x9xf32>, vector<4x9xf32> -> vector<4x9xf32>
    %c1_84 = arith.constant 1 : index
    %c0_85 = arith.constant 0 : index
    %c0_86 = arith.constant 0 : index
    %87 = vector.load %arg8[%c1_84, %c0_85, %c0_86] : memref<9x4x4xf32, #tpu.memory_space<vmem>>, vector<1x4x4xf32>
    %88 = vector.shape_cast %87 : vector<1x4x4xf32> to vector<4x4xf32>
    %cst_87 = arith.constant dense<0.000000e+00> : vector<4x9xf32>
    %89 = tpu.matmul %88, %80, %cst_87 {dimension_numbers = #tpu.dot_dimension_numbers<[1], [0], [0], [1], [0, 0, 1, 1], [], []>} : vector<4x4xf32>, vector<4x9xf32>, vector<4x9xf32> -> vector<4x9xf32>
    %c1_88 = arith.constant 1 : index
    %c0_89 = arith.constant 0 : index
    %c0_90 = arith.constant 0 : index
    %90 = vector.load %arg5[%c1_88, %c0_89, %c0_90] : memref<9x9x9xf32, #tpu.memory_space<vmem>>, vector<1x9x9xf32>
    %91 = vector.shape_cast %90 : vector<1x9x9xf32> to vector<9x9xf32>
    %cst_91 = arith.constant dense<0.000000e+00> : vector<4x9xf32>
    %92 = tpu.matmul %89, %91, %cst_91 {dimension_numbers = #tpu.dot_dimension_numbers<[1], [0], [0], [1], [0, 0, 1, 1], [], []>} : vector<4x9xf32>, vector<9x9xf32>, vector<4x9xf32> -> vector<4x9xf32>
    %93 = arith.addf %86, %92 : vector<4x9xf32>
    %c2_92 = arith.constant 2 : index
    %c0_93 = arith.constant 0 : index
    %c0_94 = arith.constant 0 : index
    %94 = vector.load %arg8[%c2_92, %c0_93, %c0_94] : memref<9x4x4xf32, #tpu.memory_space<vmem>>, vector<1x4x4xf32>
    %95 = vector.shape_cast %94 : vector<1x4x4xf32> to vector<4x4xf32>
    %cst_95 = arith.constant dense<0.000000e+00> : vector<4x9xf32>
    %96 = tpu.matmul %95, %80, %cst_95 {dimension_numbers = #tpu.dot_dimension_numbers<[1], [0], [0], [1], [0, 0, 1, 1], [], []>} : vector<4x4xf32>, vector<4x9xf32>, vector<4x9xf32> -> vector<4x9xf32>
    %c2_96 = arith.constant 2 : index
    %c0_97 = arith.constant 0 : index
    %c0_98 = arith.constant 0 : index
    %97 = vector.load %arg5[%c2_96, %c0_97, %c0_98] : memref<9x9x9xf32, #tpu.memory_space<vmem>>, vector<1x9x9xf32>
    %98 = vector.shape_cast %97 : vector<1x9x9xf32> to vector<9x9xf32>
    %cst_99 = arith.constant dense<0.000000e+00> : vector<4x9xf32>
    %99 = tpu.matmul %96, %98, %cst_99 {dimension_numbers = #tpu.dot_dimension_numbers<[1], [0], [0], [1], [0, 0, 1, 1], [], []>} : vector<4x9xf32>, vector<9x9xf32>, vector<4x9xf32> -> vector<4x9xf32>
    %100 = arith.addf %93, %99 : vector<4x9xf32>
    %c3_100 = arith.constant 3 : index
    %c0_101 = arith.constant 0 : index
    %c0_102 = arith.constant 0 : index
    %101 = vector.load %arg8[%c3_100, %c0_101, %c0_102] : memref<9x4x4xf32, #tpu.memory_space<vmem>>, vector<1x4x4xf32>
    %102 = vector.shape_cast %101 : vector<1x4x4xf32> to vector<4x4xf32>
    %cst_103 = arith.constant dense<0.000000e+00> : vector<4x9xf32>
    %103 = tpu.matmul %102, %80, %cst_103 {dimension_numbers = #tpu.dot_dimension_numbers<[1], [0], [0], [1], [0, 0, 1, 1], [], []>} : vector<4x4xf32>, vector<4x9xf32>, vector<4x9xf32> -> vector<4x9xf32>
    %c3_104 = arith.constant 3 : index
    %c0_105 = arith.constant 0 : index
    %c0_106 = arith.constant 0 : index
    %104 = vector.load %arg5[%c3_104, %c0_105, %c0_106] : memref<9x9x9xf32, #tpu.memory_space<vmem>>, vector<1x9x9xf32>
    %105 = vector.shape_cast %104 : vector<1x9x9xf32> to vector<9x9xf32>
    %cst_107 = arith.constant dense<0.000000e+00> : vector<4x9xf32>
    %106 = tpu.matmul %103, %105, %cst_107 {dimension_numbers = #tpu.dot_dimension_numbers<[1], [0], [0], [1], [0, 0, 1, 1], [], []>} : vector<4x9xf32>, vector<9x9xf32>, vector<4x9xf32> -> vector<4x9xf32>
    %107 = arith.addf %100, %106 : vector<4x9xf32>
    %c4_108 = arith.constant 4 : index
    %c0_109 = arith.constant 0 : index
    %c0_110 = arith.constant 0 : index
    %108 = vector.load %arg8[%c4_108, %c0_109, %c0_110] : memref<9x4x4xf32, #tpu.memory_space<vmem>>, vector<1x4x4xf32>
    %109 = vector.shape_cast %108 : vector<1x4x4xf32> to vector<4x4xf32>
    %cst_111 = arith.constant dense<0.000000e+00> : vector<4x9xf32>
    %110 = tpu.matmul %109, %80, %cst_111 {dimension_numbers = #tpu.dot_dimension_numbers<[1], [0], [0], [1], [0, 0, 1, 1], [], []>} : vector<4x4xf32>, vector<4x9xf32>, vector<4x9xf32> -> vector<4x9xf32>
    %c4_112 = arith.constant 4 : index
    %c0_113 = arith.constant 0 : index
    %c0_114 = arith.constant 0 : index
    %111 = vector.load %arg5[%c4_112, %c0_113, %c0_114] : memref<9x9x9xf32, #tpu.memory_space<vmem>>, vector<1x9x9xf32>
    %112 = vector.shape_cast %111 : vector<1x9x9xf32> to vector<9x9xf32>
    %cst_115 = arith.constant dense<0.000000e+00> : vector<4x9xf32>
    %113 = tpu.matmul %110, %112, %cst_115 {dimension_numbers = #tpu.dot_dimension_numbers<[1], [0], [0], [1], [0, 0, 1, 1], [], []>} : vector<4x9xf32>, vector<9x9xf32>, vector<4x9xf32> -> vector<4x9xf32>
    %114 = arith.addf %107, %113 : vector<4x9xf32>
    %c5_116 = arith.constant 5 : index
    %c0_117 = arith.constant 0 : index
    %c0_118 = arith.constant 0 : index
    %115 = vector.load %arg8[%c5_116, %c0_117, %c0_118] : memref<9x4x4xf32, #tpu.memory_space<vmem>>, vector<1x4x4xf32>
    %116 = vector.shape_cast %115 : vector<1x4x4xf32> to vector<4x4xf32>
    %cst_119 = arith.constant dense<0.000000e+00> : vector<4x9xf32>
    %117 = tpu.matmul %116, %80, %cst_119 {dimension_numbers = #tpu.dot_dimension_numbers<[1], [0], [0], [1], [0, 0, 1, 1], [], []>} : vector<4x4xf32>, vector<4x9xf32>, vector<4x9xf32> -> vector<4x9xf32>
    %c5_120 = arith.constant 5 : index
    %c0_121 = arith.constant 0 : index
    %c0_122 = arith.constant 0 : index
    %118 = vector.load %arg5[%c5_120, %c0_121, %c0_122] : memref<9x9x9xf32, #tpu.memory_space<vmem>>, vector<1x9x9xf32>
    %119 = vector.shape_cast %118 : vector<1x9x9xf32> to vector<9x9xf32>
    %cst_123 = arith.constant dense<0.000000e+00> : vector<4x9xf32>
    %120 = tpu.matmul %117, %119, %cst_123 {dimension_numbers = #tpu.dot_dimension_numbers<[1], [0], [0], [1], [0, 0, 1, 1], [], []>} : vector<4x9xf32>, vector<9x9xf32>, vector<4x9xf32> -> vector<4x9xf32>
    %121 = arith.addf %114, %120 : vector<4x9xf32>
    %c6_124 = arith.constant 6 : index
    %c0_125 = arith.constant 0 : index
    %c0_126 = arith.constant 0 : index
    %122 = vector.load %arg8[%c6_124, %c0_125, %c0_126] : memref<9x4x4xf32, #tpu.memory_space<vmem>>, vector<1x4x4xf32>
    %123 = vector.shape_cast %122 : vector<1x4x4xf32> to vector<4x4xf32>
    %cst_127 = arith.constant dense<0.000000e+00> : vector<4x9xf32>
    %124 = tpu.matmul %123, %80, %cst_127 {dimension_numbers = #tpu.dot_dimension_numbers<[1], [0], [0], [1], [0, 0, 1, 1], [], []>} : vector<4x4xf32>, vector<4x9xf32>, vector<4x9xf32> -> vector<4x9xf32>
    %c6_128 = arith.constant 6 : index
    %c0_129 = arith.constant 0 : index
    %c0_130 = arith.constant 0 : index
    %125 = vector.load %arg5[%c6_128, %c0_129, %c0_130] : memref<9x9x9xf32, #tpu.memory_space<vmem>>, vector<1x9x9xf32>
    %126 = vector.shape_cast %125 : vector<1x9x9xf32> to vector<9x9xf32>
    %cst_131 = arith.constant dense<0.000000e+00> : vector<4x9xf32>
    %127 = tpu.matmul %124, %126, %cst_131 {dimension_numbers = #tpu.dot_dimension_numbers<[1], [0], [0], [1], [0, 0, 1, 1], [], []>} : vector<4x9xf32>, vector<9x9xf32>, vector<4x9xf32> -> vector<4x9xf32>
    %128 = arith.addf %121, %127 : vector<4x9xf32>
    %c7_132 = arith.constant 7 : index
    %c0_133 = arith.constant 0 : index
    %c0_134 = arith.constant 0 : index
    %129 = vector.load %arg8[%c7_132, %c0_133, %c0_134] : memref<9x4x4xf32, #tpu.memory_space<vmem>>, vector<1x4x4xf32>
    %130 = vector.shape_cast %129 : vector<1x4x4xf32> to vector<4x4xf32>
    %cst_135 = arith.constant dense<0.000000e+00> : vector<4x9xf32>
    %131 = tpu.matmul %130, %80, %cst_135 {dimension_numbers = #tpu.dot_dimension_numbers<[1], [0], [0], [1], [0, 0, 1, 1], [], []>} : vector<4x4xf32>, vector<4x9xf32>, vector<4x9xf32> -> vector<4x9xf32>
    %c7_136 = arith.constant 7 : index
    %c0_137 = arith.constant 0 : index
    %c0_138 = arith.constant 0 : index
    %132 = vector.load %arg5[%c7_136, %c0_137, %c0_138] : memref<9x9x9xf32, #tpu.memory_space<vmem>>, vector<1x9x9xf32>
    %133 = vector.shape_cast %132 : vector<1x9x9xf32> to vector<9x9xf32>
    %cst_139 = arith.constant dense<0.000000e+00> : vector<4x9xf32>
    %134 = tpu.matmul %131, %133, %cst_139 {dimension_numbers = #tpu.dot_dimension_numbers<[1], [0], [0], [1], [0, 0, 1, 1], [], []>} : vector<4x9xf32>, vector<9x9xf32>, vector<4x9xf32> -> vector<4x9xf32>
    %135 = arith.addf %128, %134 : vector<4x9xf32>
    %c8_140 = arith.constant 8 : index
    %c0_141 = arith.constant 0 : index
    %c0_142 = arith.constant 0 : index
    %136 = vector.load %arg8[%c8_140, %c0_141, %c0_142] : memref<9x4x4xf32, #tpu.memory_space<vmem>>, vector<1x4x4xf32>
    %137 = vector.shape_cast %136 : vector<1x4x4xf32> to vector<4x4xf32>
    %cst_143 = arith.constant dense<0.000000e+00> : vector<4x9xf32>
    %138 = tpu.matmul %137, %80, %cst_143 {dimension_numbers = #tpu.dot_dimension_numbers<[1], [0], [0], [1], [0, 0, 1, 1], [], []>} : vector<4x4xf32>, vector<4x9xf32>, vector<4x9xf32> -> vector<4x9xf32>
    %c8_144 = arith.constant 8 : index
    %c0_145 = arith.constant 0 : index
    %c0_146 = arith.constant 0 : index
    %139 = vector.load %arg5[%c8_144, %c0_145, %c0_146] : memref<9x9x9xf32, #tpu.memory_space<vmem>>, vector<1x9x9xf32>
    %140 = vector.shape_cast %139 : vector<1x9x9xf32> to vector<9x9xf32>
    %cst_147 = arith.constant dense<0.000000e+00> : vector<4x9xf32>
    %141 = tpu.matmul %138, %140, %cst_147 {dimension_numbers = #tpu.dot_dimension_numbers<[1], [0], [0], [1], [0, 0, 1, 1], [], []>} : vector<4x9xf32>, vector<9x9xf32>, vector<4x9xf32> -> vector<4x9xf32>
    %142 = arith.addf %135, %141 : vector<4x9xf32>
    %c0_148 = arith.constant 0 : index
    %c0_149 = arith.constant 0 : index
    %143 = vector.load %arg9[%c0_148, %c0_149] : memref<4x1xf32, #tpu.memory_space<vmem>>, vector<4x1xf32>
    %144 = vector.broadcast %143 : vector<4x1xf32> to vector<4x9xf32>
    %145 = arith.addf %142, %144 : vector<4x9xf32>
    %cst_150 = arith.constant 0.000000e+00 : f32
    %146 = vector.broadcast %cst_150 : f32 to vector<4x9xf32>
    %147 = arith.maximumf %145, %146 : vector<4x9xf32>
    %c0_151 = arith.constant 0 : index
    %c0_152 = arith.constant 0 : index
    %c0_153 = arith.constant 0 : index
    %148 = vector.load %arg10[%c0_151, %c0_152, %c0_153] : memref<9x4x4xf32, #tpu.memory_space<vmem>>, vector<1x4x4xf32>
    %149 = vector.shape_cast %148 : vector<1x4x4xf32> to vector<4x4xf32>
    %cst_154 = arith.constant dense<0.000000e+00> : vector<4x9xf32>
    %150 = tpu.matmul %149, %147, %cst_154 {dimension_numbers = #tpu.dot_dimension_numbers<[1], [0], [0], [1], [0, 0, 1, 1], [], []>} : vector<4x4xf32>, vector<4x9xf32>, vector<4x9xf32> -> vector<4x9xf32>
    %c0_155 = arith.constant 0 : index
    %c0_156 = arith.constant 0 : index
    %c0_157 = arith.constant 0 : index
    %151 = vector.load %arg5[%c0_155, %c0_156, %c0_157] : memref<9x9x9xf32, #tpu.memory_space<vmem>>, vector<1x9x9xf32>
    %152 = vector.shape_cast %151 : vector<1x9x9xf32> to vector<9x9xf32>
    %cst_158 = arith.constant dense<0.000000e+00> : vector<4x9xf32>
    %153 = tpu.matmul %150, %152, %cst_158 {dimension_numbers = #tpu.dot_dimension_numbers<[1], [0], [0], [1], [0, 0, 1, 1], [], []>} : vector<4x9xf32>, vector<9x9xf32>, vector<4x9xf32> -> vector<4x9xf32>
    %c1_159 = arith.constant 1 : index
    %c0_160 = arith.constant 0 : index
    %c0_161 = arith.constant 0 : index
    %154 = vector.load %arg10[%c1_159, %c0_160, %c0_161] : memref<9x4x4xf32, #tpu.memory_space<vmem>>, vector<1x4x4xf32>
    %155 = vector.shape_cast %154 : vector<1x4x4xf32> to vector<4x4xf32>
    %cst_162 = arith.constant dense<0.000000e+00> : vector<4x9xf32>
    %156 = tpu.matmul %155, %147, %cst_162 {dimension_numbers = #tpu.dot_dimension_numbers<[1], [0], [0], [1], [0, 0, 1, 1], [], []>} : vector<4x4xf32>, vector<4x9xf32>, vector<4x9xf32> -> vector<4x9xf32>
    %c1_163 = arith.constant 1 : index
    %c0_164 = arith.constant 0 : index
    %c0_165 = arith.constant 0 : index
    %157 = vector.load %arg5[%c1_163, %c0_164, %c0_165] : memref<9x9x9xf32, #tpu.memory_space<vmem>>, vector<1x9x9xf32>
    %158 = vector.shape_cast %157 : vector<1x9x9xf32> to vector<9x9xf32>
    %cst_166 = arith.constant dense<0.000000e+00> : vector<4x9xf32>
    %159 = tpu.matmul %156, %158, %cst_166 {dimension_numbers = #tpu.dot_dimension_numbers<[1], [0], [0], [1], [0, 0, 1, 1], [], []>} : vector<4x9xf32>, vector<9x9xf32>, vector<4x9xf32> -> vector<4x9xf32>
    %160 = arith.addf %153, %159 : vector<4x9xf32>
    %c2_167 = arith.constant 2 : index
    %c0_168 = arith.constant 0 : index
    %c0_169 = arith.constant 0 : index
    %161 = vector.load %arg10[%c2_167, %c0_168, %c0_169] : memref<9x4x4xf32, #tpu.memory_space<vmem>>, vector<1x4x4xf32>
    %162 = vector.shape_cast %161 : vector<1x4x4xf32> to vector<4x4xf32>
    %cst_170 = arith.constant dense<0.000000e+00> : vector<4x9xf32>
    %163 = tpu.matmul %162, %147, %cst_170 {dimension_numbers = #tpu.dot_dimension_numbers<[1], [0], [0], [1], [0, 0, 1, 1], [], []>} : vector<4x4xf32>, vector<4x9xf32>, vector<4x9xf32> -> vector<4x9xf32>
    %c2_171 = arith.constant 2 : index
    %c0_172 = arith.constant 0 : index
    %c0_173 = arith.constant 0 : index
    %164 = vector.load %arg5[%c2_171, %c0_172, %c0_173] : memref<9x9x9xf32, #tpu.memory_space<vmem>>, vector<1x9x9xf32>
    %165 = vector.shape_cast %164 : vector<1x9x9xf32> to vector<9x9xf32>
    %cst_174 = arith.constant dense<0.000000e+00> : vector<4x9xf32>
    %166 = tpu.matmul %163, %165, %cst_174 {dimension_numbers = #tpu.dot_dimension_numbers<[1], [0], [0], [1], [0, 0, 1, 1], [], []>} : vector<4x9xf32>, vector<9x9xf32>, vector<4x9xf32> -> vector<4x9xf32>
    %167 = arith.addf %160, %166 : vector<4x9xf32>
    %c3_175 = arith.constant 3 : index
    %c0_176 = arith.constant 0 : index
    %c0_177 = arith.constant 0 : index
    %168 = vector.load %arg10[%c3_175, %c0_176, %c0_177] : memref<9x4x4xf32, #tpu.memory_space<vmem>>, vector<1x4x4xf32>
    %169 = vector.shape_cast %168 : vector<1x4x4xf32> to vector<4x4xf32>
    %cst_178 = arith.constant dense<0.000000e+00> : vector<4x9xf32>
    %170 = tpu.matmul %169, %147, %cst_178 {dimension_numbers = #tpu.dot_dimension_numbers<[1], [0], [0], [1], [0, 0, 1, 1], [], []>} : vector<4x4xf32>, vector<4x9xf32>, vector<4x9xf32> -> vector<4x9xf32>
    %c3_179 = arith.constant 3 : index
    %c0_180 = arith.constant 0 : index
    %c0_181 = arith.constant 0 : index
    %171 = vector.load %arg5[%c3_179, %c0_180, %c0_181] : memref<9x9x9xf32, #tpu.memory_space<vmem>>, vector<1x9x9xf32>
    %172 = vector.shape_cast %171 : vector<1x9x9xf32> to vector<9x9xf32>
    %cst_182 = arith.constant dense<0.000000e+00> : vector<4x9xf32>
    %173 = tpu.matmul %170, %172, %cst_182 {dimension_numbers = #tpu.dot_dimension_numbers<[1], [0], [0], [1], [0, 0, 1, 1], [], []>} : vector<4x9xf32>, vector<9x9xf32>, vector<4x9xf32> -> vector<4x9xf32>
    %174 = arith.addf %167, %173 : vector<4x9xf32>
    %c4_183 = arith.constant 4 : index
    %c0_184 = arith.constant 0 : index
    %c0_185 = arith.constant 0 : index
    %175 = vector.load %arg10[%c4_183, %c0_184, %c0_185] : memref<9x4x4xf32, #tpu.memory_space<vmem>>, vector<1x4x4xf32>
    %176 = vector.shape_cast %175 : vector<1x4x4xf32> to vector<4x4xf32>
    %cst_186 = arith.constant dense<0.000000e+00> : vector<4x9xf32>
    %177 = tpu.matmul %176, %147, %cst_186 {dimension_numbers = #tpu.dot_dimension_numbers<[1], [0], [0], [1], [0, 0, 1, 1], [], []>} : vector<4x4xf32>, vector<4x9xf32>, vector<4x9xf32> -> vector<4x9xf32>
    %c4_187 = arith.constant 4 : index
    %c0_188 = arith.constant 0 : index
    %c0_189 = arith.constant 0 : index
    %178 = vector.load %arg5[%c4_187, %c0_188, %c0_189] : memref<9x9x9xf32, #tpu.memory_space<vmem>>, vector<1x9x9xf32>
    %179 = vector.shape_cast %178 : vector<1x9x9xf32> to vector<9x9xf32>
    %cst_190 = arith.constant dense<0.000000e+00> : vector<4x9xf32>
    %180 = tpu.matmul %177, %179, %cst_190 {dimension_numbers = #tpu.dot_dimension_numbers<[1], [0], [0], [1], [0, 0, 1, 1], [], []>} : vector<4x9xf32>, vector<9x9xf32>, vector<4x9xf32> -> vector<4x9xf32>
    %181 = arith.addf %174, %180 : vector<4x9xf32>
    %c5_191 = arith.constant 5 : index
    %c0_192 = arith.constant 0 : index
    %c0_193 = arith.constant 0 : index
    %182 = vector.load %arg10[%c5_191, %c0_192, %c0_193] : memref<9x4x4xf32, #tpu.memory_space<vmem>>, vector<1x4x4xf32>
    %183 = vector.shape_cast %182 : vector<1x4x4xf32> to vector<4x4xf32>
    %cst_194 = arith.constant dense<0.000000e+00> : vector<4x9xf32>
    %184 = tpu.matmul %183, %147, %cst_194 {dimension_numbers = #tpu.dot_dimension_numbers<[1], [0], [0], [1], [0, 0, 1, 1], [], []>} : vector<4x4xf32>, vector<4x9xf32>, vector<4x9xf32> -> vector<4x9xf32>
    %c5_195 = arith.constant 5 : index
    %c0_196 = arith.constant 0 : index
    %c0_197 = arith.constant 0 : index
    %185 = vector.load %arg5[%c5_195, %c0_196, %c0_197] : memref<9x9x9xf32, #tpu.memory_space<vmem>>, vector<1x9x9xf32>
    %186 = vector.shape_cast %185 : vector<1x9x9xf32> to vector<9x9xf32>
    %cst_198 = arith.constant dense<0.000000e+00> : vector<4x9xf32>
    %187 = tpu.matmul %184, %186, %cst_198 {dimension_numbers = #tpu.dot_dimension_numbers<[1], [0], [0], [1], [0, 0, 1, 1], [], []>} : vector<4x9xf32>, vector<9x9xf32>, vector<4x9xf32> -> vector<4x9xf32>
    %188 = arith.addf %181, %187 : vector<4x9xf32>
    %c6_199 = arith.constant 6 : index
    %c0_200 = arith.constant 0 : index
    %c0_201 = arith.constant 0 : index
    %189 = vector.load %arg10[%c6_199, %c0_200, %c0_201] : memref<9x4x4xf32, #tpu.memory_space<vmem>>, vector<1x4x4xf32>
    %190 = vector.shape_cast %189 : vector<1x4x4xf32> to vector<4x4xf32>
    %cst_202 = arith.constant dense<0.000000e+00> : vector<4x9xf32>
    %191 = tpu.matmul %190, %147, %cst_202 {dimension_numbers = #tpu.dot_dimension_numbers<[1], [0], [0], [1], [0, 0, 1, 1], [], []>} : vector<4x4xf32>, vector<4x9xf32>, vector<4x9xf32> -> vector<4x9xf32>
    %c6_203 = arith.constant 6 : index
    %c0_204 = arith.constant 0 : index
    %c0_205 = arith.constant 0 : index
    %192 = vector.load %arg5[%c6_203, %c0_204, %c0_205] : memref<9x9x9xf32, #tpu.memory_space<vmem>>, vector<1x9x9xf32>
    %193 = vector.shape_cast %192 : vector<1x9x9xf32> to vector<9x9xf32>
    %cst_206 = arith.constant dense<0.000000e+00> : vector<4x9xf32>
    %194 = tpu.matmul %191, %193, %cst_206 {dimension_numbers = #tpu.dot_dimension_numbers<[1], [0], [0], [1], [0, 0, 1, 1], [], []>} : vector<4x9xf32>, vector<9x9xf32>, vector<4x9xf32> -> vector<4x9xf32>
    %195 = arith.addf %188, %194 : vector<4x9xf32>
    %c7_207 = arith.constant 7 : index
    %c0_208 = arith.constant 0 : index
    %c0_209 = arith.constant 0 : index
    %196 = vector.load %arg10[%c7_207, %c0_208, %c0_209] : memref<9x4x4xf32, #tpu.memory_space<vmem>>, vector<1x4x4xf32>
    %197 = vector.shape_cast %196 : vector<1x4x4xf32> to vector<4x4xf32>
    %cst_210 = arith.constant dense<0.000000e+00> : vector<4x9xf32>
    %198 = tpu.matmul %197, %147, %cst_210 {dimension_numbers = #tpu.dot_dimension_numbers<[1], [0], [0], [1], [0, 0, 1, 1], [], []>} : vector<4x4xf32>, vector<4x9xf32>, vector<4x9xf32> -> vector<4x9xf32>
    %c7_211 = arith.constant 7 : index
    %c0_212 = arith.constant 0 : index
    %c0_213 = arith.constant 0 : index
    %199 = vector.load %arg5[%c7_211, %c0_212, %c0_213] : memref<9x9x9xf32, #tpu.memory_space<vmem>>, vector<1x9x9xf32>
    %200 = vector.shape_cast %199 : vector<1x9x9xf32> to vector<9x9xf32>
    %cst_214 = arith.constant dense<0.000000e+00> : vector<4x9xf32>
    %201 = tpu.matmul %198, %200, %cst_214 {dimension_numbers = #tpu.dot_dimension_numbers<[1], [0], [0], [1], [0, 0, 1, 1], [], []>} : vector<4x9xf32>, vector<9x9xf32>, vector<4x9xf32> -> vector<4x9xf32>
    %202 = arith.addf %195, %201 : vector<4x9xf32>
    %c8_215 = arith.constant 8 : index
    %c0_216 = arith.constant 0 : index
    %c0_217 = arith.constant 0 : index
    %203 = vector.load %arg10[%c8_215, %c0_216, %c0_217] : memref<9x4x4xf32, #tpu.memory_space<vmem>>, vector<1x4x4xf32>
    %204 = vector.shape_cast %203 : vector<1x4x4xf32> to vector<4x4xf32>
    %cst_218 = arith.constant dense<0.000000e+00> : vector<4x9xf32>
    %205 = tpu.matmul %204, %147, %cst_218 {dimension_numbers = #tpu.dot_dimension_numbers<[1], [0], [0], [1], [0, 0, 1, 1], [], []>} : vector<4x4xf32>, vector<4x9xf32>, vector<4x9xf32> -> vector<4x9xf32>
    %c8_219 = arith.constant 8 : index
    %c0_220 = arith.constant 0 : index
    %c0_221 = arith.constant 0 : index
    %206 = vector.load %arg5[%c8_219, %c0_220, %c0_221] : memref<9x9x9xf32, #tpu.memory_space<vmem>>, vector<1x9x9xf32>
    %207 = vector.shape_cast %206 : vector<1x9x9xf32> to vector<9x9xf32>
    %cst_222 = arith.constant dense<0.000000e+00> : vector<4x9xf32>
    %208 = tpu.matmul %205, %207, %cst_222 {dimension_numbers = #tpu.dot_dimension_numbers<[1], [0], [0], [1], [0, 0, 1, 1], [], []>} : vector<4x9xf32>, vector<9x9xf32>, vector<4x9xf32> -> vector<4x9xf32>
    %209 = arith.addf %202, %208 : vector<4x9xf32>
    %c0_223 = arith.constant 0 : index
    %c0_224 = arith.constant 0 : index
    %210 = vector.load %arg11[%c0_223, %c0_224] : memref<4x1xf32, #tpu.memory_space<vmem>>, vector<4x1xf32>
    %211 = vector.broadcast %210 : vector<4x1xf32> to vector<4x9xf32>
    %212 = arith.addf %209, %211 : vector<4x9xf32>
    %c0_225 = arith.constant 0 : index
    %c0_226 = arith.constant 0 : index
    %c0_227 = arith.constant 0 : index
    %213 = vector.load %arg12[%c0_225, %c0_226, %c0_227] : memref<1x4x9xf32, #tpu.memory_space<vmem>>, vector<1x4x9xf32>
    %214 = vector.shape_cast %213 : vector<1x4x9xf32> to vector<4x9xf32>
    %215 = vector.shape_cast %212 : vector<4x9xf32> to vector<1x4x9xf32>
    tpu.vector_store %arg12[%c0_225, %c0_226, %c0_227], %215 {strides = array<i32>} : memref<1x4x9xf32, #tpu.memory_space<vmem>>, vector<1x4x9xf32>,
    return
  }
  func.func @transform_0(%arg0: i32) -> (i32, i32, i32) {
    %c0_i32 = arith.constant 0 : i32
    %c0_i32_0 = arith.constant 0 : i32
    %c0_i32_1 = arith.constant 0 : i32
    return %arg0, %c0_i32, %c0_i32_0 : i32, i32, i32
  }
  func.func @transform_1(%arg0: i32) -> (i32, i32) {
    %c0_i32 = arith.constant 0 : i32
    %c0_i32_0 = arith.constant 0 : i32
    %c0_i32_1 = arith.constant 0 : i32
    return %c0_i32, %c0_i32_0 : i32, i32
  }
  func.func @transform_2(%arg0: i32) -> (i32, i32) {
    %c0_i32 = arith.constant 0 : i32
    %c0_i32_0 = arith.constant 0 : i32
    %c0_i32_1 = arith.constant 0 : i32
    return %c0_i32, %c0_i32_0 : i32, i32
  }
  func.func @transform_3(%arg0: i32) -> (i32, i32) {
    %c0_i32 = arith.constant 0 : i32
    %c0_i32_0 = arith.constant 0 : i32
    %c0_i32_1 = arith.constant 0 : i32
    return %c0_i32, %c0_i32_0 : i32, i32
  }
  func.func @transform_4(%arg0: i32) -> (i32, i32, i32) {
    %c0_i32 = arith.constant 0 : i32
    %c0_i32_0 = arith.constant 0 : i32
    %c0_i32_1 = arith.constant 0 : i32
    %c0_i32_2 = arith.constant 0 : i32
    return %c0_i32, %c0_i32_0, %c0_i32_1 : i32, i32, i32
  }
  func.func @transform_5(%arg0: i32) -> (i32, i32, i32) {
    %c0_i32 = arith.constant 0 : i32
    %c0_i32_0 = arith.constant 0 : i32
    %c0_i32_1 = arith.constant 0 : i32
    %c0_i32_2 = arith.constant 0 : i32
    return %c0_i32, %c0_i32_0, %c0_i32_1 : i32, i32, i32
  }
  func.func @transform_6(%arg0: i32) -> (i32, i32) {
    %c0_i32 = arith.constant 0 : i32
    %c0_i32_0 = arith.constant 0 : i32
    %c0_i32_1 = arith.constant 0 : i32
    return %c0_i32, %c0_i32_0 : i32, i32
  }
  func.func @transform_7(%arg0: i32) -> (i32, i32, i32) {
    %c0_i32 = arith.constant 0 : i32
    %c0_i32_0 = arith.constant 0 : i32
    %c0_i32_1 = arith.constant 0 : i32
    %c0_i32_2 = arith.constant 0 : i32
    return %c0_i32, %c0_i32_0, %c0_i32_1 : i32, i32, i32
  }
  func.func @transform_8(%arg0: i32) -> (i32, i32) {
    %c0_i32 = arith.constant 0 : i32
    %c0_i32_0 = arith.constant 0 : i32
    %c0_i32_1 = arith.constant 0 : i32
    return %c0_i32, %c0_i32_0 : i32, i32
  }
  func.func @transform_9(%arg0: i32) -> (i32, i32, i32) {
    %c0_i32 = arith.constant 0 : i32
    %c0_i32_0 = arith.constant 0 : i32
    %c0_i32_1 = arith.constant 0 : i32
    %c0_i32_2 = arith.constant 0 : i32
    return %c0_i32, %c0_i32_0, %c0_i32_1 : i32, i32, i32
  }
  func.func @transform_10(%arg0: i32) -> (i32, i32) {
    %c0_i32 = arith.constant 0 : i32
    %c0_i32_0 = arith.constant 0 : i32
    %c0_i32_1 = arith.constant 0 : i32
    return %c0_i32, %c0_i32_0 : i32, i32
  }
  func.func @transform_11(%arg0: i32) -> (i32, i32, i32) {
    %c0_i32 = arith.constant 0 : i32
    %c0_i32_0 = arith.constant 0 : i32
    %c0_i32_1 = arith.constant 0 : i32
    return %arg0, %c0_i32, %c0_i32_0 : i32, i32, i32
  }
}

module attributes {stable_mosaic.version = 11 : i64} {
  func.func @_gate_kernel(%arg0: i32, %arg1: i32, %arg2: memref<1x16x1024xf32, #tpu.memory_space<vmem>>, %arg3: memref<9x1024xf32, #tpu.memory_space<vmem>>, %arg4: memref<1x4x9xf32, #tpu.memory_space<vmem>>, %arg5: memref<4x16xf32, #tpu.memory_space<vmem>>, %arg6: memref<4x1xf32, #tpu.memory_space<vmem>>, %arg7: memref<4x4xf32, #tpu.memory_space<vmem>>, %arg8: memref<4x1xf32, #tpu.memory_space<vmem>>, %arg9: memref<16x4xf32, #tpu.memory_space<vmem>>, %arg10: memref<16x1xf32, #tpu.memory_space<vmem>>, %arg11: memref<1x16x1024xf32, #tpu.memory_space<vmem>>) attributes {dimension_semantics = [#tpu.dimension_semantics<parallel>, #tpu.dimension_semantics<parallel>], iteration_bounds = array<i64: 2, 1>, scalar_prefetch = 0 : i64, scratch_operands = 0 : i64, tpu.core_type = #tpu.core_type<tc>, window_params = [{transform_indices = @transform_0, window_bounds = array<i64: 1, 16, 1024>}, {transform_indices = @transform_1, window_bounds = array<i64: 9, 1024>}, {transform_indices = @transform_2, window_bounds = array<i64: 1, 4, 9>}, {pipeline_mode = #tpu.pipeline_mode<synchronous>, transform_indices = @transform_3, window_bounds = array<i64: 4, 16>}, {pipeline_mode = #tpu.pipeline_mode<synchronous>, transform_indices = @transform_4, window_bounds = array<i64: 4, 1>}, {pipeline_mode = #tpu.pipeline_mode<synchronous>, transform_indices = @transform_5, window_bounds = array<i64: 4, 4>}, {pipeline_mode = #tpu.pipeline_mode<synchronous>, transform_indices = @transform_6, window_bounds = array<i64: 4, 1>}, {pipeline_mode = #tpu.pipeline_mode<synchronous>, transform_indices = @transform_7, window_bounds = array<i64: 16, 4>}, {pipeline_mode = #tpu.pipeline_mode<synchronous>, transform_indices = @transform_8, window_bounds = array<i64: 16, 1>}, {transform_indices = @transform_9, window_bounds = array<i64: 1, 16, 1024>}]} {
    %c0 = arith.constant 0 : index
    %c0_0 = arith.constant 0 : index
    %c0_1 = arith.constant 0 : index
    %0 = vector.load %arg2[%c0, %c0_0, %c0_1] : memref<1x16x1024xf32, #tpu.memory_space<vmem>>, vector<1x16x1024xf32>
    %1 = vector.shape_cast %0 : vector<1x16x1024xf32> to vector<16x1024xf32>
    %c0_2 = arith.constant 0 : index
    %c0_3 = arith.constant 0 : index
    %2 = vector.load %arg5[%c0_2, %c0_3] : memref<4x16xf32, #tpu.memory_space<vmem>>, vector<4x16xf32>
    %cst = arith.constant dense<0.000000e+00> : vector<4x1024xf32>
    %3 = tpu.matmul %2, %1, %cst {dimension_numbers = #tpu.dot_dimension_numbers<[1], [0], [0], [1], [0, 0, 1, 1], [], []>} : vector<4x16xf32>, vector<16x1024xf32>, vector<4x1024xf32> -> vector<4x1024xf32>
    %c0_4 = arith.constant 0 : index
    %c0_5 = arith.constant 0 : index
    %4 = vector.load %arg6[%c0_4, %c0_5] : memref<4x1xf32, #tpu.memory_space<vmem>>, vector<4x1xf32>
    %5 = vector.broadcast %4 : vector<4x1xf32> to vector<4x1024xf32>
    %6 = arith.addf %3, %5 : vector<4x1024xf32>
    %c0_6 = arith.constant 0 : index
    %c0_7 = arith.constant 0 : index
    %7 = vector.load %arg7[%c0_6, %c0_7] : memref<4x4xf32, #tpu.memory_space<vmem>>, vector<4x4xf32>
    %cst_8 = arith.constant dense<0.000000e+00> : vector<4x1024xf32>
    %8 = tpu.matmul %7, %6, %cst_8 {dimension_numbers = #tpu.dot_dimension_numbers<[1], [0], [0], [1], [0, 0, 1, 1], [], []>} : vector<4x4xf32>, vector<4x1024xf32>, vector<4x1024xf32> -> vector<4x1024xf32>
    %c0_9 = arith.constant 0 : index
    %c0_10 = arith.constant 0 : index
    %9 = vector.load %arg8[%c0_9, %c0_10] : memref<4x1xf32, #tpu.memory_space<vmem>>, vector<4x1xf32>
    %10 = vector.broadcast %9 : vector<4x1xf32> to vector<4x1024xf32>
    %11 = arith.addf %8, %10 : vector<4x1024xf32>
    %c0_11 = arith.constant 0 : index
    %c0_12 = arith.constant 0 : index
    %c0_13 = arith.constant 0 : index
    %12 = vector.load %arg4[%c0_11, %c0_12, %c0_13] : memref<1x4x9xf32, #tpu.memory_space<vmem>>, vector<1x4x9xf32>
    %13 = vector.shape_cast %12 : vector<1x4x9xf32> to vector<4x9xf32>
    %c0_14 = arith.constant 0 : index
    %c0_15 = arith.constant 0 : index
    %14 = vector.load %arg3[%c0_14, %c0_15] : memref<9x1024xf32, #tpu.memory_space<vmem>>, vector<9x1024xf32>
    %cst_16 = arith.constant dense<0.000000e+00> : vector<4x1024xf32>
    %15 = tpu.matmul %13, %14, %cst_16 {dimension_numbers = #tpu.dot_dimension_numbers<[1], [0], [0], [1], [0, 0, 1, 1], [], []>} : vector<4x9xf32>, vector<9x1024xf32>, vector<4x1024xf32> -> vector<4x1024xf32>
    %c0_17 = arith.constant 0 : index
    %c0_18 = arith.constant 0 : index
    %16 = vector.load %arg9[%c0_17, %c0_18] : memref<16x4xf32, #tpu.memory_space<vmem>>, vector<16x4xf32>
    %17 = arith.addf %15, %11 : vector<4x1024xf32>
    %cst_19 = arith.constant dense<0.000000e+00> : vector<16x1024xf32>
    %18 = tpu.matmul %16, %17, %cst_19 {dimension_numbers = #tpu.dot_dimension_numbers<[1], [0], [0], [1], [0, 0, 1, 1], [], []>} : vector<16x4xf32>, vector<4x1024xf32>, vector<16x1024xf32> -> vector<16x1024xf32>
    %c0_20 = arith.constant 0 : index
    %c0_21 = arith.constant 0 : index
    %19 = vector.load %arg10[%c0_20, %c0_21] : memref<16x1xf32, #tpu.memory_space<vmem>>, vector<16x1xf32>
    %20 = vector.broadcast %19 : vector<16x1xf32> to vector<16x1024xf32>
    %21 = arith.addf %18, %20 : vector<16x1024xf32>
    %22 = arith.negf %21 : vector<16x1024xf32>
    %23 = math.exp %22 : vector<16x1024xf32>
    %cst_22 = arith.constant 1.000000e+00 : f32
    %24 = vector.broadcast %cst_22 : f32 to vector<16x1024xf32>
    %25 = arith.addf %24, %23 : vector<16x1024xf32>
    %26 = arith.divf %24, %25 : vector<16x1024xf32>
    %27 = arith.mulf %1, %26 : vector<16x1024xf32>
    %c0_23 = arith.constant 0 : index
    %c0_24 = arith.constant 0 : index
    %c0_25 = arith.constant 0 : index
    %28 = vector.load %arg11[%c0_23, %c0_24, %c0_25] : memref<1x16x1024xf32, #tpu.memory_space<vmem>>, vector<1x16x1024xf32>
    %29 = vector.shape_cast %28 : vector<1x16x1024xf32> to vector<16x1024xf32>
    %30 = vector.shape_cast %27 : vector<16x1024xf32> to vector<1x16x1024xf32>
    tpu.vector_store %arg11[%c0_23, %c0_24, %c0_25], %30 {strides = array<i32>} : memref<1x16x1024xf32, #tpu.memory_space<vmem>>, vector<1x16x1024xf32>,
    return
  }
  func.func @transform_0(%arg0: i32, %arg1: i32) -> (i32, i32, i32) {
    %c0_i32 = arith.constant 0 : i32
    %c0_i32_0 = arith.constant 0 : i32
    return %arg0, %c0_i32, %arg1 : i32, i32, i32
  }
  func.func @transform_1(%arg0: i32, %arg1: i32) -> (i32, i32) {
    %c0_i32 = arith.constant 0 : i32
    %c0_i32_0 = arith.constant 0 : i32
    return %c0_i32, %arg1 : i32, i32
  }
  func.func @transform_2(%arg0: i32, %arg1: i32) -> (i32, i32, i32) {
    %c0_i32 = arith.constant 0 : i32
    %c0_i32_0 = arith.constant 0 : i32
    %c0_i32_1 = arith.constant 0 : i32
    return %arg0, %c0_i32, %c0_i32_0 : i32, i32, i32
  }
  func.func @transform_3(%arg0: i32, %arg1: i32) -> (i32, i32) {
    %c0_i32 = arith.constant 0 : i32
    %c0_i32_0 = arith.constant 0 : i32
    %c0_i32_1 = arith.constant 0 : i32
    return %c0_i32, %c0_i32_0 : i32, i32
  }
  func.func @transform_4(%arg0: i32, %arg1: i32) -> (i32, i32) {
    %c0_i32 = arith.constant 0 : i32
    %c0_i32_0 = arith.constant 0 : i32
    %c0_i32_1 = arith.constant 0 : i32
    return %c0_i32, %c0_i32_0 : i32, i32
  }
  func.func @transform_5(%arg0: i32, %arg1: i32) -> (i32, i32) {
    %c0_i32 = arith.constant 0 : i32
    %c0_i32_0 = arith.constant 0 : i32
    %c0_i32_1 = arith.constant 0 : i32
    return %c0_i32, %c0_i32_0 : i32, i32
  }
  func.func @transform_6(%arg0: i32, %arg1: i32) -> (i32, i32) {
    %c0_i32 = arith.constant 0 : i32
    %c0_i32_0 = arith.constant 0 : i32
    %c0_i32_1 = arith.constant 0 : i32
    return %c0_i32, %c0_i32_0 : i32, i32
  }
  func.func @transform_7(%arg0: i32, %arg1: i32) -> (i32, i32) {
    %c0_i32 = arith.constant 0 : i32
    %c0_i32_0 = arith.constant 0 : i32
    %c0_i32_1 = arith.constant 0 : i32
    return %c0_i32, %c0_i32_0 : i32, i32
  }
  func.func @transform_8(%arg0: i32, %arg1: i32) -> (i32, i32) {
    %c0_i32 = arith.constant 0 : i32
    %c0_i32_0 = arith.constant 0 : i32
    %c0_i32_1 = arith.constant 0 : i32
    return %c0_i32, %c0_i32_0 : i32, i32
  }
  func.func @transform_9(%arg0: i32, %arg1: i32) -> (i32, i32, i32) {
    %c0_i32 = arith.constant 0 : i32
    %c0_i32_0 = arith.constant 0 : i32
    return %arg0, %c0_i32, %arg1 : i32, i32, i32
  }
}

</mosaic_0001>

<llo_original>
// kernel: esa_forward.3
$region0: #{esa_forward.3}
  #allocation0 [shape = 'u32[]', space=smem, size = 0x4, offset = 0x4, fixed_abs, tag = 'smem constant byte address 0x4 - core index']
  #allocation1 [shape = 'u32[144,128]{1,0:T(1,128)}', space=vmem, size = 0x12000, scoped, tag = 'internal scratch']
  %s0 = inlined_call_operand.vmem [shape: f32[2,16,1024], index: 0, kind: input, shape index: {}]
  %s1 = inlined_call_operand.vmem [shape: f32[9,1024], index: 1, kind: input, shape index: {}]
  %s2 = inlined_call_operand.vmem [shape: f32[2,4,9], index: 2, kind: input, shape index: {}]
  %s3 = inlined_call_operand.vmem [shape: f32[4,16], index: 3, kind: input, shape index: {}]
  %s4 = inlined_call_operand.vmem [shape: f32[4,1], index: 4, kind: input, shape index: {}]
  %s5 = inlined_call_operand.vmem [shape: f32[4,4], index: 5, kind: input, shape index: {}]
  %s6 = inlined_call_operand.vmem [shape: f32[4,1], index: 6, kind: input, shape index: {}]
  %s7 = inlined_call_operand.vmem [shape: f32[16,4], index: 7, kind: input, shape index: {}]
  %s8 = inlined_call_operand.vmem [shape: f32[16,1], index: 8, kind: input, shape index: {}]
  %s9 = inlined_call_operand.vmem [shape: f32[2,16,1024], index: 9, kind: output, shape index: {}]
  %s10 = sld [smem:[#allocation0]]
  $region69: #{esa_forward.3} parent=0
    _
  %s12 = ssub.s32 1, %s10
  %s13 = scalar_select 0, %s12, %s10
  loop: start=0, step=1, limit=4
  $region2: #{esa_forward.3} parent=0 // loop_pre_header
    _
  $region3: #{esa_forward.3} parent=0 // loop_header
    %s15 = sphi 0, %s19
    %p16 = scmp.ge.s32.totalorder %s15, 4
    %s22 = sphi 0, %s34
    %s23 = sphi 0, %s30
    %s24 = sphi 0, %s22
    %s25 = sphi 0, %s23
    %s26 = sphi 0, %s24
    %s27 = sphi 0, %s25
    %s39 = sphi 0, %s41
    %s42 = sphi 0, %s39
    %s43 = sphi 0, %s42
    %s59 = sphi 0, %s43
    %s65 = sphi 0, %s67
    %s68 = sphi 0, %s65
    %s69 = sphi 0, %s68
    %s85 = sphi 0, %s69
    %s91 = sphi 0, %s93
    %s94 = sphi 0, %s91
    %s95 = sphi 0, %s94
    %s111 = sphi 0, %s95
    %s115 = sphi 0, %s115
    %s117 = sphi 0, %s115
    %s118 = sphi 0, %s117
    %s132 = sphi 0, %s118
    %s136 = sphi 0, %s136
    %s138 = sphi 0, %s136
    %s139 = sphi 0, %s138
    %s153 = sphi 0, %s139
    %s157 = sphi 0, %s157
    %s159 = sphi 0, %s157
    %s160 = sphi 0, %s159
    %s174 = sphi 0, %s160
    %s178 = sphi 0, %s178
    %s180 = sphi 0, %s178
    %s181 = sphi 0, %s180
    %s195 = sphi 0, %s181
    %s199 = sphi 0, %s199
    %s201 = sphi 0, %s199
    %s202 = sphi 0, %s201
    %s216 = sphi 0, %s202
    %s220 = sphi 0, %s220
    %s222 = sphi 0, %s220
    %s223 = sphi 0, %s222
    %s237 = sphi 0, %s223
    %s245 = sphi 0, %s247
    %s248 = sphi 0, %s245
    %s249 = sphi 0, %s248
    %s265 = sphi 0, %s249
  $region4: #{esa_forward.3} parent=0 // loop_header_branch
    %18 = sbr.rel (%p16) target = $region8
  $region5: #{esa_forward.3} parent=0 // loop_body
    %s20 = ssub.s32 %s15, 1
    %s21 = ssub.s32 %s15, 2
    %s28 = sadd.s32 1, %s23
    %p29 = scmp.ge.s32.totalorder %s28, 1
    %s30 = scalar_select %p29, 0, %s28
    %s31 = sadd.s32 1, %s22
    %s32 = scalar_select %p29, %s31, %s22
    %p33 = scmp.ge.s32.totalorder %s32, 2
    %s34 = scalar_select %p33, 0, %s32
    %s35 = ssub.s32 %s22, %s34
    %s36 = ssub.s32 %s23, %s30
    %s37 = sor.u32 %s35, %s36
    %p38 = scmp.eq.s32.totalorder %s37, 0
    %s40 = sadd.s32 %s39, 1
    %s41 = scalar_select %p38, %s39, %s40
    %p44 = pneg %p38
    %p45 = scmp.eq.s32.totalorder %s15, 1
    %p46 = por %p44, %p45
    %p47 = scmp.ne.s32.totalorder %s39, %s42
    %p48 = scmp.eq.s32.totalorder %s15, 0
    %p49 = por %p47, %p48
    %p50 = scmp.ne.s32.totalorder %s39, %s42
    %p51 = scmp.eq.s32.totalorder %s20, 1
    %p52 = por %p50, %p51
    %p53 = scmp.ne.s32.totalorder %s42, %s43
    %p54 = scmp.eq.s32.totalorder %s20, 0
    %p55 = por %p53, %p54
    %p56 = scmp.ne.s32.totalorder %s42, %s43
    %p57 = scmp.eq.s32.totalorder %s21, 1
    %p58 = por %p56, %p57
    %p60 = scmp.ne.s32.totalorder %s43, %s59
    %p61 = scmp.eq.s32.totalorder %s21, 0
    %p62 = por %p60, %p61
    %s63 = ssub.s32 %s23, %s30
    %p64 = scmp.eq.s32.totalorder %s63, 0
    %s66 = sadd.s32 %s65, 1
    %s67 = scalar_select %p64, %s65, %s66
    %p70 = pneg %p64
    %p71 = scmp.eq.s32.totalorder %s15, 1
    %p72 = por %p70, %p71
    %p73 = scmp.ne.s32.totalorder %s65, %s68
    %p74 = scmp.eq.s32.totalorder %s15, 0
    %p75 = por %p73, %p74
    %p76 = scmp.ne.s32.totalorder %s65, %s68
    %p77 = scmp.eq.s32.totalorder %s20, 1
    %p78 = por %p76, %p77
    %p79 = scmp.ne.s32.totalorder %s68, %s69
    %p80 = scmp.eq.s32.totalorder %s20, 0
    %p81 = por %p79, %p80
    %p82 = scmp.ne.s32.totalorder %s68, %s69
    %p83 = scmp.eq.s32.totalorder %s21, 1
    %p84 = por %p82, %p83
    %p86 = scmp.ne.s32.totalorder %s69, %s85
    %p87 = scmp.eq.s32.totalorder %s21, 0
    %p88 = por %p86, %p87
    %s89 = ssub.s32 %s22, %s34
    %p90 = scmp.eq.s32.totalorder %s89, 0
    %s92 = sadd.s32 %s91, 1
    %s93 = scalar_select %p90, %s91, %s92
    %p96 = pneg %p90
    %p97 = scmp.eq.s32.totalorder %s15, 1
    %p98 = por %p96, %p97
    %p99 = scmp.ne.s32.totalorder %s91, %s94
    %p100 = scmp.eq.s32.totalorder %s15, 0
    %p101 = por %p99, %p100
    %p102 = scmp.ne.s32.totalorder %s91, %s94
    %p103 = scmp.eq.s32.totalorder %s20, 1
    %p104 = por %p102, %p103
    %p105 = scmp.ne.s32.totalorder %s94, %s95
    %p106 = scmp.eq.s32.totalorder %s20, 0
    %p107 = por %p105, %p106
    %p108 = scmp.ne.s32.totalorder %s94, %s95
    %p109 = scmp.eq.s32.totalorder %s21, 1
    %p110 = por %p108, %p109
    %p112 = scmp.ne.s32.totalorder %s95, %s111
    %p113 = scmp.eq.s32.totalorder %s21, 0
    %p114 = por %p112, %p113
    %s116 = sadd.s32 %s115, 1
    %p119 = scmp.eq.s32.totalorder %s15, 1
    %p120 = scmp.ne.s32.totalorder %s115, %s117
    %p121 = scmp.eq.s32.totalorder %s15, 0
    %p122 = por %p120, %p121
    %p123 = scmp.ne.s32.totalorder %s115, %s117
    %p124 = scmp.eq.s32.totalorder %s20, 1
    %p125 = por %p123, %p124
    %p126 = scmp.ne.s32.totalorder %s117, %s118
    %p127 = scmp.eq.s32.totalorder %s20, 0
    %p128 = por %p126, %p127
    %p129 = scmp.ne.s32.totalorder %s117, %s118
    %p130 = scmp.eq.s32.totalorder %s21, 1
    %p131 = por %p129, %p130
    %p133 = scmp.ne.s32.totalorder %s118, %s132
    %p134 = scmp.eq.s32.totalorder %s21, 0
    %p135 = por %p133, %p134
    %s137 = sadd.s32 %s136, 1
    %p140 = scmp.eq.s32.totalorder %s15, 1
    %p141 = scmp.ne.s32.totalorder %s136, %s138
    %p142 = scmp.eq.s32.totalorder %s15, 0
    %p143 = por %p141, %p142
    %p144 = scmp.ne.s32.totalorder %s136, %s138
    %p145 = scmp.eq.s32.totalorder %s20, 1
    %p146 = por %p144, %p145
    %p147 = scmp.ne.s32.totalorder %s138, %s139
    %p148 = scmp.eq.s32.totalorder %s20, 0
    %p149 = por %p147, %p148
    %p150 = scmp.ne.s32.totalorder %s138, %s139
    %p151 = scmp.eq.s32.totalorder %s21, 1
    %p152 = por %p150, %p151
    %p154 = scmp.ne.s32.totalorder %s139, %s153
    %p155 = scmp.eq.s32.totalorder %s21, 0
    %p156 = por %p154, %p155
    %s158 = sadd.s32 %s157, 1
    %p161 = scmp.eq.s32.totalorder %s15, 1
    %p162 = scmp.ne.s32.totalorder %s157, %s159
    %p163 = scmp.eq.s32.totalorder %s15, 0
    %p164 = por %p162, %p163
    %p165 = scmp.ne.s32.totalorder %s157, %s159
    %p166 = scmp.eq.s32.totalorder %s20, 1
    %p167 = por %p165, %p166
    %p168 = scmp.ne.s32.totalorder %s159, %s160
    %p169 = scmp.eq.s32.totalorder %s20, 0
    %p170 = por %p168, %p169
    %p171 = scmp.ne.s32.totalorder %s159, %s160
    %p172 = scmp.eq.s32.totalorder %s21, 1
    %p173 = por %p171, %p172
    %p175 = scmp.ne.s32.totalorder %s160, %s174
    %p176 = scmp.eq.s32.totalorder %s21, 0
    %p177 = por %p175, %p176
    %s179 = sadd.s32 %s178, 1
    %p182 = scmp.eq.s32.totalorder %s15, 1
    %p183 = scmp.ne.s32.totalorder %s178, %s180
    %p184 = scmp.eq.s32.totalorder %s15, 0
    %p185 = por %p183, %p184
    %p186 = scmp.ne.s32.totalorder %s178, %s180
    %p187 = scmp.eq.s32.totalorder %s20, 1
    %p188 = por %p186, %p187
    %p189 = scmp.ne.s32.totalorder %s180, %s181
    %p190 = scmp.eq.s32.totalorder %s20, 0
    %p191 = por %p189, %p190
    %p192 = scmp.ne.s32.totalorder %s180, %s181
    %p193 = scmp.eq.s32.totalorder %s21, 1
    %p194 = por %p192, %p193
    %p196 = scmp.ne.s32.totalorder %s181, %s195
    %p197 = scmp.eq.s32.totalorder %s21, 0
    %p198 = por %p196, %p197
    %s200 = sadd.s32 %s199, 1
    %p203 = scmp.eq.s32.totalorder %s15, 1
    %p204 = scmp.ne.s32.totalorder %s199, %s201
    %p205 = scmp.eq.s32.totalorder %s15, 0
    %p206 = por %p204, %p205
    %p207 = scmp.ne.s32.totalorder %s199, %s201
    %p208 = scmp.eq.s32.totalorder %s20, 1
    %p209 = por %p207, %p208
    %p210 = scmp.ne.s32.totalorder %s201, %s202
    %p211 = scmp.eq.s32.totalorder %s20, 0
    %p212 = por %p210, %p211
    %p213 = scmp.ne.s32.totalorder %s201, %s202
    %p214 = scmp.eq.s32.totalorder %s21, 1
    %p215 = por %p213, %p214
    %p217 = scmp.ne.s32.totalorder %s202, %s216
    %p218 = scmp.eq.s32.totalorder %s21, 0
    %p219 = por %p217, %p218
    %s221 = sadd.s32 %s220, 1
    %p224 = scmp.eq.s32.totalorder %s15, 1
    %p225 = scmp.ne.s32.totalorder %s220, %s222
    %p226 = scmp.eq.s32.totalorder %s15, 0
    %p227 = por %p225, %p226
    %p228 = scmp.ne.s32.totalorder %s220, %s222
    %p229 = scmp.eq.s32.totalorder %s20, 1
    %p230 = por %p228, %p229
    %p231 = scmp.ne.s32.totalorder %s222, %s223
    %p232 = scmp.eq.s32.totalorder %s20, 0
    %p233 = por %p231, %p232
    %p234 = scmp.ne.s32.totalorder %s222, %s223
    %p235 = scmp.eq.s32.totalorder %s21, 1
    %p236 = por %p234, %p235
    %p238 = scmp.ne.s32.totalorder %s223, %s237
    %p239 = scmp.eq.s32.totalorder %s21, 0
    %p240 = por %p238, %p239
    %s241 = ssub.s32 %s22, %s34
    %s242 = ssub.s32 %s23, %s30
    %s243 = sor.u32 %s241, %s242
    %p244 = scmp.eq.s32.totalorder %s243, 0
    %s246 = sadd.s32 %s245, 1
    %s247 = scalar_select %p244, %s245, %s246
    %p250 = pneg %p244
    %p251 = scmp.eq.s32.totalorder %s15, 1
    %p252 = por %p250, %p251
    %p253 = scmp.ne.s32.totalorder %s245, %s248
    %p254 = scmp.eq.s32.totalorder %s15, 0
    %p255 = por %p253, %p254
    %p256 = scmp.ne.s32.totalorder %s245, %s248
    %p257 = scmp.eq.s32.totalorder %s20, 1
    %p258 = por %p256, %p257
    %p259 = scmp.ne.s32.totalorder %s248, %s249
    %p260 = scmp.eq.s32.totalorder %s20, 0
    %p261 = por %p259, %p260
    %p262 = scmp.ne.s32.totalorder %s248, %s249
    %p263 = scmp.eq.s32.totalorder %s21, 1
    %p264 = por %p262, %p263
    %p266 = scmp.ne.s32.totalorder %s249, %s265
    %p267 = scmp.eq.s32.totalorder %s21, 0
    %p268 = por %p266, %p267
    %p269 = scmp.le.s32.totalorder 1, %s15
    %p270 = scmp.lt.s32.totalorder %s15, 3
    %p271 = pnand %p269, %p270
    %p272 = pneg %p271
    // Predicated region
    $region9: #{esa_forward.3} parent=5 // pred_check
      _
    $region10: #{esa_forward.3} parent=5 // pred_check_branch
      %274 = sbr.rel (%p271) target = $region12
    $region11: #{esa_forward.3} parent=5 // pred_region
      %s275 = ssub.s32 %s15, 1
      // Predicated region
      $region13: #{esa_forward.3} parent=11 // pred_check
        %p276 = pneg %p81
      $region14: #{esa_forward.3} parent=11 // pred_check_branch
        %278 = sbr.rel (%p276) target = $region16
      $region15: #{esa_forward.3} parent=11 // pred_region
        %s279 = smul.u32 8, %s25
        %p280 = scmp.lt.s32.totalorder %s279, 7
        %s281 = scalar_select %p280, %s279, 7
        %s282 = smul.addr %s281, 8
        %s283 = scalar_lea.vmem %s1, %s282
        %s284 = smul.u32 8, %s25
      $region16: #{esa_forward.3} parent=11 // pred_fallthru
        _
      // Predicated region
      $region17: #{esa_forward.3} parent=11 // pred_check
        %p285 = pneg %p128
      $region18: #{esa_forward.3} parent=11 // pred_check_branch
        %287 = sbr.rel (%p285) target = $region20
      $region19: #{esa_forward.3} parent=11 // pred_region
        _
      $region20: #{esa_forward.3} parent=11 // pred_fallthru
        _
      // Predicated region
      $region21: #{esa_forward.3} parent=11 // pred_check
        %p288 = pneg %p149
      $region22: #{esa_forward.3} parent=11 // pred_check_branch
        %290 = sbr.rel (%p288) target = $region24
      $region23: #{esa_forward.3} parent=11 // pred_region
        _
      $region24: #{esa_forward.3} parent=11 // pred_fallthru
        _
      // Predicated region
      $region25: #{esa_forward.3} parent=11 // pred_check
        %p291 = pneg %p170
      $region26: #{esa_forward.3} parent=11 // pred_check_branch
        %293 = sbr.rel (%p291) target = $region28
      $region27: #{esa_forward.3} parent=11 // pred_region
        _
      $region28: #{esa_forward.3} parent=11 // pred_fallthru
        _
      // Predicated region
      $region29: #{esa_forward.3} parent=11 // pred_check
        %p294 = pneg %p191
      $region30: #{esa_forward.3} parent=11 // pred_check_branch
        %296 = sbr.rel (%p294) target = $region32
      $region31: #{esa_forward.3} parent=11 // pred_region
        _
      $region32: #{esa_forward.3} parent=11 // pred_fallthru
        _
      // Predicated region
      $region33: #{esa_forward.3} parent=11 // pred_check
        %p297 = pneg %p212
      $region34: #{esa_forward.3} parent=11 // pred_check_branch
        %299 = sbr.rel (%p297) target = $region36
      $region35: #{esa_forward.3} parent=11 // pred_region
        _
      $region36: #{esa_forward.3} parent=11 // pred_fallthru
        _
      // Predicated region
      $region37: #{esa_forward.3} parent=11 // pred_check
        %p300 = pneg %p233
      $region38: #{esa_forward.3} parent=11 // pred_check_branch
        %302 = sbr.rel (%p300) target = $region40
      $region39: #{esa_forward.3} parent=11 // pred_region
        _
      $region40: #{esa_forward.3} parent=11 // pred_fallthru
        _
    $region12: #{esa_forward.3} parent=5 // pred_fallthru
      _
    %p303 = scmp.lt.s32.totalorder %s15, 2
    // Predicated region
    $region41: #{esa_forward.3} parent=5 // pred_check
      %p304 = pneg %p303
    $region42: #{esa_forward.3} parent=5 // pred_check_branch
      %306 = sbr.rel (%p304) target = $region44
    $region43: #{esa_forward.3} parent=5 // pred_region
      // Predicated region
      $region45: #{esa_forward.3} parent=43 // pred_check
        %p307 = pneg %p49
      $region46: #{esa_forward.3} parent=43 // pred_check_branch
        %309 = sbr.rel (%p307) target = $region48
      $region47: #{esa_forward.3} parent=43 // pred_region
        %s310 = smul.u32 8, %s23
        %p311 = scmp.lt.s32.totalorder %s22, 1
        %s312 = scalar_select %p311, %s22, 1
        %p313 = scmp.lt.s32.totalorder %s310, 7
        %s314 = scalar_select %p313, %s310, 7
        %s315 = smul.addr %s312, 16
        %s316 = sadd.s32 %s314, %s315
        %s317 = smul.addr %s316, 8
        %s318 = scalar_lea.vmem %s0, %s317
        %s319 = smul.u32 8, %s23
      $region48: #{esa_forward.3} parent=43 // pred_fallthru
        _
      // Predicated region
      $region49: #{esa_forward.3} parent=43 // pred_check
        %p320 = pneg %p101
      $region50: #{esa_forward.3} parent=43 // pred_check_branch
        %322 = sbr.rel (%p320) target = $region52
      $region51: #{esa_forward.3} parent=43 // pred_region
        %p323 = scmp.lt.s32.totalorder %s22, 1
        %s324 = scalar_select %p323, %s22, 1
        %s325 = smul.addr %s324, 4
        %s326 = scalar_lea.vmem %s2, %s325
      $region52: #{esa_forward.3} parent=43 // pred_fallthru
        _
    $region44: #{esa_forward.3} parent=5 // pred_fallthru
      _
    %p327 = scmp.le.s32.totalorder 1, %s15
    %p328 = scmp.lt.s32.totalorder %s15, 3
    %p329 = pnand %p327, %p328
    %p330 = pneg %p329
    // Predicated region
    $region53: #{esa_forward.3} parent=5 // pred_check
      _
    $region54: #{esa_forward.3} parent=5 // pred_check_branch
      %332 = sbr.rel (%p329) target = $region56
    $region55: #{esa_forward.3} parent=5 // pred_region
      %s333 = ssub.s32 %s15, 1
      %s334 = smul.u32 8, %s25
      %p335 = scmp.lt.s32.totalorder %s24, 1
      %s336 = scalar_select %p335, %s24, 1
      %p337 = scmp.lt.s32.totalorder %s334, 7
      %s338 = scalar_select %p337, %s334, 7
      %s339 = smul.addr %s336, 16
      %s340 = sadd.s32 %s338, %s339
      %s341 = smul.addr %s340, 8
      %s342 = scalar_lea.vmem %s0, %s341
      %p343 = pneg %p55
      %p344 = pneg %p52
      %s345 = smul.u32 8, %s25
      %p346 = scmp.lt.s32.totalorder %s345, 7
      %s347 = scalar_select %p346, %s345, 7
      %s348 = smul.addr %s347, 8
      %s349 = scalar_lea.vmem %s1, %s348
      %p350 = pneg %p81
      %p351 = pneg %p78
      %p352 = scmp.lt.s32.totalorder %s24, 1
      %s353 = scalar_select %p352, %s24, 1
      %s354 = smul.addr %s353, 4
      %s355 = scalar_lea.vmem %s2, %s354
      %p356 = pneg %p107
      %p357 = pneg %p104
      %p358 = pneg %p128
      %p359 = pneg %p125
      %p360 = pneg %p149
      %p361 = pneg %p146
      %p362 = pneg %p170
      %p363 = pneg %p167
      %p364 = pneg %p191
      %p365 = pneg %p188
      %p366 = pneg %p212
      %p367 = pneg %p209
      %p368 = pneg %p233
      %p369 = pneg %p230
      %p370 = pneg %p261
      %p371 = pneg %p258
      %s372 = smul.u32 8, %s25
      %p373 = scmp.lt.s32.totalorder %s24, 1
      %s374 = scalar_select %p373, %s24, 1
      %p375 = scmp.lt.s32.totalorder %s372, 7
      %s376 = scalar_select %p375, %s372, 7
      %s377 = smul.addr %s374, 16
      %s378 = sadd.s32 %s376, %s377
      %s379 = smul.addr %s378, 8
      %s380 = scalar_lea.vmem %s9, %s379
      %s381 = smul.u32 8, %s25
      %p382 = scmp.lt.s32.totalorder %s24, 1
      %s383 = scalar_select %p382, %s24, 1
      %p384 = scmp.lt.s32.totalorder %s381, 7
      %s385 = scalar_select %p384, %s381, 7
      %s386 = smul.addr %s383, 16
      %s387 = sadd.s32 %s385, %s386
      %s388 = smul.addr %s387, 8
      %s389 = scalar_lea.vmem %s0, %s388
      %s390 = smul.u32 8, %s25
      %s391 = smul.u32 8, %s25
      %p392 = scmp.lt.s32.totalorder %s391, 7
      %s393 = scalar_select %p392, %s391, 7
      %s394 = smul.addr %s393, 8
      %s395 = scalar_lea.vmem %s1, %s394
      %s396 = smul.u32 8, %s25
      %p397 = scmp.lt.s32.totalorder %s24, 1
      %s398 = scalar_select %p397, %s24, 1
      %s399 = smul.addr %s398, 4
      %s400 = scalar_lea.vmem %s2, %s399
      %s401 = smul.u32 8, %s25
      %p402 = scmp.lt.s32.totalorder %s24, 1
      %s403 = scalar_select %p402, %s24, 1
      %p404 = scmp.lt.s32.totalorder %s401, 7
      %s405 = scalar_select %p404, %s401, 7
      %s406 = smul.addr %s403, 16
      %s407 = sadd.s32 %s405, %s406
      %s408 = smul.addr %s407, 8
      %s409 = scalar_lea.vmem %s9, %s408
      %s410 = smul.u32 8, %s25
      %v411 = vld [vmem:[%s389] sm:$0xff]
      %v412 = vld [vmem:[%s389 + $0x8] sm:$0xff]
      %v413 = vld [vmem:[%s389 + $0x10] sm:$0xff]
      %v414 = vld [vmem:[%s389 + $0x18] sm:$0xff]
      %v415 = vld [vmem:[%s389 + $0x20] sm:$0xff]
      %v416 = vld [vmem:[%s389 + $0x28] sm:$0xff]
      %v417 = vld [vmem:[%s389 + $0x30] sm:$0xff]
      %v418 = vld [vmem:[%s389 + $0x38] sm:$0xff]
      %v419 = vld [vmem:[%s389 + $0x40] sm:$0xff]
      %v420 = vld [vmem:[%s389 + $0x48] sm:$0xff]
      %v421 = vld [vmem:[%s389 + $0x50] sm:$0xff]
      %v422 = vld [vmem:[%s389 + $0x58] sm:$0xff]
      %v423 = vld [vmem:[%s389 + $0x60] sm:$0xff]
      %v424 = vld [vmem:[%s389 + $0x68] sm:$0xff]
      %v425 = vld [vmem:[%s389 + $0x70] sm:$0xff]
      %v426 = vld [vmem:[%s389 + $0x78] sm:$0xff]
      %v427 = vld [vmem:[%s3] sm:$0xf]
      %v428 = vld [vmem:[%s4] sm:$0xf]
      %430 = vset.pattern.permute.xlu0 0
      %431 = vperm.xlu0 %430, %v428
      %v432 = vpop.permute.xlu0 %431
      %vm434 = vcmask 130048
      %v436 = vsel %vm434, %v427, 0
      %438 = vmatprep.subr.mxu0 %v412
      %439 = vmatpush1.msra.mxu0 %v411
      %440 = vmatprep.subr.mxu0 %v420
      %441 = vmatpush1.msra.mxu0 %v419
      %442 = vmatprep.subr.mxu0 0.0
      %443 = vmatpush1.msra.mxu0 0.0
      %444 = vmatprep.subr.mxu0 0.0
      %445 = vmatpush1.msra.mxu0 0.0
      %446 = vmatprep.subr.mxu0 0.0
      %447 = vmatpush1.msra.mxu0 0.0
      %448 = vmatprep.subr.mxu0 0.0
      %449 = vmatpush1.msra.mxu0 0.0
      %450 = vmatprep.subr.mxu0 0.0
      %451 = vmatpush1.msra.mxu0 0.0
      %452 = vmatprep.subr.mxu0 0.0
      %453 = vmatpush1.msra.mxu0 0.0
      %454 = vmatprep.subr.mxu0 0.0
      %455 = vmatpush1.msra.mxu0 0.0
      %456 = vmatprep.subr.mxu0 0.0
      %457 = vmatpush1.msra.mxu0 0.0
      %458 = vmatprep.subr.mxu0 0.0
      %459 = vmatpush1.msra.mxu0 0.0
      %460 = vmatprep.subr.mxu0 0.0
      %461 = vmatpush1.msra.mxu0 0.0
      %462 = vmatprep.subr.mxu0 0.0
      %463 = vmatpush1.msra.mxu0 0.0
      %464 = vmatprep.subr.mxu0 0.0
      %465 = vmatpush1.msra.mxu0 0.0
      %466 = vmatprep.subr.mxu0 0.0
      %467 = vmatpush1.msra.mxu0 0.0
      %468 = vmatprep.subr.mxu0 0.0
      %469 = vmatpush1.msra.mxu0 0.0
      %470 = vmatprep.subr.mxu0 0.0
      %471 = vmatpush1.msra.mxu0 0.0
      %472 = vmatprep.subr.mxu0 0.0
      %473 = vmatpush1.msra.mxu0 0.0
      %474 = vmatprep.subr.mxu0 0.0
      %475 = vmatpush1.msra.mxu0 0.0
      %476 = vmatprep.subr.mxu0 0.0
      %477 = vmatpush1.msra.mxu0 0.0
      %478 = vmatprep.subr.mxu0 0.0
      %479 = vmatpush1.msra.mxu0 0.0
      %480 = vmatprep.subr.mxu0 0.0
      %481 = vmatpush1.msra.mxu0 0.0
      %482 = vmatprep.subr.mxu0 0.0
      %483 = vmatpush1.msra.mxu0 0.0
      %484 = vmatprep.subr.mxu0 0.0
      %485 = vmatpush1.msra.mxu0 0.0
      %486 = vmatprep.subr.mxu0 0.0
      %487 = vmatpush1.msra.mxu0 0.0
      %488 = vmatprep.subr.mxu0 0.0
      %489 = vmatpush1.msra.mxu0 0.0
      %490 = vmatprep.subr.mxu0 0.0
      %491 = vmatpush1.msra.mxu0 0.0
      %492 = vmatprep.subr.mxu0 0.0
      %493 = vmatpush1.msra.mxu0 0.0
      %494 = vmatprep.subr.mxu0 0.0
      %495 = vmatpush1.msra.mxu0 0.0
      %496 = vmatprep.subr.mxu0 0.0
      %497 = vmatpush1.msra.mxu0 0.0
      %498 = vmatprep.subr.mxu0 0.0
      %499 = vmatpush1.msra.mxu0 0.0
      %500 = vmatprep.subr.mxu0 0.0
      %501 = vmatpush1.msra.mxu0 0.0
      %502 = vmatprep.mubr.f32.mxu0 0.0
      %503 = vmatmul.mubr.f32.gmra.mrb[0].mxu0 %v436
      %v504 = vpop.f32.mrb[0].mxu0
      %v505 = vadd.f32 %v432, %v504
      %v506 = vpop.f32.mrb[0].mxu0
      %v507 = vadd.f32 %v432, %v506
      %508 = vdwg.mxu0
      %509 = vmatprep.subr.mxu0 %v414
      %510 = vmatpush1.msra.mxu0 %v413
      %511 = vmatprep.subr.mxu0 %v422
      %512 = vmatpush1.msra.mxu0 %v421
      %513 = vmatprep.subr.mxu0 0.0
      %514 = vmatpush1.msra.mxu0 0.0
      %515 = vmatprep.subr.mxu0 0.0
      %516 = vmatpush1.msra.mxu0 0.0
      %517 = vmatprep.subr.mxu0 0.0
      %518 = vmatpush1.msra.mxu0 0.0
      %519 = vmatprep.subr.mxu0 0.0
      %520 = vmatpush1.msra.mxu0 0.0
      %521 = vmatprep.subr.mxu0 0.0
      %522 = vmatpush1.msra.mxu0 0.0
      %523 = vmatprep.subr.mxu0 0.0
      %524 = vmatpush1.msra.mxu0 0.0
      %525 = vmatprep.subr.mxu0 0.0
      %526 = vmatpush1.msra.mxu0 0.0
      %527 = vmatprep.subr.mxu0 0.0
      %528 = vmatpush1.msra.mxu0 0.0
      %529 = vmatprep.subr.mxu0 0.0
      %530 = vmatpush1.msra.mxu0 0.0
      %531 = vmatprep.subr.mxu0 0.0
      %532 = vmatpush1.msra.mxu0 0.0
      %533 = vmatprep.subr.mxu0 0.0
      %534 = vmatpush1.msra.mxu0 0.0
      %535 = vmatprep.subr.mxu0 0.0
      %536 = vmatpush1.msra.mxu0 0.0
      %537 = vmatprep.subr.mxu0 0.0
      %538 = vmatpush1.msra.mxu0 0.0
      %539 = vmatprep.subr.mxu0 0.0
      %540 = vmatpush1.msra.mxu0 0.0
      %541 = vmatprep.subr.mxu0 0.0
      %542 = vmatpush1.msra.mxu0 0.0
      %543 = vmatprep.subr.mxu0 0.0
      %544 = vmatpush1.msra.mxu0 0.0
      %545 = vmatprep.subr.mxu0 0.0
      %546 = vmatpush1.msra.mxu0 0.0
      %547 = vmatprep.subr.mxu0 0.0
      %548 = vmatpush1.msra.mxu0 0.0
      %549 = vmatprep.subr.mxu0 0.0
      %550 = vmatpush1.msra.mxu0 0.0
      %551 = vmatprep.subr.mxu0 0.0
      %552 = vmatpush1.msra.mxu0 0.0
      %553 = vmatprep.subr.mxu0 0.0
      %554 = vmatpush1.msra.mxu0 0.0
      %555 = vmatprep.subr.mxu0 0.0
      %556 = vmatpush1.msra.mxu0 0.0
      %557 = vmatprep.subr.mxu0 0.0
      %558 = vmatpush1.msra.mxu0 0.0
      %559 = vmatprep.subr.mxu0 0.0
      %560 = vmatpush1.msra.mxu0 0.0
      %561 = vmatprep.subr.mxu0 0.0
      %562 = vmatpush1.msra.mxu0 0.0
      %563 = vmatprep.subr.mxu0 0.0
      %564 = vmatpush1.msra.mxu0 0.0
      %565 = vmatprep.subr.mxu0 0.0
      %566 = vmatpush1.msra.mxu0 0.0
      %567 = vmatprep.subr.mxu0 0.0
      %568 = vmatpush1.msra.mxu0 0.0
      %569 = vmatprep.subr.mxu0 0.0
      %570 = vmatpush1.msra.mxu0 0.0
      %571 = vmatprep.subr.mxu0 0.0
      %572 = vmatpush1.msra.mxu0 0.0
      %573 = vmatprep.mubr.f32.mxu0 0.0
      %574 = vmatmul.mubr.f32.gmra.mrb[0].mxu0 %v436
      %v575 = vpop.f32.mrb[0].mxu0
      %v576 = vadd.f32 %v432, %v575
      %v577 = vpop.f32.mrb[0].mxu0
      %v578 = vadd.f32 %v432, %v577
      %579 = vdwg.mxu0
      %580 = vmatprep.subr.mxu0 %v416
      %581 = vmatpush1.msra.mxu0 %v415
      %582 = vmatprep.subr.mxu0 %v424
      %583 = vmatpush1.msra.mxu0 %v423
      %584 = vmatprep.subr.mxu0 0.0
      %585 = vmatpush1.msra.mxu0 0.0
      %586 = vmatprep.subr.mxu0 0.0
      %587 = vmatpush1.msra.mxu0 0.0
      %588 = vmatprep.subr.mxu0 0.0
      %589 = vmatpush1.msra.mxu0 0.0
      %590 = vmatprep.subr.mxu0 0.0
      %591 = vmatpush1.msra.mxu0 0.0
      %592 = vmatprep.subr.mxu0 0.0
      %593 = vmatpush1.msra.mxu0 0.0
      %594 = vmatprep.subr.mxu0 0.0
      %595 = vmatpush1.msra.mxu0 0.0
      %596 = vmatprep.subr.mxu0 0.0
      %597 = vmatpush1.msra.mxu0 0.0
      %598 = vmatprep.subr.mxu0 0.0
      %599 = vmatpush1.msra.mxu0 0.0
      %600 = vmatprep.subr.mxu0 0.0
      %601 = vmatpush1.msra.mxu0 0.0
      %602 = vmatprep.subr.mxu0 0.0
      %603 = vmatpush1.msra.mxu0 0.0
      %604 = vmatprep.subr.mxu0 0.0
      %605 = vmatpush1.msra.mxu0 0.0
      %606 = vmatprep.subr.mxu0 0.0
      %607 = vmatpush1.msra.mxu0 0.0
      %608 = vmatprep.subr.mxu0 0.0
      %609 = vmatpush1.msra.mxu0 0.0
      %610 = vmatprep.subr.mxu0 0.0
      %611 = vmatpush1.msra.mxu0 0.0
      %612 = vmatprep.subr.mxu0 0.0
      %613 = vmatpush1.msra.mxu0 0.0
      %614 = vmatprep.subr.mxu0 0.0
      %615 = vmatpush1.msra.mxu0 0.0
      %616 = vmatprep.subr.mxu0 0.0
      %617 = vmatpush1.msra.mxu0 0.0
      %618 = vmatprep.subr.mxu0 0.0
      %619 = vmatpush1.msra.mxu0 0.0
      %620 = vmatprep.subr.mxu0 0.0
      %621 = vmatpush1.msra.mxu0 0.0
      %622 = vmatprep.subr.mxu0 0.0
      %623 = vmatpush1.msra.mxu0 0.0
      %624 = vmatprep.subr.mxu0 0.0
      %625 = vmatpush1.msra.mxu0 0.0
      %626 = vmatprep.subr.mxu0 0.0
      %627 = vmatpush1.msra.mxu0 0.0
      %628 = vmatprep.subr.mxu0 0.0
      %629 = vmatpush1.msra.mxu0 0.0
      %630 = vmatprep.subr.mxu0 0.0
      %631 = vmatpush1.msra.mxu0 0.0
      %632 = vmatprep.subr.mxu0 0.0
      %633 = vmatpush1.msra.mxu0 0.0
      %634 = vmatprep.subr.mxu0 0.0
      %635 = vmatpush1.msra.mxu0 0.0
      %636 = vmatprep.subr.mxu0 0.0
      %637 = vmatpush1.msra.mxu0 0.0
      %638 = vmatprep.subr.mxu0 0.0
      %639 = vmatpush1.msra.mxu0 0.0
      %640 = vmatprep.subr.mxu0 0.0
      %641 = vmatpush1.msra.mxu0 0.0
      %642 = vmatprep.subr.mxu0 0.0
      %643 = vmatpush1.msra.mxu0 0.0
      %644 = vmatprep.mubr.f32.mxu0 0.0
      %645 = vmatmul.mubr.f32.gmra.mrb[0].mxu0 %v436
      %v646 = vpop.f32.mrb[0].mxu0
      %v647 = vadd.f32 %v432, %v646
      %v648 = vpop.f32.mrb[0].mxu0
      %v649 = vadd.f32 %v432, %v648
      %650 = vdwg.mxu0
      %651 = vmatprep.subr.mxu0 %v418
      %652 = vmatpush1.msra.mxu0 %v417
      %653 = vmatprep.subr.mxu0 %v426
      %654 = vmatpush1.msra.mxu0 %v425
      %655 = vmatprep.subr.mxu0 0.0
      %656 = vmatpush1.msra.mxu0 0.0
      %657 = vmatprep.subr.mxu0 0.0
      %658 = vmatpush1.msra.mxu0 0.0
      %659 = vmatprep.subr.mxu0 0.0
      %660 = vmatpush1.msra.mxu0 0.0
      %661 = vmatprep.subr.mxu0 0.0
      %662 = vmatpush1.msra.mxu0 0.0
      %663 = vmatprep.subr.mxu0 0.0
      %664 = vmatpush1.msra.mxu0 0.0
      %665 = vmatprep.subr.mxu0 0.0
      %666 = vmatpush1.msra.mxu0 0.0
      %667 = vmatprep.subr.mxu0 0.0
      %668 = vmatpush1.msra.mxu0 0.0
      %669 = vmatprep.subr.mxu0 0.0
      %670 = vmatpush1.msra.mxu0 0.0
      %671 = vmatprep.subr.mxu0 0.0
      %672 = vmatpush1.msra.mxu0 0.0
      %673 = vmatprep.subr.mxu0 0.0
      %674 = vmatpush1.msra.mxu0 0.0
      %675 = vmatprep.subr.mxu0 0.0
      %676 = vmatpush1.msra.mxu0 0.0
      %677 = vmatprep.subr.mxu0 0.0
      %678 = vmatpush1.msra.mxu0 0.0
      %679 = vmatprep.subr.mxu0 0.0
      %680 = vmatpush1.msra.mxu0 0.0
      %681 = vmatprep.subr.mxu0 0.0
      %682 = vmatpush1.msra.mxu0 0.0
      %683 = vmatprep.subr.mxu0 0.0
      %684 = vmatpush1.msra.mxu0 0.0
      %685 = vmatprep.subr.mxu0 0.0
      %686 = vmatpush1.msra.mxu0 0.0
      %687 = vmatprep.subr.mxu0 0.0
      %688 = vmatpush1.msra.mxu0 0.0
      %689 = vmatprep.subr.mxu0 0.0
      %690 = vmatpush1.msra.mxu0 0.0
      %691 = vmatprep.subr.mxu0 0.0
      %692 = vmatpush1.msra.mxu0 0.0
      %693 = vmatprep.subr.mxu0 0.0
      %694 = vmatpush1.msra.mxu0 0.0
      %695 = vmatprep.subr.mxu0 0.0
      %696 = vmatpush1.msra.mxu0 0.0
      %697 = vmatprep.subr.mxu0 0.0
      %698 = vmatpush1.msra.mxu0 0.0
      %699 = vmatprep.subr.mxu0 0.0
      %700 = vmatpush1.msra.mxu0 0.0
      %701 = vmatprep.subr.mxu0 0.0
      %702 = vmatpush1.msra.mxu0 0.0
      %703 = vmatprep.subr.mxu0 0.0
      %704 = vmatpush1.msra.mxu0 0.0
      %705 = vmatprep.subr.mxu0 0.0
      %706 = vmatpush1.msra.mxu0 0.0
      %707 = vmatprep.subr.mxu0 0.0
      %708 = vmatpush1.msra.mxu0 0.0
      %709 = vmatprep.subr.mxu0 0.0
      %710 = vmatpush1.msra.mxu0 0.0
      %711 = vmatprep.subr.mxu0 0.0
      %712 = vmatpush1.msra.mxu0 0.0
      %713 = vmatprep.subr.mxu0 0.0
      %714 = vmatpush1.msra.mxu0 0.0
      %715 = vmatprep.mubr.f32.mxu0 0.0
      %716 = vmatmul.mubr.f32.gmra.mrb[0].mxu0 %v436
      %v717 = vpop.f32.mrb[0].mxu0
      %v718 = vadd.f32 %v432, %v717
      %v719 = vpop.f32.mrb[0].mxu0
      %v720 = vadd.f32 %v432, %v719
      %721 = vdwg.mxu0
      %v722 = vld [vmem:[%s5] sm:$0xf]
      %v723 = vld [vmem:[%s6] sm:$0xf]
      %725 = vset.pattern.permute.xlu0 0
      %726 = vperm.xlu0 %725, %v723
      %v727 = vpop.permute.xlu0 %726
      %vm729 = vcmask 31744
      %v731 = vsel %vm729, %v722, 0
      %vm733 = vcmask 1043456
      %v735 = vsel %vm733, %v505, 0
      %v738 = vsel %vm733, %v507, 0
      %v741 = vsel %vm733, %v576, 0
      %v744 = vsel %vm733, %v578, 0
      %v747 = vsel %vm733, %v647, 0
      %v750 = vsel %vm733, %v649, 0
      %v753 = vsel %vm733, %v718, 0
      %v756 = vsel %vm733, %v720, 0
      %758 = vmatprep.subr.mxu0 %v738
      %759 = vmatpush1.msra.mxu0 %v735
      %760 = vmatprep.subr.mxu0 0.0
      %761 = vmatpush1.msra.mxu0 0.0
      %762 = vmatprep.subr.mxu0 0.0
      %763 = vmatpush1.msra.mxu0 0.0
      %764 = vmatprep.subr.mxu0 0.0
      %765 = vmatpush1.msra.mxu0 0.0
      %766 = vmatprep.subr.mxu0 0.0
      %767 = vmatpush1.msra.mxu0 0.0
      %768 = vmatprep.subr.mxu0 0.0
      %769 = vmatpush1.msra.mxu0 0.0
      %770 = vmatprep.subr.mxu0 0.0
      %771 = vmatpush1.msra.mxu0 0.0
      %772 = vmatprep.subr.mxu0 0.0
      %773 = vmatpush1.msra.mxu0 0.0
      %774 = vmatprep.subr.mxu0 0.0
      %775 = vmatpush1.msra.mxu0 0.0
      %776 = vmatprep.subr.mxu0 0.0
      %777 = vmatpush1.msra.mxu0 0.0
      %778 = vmatprep.subr.mxu0 0.0
      %779 = vmatpush1.msra.mxu0 0.0
      %780 = vmatprep.subr.mxu0 0.0
      %781 = vmatpush1.msra.mxu0 0.0
      %782 = vmatprep.subr.mxu0 0.0
      %783 = vmatpush1.msra.mxu0 0.0
      %784 = vmatprep.subr.mxu0 0.0
      %785 = vmatpush1.msra.mxu0 0.0
      %786 = vmatprep.subr.mxu0 0.0
      %787 = vmatpush1.msra.mxu0 0.0
      %788 = vmatprep.subr.mxu0 0.0
      %789 = vmatpush1.msra.mxu0 0.0
      %790 = vmatprep.subr.mxu0 0.0
      %791 = vmatpush1.msra.mxu0 0.0
      %792 = vmatprep.subr.mxu0 0.0
      %793 = vmatpush1.msra.mxu0 0.0
      %794 = vmatprep.subr.mxu0 0.0
      %795 = vmatpush1.msra.mxu0 0.0
      %796 = vmatprep.subr.mxu0 0.0
      %797 = vmatpush1.msra.mxu0 0.0
      %798 = vmatprep.subr.mxu0 0.0
      %799 = vmatpush1.msra.mxu0 0.0
      %800 = vmatprep.subr.mxu0 0.0
      %801 = vmatpush1.msra.mxu0 0.0
      %802 = vmatprep.subr.mxu0 0.0
      %803 = vmatpush1.msra.mxu0 0.0
      %804 = vmatprep.subr.mxu0 0.0
      %805 = vmatpush1.msra.mxu0 0.0
      %806 = vmatprep.subr.mxu0 0.0
      %807 = vmatpush1.msra.mxu0 0.0
      %808 = vmatprep.subr.mxu0 0.0
      %809 = vmatpush1.msra.mxu0 0.0
      %810 = vmatprep.subr.mxu0 0.0
      %811 = vmatpush1.msra.mxu0 0.0
      %812 = vmatprep.subr.mxu0 0.0
      %813 = vmatpush1.msra.mxu0 0.0
      %814 = vmatprep.subr.mxu0 0.0
      %815 = vmatpush1.msra.mxu0 0.0
      %816 = vmatprep.subr.mxu0 0.0
      %817 = vmatpush1.msra.mxu0 0.0
      %818 = vmatprep.subr.mxu0 0.0
      %819 = vmatpush1.msra.mxu0 0.0
      %820 = vmatprep.subr.mxu0 0.0
      %821 = vmatpush1.msra.mxu0 0.0
      %822 = vmatprep.mubr.f32.mxu0 0.0
      %823 = vmatmul.mubr.f32.gmra.mrb[0].mxu0 %v731
      %v824 = vpop.f32.mrb[0].mxu0
      %v825 = vadd.f32 %v727, %v824
      %v826 = vpop.f32.mrb[0].mxu0
      %v827 = vadd.f32 %v727, %v826
      %828 = vdwg.mxu0
      %829 = vmatprep.subr.mxu0 %v744
      %830 = vmatpush1.msra.mxu0 %v741
      %831 = vmatprep.subr.mxu0 0.0
      %832 = vmatpush1.msra.mxu0 0.0
      %833 = vmatprep.subr.mxu0 0.0
      %834 = vmatpush1.msra.mxu0 0.0
      %835 = vmatprep.subr.mxu0 0.0
      %836 = vmatpush1.msra.mxu0 0.0
      %837 = vmatprep.subr.mxu0 0.0
      %838 = vmatpush1.msra.mxu0 0.0
      %839 = vmatprep.subr.mxu0 0.0
      %840 = vmatpush1.msra.mxu0 0.0
      %841 = vmatprep.subr.mxu0 0.0
      %842 = vmatpush1.msra.mxu0 0.0
      %843 = vmatprep.subr.mxu0 0.0
      %844 = vmatpush1.msra.mxu0 0.0
      %845 = vmatprep.subr.mxu0 0.0
      %846 = vmatpush1.msra.mxu0 0.0
      %847 = vmatprep.subr.mxu0 0.0
      %848 = vmatpush1.msra.mxu0 0.0
      %849 = vmatprep.subr.mxu0 0.0
      %850 = vmatpush1.msra.mxu0 0.0
      %851 = vmatprep.subr.mxu0 0.0
      %852 = vmatpush1.msra.mxu0 0.0
      %853 = vmatprep.subr.mxu0 0.0
      %854 = vmatpush1.msra.mxu0 0.0
      %855 = vmatprep.subr.mxu0 0.0
      %856 = vmatpush1.msra.mxu0 0.0
      %857 = vmatprep.subr.mxu0 0.0
      %858 = vmatpush1.msra.mxu0 0.0
      %859 = vmatprep.subr.mxu0 0.0
      %860 = vmatpush1.msra.mxu0 0.0
      %861 = vmatprep.subr.mxu0 0.0
      %862 = vmatpush1.msra.mxu0 0.0
      %863 = vmatprep.subr.mxu0 0.0
      %864 = vmatpush1.msra.mxu0 0.0
      %865 = vmatprep.subr.mxu0 0.0
      %866 = vmatpush1.msra.mxu0 0.0
      %867 = vmatprep.subr.mxu0 0.0
      %868 = vmatpush1.msra.mxu0 0.0
      %869 = vmatprep.subr.mxu0 0.0
      %870 = vmatpush1.msra.mxu0 0.0
      %871 = vmatprep.subr.mxu0 0.0
      %872 = vmatpush1.msra.mxu0 0.0
      %873 = vmatprep.subr.mxu0 0.0
      %874 = vmatpush1.msra.mxu0 0.0
      %875 = vmatprep.subr.mxu0 0.0
      %876 = vmatpush1.msra.mxu0 0.0
      %877 = vmatprep.subr.mxu0 0.0
      %878 = vmatpush1.msra.mxu0 0.0
      %879 = vmatprep.subr.mxu0 0.0
      %880 = vmatpush1.msra.mxu0 0.0
      %881 = vmatprep.subr.mxu0 0.0
      %882 = vmatpush1.msra.mxu0 0.0
      %883 = vmatprep.subr.mxu0 0.0
      %884 = vmatpush1.msra.mxu0 0.0
      %885 = vmatprep.subr.mxu0 0.0
      %886 = vmatpush1.msra.mxu0 0.0
      %887 = vmatprep.subr.mxu0 0.0
      %888 = vmatpush1.msra.mxu0 0.0
      %889 = vmatprep.subr.mxu0 0.0
      %890 = vmatpush1.msra.mxu0 0.0
      %891 = vmatprep.subr.mxu0 0.0
      %892 = vmatpush1.msra.mxu0 0.0
      %893 = vmatprep.mubr.f32.mxu0 0.0
      %894 = vmatmul.mubr.f32.gmra.mrb[0].mxu0 %v731
      %v895 = vpop.f32.mrb[0].mxu0
      %v896 = vadd.f32 %v727, %v895
      %v897 = vpop.f32.mrb[0].mxu0
      %v898 = vadd.f32 %v727, %v897
      %899 = vdwg.mxu0
      %900 = vmatprep.subr.mxu0 %v750
      %901 = vmatpush1.msra.mxu0 %v747
      %902 = vmatprep.subr.mxu0 0.0
      %903 = vmatpush1.msra.mxu0 0.0
      %904 = vmatprep.subr.mxu0 0.0
      %905 = vmatpush1.msra.mxu0 0.0
      %906 = vmatprep.subr.mxu0 0.0
      %907 = vmatpush1.msra.mxu0 0.0
      %908 = vmatprep.subr.mxu0 0.0
      %909 = vmatpush1.msra.mxu0 0.0
      %910 = vmatprep.subr.mxu0 0.0
      %911 = vmatpush1.msra.mxu0 0.0
      %912 = vmatprep.subr.mxu0 0.0
      %913 = vmatpush1.msra.mxu0 0.0
      %914 = vmatprep.subr.mxu0 0.0
      %915 = vmatpush1.msra.mxu0 0.0
      %916 = vmatprep.subr.mxu0 0.0
      %917 = vmatpush1.msra.mxu0 0.0
      %918 = vmatprep.subr.mxu0 0.0
      %919 = vmatpush1.msra.mxu0 0.0
      %920 = vmatprep.subr.mxu0 0.0
      %921 = vmatpush1.msra.mxu0 0.0
      %922 = vmatprep.subr.mxu0 0.0
      %923 = vmatpush1.msra.mxu0 0.0
      %924 = vmatprep.subr.mxu0 0.0
      %925 = vmatpush1.msra.mxu0 0.0
      %926 = vmatprep.subr.mxu0 0.0
      %927 = vmatpush1.msra.mxu0 0.0
      %928 = vmatprep.subr.mxu0 0.0
      %929 = vmatpush1.msra.mxu0 0.0
      %930 = vmatprep.subr.mxu0 0.0
      %931 = vmatpush1.msra.mxu0 0.0
      %932 = vmatprep.subr.mxu0 0.0
      %933 = vmatpush1.msra.mxu0 0.0
      %934 = vmatprep.subr.mxu0 0.0
      %935 = vmatpush1.msra.mxu0 0.0
      %936 = vmatprep.subr.mxu0 0.0
      %937 = vmatpush1.msra.mxu0 0.0
      %938 = vmatprep.subr.mxu0 0.0
      %939 = vmatpush1.msra.mxu0 0.0
      %940 = vmatprep.subr.mxu0 0.0
      %941 = vmatpush1.msra.mxu0 0.0
      %942 = vmatprep.subr.mxu0 0.0
      %943 = vmatpush1.msra.mxu0 0.0
      %944 = vmatprep.subr.mxu0 0.0
      %945 = vmatpush1.msra.mxu0 0.0
      %946 = vmatprep.subr.mxu0 0.0
      %947 = vmatpush1.msra.mxu0 0.0
      %948 = vmatprep.subr.mxu0 0.0
      %949 = vmatpush1.msra.mxu0 0.0
      %950 = vmatprep.subr.mxu0 0.0
      %951 = vmatpush1.msra.mxu0 0.0
      %952 = vmatprep.subr.mxu0 0.0
      %953 = vmatpush1.msra.mxu0 0.0
      %954 = vmatprep.subr.mxu0 0.0
      %955 = vmatpush1.msra.mxu0 0.0
      %956 = vmatprep.subr.mxu0 0.0
      %957 = vmatpush1.msra.mxu0 0.0
      %958 = vmatprep.subr.mxu0 0.0
      %959 = vmatpush1.msra.mxu0 0.0
      %960 = vmatprep.subr.mxu0 0.0
      %961 = vmatpush1.msra.mxu0 0.0
      %962 = vmatprep.subr.mxu0 0.0
      %963 = vmatpush1.msra.mxu0 0.0
      %964 = vmatprep.mubr.f32.mxu0 0.0
      %965 = vmatmul.mubr.f32.gmra.mrb[0].mxu0 %v731
      %v966 = vpop.f32.mrb[0].mxu0
      %v967 = vadd.f32 %v727, %v966
      %v968 = vpop.f32.mrb[0].mxu0
      %v969 = vadd.f32 %v727, %v968
      %970 = vdwg.mxu0
      %971 = vmatprep.subr.mxu0 %v756
      %972 = vmatpush1.msra.mxu0 %v753
      %973 = vmatprep.subr.mxu0 0.0
      %974 = vmatpush1.msra.mxu0 0.0
      %975 = vmatprep.subr.mxu0 0.0
      %976 = vmatpush1.msra.mxu0 0.0
      %977 = vmatprep.subr.mxu0 0.0
      %978 = vmatpush1.msra.mxu0 0.0
      %979 = vmatprep.subr.mxu0 0.0
      %980 = vmatpush1.msra.mxu0 0.0
      %981 = vmatprep.subr.mxu0 0.0
      %982 = vmatpush1.msra.mxu0 0.0
      %983 = vmatprep.subr.mxu0 0.0
      %984 = vmatpush1.msra.mxu0 0.0
      %985 = vmatprep.subr.mxu0 0.0
      %986 = vmatpush1.msra.mxu0 0.0
      %987 = vmatprep.subr.mxu0 0.0
      %988 = vmatpush1.msra.mxu0 0.0
      %989 = vmatprep.subr.mxu0 0.0
      %990 = vmatpush1.msra.mxu0 0.0
      %991 = vmatprep.subr.mxu0 0.0
      %992 = vmatpush1.msra.mxu0 0.0
      %993 = vmatprep.subr.mxu0 0.0
      %994 = vmatpush1.msra.mxu0 0.0
      %995 = vmatprep.subr.mxu0 0.0
      %996 = vmatpush1.msra.mxu0 0.0
      %997 = vmatprep.subr.mxu0 0.0
      %998 = vmatpush1.msra.mxu0 0.0
      %999 = vmatprep.subr.mxu0 0.0
      %1000 = vmatpush1.msra.mxu0 0.0
      %1001 = vmatprep.subr.mxu0 0.0
      %1002 = vmatpush1.msra.mxu0 0.0
      %1003 = vmatprep.subr.mxu0 0.0
      %1004 = vmatpush1.msra.mxu0 0.0
      %1005 = vmatprep.subr.mxu0 0.0
      %1006 = vmatpush1.msra.mxu0 0.0
      %1007 = vmatprep.subr.mxu0 0.0
      %1008 = vmatpush1.msra.mxu0 0.0
      %1009 = vmatprep.subr.mxu0 0.0
      %1010 = vmatpush1.msra.mxu0 0.0
      %1011 = vmatprep.subr.mxu0 0.0
      %1012 = vmatpush1.msra.mxu0 0.0
      %1013 = vmatprep.subr.mxu0 0.0
      %1014 = vmatpush1.msra.mxu0 0.0
      %1015 = vmatprep.subr.mxu0 0.0
      %1016 = vmatpush1.msra.mxu0 0.0
      %1017 = vmatprep.subr.mxu0 0.0
      %1018 = vmatpush1.msra.mxu0 0.0
      %1019 = vmatprep.subr.mxu0 0.0
      %1020 = vmatpush1.msra.mxu0 0.0
      %1021 = vmatprep.subr.mxu0 0.0
      %1022 = vmatpush1.msra.mxu0 0.0
      %1023 = vmatprep.subr.mxu0 0.0
      %1024 = vmatpush1.msra.mxu0 0.0
      %1025 = vmatprep.subr.mxu0 0.0
      %1026 = vmatpush1.msra.mxu0 0.0
      %1027 = vmatprep.subr.mxu0 0.0
      %1028 = vmatpush1.msra.mxu0 0.0
      %1029 = vmatprep.subr.mxu0 0.0
      %1030 = vmatpush1.msra.mxu0 0.0
      %1031 = vmatprep.subr.mxu0 0.0
      %1032 = vmatpush1.msra.mxu0 0.0
      %1033 = vmatprep.subr.mxu0 0.0
      %1034 = vmatpush1.msra.mxu0 0.0
      %1035 = vmatprep.mubr.f32.mxu0 0.0
      %1036 = vmatmul.mubr.f32.gmra.mrb[0].mxu0 %v731
      %v1037 = vpop.f32.mrb[0].mxu0
      %v1038 = vadd.f32 %v727, %v1037
      %v1039 = vpop.f32.mrb[0].mxu0
      %v1040 = vadd.f32 %v727, %v1039
      %1041 = vdwg.mxu0
      %v1042 = vld [vmem:[%s400] sm:$0xf]
      %v1043 = vld [vmem:[%s395] sm:$0xff]
      %v1044 = vld [vmem:[%s395 + $0x8] sm:$0xff]
      %v1045 = vld [vmem:[%s395 + $0x10] sm:$0xff]
      %v1046 = vld [vmem:[%s395 + $0x18] sm:$0xff]
      %v1047 = vld [vmem:[%s395 + $0x20] sm:$0xff]
      %v1048 = vld [vmem:[%s395 + $0x28] sm:$0xff]
      %v1049 = vld [vmem:[%s395 + $0x30] sm:$0xff]
      %v1050 = vld [vmem:[%s395 + $0x38] sm:$0xff]
      %v1051 = vld [vmem:[%s395 + $0x40] sm:$0x1]
      %v1052 = vld [vmem:[%s395 + $0x48] sm:$0x1]
      %v1053 = vld [vmem:[%s395 + $0x50] sm:$0x1]
      %v1054 = vld [vmem:[%s395 + $0x58] sm:$0x1]
      %v1055 = vld [vmem:[%s395 + $0x60] sm:$0x1]
      %v1056 = vld [vmem:[%s395 + $0x68] sm:$0x1]
      %v1057 = vld [vmem:[%s395 + $0x70] sm:$0x1]
      %v1058 = vld [vmem:[%s395 + $0x78] sm:$0x1]
      %v1059 = vld [vmem:[%s7] sm:$0xff]
      %v1060 = vld [vmem:[%s7 + $0x8] sm:$0xff]
      %vm1061 = vcmask 72704
      %v1063 = vsel %vm1061, %v1042, 0
      %vm1065 = vcmask 1040384
      %v1067 = vsel %vm1065, %v1051, 0
      %v1070 = vsel %vm1065, %v1052, 0
      %v1073 = vsel %vm1065, %v1053, 0
      %v1076 = vsel %vm1065, %v1054, 0
      %v1079 = vsel %vm1065, %v1055, 0
      %v1082 = vsel %vm1065, %v1056, 0
      %v1085 = vsel %vm1065, %v1057, 0
      %v1088 = vsel %vm1065, %v1058, 0
      %1090 = vmatprep.subr.mxu0 %v1044
      %1091 = vmatpush1.msra.mxu0 %v1043
      %1092 = vmatprep.subr.mxu0 %v1070
      %1093 = vmatpush1.msra.mxu0 %v1067
      %1094 = vmatprep.subr.mxu0 0.0
      %1095 = vmatpush1.msra.mxu0 0.0
      %1096 = vmatprep.subr.mxu0 0.0
      %1097 = vmatpush1.msra.mxu0 0.0
      %1098 = vmatprep.subr.mxu0 0.0
      %1099 = vmatpush1.msra.mxu0 0.0
      %1100 = vmatprep.subr.mxu0 0.0
      %1101 = vmatpush1.msra.mxu0 0.0
      %1102 = vmatprep.subr.mxu0 0.0
      %1103 = vmatpush1.msra.mxu0 0.0
      %1104 = vmatprep.subr.mxu0 0.0
      %1105 = vmatpush1.msra.mxu0 0.0
      %1106 = vmatprep.subr.mxu0 0.0
      %1107 = vmatpush1.msra.mxu0 0.0
      %1108 = vmatprep.subr.mxu0 0.0
      %1109 = vmatpush1.msra.mxu0 0.0
      %1110 = vmatprep.subr.mxu0 0.0
      %1111 = vmatpush1.msra.mxu0 0.0
      %1112 = vmatprep.subr.mxu0 0.0
      %1113 = vmatpush1.msra.mxu0 0.0
      %1114 = vmatprep.subr.mxu0 0.0
      %1115 = vmatpush1.msra.mxu0 0.0
      %1116 = vmatprep.subr.mxu0 0.0
      %1117 = vmatpush1.msra.mxu0 0.0
      %1118 = vmatprep.subr.mxu0 0.0
      %1119 = vmatpush1.msra.mxu0 0.0
      %1120 = vmatprep.subr.mxu0 0.0
      %1121 = vmatpush1.msra.mxu0 0.0
      %1122 = vmatprep.subr.mxu0 0.0
      %1123 = vmatpush1.msra.mxu0 0.0
      %1124 = vmatprep.subr.mxu0 0.0
      %1125 = vmatpush1.msra.mxu0 0.0
      %1126 = vmatprep.subr.mxu0 0.0
      %1127 = vmatpush1.msra.mxu0 0.0
      %1128 = vmatprep.subr.mxu0 0.0
      %1129 = vmatpush1.msra.mxu0 0.0
      %1130 = vmatprep.subr.mxu0 0.0
      %1131 = vmatpush1.msra.mxu0 0.0
      %1132 = vmatprep.subr.mxu0 0.0
      %1133 = vmatpush1.msra.mxu0 0.0
      %1134 = vmatprep.subr.mxu0 0.0
      %1135 = vmatpush1.msra.mxu0 0.0
      %1136 = vmatprep.subr.mxu0 0.0
      %1137 = vmatpush1.msra.mxu0 0.0
      %1138 = vmatprep.subr.mxu0 0.0
      %1139 = vmatpush1.msra.mxu0 0.0
      %1140 = vmatprep.subr.mxu0 0.0
      %1141 = vmatpush1.msra.mxu0 0.0
      %1142 = vmatprep.subr.mxu0 0.0
      %1143 = vmatpush1.msra.mxu0 0.0
      %1144 = vmatprep.subr.mxu0 0.0
      %1145 = vmatpush1.msra.mxu0 0.0
      %1146 = vmatprep.subr.mxu0 0.0
      %1147 = vmatpush1.msra.mxu0 0.0
      %1148 = vmatprep.subr.mxu0 0.0
      %1149 = vmatpush1.msra.mxu0 0.0
      %1150 = vmatprep.subr.mxu0 0.0
      %1151 = vmatpush1.msra.mxu0 0.0
      %1152 = vmatprep.subr.mxu0 0.0
      %1153 = vmatpush1.msra.mxu0 0.0
      %1154 = vmatprep.mubr.f32.mxu0 0.0
      %1155 = vmatmul.mubr.f32.gmra.mrb[0].mxu0 %v1063
      %v1156 = vpop.f32.mrb[0].mxu0
      %v1157 = vadd.f32 %v825, %v1156
      %v1158 = vpop.f32.mrb[0].mxu0
      %v1159 = vadd.f32 %v827, %v1158
      %1160 = vdwg.mxu0
      %1161 = vmatprep.subr.mxu0 %v1046
      %1162 = vmatpush1.msra.mxu0 %v1045
      %1163 = vmatprep.subr.mxu0 %v1076
      %1164 = vmatpush1.msra.mxu0 %v1073
      %1165 = vmatprep.subr.mxu0 0.0
      %1166 = vmatpush1.msra.mxu0 0.0
      %1167 = vmatprep.subr.mxu0 0.0
      %1168 = vmatpush1.msra.mxu0 0.0
      %1169 = vmatprep.subr.mxu0 0.0
      %1170 = vmatpush1.msra.mxu0 0.0
      %1171 = vmatprep.subr.mxu0 0.0
      %1172 = vmatpush1.msra.mxu0 0.0
      %1173 = vmatprep.subr.mxu0 0.0
      %1174 = vmatpush1.msra.mxu0 0.0
      %1175 = vmatprep.subr.mxu0 0.0
      %1176 = vmatpush1.msra.mxu0 0.0
      %1177 = vmatprep.subr.mxu0 0.0
      %1178 = vmatpush1.msra.mxu0 0.0
      %1179 = vmatprep.subr.mxu0 0.0
      %1180 = vmatpush1.msra.mxu0 0.0
      %1181 = vmatprep.subr.mxu0 0.0
      %1182 = vmatpush1.msra.mxu0 0.0
      %1183 = vmatprep.subr.mxu0 0.0
      %1184 = vmatpush1.msra.mxu0 0.0
      %1185 = vmatprep.subr.mxu0 0.0
      %1186 = vmatpush1.msra.mxu0 0.0
      %1187 = vmatprep.subr.mxu0 0.0
      %1188 = vmatpush1.msra.mxu0 0.0
      %1189 = vmatprep.subr.mxu0 0.0
      %1190 = vmatpush1.msra.mxu0 0.0
      %1191 = vmatprep.subr.mxu0 0.0
      %1192 = vmatpush1.msra.mxu0 0.0
      %1193 = vmatprep.subr.mxu0 0.0
      %1194 = vmatpush1.msra.mxu0 0.0
      %1195 = vmatprep.subr.mxu0 0.0
      %1196 = vmatpush1.msra.mxu0 0.0
      %1197 = vmatprep.subr.mxu0 0.0
      %1198 = vmatpush1.msra.mxu0 0.0
      %1199 = vmatprep.subr.mxu0 0.0
      %1200 = vmatpush1.msra.mxu0 0.0
      %1201 = vmatprep.subr.mxu0 0.0
      %1202 = vmatpush1.msra.mxu0 0.0
      %1203 = vmatprep.subr.mxu0 0.0
      %1204 = vmatpush1.msra.mxu0 0.0
      %1205 = vmatprep.subr.mxu0 0.0
      %1206 = vmatpush1.msra.mxu0 0.0
      %1207 = vmatprep.subr.mxu0 0.0
      %1208 = vmatpush1.msra.mxu0 0.0
      %1209 = vmatprep.subr.mxu0 0.0
      %1210 = vmatpush1.msra.mxu0 0.0
      %1211 = vmatprep.subr.mxu0 0.0
      %1212 = vmatpush1.msra.mxu0 0.0
      %1213 = vmatprep.subr.mxu0 0.0
      %1214 = vmatpush1.msra.mxu0 0.0
      %1215 = vmatprep.subr.mxu0 0.0
      %1216 = vmatpush1.msra.mxu0 0.0
      %1217 = vmatprep.subr.mxu0 0.0
      %1218 = vmatpush1.msra.mxu0 0.0
      %1219 = vmatprep.subr.mxu0 0.0
      %1220 = vmatpush1.msra.mxu0 0.0
      %1221 = vmatprep.subr.mxu0 0.0
      %1222 = vmatpush1.msra.mxu0 0.0
      %1223 = vmatprep.subr.mxu0 0.0
      %1224 = vmatpush1.msra.mxu0 0.0
      %1225 = vmatprep.mubr.f32.mxu0 0.0
      %1226 = vmatmul.mubr.f32.gmra.mrb[0].mxu0 %v1063
      %v1227 = vpop.f32.mrb[0].mxu0
      %v1228 = vadd.f32 %v896, %v1227
      %v1229 = vpop.f32.mrb[0].mxu0
      %v1230 = vadd.f32 %v898, %v1229
      %1231 = vdwg.mxu0
      %1232 = vmatprep.subr.mxu0 %v1048
      %1233 = vmatpush1.msra.mxu0 %v1047
      %1234 = vmatprep.subr.mxu0 %v1082
      %1235 = vmatpush1.msra.mxu0 %v1079
      %1236 = vmatprep.subr.mxu0 0.0
      %1237 = vmatpush1.msra.mxu0 0.0
      %1238 = vmatprep.subr.mxu0 0.0
      %1239 = vmatpush1.msra.mxu0 0.0
      %1240 = vmatprep.subr.mxu0 0.0
      %1241 = vmatpush1.msra.mxu0 0.0
      %1242 = vmatprep.subr.mxu0 0.0
      %1243 = vmatpush1.msra.mxu0 0.0
      %1244 = vmatprep.subr.mxu0 0.0
      %1245 = vmatpush1.msra.mxu0 0.0
      %1246 = vmatprep.subr.mxu0 0.0
      %1247 = vmatpush1.msra.mxu0 0.0
      %1248 = vmatprep.subr.mxu0 0.0
      %1249 = vmatpush1.msra.mxu0 0.0
      %1250 = vmatprep.subr.mxu0 0.0
      %1251 = vmatpush1.msra.mxu0 0.0
      %1252 = vmatprep.subr.mxu0 0.0
      %1253 = vmatpush1.msra.mxu0 0.0
      %1254 = vmatprep.subr.mxu0 0.0
      %1255 = vmatpush1.msra.mxu0 0.0
      %1256 = vmatprep.subr.mxu0 0.0
      %1257 = vmatpush1.msra.mxu0 0.0
      %1258 = vmatprep.subr.mxu0 0.0
      %1259 = vmatpush1.msra.mxu0 0.0
      %1260 = vmatprep.subr.mxu0 0.0
      %1261 = vmatpush1.msra.mxu0 0.0
      %1262 = vmatprep.subr.mxu0 0.0
      %1263 = vmatpush1.msra.mxu0 0.0
      %1264 = vmatprep.subr.mxu0 0.0
      %1265 = vmatpush1.msra.mxu0 0.0
      %1266 = vmatprep.subr.mxu0 0.0
      %1267 = vmatpush1.msra.mxu0 0.0
      %1268 = vmatprep.subr.mxu0 0.0
      %1269 = vmatpush1.msra.mxu0 0.0
      %1270 = vmatprep.subr.mxu0 0.0
      %1271 = vmatpush1.msra.mxu0 0.0
      %1272 = vmatprep.subr.mxu0 0.0
      %1273 = vmatpush1.msra.mxu0 0.0
      %1274 = vmatprep.subr.mxu0 0.0
      %1275 = vmatpush1.msra.mxu0 0.0
      %1276 = vmatprep.subr.mxu0 0.0
      %1277 = vmatpush1.msra.mxu0 0.0
      %1278 = vmatprep.subr.mxu0 0.0
      %1279 = vmatpush1.msra.mxu0 0.0
      %1280 = vmatprep.subr.mxu0 0.0
      %1281 = vmatpush1.msra.mxu0 0.0
      %1282 = vmatprep.subr.mxu0 0.0
      %1283 = vmatpush1.msra.mxu0 0.0
      %1284 = vmatprep.subr.mxu0 0.0
      %1285 = vmatpush1.msra.mxu0 0.0
      %1286 = vmatprep.subr.mxu0 0.0
      %1287 = vmatpush1.msra.mxu0 0.0
      %1288 = vmatprep.subr.mxu0 0.0
      %1289 = vmatpush1.msra.mxu0 0.0
      %1290 = vmatprep.subr.mxu0 0.0
      %1291 = vmatpush1.msra.mxu0 0.0
      %1292 = vmatprep.subr.mxu0 0.0
      %1293 = vmatpush1.msra.mxu0 0.0
      %1294 = vmatprep.subr.mxu0 0.0
      %1295 = vmatpush1.msra.mxu0 0.0
      %1296 = vmatprep.mubr.f32.mxu0 0.0
      %1297 = vmatmul.mubr.f32.gmra.mrb[0].mxu0 %v1063
      %v1298 = vpop.f32.mrb[0].mxu0
      %v1299 = vadd.f32 %v967, %v1298
      %v1300 = vpop.f32.mrb[0].mxu0
      %v1301 = vadd.f32 %v969, %v1300
      %1302 = vdwg.mxu0
      %1303 = vmatprep.subr.mxu0 %v1050
      %1304 = vmatpush1.msra.mxu0 %v1049
      %1305 = vmatprep.subr.mxu0 %v1088
      %1306 = vmatpush1.msra.mxu0 %v1085
      %1307 = vmatprep.subr.mxu0 0.0
      %1308 = vmatpush1.msra.mxu0 0.0
      %1309 = vmatprep.subr.mxu0 0.0
      %1310 = vmatpush1.msra.mxu0 0.0
      %1311 = vmatprep.subr.mxu0 0.0
      %1312 = vmatpush1.msra.mxu0 0.0
      %1313 = vmatprep.subr.mxu0 0.0
      %1314 = vmatpush1.msra.mxu0 0.0
      %1315 = vmatprep.subr.mxu0 0.0
      %1316 = vmatpush1.msra.mxu0 0.0
      %1317 = vmatprep.subr.mxu0 0.0
      %1318 = vmatpush1.msra.mxu0 0.0
      %1319 = vmatprep.subr.mxu0 0.0
      %1320 = vmatpush1.msra.mxu0 0.0
      %1321 = vmatprep.subr.mxu0 0.0
      %1322 = vmatpush1.msra.mxu0 0.0
      %1323 = vmatprep.subr.mxu0 0.0
      %1324 = vmatpush1.msra.mxu0 0.0
      %1325 = vmatprep.subr.mxu0 0.0
      %1326 = vmatpush1.msra.mxu0 0.0
      %1327 = vmatprep.subr.mxu0 0.0
      %1328 = vmatpush1.msra.mxu0 0.0
      %1329 = vmatprep.subr.mxu0 0.0
      %1330 = vmatpush1.msra.mxu0 0.0
      %1331 = vmatprep.subr.mxu0 0.0
      %1332 = vmatpush1.msra.mxu0 0.0
      %1333 = vmatprep.subr.mxu0 0.0
      %1334 = vmatpush1.msra.mxu0 0.0
      %1335 = vmatprep.subr.mxu0 0.0
      %1336 = vmatpush1.msra.mxu0 0.0
      %1337 = vmatprep.subr.mxu0 0.0
      %1338 = vmatpush1.msra.mxu0 0.0
      %1339 = vmatprep.subr.mxu0 0.0
      %1340 = vmatpush1.msra.mxu0 0.0
      %1341 = vmatprep.subr.mxu0 0.0
      %1342 = vmatpush1.msra.mxu0 0.0
      %1343 = vmatprep.subr.mxu0 0.0
      %1344 = vmatpush1.msra.mxu0 0.0
      %1345 = vmatprep.subr.mxu0 0.0
      %1346 = vmatpush1.msra.mxu0 0.0
      %1347 = vmatprep.subr.mxu0 0.0
      %1348 = vmatpush1.msra.mxu0 0.0
      %1349 = vmatprep.subr.mxu0 0.0
      %1350 = vmatpush1.msra.mxu0 0.0
      %1351 = vmatprep.subr.mxu0 0.0
      %1352 = vmatpush1.msra.mxu0 0.0
      %1353 = vmatprep.subr.mxu0 0.0
      %1354 = vmatpush1.msra.mxu0 0.0
      %1355 = vmatprep.subr.mxu0 0.0
      %1356 = vmatpush1.msra.mxu0 0.0
      %1357 = vmatprep.subr.mxu0 0.0
      %1358 = vmatpush1.msra.mxu0 0.0
      %1359 = vmatprep.subr.mxu0 0.0
      %1360 = vmatpush1.msra.mxu0 0.0
      %1361 = vmatprep.subr.mxu0 0.0
      %1362 = vmatpush1.msra.mxu0 0.0
      %1363 = vmatprep.subr.mxu0 0.0
      %1364 = vmatpush1.msra.mxu0 0.0
      %1365 = vmatprep.subr.mxu0 0.0
      %1366 = vmatpush1.msra.mxu0 0.0
      %1367 = vmatprep.mubr.f32.mxu0 0.0
      %1368 = vmatmul.mubr.f32.gmra.mrb[0].mxu0 %v1063
      %v1369 = vpop.f32.mrb[0].mxu0
      %v1370 = vadd.f32 %v1038, %v1369
      %v1371 = vpop.f32.mrb[0].mxu0
      %v1372 = vadd.f32 %v1040, %v1371
      %1373 = vdwg.mxu0
      %v1374 = vld [vmem:[%s8] sm:$0xff]
      %v1375 = vld [vmem:[%s8 + $0x8] sm:$0xff]
      %1377 = vset.pattern.permute.xlu0 0
      %1378 = vperm.xlu0 %1377, %v1374
      %v1379 = vpop.permute.xlu0 %1378
      %1382 = vset.pattern.permute.xlu0 0
      %1383 = vperm.xlu0 %1382, %v1375
      %v1384 = vpop.permute.xlu0 %1383
      %v1387 = vsel %vm729, %v1059, 0
      %v1390 = vsel %vm729, %v1060, 0
      %v1393 = vsel %vm733, %v1157, 0
      %v1396 = vsel %vm733, %v1159, 0
      %v1399 = vsel %vm733, %v1228, 0
      %v1402 = vsel %vm733, %v1230, 0
      %v1405 = vsel %vm733, %v1299, 0
      %v1408 = vsel %vm733, %v1301, 0
      %v1411 = vsel %vm733, %v1370, 0
      %v1414 = vsel %vm733, %v1372, 0
      %1416 = vmatprep.subr.mxu0 %v1396
      %1417 = vmatpush1.msra.mxu0 %v1393
      %1418 = vmatprep.subr.mxu0 0.0
      %1419 = vmatpush1.msra.mxu0 0.0
      %1420 = vmatprep.subr.mxu0 0.0
      %1421 = vmatpush1.msra.mxu0 0.0
      %1422 = vmatprep.subr.mxu0 0.0
      %1423 = vmatpush1.msra.mxu0 0.0
      %1424 = vmatprep.subr.mxu0 0.0
      %1425 = vmatpush1.msra.mxu0 0.0
      %1426 = vmatprep.subr.mxu0 0.0
      %1427 = vmatpush1.msra.mxu0 0.0
      %1428 = vmatprep.subr.mxu0 0.0
      %1429 = vmatpush1.msra.mxu0 0.0
      %1430 = vmatprep.subr.mxu0 0.0
      %1431 = vmatpush1.msra.mxu0 0.0
      %1432 = vmatprep.subr.mxu0 0.0
      %1433 = vmatpush1.msra.mxu0 0.0
      %1434 = vmatprep.subr.mxu0 0.0
      %1435 = vmatpush1.msra.mxu0 0.0
      %1436 = vmatprep.subr.mxu0 0.0
      %1437 = vmatpush1.msra.mxu0 0.0
      %1438 = vmatprep.subr.mxu0 0.0
      %1439 = vmatpush1.msra.mxu0 0.0
      %1440 = vmatprep.subr.mxu0 0.0
      %1441 = vmatpush1.msra.mxu0 0.0
      %1442 = vmatprep.subr.mxu0 0.0
      %1443 = vmatpush1.msra.mxu0 0.0
      %1444 = vmatprep.subr.mxu0 0.0
      %1445 = vmatpush1.msra.mxu0 0.0
      %1446 = vmatprep.subr.mxu0 0.0
      %1447 = vmatpush1.msra.mxu0 0.0
      %1448 = vmatprep.subr.mxu0 0.0
      %1449 = vmatpush1.msra.mxu0 0.0
      %1450 = vmatprep.subr.mxu0 0.0
      %1451 = vmatpush1.msra.mxu0 0.0
      %1452 = vmatprep.subr.mxu0 0.0
      %1453 = vmatpush1.msra.mxu0 0.0
      %1454 = vmatprep.subr.mxu0 0.0
      %1455 = vmatpush1.msra.mxu0 0.0
      %1456 = vmatprep.subr.mxu0 0.0
      %1457 = vmatpush1.msra.mxu0 0.0
      %1458 = vmatprep.subr.mxu0 0.0
      %1459 = vmatpush1.msra.mxu0 0.0
      %1460 = vmatprep.subr.mxu0 0.0
      %1461 = vmatpush1.msra.mxu0 0.0
      %1462 = vmatprep.subr.mxu0 0.0
      %1463 = vmatpush1.msra.mxu0 0.0
      %1464 = vmatprep.subr.mxu0 0.0
      %1465 = vmatpush1.msra.mxu0 0.0
      %1466 = vmatprep.subr.mxu0 0.0
      %1467 = vmatpush1.msra.mxu0 0.0
      %1468 = vmatprep.subr.mxu0 0.0
      %1469 = vmatpush1.msra.mxu0 0.0
      %1470 = vmatprep.subr.mxu0 0.0
      %1471 = vmatpush1.msra.mxu0 0.0
      %1472 = vmatprep.subr.mxu0 0.0
      %1473 = vmatpush1.msra.mxu0 0.0
      %1474 = vmatprep.subr.mxu0 0.0
      %1475 = vmatpush1.msra.mxu0 0.0
      %1476 = vmatprep.subr.mxu0 0.0
      %1477 = vmatpush1.msra.mxu0 0.0
      %1478 = vmatprep.subr.mxu0 0.0
      %1479 = vmatpush1.msra.mxu0 0.0
      %1480 = vmatprep.mubr.f32.mxu0 0.0
      %1481 = vmatmul.mubr.f32.gmra.mrb[0].mxu0 %v1387
      %v1482 = vpop.f32.mrb[0].mxu0
      %v1483 = vadd.f32 %v1379, %v1482
      %v1484 = vpop.f32.mrb[0].mxu0
      %v1485 = vadd.f32 %v1379, %v1484
      %1486 = vmatprep.mubr.f32.mxu0 0.0
      %1487 = vmatmul.mubr.f32.gmra.mrb[0].mxu0 %v1390
      %v1488 = vpop.f32.mrb[0].mxu0
      %v1489 = vadd.f32 %v1384, %v1488
      %v1490 = vpop.f32.mrb[0].mxu0
      %v1491 = vadd.f32 %v1384, %v1490
      %1492 = vdwg.mxu0
      %1493 = vmatprep.subr.mxu0 %v1402
      %1494 = vmatpush1.msra.mxu0 %v1399
      %1495 = vmatprep.subr.mxu0 0.0
      %1496 = vmatpush1.msra.mxu0 0.0
      %1497 = vmatprep.subr.mxu0 0.0
      %1498 = vmatpush1.msra.mxu0 0.0
      %1499 = vmatprep.subr.mxu0 0.0
      %1500 = vmatpush1.msra.mxu0 0.0
      %1501 = vmatprep.subr.mxu0 0.0
      %1502 = vmatpush1.msra.mxu0 0.0
      %1503 = vmatprep.subr.mxu0 0.0
      %1504 = vmatpush1.msra.mxu0 0.0
      %1505 = vmatprep.subr.mxu0 0.0
      %1506 = vmatpush1.msra.mxu0 0.0
      %1507 = vmatprep.subr.mxu0 0.0
      %1508 = vmatpush1.msra.mxu0 0.0
      %1509 = vmatprep.subr.mxu0 0.0
      %1510 = vmatpush1.msra.mxu0 0.0
      %1511 = vmatprep.subr.mxu0 0.0
      %1512 = vmatpush1.msra.mxu0 0.0
      %1513 = vmatprep.subr.mxu0 0.0
      %1514 = vmatpush1.msra.mxu0 0.0
      %1515 = vmatprep.subr.mxu0 0.0
      %1516 = vmatpush1.msra.mxu0 0.0
      %1517 = vmatprep.subr.mxu0 0.0
      %1518 = vmatpush1.msra.mxu0 0.0
      %1519 = vmatprep.subr.mxu0 0.0
      %1520 = vmatpush1.msra.mxu0 0.0
      %1521 = vmatprep.subr.mxu0 0.0
      %1522 = vmatpush1.msra.mxu0 0.0
      %1523 = vmatprep.subr.mxu0 0.0
      %1524 = vmatpush1.msra.mxu0 0.0
      %1525 = vmatprep.subr.mxu0 0.0
      %1526 = vmatpush1.msra.mxu0 0.0
      %1527 = vmatprep.subr.mxu0 0.0
      %1528 = vmatpush1.msra.mxu0 0.0
      %1529 = vmatprep.subr.mxu0 0.0
      %1530 = vmatpush1.msra.mxu0 0.0
      %1531 = vmatprep.subr.mxu0 0.0
      %1532 = vmatpush1.msra.mxu0 0.0
      %1533 = vmatprep.subr.mxu0 0.0
      %1534 = vmatpush1.msra.mxu0 0.0
      %1535 = vmatprep.subr.mxu0 0.0
      %1536 = vmatpush1.msra.mxu0 0.0
      %1537 = vmatprep.subr.mxu0 0.0
      %1538 = vmatpush1.msra.mxu0 0.0
      %1539 = vmatprep.subr.mxu0 0.0
      %1540 = vmatpush1.msra.mxu0 0.0
      %1541 = vmatprep.subr.mxu0 0.0
      %1542 = vmatpush1.msra.mxu0 0.0
      %1543 = vmatprep.subr.mxu0 0.0
      %1544 = vmatpush1.msra.mxu0 0.0
      %1545 = vmatprep.subr.mxu0 0.0
      %1546 = vmatpush1.msra.mxu0 0.0
      %1547 = vmatprep.subr.mxu0 0.0
      %1548 = vmatpush1.msra.mxu0 0.0
      %1549 = vmatprep.subr.mxu0 0.0
      %1550 = vmatpush1.msra.mxu0 0.0
      %1551 = vmatprep.subr.mxu0 0.0
      %1552 = vmatpush1.msra.mxu0 0.0
      %1553 = vmatprep.subr.mxu0 0.0
      %1554 = vmatpush1.msra.mxu0 0.0
      %1555 = vmatprep.subr.mxu0 0.0
      %1556 = vmatpush1.msra.mxu0 0.0
      %1557 = vmatprep.mubr.f32.mxu0 0.0
      %1558 = vmatmul.mubr.f32.gmra.mrb[0].mxu0 %v1387
      %v1559 = vpop.f32.mrb[0].mxu0
      %v1560 = vadd.f32 %v1379, %v1559
      %v1561 = vpop.f32.mrb[0].mxu0
      %v1562 = vadd.f32 %v1379, %v1561
      %1563 = vmatprep.mubr.f32.mxu0 0.0
      %1564 = vmatmul.mubr.f32.gmra.mrb[0].mxu0 %v1390
      %v1565 = vpop.f32.mrb[0].mxu0
      %v1566 = vadd.f32 %v1384, %v1565
      %v1567 = vpop.f32.mrb[0].mxu0
      %v1568 = vadd.f32 %v1384, %v1567
      %1569 = vdwg.mxu0
      %1570 = vmatprep.subr.mxu0 %v1408
      %1571 = vmatpush1.msra.mxu0 %v1405
      %1572 = vmatprep.subr.mxu0 0.0
      %1573 = vmatpush1.msra.mxu0 0.0
      %1574 = vmatprep.subr.mxu0 0.0
      %1575 = vmatpush1.msra.mxu0 0.0
      %1576 = vmatprep.subr.mxu0 0.0
      %1577 = vmatpush1.msra.mxu0 0.0
      %1578 = vmatprep.subr.mxu0 0.0
      %1579 = vmatpush1.msra.mxu0 0.0
      %1580 = vmatprep.subr.mxu0 0.0
      %1581 = vmatpush1.msra.mxu0 0.0
      %1582 = vmatprep.subr.mxu0 0.0
      %1583 = vmatpush1.msra.mxu0 0.0
      %1584 = vmatprep.subr.mxu0 0.0
      %1585 = vmatpush1.msra.mxu0 0.0
      %1586 = vmatprep.subr.mxu0 0.0
      %1587 = vmatpush1.msra.mxu0 0.0
      %1588 = vmatprep.subr.mxu0 0.0
      %1589 = vmatpush1.msra.mxu0 0.0
      %1590 = vmatprep.subr.mxu0 0.0
      %1591 = vmatpush1.msra.mxu0 0.0
      %1592 = vmatprep.subr.mxu0 0.0
      %1593 = vmatpush1.msra.mxu0 0.0
      %1594 = vmatprep.subr.mxu0 0.0
      %1595 = vmatpush1.msra.mxu0 0.0
      %1596 = vmatprep.subr.mxu0 0.0
      %1597 = vmatpush1.msra.mxu0 0.0
      %1598 = vmatprep.subr.mxu0 0.0
      %1599 = vmatpush1.msra.mxu0 0.0
      %1600 = vmatprep.subr.mxu0 0.0
      %1601 = vmatpush1.msra.mxu0 0.0
      %1602 = vmatprep.subr.mxu0 0.0
      %1603 = vmatpush1.msra.mxu0 0.0
      %1604 = vmatprep.subr.mxu0 0.0
      %1605 = vmatpush1.msra.mxu0 0.0
      %1606 = vmatprep.subr.mxu0 0.0
      %1607 = vmatpush1.msra.mxu0 0.0
      %1608 = vmatprep.subr.mxu0 0.0
      %1609 = vmatpush1.msra.mxu0 0.0
      %1610 = vmatprep.subr.mxu0 0.0
      %1611 = vmatpush1.msra.mxu0 0.0
      %1612 = vmatprep.subr.mxu0 0.0
      %1613 = vmatpush1.msra.mxu0 0.0
      %1614 = vmatprep.subr.mxu0 0.0
      %1615 = vmatpush1.msra.mxu0 0.0
      %1616 = vmatprep.subr.mxu0 0.0
      %1617 = vmatpush1.msra.mxu0 0.0
      %1618 = vmatprep.subr.mxu0 0.0
      %1619 = vmatpush1.msra.mxu0 0.0
      %1620 = vmatprep.subr.mxu0 0.0
      %1621 = vmatpush1.msra.mxu0 0.0
      %1622 = vmatprep.subr.mxu0 0.0
      %1623 = vmatpush1.msra.mxu0 0.0
      %1624 = vmatprep.subr.mxu0 0.0
      %1625 = vmatpush1.msra.mxu0 0.0
      %1626 = vmatprep.subr.mxu0 0.0
      %1627 = vmatpush1.msra.mxu0 0.0
      %1628 = vmatprep.subr.mxu0 0.0
      %1629 = vmatpush1.msra.mxu0 0.0
      %1630 = vmatprep.subr.mxu0 0.0
      %1631 = vmatpush1.msra.mxu0 0.0
      %1632 = vmatprep.subr.mxu0 0.0
      %1633 = vmatpush1.msra.mxu0 0.0
      %1634 = vmatprep.mubr.f32.mxu0 0.0
      %1635 = vmatmul.mubr.f32.gmra.mrb[0].mxu0 %v1387
      %v1636 = vpop.f32.mrb[0].mxu0
      %v1637 = vadd.f32 %v1379, %v1636
      %v1638 = vpop.f32.mrb[0].mxu0
      %v1639 = vadd.f32 %v1379, %v1638
      %1640 = vmatprep.mubr.f32.mxu0 0.0
      %1641 = vmatmul.mubr.f32.gmra.mrb[0].mxu0 %v1390
      %v1642 = vpop.f32.mrb[0].mxu0
      %v1643 = vadd.f32 %v1384, %v1642
      %v1644 = vpop.f32.mrb[0].mxu0
      %v1645 = vadd.f32 %v1384, %v1644
      %1646 = vdwg.mxu0
      %1647 = vmatprep.subr.mxu0 %v1414
      %1648 = vmatpush1.msra.mxu0 %v1411
      %1649 = vmatprep.subr.mxu0 0.0
      %1650 = vmatpush1.msra.mxu0 0.0
      %1651 = vmatprep.subr.mxu0 0.0
      %1652 = vmatpush1.msra.mxu0 0.0
      %1653 = vmatprep.subr.mxu0 0.0
      %1654 = vmatpush1.msra.mxu0 0.0
      %1655 = vmatprep.subr.mxu0 0.0
      %1656 = vmatpush1.msra.mxu0 0.0
      %1657 = vmatprep.subr.mxu0 0.0
      %1658 = vmatpush1.msra.mxu0 0.0
      %1659 = vmatprep.subr.mxu0 0.0
      %1660 = vmatpush1.msra.mxu0 0.0
      %1661 = vmatprep.subr.mxu0 0.0
      %1662 = vmatpush1.msra.mxu0 0.0
      %1663 = vmatprep.subr.mxu0 0.0
      %1664 = vmatpush1.msra.mxu0 0.0
      %1665 = vmatprep.subr.mxu0 0.0
      %1666 = vmatpush1.msra.mxu0 0.0
      %1667 = vmatprep.subr.mxu0 0.0
      %1668 = vmatpush1.msra.mxu0 0.0
      %1669 = vmatprep.subr.mxu0 0.0
      %1670 = vmatpush1.msra.mxu0 0.0
      %1671 = vmatprep.subr.mxu0 0.0
      %1672 = vmatpush1.msra.mxu0 0.0
      %1673 = vmatprep.subr.mxu0 0.0
      %1674 = vmatpush1.msra.mxu0 0.0
      %1675 = vmatprep.subr.mxu0 0.0
      %1676 = vmatpush1.msra.mxu0 0.0
      %1677 = vmatprep.subr.mxu0 0.0
      %1678 = vmatpush1.msra.mxu0 0.0
      %1679 = vmatprep.subr.mxu0 0.0
      %1680 = vmatpush1.msra.mxu0 0.0
      %1681 = vmatprep.subr.mxu0 0.0
      %1682 = vmatpush1.msra.mxu0 0.0
      %1683 = vmatprep.subr.mxu0 0.0
      %1684 = vmatpush1.msra.mxu0 0.0
      %1685 = vmatprep.subr.mxu0 0.0
      %1686 = vmatpush1.msra.mxu0 0.0
      %1687 = vmatprep.subr.mxu0 0.0
      %1688 = vmatpush1.msra.mxu0 0.0
      %1689 = vmatprep.subr.mxu0 0.0
      %1690 = vmatpush1.msra.mxu0 0.0
      %1691 = vmatprep.subr.mxu0 0.0
      %1692 = vmatpush1.msra.mxu0 0.0
      %1693 = vmatprep.subr.mxu0 0.0
      %1694 = vmatpush1.msra.mxu0 0.0
      %1695 = vmatprep.subr.mxu0 0.0
      %1696 = vmatpush1.msra.mxu0 0.0
      %1697 = vmatprep.subr.mxu0 0.0
      %1698 = vmatpush1.msra.mxu0 0.0
      %1699 = vmatprep.subr.mxu0 0.0
      %1700 = vmatpush1.msra.mxu0 0.0
      %1701 = vmatprep.subr.mxu0 0.0
      %1702 = vmatpush1.msra.mxu0 0.0
      %1703 = vmatprep.subr.mxu0 0.0
      %1704 = vmatpush1.msra.mxu0 0.0
      %1705 = vmatprep.subr.mxu0 0.0
      %1706 = vmatpush1.msra.mxu0 0.0
      %1707 = vmatprep.subr.mxu0 0.0
      %1708 = vmatpush1.msra.mxu0 0.0
      %1709 = vmatprep.subr.mxu0 0.0
      %1710 = vmatpush1.msra.mxu0 0.0
      %1711 = vmatprep.mubr.f32.mxu0 0.0
      %1712 = vmatmul.mubr.f32.gmra.mrb[0].mxu0 %v1387
      %v1713 = vpop.f32.mrb[0].mxu0
      %v1714 = vadd.f32 %v1379, %v1713
      %v1715 = vpop.f32.mrb[0].mxu0
      %v1716 = vadd.f32 %v1379, %v1715
      %1717 = vmatprep.mubr.f32.mxu0 0.0
      %1718 = vmatmul.mubr.f32.gmra.mrb[0].mxu0 %v1390
      %v1719 = vpop.f32.mrb[0].mxu0
      %v1720 = vadd.f32 %v1384, %v1719
      %v1721 = vpop.f32.mrb[0].mxu0
      %v1722 = vadd.f32 %v1384, %v1721
      %1723 = vdwg.mxu0
      %v1724 = vxor.u32 %v1483, 2147483648
      %v1725 = vxor.u32 %v1485, 2147483648
      %v1726 = vxor.u32 %v1560, 2147483648
      %v1727 = vxor.u32 %v1562, 2147483648
      %v1728 = vxor.u32 %v1637, 2147483648
      %v1729 = vxor.u32 %v1639, 2147483648
      %v1730 = vxor.u32 %v1714, 2147483648
      %v1731 = vxor.u32 %v1716, 2147483648
      %v1732 = vxor.u32 %v1489, 2147483648
      %v1733 = vxor.u32 %v1491, 2147483648
      %v1734 = vxor.u32 %v1566, 2147483648
      %v1735 = vxor.u32 %v1568, 2147483648
      %v1736 = vxor.u32 %v1643, 2147483648
      %v1737 = vxor.u32 %v1645, 2147483648
      %v1738 = vxor.u32 %v1720, 2147483648
      %v1739 = vxor.u32 %v1722, 2147483648
      %v1740 = vmul.f32 %v1724, 1.442695
      %v1741 = vpow.pop %v1740
      %v1742 = vmul.f32 %v1725, 1.442695
      %v1743 = vpow.pop %v1742
      %v1744 = vmul.f32 %v1726, 1.442695
      %v1745 = vpow.pop %v1744
      %v1746 = vmul.f32 %v1727, 1.442695
      %v1747 = vpow.pop %v1746
      %v1748 = vmul.f32 %v1728, 1.442695
      %v1749 = vpow.pop %v1748
      %v1750 = vmul.f32 %v1729, 1.442695
      %v1751 = vpow.pop %v1750
      %v1752 = vmul.f32 %v1730, 1.442695
      %v1753 = vpow.pop %v1752
      %v1754 = vmul.f32 %v1731, 1.442695
      %v1755 = vpow.pop %v1754
      %v1756 = vmul.f32 %v1732, 1.442695
      %v1757 = vpow.pop %v1756
      %v1758 = vmul.f32 %v1733, 1.442695
      %v1759 = vpow.pop %v1758
      %v1760 = vmul.f32 %v1734, 1.442695
      %v1761 = vpow.pop %v1760
      %v1762 = vmul.f32 %v1735, 1.442695
      %v1763 = vpow.pop %v1762
      %v1764 = vmul.f32 %v1736, 1.442695
      %v1765 = vpow.pop %v1764
      %v1766 = vmul.f32 %v1737, 1.442695
      %v1767 = vpow.pop %v1766
      %v1768 = vmul.f32 %v1738, 1.442695
      %v1769 = vpow.pop %v1768
      %v1770 = vmul.f32 %v1739, 1.442695
      %v1771 = vpow.pop %v1770
      %v1772 = vadd.f32 %v1741, 1.0
      %v1773 = vadd.f32 %v1743, 1.0
      %v1774 = vadd.f32 %v1745, 1.0
      %v1775 = vadd.f32 %v1747, 1.0
      %v1776 = vadd.f32 %v1749, 1.0
      %v1777 = vadd.f32 %v1751, 1.0
      %v1778 = vadd.f32 %v1753, 1.0
      %v1779 = vadd.f32 %v1755, 1.0
      %v1780 = vadd.f32 %v1757, 1.0
      %v1781 = vadd.f32 %v1759, 1.0
      %v1782 = vadd.f32 %v1761, 1.0
      %v1783 = vadd.f32 %v1763, 1.0
      %v1784 = vadd.f32 %v1765, 1.0
      %v1785 = vadd.f32 %v1767, 1.0
      %v1786 = vadd.f32 %v1769, 1.0
      %v1787 = vadd.f32 %v1771, 1.0
      %v1788 = vrcp.pop %v1772
      %v1789 = vmul.f32 1.0, %v1788
      %v1790 = vrcp.pop %v1773
      %v1791 = vmul.f32 1.0, %v1790
      %v1792 = vrcp.pop %v1774
      %v1793 = vmul.f32 1.0, %v1792
      %v1794 = vrcp.pop %v1775
      %v1795 = vmul.f32 1.0, %v1794
      %v1796 = vrcp.pop %v1776
      %v1797 = vmul.f32 1.0, %v1796
      %v1798 = vrcp.pop %v1777
      %v1799 = vmul.f32 1.0, %v1798
      %v1800 = vrcp.pop %v1778
      %v1801 = vmul.f32 1.0, %v1800
      %v1802 = vrcp.pop %v1779
      %v1803 = vmul.f32 1.0, %v1802
      %v1804 = vrcp.pop %v1780
      %v1805 = vmul.f32 1.0, %v1804
      %v1806 = vrcp.pop %v1781
      %v1807 = vmul.f32 1.0, %v1806
      %v1808 = vrcp.pop %v1782
      %v1809 = vmul.f32 1.0, %v1808
      %v1810 = vrcp.pop %v1783
      %v1811 = vmul.f32 1.0, %v1810
      %v1812 = vrcp.pop %v1784
      %v1813 = vmul.f32 1.0, %v1812
      %v1814 = vrcp.pop %v1785
      %v1815 = vmul.f32 1.0, %v1814
      %v1816 = vrcp.pop %v1786
      %v1817 = vmul.f32 1.0, %v1816
      %v1818 = vrcp.pop %v1787
      %v1819 = vmul.f32 1.0, %v1818
      %v1820 = vmul.f32 %v411, %v1789
      %v1821 = vmul.f32 %v412, %v1791
      %v1822 = vmul.f32 %v413, %v1793
      %v1823 = vmul.f32 %v414, %v1795
      %v1824 = vmul.f32 %v415, %v1797
      %v1825 = vmul.f32 %v416, %v1799
      %v1826 = vmul.f32 %v417, %v1801
      %v1827 = vmul.f32 %v418, %v1803
      %v1828 = vmul.f32 %v419, %v1805
      %v1829 = vmul.f32 %v420, %v1807
      %v1830 = vmul.f32 %v421, %v1809
      %v1831 = vmul.f32 %v422, %v1811
      %v1832 = vmul.f32 %v423, %v1813
      %v1833 = vmul.f32 %v424, %v1815
      %v1834 = vmul.f32 %v425, %v1817
      %v1835 = vmul.f32 %v426, %v1819
      %1836 = vst [vmem:[%s409] sm:$0xff] %v1820
      %1837 = vst [vmem:[%s409 + $0x8] sm:$0xff] %v1821
      %1838 = vst [vmem:[%s409 + $0x10] sm:$0xff] %v1822
      %1839 = vst [vmem:[%s409 + $0x18] sm:$0xff] %v1823
      %1840 = vst [vmem:[%s409 + $0x20] sm:$0xff] %v1824
      %1841 = vst [vmem:[%s409 + $0x28] sm:$0xff] %v1825
      %1842 = vst [vmem:[%s409 + $0x30] sm:$0xff] %v1826
      %1843 = vst [vmem:[%s409 + $0x38] sm:$0xff] %v1827
      %1844 = vst [vmem:[%s409 + $0x40] sm:$0xff] %v1828
      %1845 = vst [vmem:[%s409 + $0x48] sm:$0xff] %v1829
      %1846 = vst [vmem:[%s409 + $0x50] sm:$0xff] %v1830
      %1847 = vst [vmem:[%s409 + $0x58] sm:$0xff] %v1831
      %1848 = vst [vmem:[%s409 + $0x60] sm:$0xff] %v1832
      %1849 = vst [vmem:[%s409 + $0x68] sm:$0xff] %v1833
      %1850 = vst [vmem:[%s409 + $0x70] sm:$0xff] %v1834
      %1851 = vst [vmem:[%s409 + $0x78] sm:$0xff] %v1835
      %s1852 = smul.u32 8, %s25
      %p1853 = scmp.lt.s32.totalorder %s24, 1
      %s1854 = scalar_select %p1853, %s24, 1
      %p1855 = scmp.lt.s32.totalorder %s1852, 7
      %s1856 = scalar_select %p1855, %s1852, 7
      %s1857 = smul.addr %s1854, 16
      %s1858 = sadd.s32 %s1856, %s1857
      %s1859 = smul.addr %s1858, 8
      %s1860 = scalar_lea.vmem %s9, %s1859
      // Predicated region
      $region57: #{esa_forward.3} parent=55 // pred_check
        %p1861 = pneg %p258
      $region58: #{esa_forward.3} parent=55 // pred_check_branch
        %1863 = sbr.rel (%p1861) target = $region60
      $region59: #{esa_forward.3} parent=55 // pred_region
        %s1864 = smul.u32 8, %s25
      $region60: #{esa_forward.3} parent=55 // pred_fallthru
        _
    $region56: #{esa_forward.3} parent=5 // pred_fallthru
      _
    %p1865 = scmp.le.s32.totalorder 2, %s15
    // Predicated region
    $region61: #{esa_forward.3} parent=5 // pred_check
      %p1866 = pneg %p1865
    $region62: #{esa_forward.3} parent=5 // pred_check_branch
      %1868 = sbr.rel (%p1866) target = $region64
    $region63: #{esa_forward.3} parent=5 // pred_region
      %s1869 = ssub.s32 %s15, 2
      // Predicated region
      $region65: #{esa_forward.3} parent=63 // pred_check
        %p1870 = pneg %p264
      $region66: #{esa_forward.3} parent=63 // pred_check_branch
        %1872 = sbr.rel (%p1870) target = $region68
      $region67: #{esa_forward.3} parent=63 // pred_region
        %s1873 = smul.u32 8, %s27
        %p1874 = scmp.lt.s32.totalorder %s26, 1
        %s1875 = scalar_select %p1874, %s26, 1
        %p1876 = scmp.lt.s32.totalorder %s1873, 7
        %s1877 = scalar_select %p1876, %s1873, 7
        %s1878 = smul.addr %s1875, 16
        %s1879 = sadd.s32 %s1877, %s1878
        %s1880 = smul.addr %s1879, 8
        %s1881 = scalar_lea.vmem %s9, %s1880
      $region68: #{esa_forward.3} parent=63 // pred_fallthru
        _
    $region64: #{esa_forward.3} parent=5 // pred_fallthru
      _
  $region6: #{esa_forward.3} parent=0 // loop_footer
    %s19 = sadd.s32 1, %s15
  $region7: #{esa_forward.3} parent=0 // loop_footer_branch
    %14 = sbr.rel target = $region3
  $region8: #{esa_forward.3} parent=0 // loop_exit
    _

// kernel: esa_forward.2
$region0: #{esa_forward.2}
  #allocation0 [shape = 'u32[]', space=smem, size = 0x4, offset = 0x4, fixed_abs, tag = 'smem constant byte address 0x4 - core index']
  #allocation1 [shape = 'u32[144,128]{1,0:T(1,128)}', space=vmem, size = 0x12000, scoped, tag = 'internal scratch']
  %s0 = inlined_call_operand.vmem [shape: f32[2,144,225], index: 0, kind: input, shape index: {}]
  %s1 = inlined_call_operand.vmem [shape: f32[4,144], index: 1, kind: input, shape index: {}]
  %s2 = inlined_call_operand.vmem [shape: f32[4,1], index: 2, kind: input, shape index: {}]
  %s3 = inlined_call_operand.vmem [shape: f32[9,225], index: 3, kind: input, shape index: {}]
  %s4 = inlined_call_operand.vmem [shape: f32[9,9,9], index: 4, kind: input, shape index: {}]
  %s5 = inlined_call_operand.vmem [shape: f32[9,4,4], index: 5, kind: input, shape index: {}]
  %s6 = inlined_call_operand.vmem [shape: f32[4,1], index: 6, kind: input, shape index: {}]
  %s7 = inlined_call_operand.vmem [shape: f32[9,4,4], index: 7, kind: input, shape index: {}]
  %s8 = inlined_call_operand.vmem [shape: f32[4,1], index: 8, kind: input, shape index: {}]
  %s9 = inlined_call_operand.vmem [shape: f32[9,4,4], index: 9, kind: input, shape index: {}]
  %s10 = inlined_call_operand.vmem [shape: f32[4,1], index: 10, kind: input, shape index: {}]
  %s11 = inlined_call_operand.vmem [shape: f32[2,4,9], index: 11, kind: output, shape index: {}]
  %s12 = sld [smem:[#allocation0]]
  $region77: #{esa_forward.2} parent=0
    _
  %s14 = ssub.s32 1, %s12
  %s15 = scalar_select 0, %s14, %s12
  loop: start=0, step=1, limit=4
  $region2: #{esa_forward.2} parent=0 // loop_pre_header
    _
  $region3: #{esa_forward.2} parent=0 // loop_header
    %s17 = sphi 0, %s21
    %p18 = scmp.ge.s32.totalorder %s17, 4
    %s27 = sphi 0, %s29
    %s30 = sphi 0, %s27
    %s31 = sphi 0, %s30
    %s47 = sphi 0, %s31
    %s51 = sphi 0, %s51
    %s53 = sphi 0, %s51
    %s54 = sphi 0, %s53
    %s68 = sphi 0, %s54
    %s72 = sphi 0, %s72
    %s74 = sphi 0, %s72
    %s75 = sphi 0, %s74
    %s89 = sphi 0, %s75
    %s93 = sphi 0, %s93
    %s95 = sphi 0, %s93
    %s96 = sphi 0, %s95
    %s110 = sphi 0, %s96
    %s114 = sphi 0, %s114
    %s116 = sphi 0, %s114
    %s117 = sphi 0, %s116
    %s131 = sphi 0, %s117
    %s135 = sphi 0, %s135
    %s137 = sphi 0, %s135
    %s138 = sphi 0, %s137
    %s152 = sphi 0, %s138
    %s156 = sphi 0, %s156
    %s158 = sphi 0, %s156
    %s159 = sphi 0, %s158
    %s173 = sphi 0, %s159
    %s177 = sphi 0, %s177
    %s179 = sphi 0, %s177
    %s180 = sphi 0, %s179
    %s194 = sphi 0, %s180
    %s198 = sphi 0, %s198
    %s200 = sphi 0, %s198
    %s201 = sphi 0, %s200
    %s215 = sphi 0, %s201
    %s219 = sphi 0, %s219
    %s221 = sphi 0, %s219
    %s222 = sphi 0, %s221
    %s236 = sphi 0, %s222
    %s240 = sphi 0, %s240
    %s242 = sphi 0, %s240
    %s243 = sphi 0, %s242
    %s257 = sphi 0, %s243
    %s263 = sphi 0, %s265
    %s266 = sphi 0, %s263
    %s267 = sphi 0, %s266
    %s283 = sphi 0, %s267
  $region4: #{esa_forward.2} parent=0 // loop_header_branch
    %20 = sbr.rel (%p18) target = $region8
  $region5: #{esa_forward.2} parent=0 // loop_body
    %s22 = ssub.s32 %s17, 1
    %s23 = ssub.s32 %s17, 2
    %s24 = sadd.s32 %s17, 1
    %s25 = ssub.s32 %s17, %s24
    %p26 = scmp.eq.s32.totalorder %s25, 0
    %s28 = sadd.s32 %s27, 1
    %s29 = scalar_select %p26, %s27, %s28
    %p32 = pneg %p26
    %p33 = scmp.eq.s32.totalorder %s17, 1
    %p34 = por %p32, %p33
    %p35 = scmp.ne.s32.totalorder %s27, %s30
    %p36 = scmp.eq.s32.totalorder %s17, 0
    %p37 = por %p35, %p36
    %p38 = scmp.ne.s32.totalorder %s27, %s30
    %p39 = scmp.eq.s32.totalorder %s22, 1
    %p40 = por %p38, %p39
    %p41 = scmp.ne.s32.totalorder %s30, %s31
    %p42 = scmp.eq.s32.totalorder %s22, 0
    %p43 = por %p41, %p42
    %p44 = scmp.ne.s32.totalorder %s30, %s31
    %p45 = scmp.eq.s32.totalorder %s23, 1
    %p46 = por %p44, %p45
    %p48 = scmp.ne.s32.totalorder %s31, %s47
    %p49 = scmp.eq.s32.totalorder %s23, 0
    %p50 = por %p48, %p49
    %s52 = sadd.s32 %s51, 1
    %p55 = scmp.eq.s32.totalorder %s17, 1
    %p56 = scmp.ne.s32.totalorder %s51, %s53
    %p57 = scmp.eq.s32.totalorder %s17, 0
    %p58 = por %p56, %p57
    %p59 = scmp.ne.s32.totalorder %s51, %s53
    %p60 = scmp.eq.s32.totalorder %s22, 1
    %p61 = por %p59, %p60
    %p62 = scmp.ne.s32.totalorder %s53, %s54
    %p63 = scmp.eq.s32.totalorder %s22, 0
    %p64 = por %p62, %p63
    %p65 = scmp.ne.s32.totalorder %s53, %s54
    %p66 = scmp.eq.s32.totalorder %s23, 1
    %p67 = por %p65, %p66
    %p69 = scmp.ne.s32.totalorder %s54, %s68
    %p70 = scmp.eq.s32.totalorder %s23, 0
    %p71 = por %p69, %p70
    %s73 = sadd.s32 %s72, 1
    %p76 = scmp.eq.s32.totalorder %s17, 1
    %p77 = scmp.ne.s32.totalorder %s72, %s74
    %p78 = scmp.eq.s32.totalorder %s17, 0
    %p79 = por %p77, %p78
    %p80 = scmp.ne.s32.totalorder %s72, %s74
    %p81 = scmp.eq.s32.totalorder %s22, 1
    %p82 = por %p80, %p81
    %p83 = scmp.ne.s32.totalorder %s74, %s75
    %p84 = scmp.eq.s32.totalorder %s22, 0
    %p85 = por %p83, %p84
    %p86 = scmp.ne.s32.totalorder %s74, %s75
    %p87 = scmp.eq.s32.totalorder %s23, 1
    %p88 = por %p86, %p87
    %p90 = scmp.ne.s32.totalorder %s75, %s89
    %p91 = scmp.eq.s32.totalorder %s23, 0
    %p92 = por %p90, %p91
    %s94 = sadd.s32 %s93, 1
    %p97 = scmp.eq.s32.totalorder %s17, 1
    %p98 = scmp.ne.s32.totalorder %s93, %s95
    %p99 = scmp.eq.s32.totalorder %s17, 0
    %p100 = por %p98, %p99
    %p101 = scmp.ne.s32.totalorder %s93, %s95
    %p102 = scmp.eq.s32.totalorder %s22, 1
    %p103 = por %p101, %p102
    %p104 = scmp.ne.s32.totalorder %s95, %s96
    %p105 = scmp.eq.s32.totalorder %s22, 0
    %p106 = por %p104, %p105
    %p107 = scmp.ne.s32.totalorder %s95, %s96
    %p108 = scmp.eq.s32.totalorder %s23, 1
    %p109 = por %p107, %p108
    %p111 = scmp.ne.s32.totalorder %s96, %s110
    %p112 = scmp.eq.s32.totalorder %s23, 0
    %p113 = por %p111, %p112
    %s115 = sadd.s32 %s114, 1
    %p118 = scmp.eq.s32.totalorder %s17, 1
    %p119 = scmp.ne.s32.totalorder %s114, %s116
    %p120 = scmp.eq.s32.totalorder %s17, 0
    %p121 = por %p119, %p120
    %p122 = scmp.ne.s32.totalorder %s114, %s116
    %p123 = scmp.eq.s32.totalorder %s22, 1
    %p124 = por %p122, %p123
    %p125 = scmp.ne.s32.totalorder %s116, %s117
    %p126 = scmp.eq.s32.totalorder %s22, 0
    %p127 = por %p125, %p126
    %p128 = scmp.ne.s32.totalorder %s116, %s117
    %p129 = scmp.eq.s32.totalorder %s23, 1
    %p130 = por %p128, %p129
    %p132 = scmp.ne.s32.totalorder %s117, %s131
    %p133 = scmp.eq.s32.totalorder %s23, 0
    %p134 = por %p132, %p133
    %s136 = sadd.s32 %s135, 1
    %p139 = scmp.eq.s32.totalorder %s17, 1
    %p140 = scmp.ne.s32.totalorder %s135, %s137
    %p141 = scmp.eq.s32.totalorder %s17, 0
    %p142 = por %p140, %p141
    %p143 = scmp.ne.s32.totalorder %s135, %s137
    %p144 = scmp.eq.s32.totalorder %s22, 1
    %p145 = por %p143, %p144
    %p146 = scmp.ne.s32.totalorder %s137, %s138
    %p147 = scmp.eq.s32.totalorder %s22, 0
    %p148 = por %p146, %p147
    %p149 = scmp.ne.s32.totalorder %s137, %s138
    %p150 = scmp.eq.s32.totalorder %s23, 1
    %p151 = por %p149, %p150
    %p153 = scmp.ne.s32.totalorder %s138, %s152
    %p154 = scmp.eq.s32.totalorder %s23, 0
    %p155 = por %p153, %p154
    %s157 = sadd.s32 %s156, 1
    %p160 = scmp.eq.s32.totalorder %s17, 1
    %p161 = scmp.ne.s32.totalorder %s156, %s158
    %p162 = scmp.eq.s32.totalorder %s17, 0
    %p163 = por %p161, %p162
    %p164 = scmp.ne.s32.totalorder %s156, %s158
    %p165 = scmp.eq.s32.totalorder %s22, 1
    %p166 = por %p164, %p165
    %p167 = scmp.ne.s32.totalorder %s158, %s159
    %p168 = scmp.eq.s32.totalorder %s22, 0
    %p169 = por %p167, %p168
    %p170 = scmp.ne.s32.totalorder %s158, %s159
    %p171 = scmp.eq.s32.totalorder %s23, 1
    %p172 = por %p170, %p171
    %p174 = scmp.ne.s32.totalorder %s159, %s173
    %p175 = scmp.eq.s32.totalorder %s23, 0
    %p176 = por %p174, %p175
    %s178 = sadd.s32 %s177, 1
    %p181 = scmp.eq.s32.totalorder %s17, 1
    %p182 = scmp.ne.s32.totalorder %s177, %s179
    %p183 = scmp.eq.s32.totalorder %s17, 0
    %p184 = por %p182, %p183
    %p185 = scmp.ne.s32.totalorder %s177, %s179
    %p186 = scmp.eq.s32.totalorder %s22, 1
    %p187 = por %p185, %p186
    %p188 = scmp.ne.s32.totalorder %s179, %s180
    %p189 = scmp.eq.s32.totalorder %s22, 0
    %p190 = por %p188, %p189
    %p191 = scmp.ne.s32.totalorder %s179, %s180
    %p192 = scmp.eq.s32.totalorder %s23, 1
    %p193 = por %p191, %p192
    %p195 = scmp.ne.s32.totalorder %s180, %s194
    %p196 = scmp.eq.s32.totalorder %s23, 0
    %p197 = por %p195, %p196
    %s199 = sadd.s32 %s198, 1
    %p202 = scmp.eq.s32.totalorder %s17, 1
    %p203 = scmp.ne.s32.totalorder %s198, %s200
    %p204 = scmp.eq.s32.totalorder %s17, 0
    %p205 = por %p203, %p204
    %p206 = scmp.ne.s32.totalorder %s198, %s200
    %p207 = scmp.eq.s32.totalorder %s22, 1
    %p208 = por %p206, %p207
    %p209 = scmp.ne.s32.totalorder %s200, %s201
    %p210 = scmp.eq.s32.totalorder %s22, 0
    %p211 = por %p209, %p210
    %p212 = scmp.ne.s32.totalorder %s200, %s201
    %p213 = scmp.eq.s32.totalorder %s23, 1
    %p214 = por %p212, %p213
    %p216 = scmp.ne.s32.totalorder %s201, %s215
    %p217 = scmp.eq.s32.totalorder %s23, 0
    %p218 = por %p216, %p217
    %s220 = sadd.s32 %s219, 1
    %p223 = scmp.eq.s32.totalorder %s17, 1
    %p224 = scmp.ne.s32.totalorder %s219, %s221
    %p225 = scmp.eq.s32.totalorder %s17, 0
    %p226 = por %p224, %p225
    %p227 = scmp.ne.s32.totalorder %s219, %s221
    %p228 = scmp.eq.s32.totalorder %s22, 1
    %p229 = por %p227, %p228
    %p230 = scmp.ne.s32.totalorder %s221, %s222
    %p231 = scmp.eq.s32.totalorder %s22, 0
    %p232 = por %p230, %p231
    %p233 = scmp.ne.s32.totalorder %s221, %s222
    %p234 = scmp.eq.s32.totalorder %s23, 1
    %p235 = por %p233, %p234
    %p237 = scmp.ne.s32.totalorder %s222, %s236
    %p238 = scmp.eq.s32.totalorder %s23, 0
    %p239 = por %p237, %p238
    %s241 = sadd.s32 %s240, 1
    %p244 = scmp.eq.s32.totalorder %s17, 1
    %p245 = scmp.ne.s32.totalorder %s240, %s242
    %p246 = scmp.eq.s32.totalorder %s17, 0
    %p247 = por %p245, %p246
    %p248 = scmp.ne.s32.totalorder %s240, %s242
    %p249 = scmp.eq.s32.totalorder %s22, 1
    %p250 = por %p248, %p249
    %p251 = scmp.ne.s32.totalorder %s242, %s243
    %p252 = scmp.eq.s32.totalorder %s22, 0
    %p253 = por %p251, %p252
    %p254 = scmp.ne.s32.totalorder %s242, %s243
    %p255 = scmp.eq.s32.totalorder %s23, 1
    %p256 = por %p254, %p255
    %p258 = scmp.ne.s32.totalorder %s243, %s257
    %p259 = scmp.eq.s32.totalorder %s23, 0
    %p260 = por %p258, %p259
    %s261 = ssub.s32 %s17, %s24
    %p262 = scmp.eq.s32.totalorder %s261, 0
    %s264 = sadd.s32 %s263, 1
    %s265 = scalar_select %p262, %s263, %s264
    %p268 = pneg %p262
    %p269 = scmp.eq.s32.totalorder %s17, 1
    %p270 = por %p268, %p269
    %p271 = scmp.ne.s32.totalorder %s263, %s266
    %p272 = scmp.eq.s32.totalorder %s17, 0
    %p273 = por %p271, %p272
    %p274 = scmp.ne.s32.totalorder %s263, %s266
    %p275 = scmp.eq.s32.totalorder %s22, 1
    %p276 = por %p274, %p275
    %p277 = scmp.ne.s32.totalorder %s266, %s267
    %p278 = scmp.eq.s32.totalorder %s22, 0
    %p279 = por %p277, %p278
    %p280 = scmp.ne.s32.totalorder %s266, %s267
    %p281 = scmp.eq.s32.totalorder %s23, 1
    %p282 = por %p280, %p281
    %p284 = scmp.ne.s32.totalorder %s267, %s283
    %p285 = scmp.eq.s32.totalorder %s23, 0
    %p286 = por %p284, %p285
    %p287 = scmp.le.s32.totalorder 1, %s17
    %p288 = scmp.lt.s32.totalorder %s17, 3
    %p289 = pnand %p287, %p288
    %p290 = pneg %p289
    // Predicated region
    $region9: #{esa_forward.2} parent=5 // pred_check
      _
    $region10: #{esa_forward.2} parent=5 // pred_check_branch
      %292 = sbr.rel (%p289) target = $region12
    $region11: #{esa_forward.2} parent=5 // pred_region
      %s293 = ssub.s32 %s17, 1
      // Predicated region
      $region13: #{esa_forward.2} parent=11 // pred_check
        %p294 = pneg %p64
      $region14: #{esa_forward.2} parent=11 // pred_check_branch
        %296 = sbr.rel (%p294) target = $region16
      $region15: #{esa_forward.2} parent=11 // pred_region
        _
      $region16: #{esa_forward.2} parent=11 // pred_fallthru
        _
      // Predicated region
      $region17: #{esa_forward.2} parent=11 // pred_check
        %p297 = pneg %p85
      $region18: #{esa_forward.2} parent=11 // pred_check_branch
        %299 = sbr.rel (%p297) target = $region20
      $region19: #{esa_forward.2} parent=11 // pred_region
        _
      $region20: #{esa_forward.2} parent=11 // pred_fallthru
        _
      // Predicated region
      $region21: #{esa_forward.2} parent=11 // pred_check
        %p300 = pneg %p106
      $region22: #{esa_forward.2} parent=11 // pred_check_branch
        %302 = sbr.rel (%p300) target = $region24
      $region23: #{esa_forward.2} parent=11 // pred_region
        _
      $region24: #{esa_forward.2} parent=11 // pred_fallthru
        _
      // Predicated region
      $region25: #{esa_forward.2} parent=11 // pred_check
        %p303 = pneg %p127
      $region26: #{esa_forward.2} parent=11 // pred_check_branch
        %305 = sbr.rel (%p303) target = $region28
      $region27: #{esa_forward.2} parent=11 // pred_region
        _
      $region28: #{esa_forward.2} parent=11 // pred_fallthru
        _
      // Predicated region
      $region29: #{esa_forward.2} parent=11 // pred_check
        %p306 = pneg %p148
      $region30: #{esa_forward.2} parent=11 // pred_check_branch
        %308 = sbr.rel (%p306) target = $region32
      $region31: #{esa_forward.2} parent=11 // pred_region
        _
      $region32: #{esa_forward.2} parent=11 // pred_fallthru
        _
      // Predicated region
      $region33: #{esa_forward.2} parent=11 // pred_check
        %p309 = pneg %p169
      $region34: #{esa_forward.2} parent=11 // pred_check_branch
        %311 = sbr.rel (%p309) target = $region36
      $region35: #{esa_forward.2} parent=11 // pred_region
        _
      $region36: #{esa_forward.2} parent=11 // pred_fallthru
        _
      // Predicated region
      $region37: #{esa_forward.2} parent=11 // pred_check
        %p312 = pneg %p190
      $region38: #{esa_forward.2} parent=11 // pred_check_branch
        %314 = sbr.rel (%p312) target = $region40
      $region39: #{esa_forward.2} parent=11 // pred_region
        _
      $region40: #{esa_forward.2} parent=11 // pred_fallthru
        _
      // Predicated region
      $region41: #{esa_forward.2} parent=11 // pred_check
        %p315 = pneg %p211
      $region42: #{esa_forward.2} parent=11 // pred_check_branch
        %317 = sbr.rel (%p315) target = $region44
      $region43: #{esa_forward.2} parent=11 // pred_region
        _
      $region44: #{esa_forward.2} parent=11 // pred_fallthru
        _
      // Predicated region
      $region45: #{esa_forward.2} parent=11 // pred_check
        %p318 = pneg %p232
      $region46: #{esa_forward.2} parent=11 // pred_check_branch
        %320 = sbr.rel (%p318) target = $region48
      $region47: #{esa_forward.2} parent=11 // pred_region
        _
      $region48: #{esa_forward.2} parent=11 // pred_fallthru
        _
      // Predicated region
      $region49: #{esa_forward.2} parent=11 // pred_check
        %p321 = pneg %p253
      $region50: #{esa_forward.2} parent=11 // pred_check_branch
        %323 = sbr.rel (%p321) target = $region52
      $region51: #{esa_forward.2} parent=11 // pred_region
        _
      $region52: #{esa_forward.2} parent=11 // pred_fallthru
        _
    $region12: #{esa_forward.2} parent=5 // pred_fallthru
      _
    %p324 = scmp.lt.s32.totalorder %s17, 2
    // Predicated region
    $region53: #{esa_forward.2} parent=5 // pred_check
      %p325 = pneg %p324
    $region54: #{esa_forward.2} parent=5 // pred_check_branch
      %327 = sbr.rel (%p325) target = $region56
    $region55: #{esa_forward.2} parent=5 // pred_region
      // Predicated region
      $region57: #{esa_forward.2} parent=55 // pred_check
        %p328 = pneg %p37
      $region58: #{esa_forward.2} parent=55 // pred_check_branch
        %330 = sbr.rel (%p328) target = $region60
      $region59: #{esa_forward.2} parent=55 // pred_region
        %p331 = scmp.lt.s32.totalorder %s17, 1
        %s332 = scalar_select %p331, %s17, 1
        %s333 = smul.addr %s332, 36
        %s334 = smul.addr %s333, 8
        %s335 = scalar_lea.vmem %s0, %s334
      $region60: #{esa_forward.2} parent=55 // pred_fallthru
        _
    $region56: #{esa_forward.2} parent=5 // pred_fallthru
      _
    %p336 = scmp.le.s32.totalorder 1, %s17
    %p337 = scmp.lt.s32.totalorder %s17, 3
    %p338 = pnand %p336, %p337
    %p339 = pneg %p338
    // Predicated region
    $region61: #{esa_forward.2} parent=5 // pred_check
      _
    $region62: #{esa_forward.2} parent=5 // pred_check_branch
      %341 = sbr.rel (%p338) target = $region64
    $region63: #{esa_forward.2} parent=5 // pred_region
      %s342 = ssub.s32 %s17, 1
      %p343 = scmp.lt.s32.totalorder %s22, 1
      %s344 = scalar_select %p343, %s22, 1
      %s345 = smul.addr %s344, 36
      %s346 = smul.addr %s345, 8
      %s347 = scalar_lea.vmem %s0, %s346
      %p348 = pneg %p43
      %p349 = pneg %p40
      %p350 = pneg %p64
      %p351 = pneg %p61
      %p352 = pneg %p85
      %p353 = pneg %p82
      %p354 = pneg %p106
      %p355 = pneg %p103
      %p356 = pneg %p127
      %p357 = pneg %p124
      %p358 = pneg %p148
      %p359 = pneg %p145
      %p360 = pneg %p169
      %p361 = pneg %p166
      %p362 = pneg %p190
      %p363 = pneg %p187
      %p364 = pneg %p211
      %p365 = pneg %p208
      %p366 = pneg %p232
      %p367 = pneg %p229
      %p368 = pneg %p253
      %p369 = pneg %p250
      %p370 = pneg %p279
      %p371 = pneg %p276
      %p372 = scmp.lt.s32.totalorder %s22, 1
      %s373 = scalar_select %p372, %s22, 1
      %s374 = smul.addr %s373, 4
      %s375 = scalar_lea.vmem %s11, %s374
      %p376 = scmp.lt.s32.totalorder %s22, 1
      %s377 = scalar_select %p376, %s22, 1
      %s378 = smul.addr %s377, 36
      %s379 = smul.addr %s378, 8
      %s380 = scalar_lea.vmem %s0, %s379
      %p381 = scmp.lt.s32.totalorder %s22, 1
      %s382 = scalar_select %p381, %s22, 1
      %s383 = smul.addr %s382, 4
      %s384 = scalar_lea.vmem %s11, %s383
      %v385 = vld [vmem:[%s1] sm:$0xff]
      %v386 = vld [vmem:[%s380] sm:$0xff]
      %v387 = vld [vmem:[%s380 + $0x8] sm:$0xff]
      %v388 = vld [vmem:[%s380 + $0x10] sm:$0xff]
      %v389 = vld [vmem:[%s380 + $0x18] sm:$0xff]
      %v390 = vld [vmem:[%s380 + $0x20] sm:$0xff]
      %v391 = vld [vmem:[%s380 + $0x28] sm:$0xff]
      %v392 = vld [vmem:[%s380 + $0x30] sm:$0xff]
      %v393 = vld [vmem:[%s380 + $0x38] sm:$0xff]
      %v394 = vld [vmem:[%s380 + $0x40] sm:$0xff]
      %v395 = vld [vmem:[%s380 + $0x48] sm:$0xff]
      %v396 = vld [vmem:[%s380 + $0x50] sm:$0xff]
      %v397 = vld [vmem:[%s380 + $0x58] sm:$0xff]
      %v398 = vld [vmem:[%s380 + $0x60] sm:$0xff]
      %v399 = vld [vmem:[%s380 + $0x68] sm:$0xff]
      %v400 = vld [vmem:[%s380 + $0x70] sm:$0xff]
      %v401 = vld [vmem:[%s380 + $0x78] sm:$0xff]
      %v402 = vld [vmem:[%s380 + $0x80] sm:$0xff]
      %v403 = vld [vmem:[%s380 + $0x88] sm:$0xff]
      %v404 = vld [vmem:[%s380 + $0x90] sm:$0xff]
      %v405 = vld [vmem:[%s380 + $0x98] sm:$0xff]
      %v406 = vld [vmem:[%s380 + $0xa0] sm:$0xff]
      %v407 = vld [vmem:[%s380 + $0xa8] sm:$0xff]
      %v408 = vld [vmem:[%s380 + $0xb0] sm:$0xff]
      %v409 = vld [vmem:[%s380 + $0xb8] sm:$0xff]
      %v410 = vld [vmem:[%s380 + $0xc0] sm:$0xff]
      %v411 = vld [vmem:[%s380 + $0xc8] sm:$0xff]
      %v412 = vld [vmem:[%s380 + $0xd0] sm:$0xff]
      %v413 = vld [vmem:[%s380 + $0xd8] sm:$0xff]
      %v414 = vld [vmem:[%s380 + $0xe0] sm:$0xff]
      %v415 = vld [vmem:[%s380 + $0xe8] sm:$0xff]
      %v416 = vld [vmem:[%s380 + $0xf0] sm:$0xff]
      %v417 = vld [vmem:[%s380 + $0xf8] sm:$0xff]
      %v418 = vld [vmem:[%s380 + $0x100] sm:$0xff]
      %v419 = vld [vmem:[%s380 + $0x108] sm:$0xff]
      %v420 = vld [vmem:[%s380 + $0x110] sm:$0xff]
      %v421 = vld [vmem:[%s380 + $0x118] sm:$0xff]
      %v422 = vld [vmem:[%s2] sm:$0xf]
      %424 = vset.pattern.permute.xlu0 0
      %425 = vperm.xlu0 %424, %v422
      %v426 = vpop.permute.xlu0 %425
      %v429 = vcombine.high %v385, %v385
      %vm430 = vcmask 130048
      %v431 = vsel %vm430, %v429, 0
      %433 = vmatprep.subr.mxu0 %v387
      %434 = vmatpush1.msra.mxu0 %v386
      %435 = vmatprep.subr.mxu0 %v389
      %436 = vmatpush1.msra.mxu0 %v388
      %437 = vmatprep.subr.mxu0 %v391
      %438 = vmatpush1.msra.mxu0 %v390
      %439 = vmatprep.subr.mxu0 %v393
      %440 = vmatpush1.msra.mxu0 %v392
      %441 = vmatprep.subr.mxu0 %v395
      %442 = vmatpush1.msra.mxu0 %v394
      %443 = vmatprep.subr.mxu0 %v397
      %444 = vmatpush1.msra.mxu0 %v396
      %445 = vmatprep.subr.mxu0 %v399
      %446 = vmatpush1.msra.mxu0 %v398
      %447 = vmatprep.subr.mxu0 %v401
      %448 = vmatpush1.msra.mxu0 %v400
      %449 = vmatprep.subr.mxu0 %v403
      %450 = vmatpush1.msra.mxu0 %v402
      %451 = vmatprep.subr.mxu0 %v405
      %452 = vmatpush1.msra.mxu0 %v404
      %453 = vmatprep.subr.mxu0 %v407
      %454 = vmatpush1.msra.mxu0 %v406
      %455 = vmatprep.subr.mxu0 %v409
      %456 = vmatpush1.msra.mxu0 %v408
      %457 = vmatprep.subr.mxu0 %v411
      %458 = vmatpush1.msra.mxu0 %v410
      %459 = vmatprep.subr.mxu0 %v413
      %460 = vmatpush1.msra.mxu0 %v412
      %461 = vmatprep.subr.mxu0 %v415
      %462 = vmatpush1.msra.mxu0 %v414
      %463 = vmatprep.subr.mxu0 %v417
      %464 = vmatpush1.msra.mxu0 %v416
      %465 = vmatprep.subr.mxu0 %v419
      %466 = vmatpush1.msra.mxu0 %v418
      %467 = vmatprep.subr.mxu0 %v421
      %468 = vmatpush1.msra.mxu0 %v420
      %469 = vmatprep.subr.mxu0 0.0
      %470 = vmatpush1.msra.mxu0 0.0
      %471 = vmatprep.subr.mxu0 0.0
      %472 = vmatpush1.msra.mxu0 0.0
      %473 = vmatprep.subr.mxu0 0.0
      %474 = vmatpush1.msra.mxu0 0.0
      %475 = vmatprep.subr.mxu0 0.0
      %476 = vmatpush1.msra.mxu0 0.0
      %477 = vmatprep.subr.mxu0 0.0
      %478 = vmatpush1.msra.mxu0 0.0
      %479 = vmatprep.subr.mxu0 0.0
      %480 = vmatpush1.msra.mxu0 0.0
      %481 = vmatprep.subr.mxu0 0.0
      %482 = vmatpush1.msra.mxu0 0.0
      %483 = vmatprep.subr.mxu0 0.0
      %484 = vmatpush1.msra.mxu0 0.0
      %485 = vmatprep.subr.mxu0 0.0
      %486 = vmatpush1.msra.mxu0 0.0
      %487 = vmatprep.subr.mxu0 0.0
      %488 = vmatpush1.msra.mxu0 0.0
      %489 = vmatprep.subr.mxu0 0.0
      %490 = vmatpush1.msra.mxu0 0.0
      %491 = vmatprep.subr.mxu0 0.0
      %492 = vmatpush1.msra.mxu0 0.0
      %493 = vmatprep.subr.mxu0 0.0
      %494 = vmatpush1.msra.mxu0 0.0
      %495 = vmatprep.subr.mxu0 0.0
      %496 = vmatpush1.msra.mxu0 0.0
      %497 = vmatprep.mubr.f32.mxu0 %v431
      %498 = vmatmul.mubr.f32.gmra.mrb[0].mxu0 %v385
      %v499 = vpop.f32.mrb[0].mxu0
      %v500 = vadd.f32 %v426, %v499
      %v501 = vpop.f32.mrb[0].mxu0
      %v502 = vadd.f32 %v426, %v501
      %503 = vdwg.mxu0
      %v506 = vcombine.low %v500, %v502
      %v508 = vunpack.c.l.s4 1966171168
      %v509 = vunpack.c.0.s8 %v508
      %v510 = vlaneseq
      %v511 = vshrl.u32 %v510, 7
      %v512 = vsub.s32 %v509, %v511
      %v513 = vrot.slane %v506, %v512
      %v514 = vcombine.high %v513, %v513
      %v516 = vunpack.c.l.s4 1966171168
      %v517 = vunpack.c.0.s8 %v516
      %v518 = vlaneseq
      %v519 = vshrl.u32 %v518, 7
      %v520 = vsub.s32 %v517, %v519
      %v521 = vrot.slane %v513, %v520
      %v523 = vunpack.c.l.s4 1966171168
      %v524 = vunpack.c.0.s8 %v523
      %v525 = vlaneseq
      %v526 = vshrl.u32 %v525, 7
      %v527 = vsub.s32 %v524, %v526
      %v528 = vrot.slane %v514, %v527
      %v529 = vcombine.high %v521, %v521
      %v530 = vcombine.high %v528, %v528
      %v531 = vld [vmem:[%s3] sm:$0xff]
      %v532 = vld [vmem:[%s3 + $0x8] sm:$0xff]
      %v533 = vld [vmem:[%s3 + $0x10] sm:$0x1]
      %v534 = vld [vmem:[%s3 + $0x18] sm:$0x1]
      %v535 = vlaneseq
      %v536 = vshrl.u32 %v535, 7
      %v537 = vsub.s32 0, %v536
      %v538 = vrot.slane %v521, %v537
      %v539 = vlaneseq
      %v540 = vshrl.u32 %v539, 7
      %v541 = vsub.s32 1, %v540
      %v542 = vrot.slane %v521, %v541
      %v543 = vlaneseq
      %v544 = vshrl.u32 %v543, 7
      %v545 = vsub.s32 0, %v544
      %v546 = vrot.slane %v528, %v545
      %v547 = vlaneseq
      %v548 = vshrl.u32 %v547, 7
      %v549 = vsub.s32 1, %v548
      %v550 = vrot.slane %v528, %v549
      %v551 = vlaneseq
      %v552 = vshrl.u32 %v551, 7
      %v553 = vsub.s32 0, %v552
      %v554 = vrot.slane %v529, %v553
      %v555 = vlaneseq
      %v556 = vshrl.u32 %v555, 7
      %v557 = vsub.s32 1, %v556
      %v558 = vrot.slane %v529, %v557
      %v559 = vlaneseq
      %v560 = vshrl.u32 %v559, 7
      %v561 = vsub.s32 0, %v560
      %v562 = vrot.slane %v530, %v561
      %v563 = vlaneseq
      %v564 = vshrl.u32 %v563, 7
      %v565 = vsub.s32 1, %v564
      %v566 = vrot.slane %v530, %v565
      %v575 = vadd.f32 %v538, %v531
      %v576 = vadd.f32 %v542, %v532
      %v577 = vadd.f32 %v538, %v533
      %v578 = vadd.f32 %v542, %v534
      %v579 = vadd.f32 %v546, %v531
      %v580 = vadd.f32 %v550, %v532
      %v581 = vadd.f32 %v546, %v533
      %v582 = vadd.f32 %v550, %v534
      %v583 = vadd.f32 %v554, %v531
      %v584 = vadd.f32 %v558, %v532
      %v585 = vadd.f32 %v554, %v533
      %v586 = vadd.f32 %v558, %v534
      %v587 = vadd.f32 %v562, %v531
      %v588 = vadd.f32 %v566, %v532
      %v589 = vadd.f32 %v562, %v533
      %v590 = vadd.f32 %v566, %v534
      %vm591 = vcmask 793600
      %v592 = vsel %vm591, %v576, -inf
      %v593 = vmax.f32 %v575, %v592
      %594 = vmax.xlane.f32.xlu0 %v593
      %v595 = vpop.xlane.xlu0 %594
      %vm596 = vcmask 1040384
      %v597 = vsel %vm596, %v577, -inf
      %vm598 = vcmask 786432
      %v599 = vsel %vm598, %v578, -inf
      %v600 = vmax.f32 %v597, %v599
      %601 = vmax.xlane.f32.xlu0 %v600
      %v602 = vpop.xlane.xlu0 %601
      %v603 = vsel %vm591, %v580, -inf
      %v604 = vmax.f32 %v579, %v603
      %605 = vmax.xlane.f32.xlu0 %v604
      %v606 = vpop.xlane.xlu0 %605
      %v607 = vsel %vm596, %v581, -inf
      %v608 = vsel %vm598, %v582, -inf
      %v609 = vmax.f32 %v607, %v608
      %610 = vmax.xlane.f32.xlu0 %v609
      %v611 = vpop.xlane.xlu0 %610
      %v612 = vsel %vm591, %v584, -inf
      %v613 = vmax.f32 %v583, %v612
      %614 = vmax.xlane.f32.xlu0 %v613
      %v615 = vpop.xlane.xlu0 %614
      %v616 = vsel %vm596, %v585, -inf
      %v617 = vsel %vm598, %v586, -inf
      %v618 = vmax.f32 %v616, %v617
      %619 = vmax.xlane.f32.xlu0 %v618
      %v620 = vpop.xlane.xlu0 %619
      %v621 = vsel %vm591, %v588, -inf
      %v622 = vmax.f32 %v587, %v621
      %623 = vmax.xlane.f32.xlu0 %v622
      %v624 = vpop.xlane.xlu0 %623
      %v625 = vsel %vm596, %v589, -inf
      %v626 = vsel %vm598, %v590, -inf
      %v627 = vmax.f32 %v625, %v626
      %628 = vmax.xlane.f32.xlu0 %v627
      %v629 = vpop.xlane.xlu0 %628
      %v630 = vld [vmem:[%s5] sm:$0xf]
      %v639 = vlaneseq
      %v640 = vand.u32 %v639, 127
      %v641 = vlaneseq
      %v642 = vshrl.u32 %v641, 7
      %v643 = vsub.s32 %v640, %v642
      %v644 = vrot.slane %v595, %v643
      %v645 = vadd.s32 %v640, 4294967288
      %v646 = vlaneseq
      %v647 = vshrl.u32 %v646, 7
      %v648 = vsub.s32 %v645, %v647
      %v649 = vrot.slane %v602, %v648
      %vm650 = vcmask 130112
      %v651 = vsel %vm650, %v649, %v644
      %v652 = vlaneseq
      %v653 = vshrl.u32 %v652, 7
      %v654 = vsub.s32 %v640, %v653
      %v655 = vrot.slane %v606, %v654
      %v656 = vlaneseq
      %v657 = vshrl.u32 %v656, 7
      %v658 = vsub.s32 %v645, %v657
      %v659 = vrot.slane %v611, %v658
      %v660 = vsel %vm650, %v659, %v655
      %v661 = vlaneseq
      %v662 = vshrl.u32 %v661, 7
      %v663 = vsub.s32 %v640, %v662
      %v664 = vrot.slane %v615, %v663
      %v665 = vlaneseq
      %v666 = vshrl.u32 %v665, 7
      %v667 = vsub.s32 %v645, %v666
      %v668 = vrot.slane %v620, %v667
      %v669 = vsel %vm650, %v668, %v664
      %v670 = vlaneseq
      %v671 = vshrl.u32 %v670, 7
      %v672 = vsub.s32 %v640, %v671
      %v673 = vrot.slane %v624, %v672
      %v674 = vlaneseq
      %v675 = vshrl.u32 %v674, 7
      %v676 = vsub.s32 %v645, %v675
      %v677 = vrot.slane %v629, %v676
      %v678 = vsel %vm650, %v677, %v673
      %vm679 = vcmask 1041409
      %v680 = vsel %vm679, %v660, %v651
      %vm681 = vcmask 1042434
      %v682 = vsel %vm681, %v669, %v680
      %vm683 = vcmask 1043459
      %v684 = vsel %vm683, %v678, %v682
      %vm685 = vcmask 31744
      %v687 = vsel %vm685, %v630, 0
      %vm689 = vcmask 1043456
      %v690 = vsel %vm689, %v684, 0
      %692 = vmatprep.subr.mxu0 0.0
      %693 = vmatpush1.msra.mxu0 %v690
      %694 = vmatprep.subr.mxu0 0.0
      %695 = vmatpush1.msra.mxu0 0.0
      %696 = vmatprep.subr.mxu0 0.0
      %697 = vmatpush1.msra.mxu0 0.0
      %698 = vmatprep.subr.mxu0 0.0
      %699 = vmatpush1.msra.mxu0 0.0
      %700 = vmatprep.subr.mxu0 0.0
      %701 = vmatpush1.msra.mxu0 0.0
      %702 = vmatprep.subr.mxu0 0.0
      %703 = vmatpush1.msra.mxu0 0.0
      %704 = vmatprep.subr.mxu0 0.0
      %705 = vmatpush1.msra.mxu0 0.0
      %706 = vmatprep.subr.mxu0 0.0
      %707 = vmatpush1.msra.mxu0 0.0
      %708 = vmatprep.subr.mxu0 0.0
      %709 = vmatpush1.msra.mxu0 0.0
      %710 = vmatprep.subr.mxu0 0.0
      %711 = vmatpush1.msra.mxu0 0.0
      %712 = vmatprep.subr.mxu0 0.0
      %713 = vmatpush1.msra.mxu0 0.0
      %714 = vmatprep.subr.mxu0 0.0
      %715 = vmatpush1.msra.mxu0 0.0
      %716 = vmatprep.subr.mxu0 0.0
      %717 = vmatpush1.msra.mxu0 0.0
      %718 = vmatprep.subr.mxu0 0.0
      %719 = vmatpush1.msra.mxu0 0.0
      %720 = vmatprep.subr.mxu0 0.0
      %721 = vmatpush1.msra.mxu0 0.0
      %722 = vmatprep.subr.mxu0 0.0
      %723 = vmatpush1.msra.mxu0 0.0
      %724 = vmatprep.subr.mxu0 0.0
      %725 = vmatpush1.msra.mxu0 0.0
      %726 = vmatprep.subr.mxu0 0.0
      %727 = vmatpush1.msra.mxu0 0.0
      %728 = vmatprep.subr.mxu0 0.0
      %729 = vmatpush1.msra.mxu0 0.0
      %730 = vmatprep.subr.mxu0 0.0
      %731 = vmatpush1.msra.mxu0 0.0
      %732 = vmatprep.subr.mxu0 0.0
      %733 = vmatpush1.msra.mxu0 0.0
      %734 = vmatprep.subr.mxu0 0.0
      %735 = vmatpush1.msra.mxu0 0.0
      %736 = vmatprep.subr.mxu0 0.0
      %737 = vmatpush1.msra.mxu0 0.0
      %738 = vmatprep.subr.mxu0 0.0
      %739 = vmatpush1.msra.mxu0 0.0
      %740 = vmatprep.subr.mxu0 0.0
      %741 = vmatpush1.msra.mxu0 0.0
      %742 = vmatprep.subr.mxu0 0.0
      %743 = vmatpush1.msra.mxu0 0.0
      %744 = vmatprep.subr.mxu0 0.0
      %745 = vmatpush1.msra.mxu0 0.0
      %746 = vmatprep.subr.mxu0 0.0
      %747 = vmatpush1.msra.mxu0 0.0
      %748 = vmatprep.subr.mxu0 0.0
      %749 = vmatpush1.msra.mxu0 0.0
      %750 = vmatprep.subr.mxu0 0.0
      %751 = vmatpush1.msra.mxu0 0.0
      %752 = vmatprep.subr.mxu0 0.0
      %753 = vmatpush1.msra.mxu0 0.0
      %754 = vmatprep.subr.mxu0 0.0
      %755 = vmatpush1.msra.mxu0 0.0
      %756 = vmatprep.mubr.f32.mxu0 0.0
      %757 = vmatmul.mubr.f32.gmra.mrb[0].mxu0 %v687
      %v758 = vpop.f32.mrb[0].mxu0
      %v759 = vadd.f32 0.0, %v758
      %v760 = vpop.f32.mrb[0].mxu0
      %761 = vdwg.mxu0
      %v762 = vld [vmem:[%s4] sm:$0xff]
      %v763 = vld [vmem:[%s4 + $0x8] sm:$0x1]
      %s764 = scalar_lea.vmem %s5, 4
      %v765 = vld [vmem:[%s764] sm:$0xf]
      %v767 = vsel %vm685, %v765, 0
      %769 = vmatprep.subr.mxu0 0.0
      %770 = vmatpush1.msra.mxu0 %v690
      %771 = vmatprep.subr.mxu0 0.0
      %772 = vmatpush1.msra.mxu0 0.0
      %773 = vmatprep.subr.mxu0 0.0
      %774 = vmatpush1.msra.mxu0 0.0
      %775 = vmatprep.subr.mxu0 0.0
      %776 = vmatpush1.msra.mxu0 0.0
      %777 = vmatprep.subr.mxu0 0.0
      %778 = vmatpush1.msra.mxu0 0.0
      %779 = vmatprep.subr.mxu0 0.0
      %780 = vmatpush1.msra.mxu0 0.0
      %781 = vmatprep.subr.mxu0 0.0
      %782 = vmatpush1.msra.mxu0 0.0
      %783 = vmatprep.subr.mxu0 0.0
      %784 = vmatpush1.msra.mxu0 0.0
      %785 = vmatprep.subr.mxu0 0.0
      %786 = vmatpush1.msra.mxu0 0.0
      %787 = vmatprep.subr.mxu0 0.0
      %788 = vmatpush1.msra.mxu0 0.0
      %789 = vmatprep.subr.mxu0 0.0
      %790 = vmatpush1.msra.mxu0 0.0
      %791 = vmatprep.subr.mxu0 0.0
      %792 = vmatpush1.msra.mxu0 0.0
      %793 = vmatprep.subr.mxu0 0.0
      %794 = vmatpush1.msra.mxu0 0.0
      %795 = vmatprep.subr.mxu0 0.0
      %796 = vmatpush1.msra.mxu0 0.0
      %797 = vmatprep.subr.mxu0 0.0
      %798 = vmatpush1.msra.mxu0 0.0
      %799 = vmatprep.subr.mxu0 0.0
      %800 = vmatpush1.msra.mxu0 0.0
      %801 = vmatprep.subr.mxu0 0.0
      %802 = vmatpush1.msra.mxu0 0.0
      %803 = vmatprep.subr.mxu0 0.0
      %804 = vmatpush1.msra.mxu0 0.0
      %805 = vmatprep.subr.mxu0 0.0
      %806 = vmatpush1.msra.mxu0 0.0
      %807 = vmatprep.subr.mxu0 0.0
      %808 = vmatpush1.msra.mxu0 0.0
      %809 = vmatprep.subr.mxu0 0.0
      %810 = vmatpush1.msra.mxu0 0.0
      %811 = vmatprep.subr.mxu0 0.0
      %812 = vmatpush1.msra.mxu0 0.0
      %813 = vmatprep.subr.mxu0 0.0
      %814 = vmatpush1.msra.mxu0 0.0
      %815 = vmatprep.subr.mxu0 0.0
      %816 = vmatpush1.msra.mxu0 0.0
      %817 = vmatprep.subr.mxu0 0.0
      %818 = vmatpush1.msra.mxu0 0.0
      %819 = vmatprep.subr.mxu0 0.0
      %820 = vmatpush1.msra.mxu0 0.0
      %821 = vmatprep.subr.mxu0 0.0
      %822 = vmatpush1.msra.mxu0 0.0
      %823 = vmatprep.subr.mxu0 0.0
      %824 = vmatpush1.msra.mxu0 0.0
      %825 = vmatprep.subr.mxu0 0.0
      %826 = vmatpush1.msra.mxu0 0.0
      %827 = vmatprep.subr.mxu0 0.0
      %828 = vmatpush1.msra.mxu0 0.0
      %829 = vmatprep.subr.mxu0 0.0
      %830 = vmatpush1.msra.mxu0 0.0
      %831 = vmatprep.subr.mxu0 0.0
      %832 = vmatpush1.msra.mxu0 0.0
      %833 = vmatprep.mubr.f32.mxu0 0.0
      %834 = vmatmul.mubr.f32.gmra.mrb[0].mxu0 %v767
      %v835 = vpop.f32.mrb[0].mxu0
      %v836 = vadd.f32 0.0, %v835
      %v837 = vpop.f32.mrb[0].mxu0
      %838 = vdwg.mxu0
      %s839 = scalar_lea.vmem %s4, 16
      %v840 = vld [vmem:[%s839] sm:$0xff]
      %v841 = vld [vmem:[%s839 + $0x8] sm:$0x1]
      %vm842 = vcmask 72704
      %v844 = vsel %vm842, %v836, 0
      %v847 = vsel %vm596, %v841, 0
      %849 = vmatprep.subr.mxu0 0.0
      %850 = vmatpush1.msra.mxu0 %v840
      %851 = vmatprep.subr.mxu0 0.0
      %852 = vmatpush1.msra.mxu0 %v847
      %853 = vmatprep.subr.mxu0 0.0
      %854 = vmatpush1.msra.mxu0 0.0
      %855 = vmatprep.subr.mxu0 0.0
      %856 = vmatpush1.msra.mxu0 0.0
      %857 = vmatprep.subr.mxu0 0.0
      %858 = vmatpush1.msra.mxu0 0.0
      %859 = vmatprep.subr.mxu0 0.0
      %860 = vmatpush1.msra.mxu0 0.0
      %861 = vmatprep.subr.mxu0 0.0
      %862 = vmatpush1.msra.mxu0 0.0
      %863 = vmatprep.subr.mxu0 0.0
      %864 = vmatpush1.msra.mxu0 0.0
      %865 = vmatprep.subr.mxu0 0.0
      %866 = vmatpush1.msra.mxu0 0.0
      %867 = vmatprep.subr.mxu0 0.0
      %868 = vmatpush1.msra.mxu0 0.0
      %869 = vmatprep.subr.mxu0 0.0
      %870 = vmatpush1.msra.mxu0 0.0
      %871 = vmatprep.subr.mxu0 0.0
      %872 = vmatpush1.msra.mxu0 0.0
      %873 = vmatprep.subr.mxu0 0.0
      %874 = vmatpush1.msra.mxu0 0.0
      %875 = vmatprep.subr.mxu0 0.0
      %876 = vmatpush1.msra.mxu0 0.0
      %877 = vmatprep.subr.mxu0 0.0
      %878 = vmatpush1.msra.mxu0 0.0
      %879 = vmatprep.subr.mxu0 0.0
      %880 = vmatpush1.msra.mxu0 0.0
      %881 = vmatprep.subr.mxu0 0.0
      %882 = vmatpush1.msra.mxu0 0.0
      %883 = vmatprep.subr.mxu0 0.0
      %884 = vmatpush1.msra.mxu0 0.0
      %885 = vmatprep.subr.mxu0 0.0
      %886 = vmatpush1.msra.mxu0 0.0
      %887 = vmatprep.subr.mxu0 0.0
      %888 = vmatpush1.msra.mxu0 0.0
      %889 = vmatprep.subr.mxu0 0.0
      %890 = vmatpush1.msra.mxu0 0.0
      %891 = vmatprep.subr.mxu0 0.0
      %892 = vmatpush1.msra.mxu0 0.0
      %893 = vmatprep.subr.mxu0 0.0
      %894 = vmatpush1.msra.mxu0 0.0
      %895 = vmatprep.subr.mxu0 0.0
      %896 = vmatpush1.msra.mxu0 0.0
      %897 = vmatprep.subr.mxu0 0.0
      %898 = vmatpush1.msra.mxu0 0.0
      %899 = vmatprep.subr.mxu0 0.0
      %900 = vmatpush1.msra.mxu0 0.0
      %901 = vmatprep.subr.mxu0 0.0
      %902 = vmatpush1.msra.mxu0 0.0
      %903 = vmatprep.subr.mxu0 0.0
      %904 = vmatpush1.msra.mxu0 0.0
      %905 = vmatprep.subr.mxu0 0.0
      %906 = vmatpush1.msra.mxu0 0.0
      %907 = vmatprep.subr.mxu0 0.0
      %908 = vmatpush1.msra.mxu0 0.0
      %909 = vmatprep.subr.mxu0 0.0
      %910 = vmatpush1.msra.mxu0 0.0
      %911 = vmatprep.subr.mxu0 0.0
      %912 = vmatpush1.msra.mxu0 0.0
      %913 = vmatprep.mubr.f32.mxu0 0.0
      %914 = vmatmul.mubr.f32.gmra.mrb[0].mxu0 %v844
      %v915 = vpop.f32.mrb[0].mxu0
      %v916 = vadd.f32 0.0, %v915
      %v917 = vpop.f32.mrb[0].mxu0
      %918 = vdwg.mxu0
      %v920 = vsel %vm842, %v759, 0
      %v923 = vsel %vm596, %v763, 0
      %925 = vmatprep.subr.mxu0 0.0
      %926 = vmatpush1.msra.mxu0 %v762
      %927 = vmatprep.subr.mxu0 0.0
      %928 = vmatpush1.msra.mxu0 %v923
      %929 = vmatprep.subr.mxu0 0.0
      %930 = vmatpush1.msra.mxu0 0.0
      %931 = vmatprep.subr.mxu0 0.0
      %932 = vmatpush1.msra.mxu0 0.0
      %933 = vmatprep.subr.mxu0 0.0
      %934 = vmatpush1.msra.mxu0 0.0
      %935 = vmatprep.subr.mxu0 0.0
      %936 = vmatpush1.msra.mxu0 0.0
      %937 = vmatprep.subr.mxu0 0.0
      %938 = vmatpush1.msra.mxu0 0.0
      %939 = vmatprep.subr.mxu0 0.0
      %940 = vmatpush1.msra.mxu0 0.0
      %941 = vmatprep.subr.mxu0 0.0
      %942 = vmatpush1.msra.mxu0 0.0
      %943 = vmatprep.subr.mxu0 0.0
      %944 = vmatpush1.msra.mxu0 0.0
      %945 = vmatprep.subr.mxu0 0.0
      %946 = vmatpush1.msra.mxu0 0.0
      %947 = vmatprep.subr.mxu0 0.0
      %948 = vmatpush1.msra.mxu0 0.0
      %949 = vmatprep.subr.mxu0 0.0
      %950 = vmatpush1.msra.mxu0 0.0
      %951 = vmatprep.subr.mxu0 0.0
      %952 = vmatpush1.msra.mxu0 0.0
      %953 = vmatprep.subr.mxu0 0.0
      %954 = vmatpush1.msra.mxu0 0.0
      %955 = vmatprep.subr.mxu0 0.0
      %956 = vmatpush1.msra.mxu0 0.0
      %957 = vmatprep.subr.mxu0 0.0
      %958 = vmatpush1.msra.mxu0 0.0
      %959 = vmatprep.subr.mxu0 0.0
      %960 = vmatpush1.msra.mxu0 0.0
      %961 = vmatprep.subr.mxu0 0.0
      %962 = vmatpush1.msra.mxu0 0.0
      %963 = vmatprep.subr.mxu0 0.0
      %964 = vmatpush1.msra.mxu0 0.0
      %965 = vmatprep.subr.mxu0 0.0
      %966 = vmatpush1.msra.mxu0 0.0
      %967 = vmatprep.subr.mxu0 0.0
      %968 = vmatpush1.msra.mxu0 0.0
      %969 = vmatprep.subr.mxu0 0.0
      %970 = vmatpush1.msra.mxu0 0.0
      %971 = vmatprep.subr.mxu0 0.0
      %972 = vmatpush1.msra.mxu0 0.0
      %973 = vmatprep.subr.mxu0 0.0
      %974 = vmatpush1.msra.mxu0 0.0
      %975 = vmatprep.subr.mxu0 0.0
      %976 = vmatpush1.msra.mxu0 0.0
      %977 = vmatprep.subr.mxu0 0.0
      %978 = vmatpush1.msra.mxu0 0.0
      %979 = vmatprep.subr.mxu0 0.0
      %980 = vmatpush1.msra.mxu0 0.0
      %981 = vmatprep.subr.mxu0 0.0
      %982 = vmatpush1.msra.mxu0 0.0
      %983 = vmatprep.subr.mxu0 0.0
      %984 = vmatpush1.msra.mxu0 0.0
      %985 = vmatprep.subr.mxu0 0.0
      %986 = vmatpush1.msra.mxu0 0.0
      %987 = vmatprep.subr.mxu0 0.0
      %988 = vmatpush1.msra.mxu0 0.0
      %989 = vmatprep.mubr.f32.mxu0 0.0
      %990 = vmatmul.mubr.f32.gmra.mrb[0].mxu0 %v920
      %v991 = vpop.f32.mrb[0].mxu0
      %v992 = vadd.f32 %v916, %v991
      %v993 = vpop.f32.mrb[0].mxu0
      %994 = vdwg.mxu0
      %s995 = scalar_lea.vmem %s5, 8
      %v996 = vld [vmem:[%s995] sm:$0xf]
      %v998 = vsel %vm685, %v996, 0
      %1000 = vmatprep.subr.mxu0 0.0
      %1001 = vmatpush1.msra.mxu0 %v690
      %1002 = vmatprep.subr.mxu0 0.0
      %1003 = vmatpush1.msra.mxu0 0.0
      %1004 = vmatprep.subr.mxu0 0.0
      %1005 = vmatpush1.msra.mxu0 0.0
      %1006 = vmatprep.subr.mxu0 0.0
      %1007 = vmatpush1.msra.mxu0 0.0
      %1008 = vmatprep.subr.mxu0 0.0
      %1009 = vmatpush1.msra.mxu0 0.0
      %1010 = vmatprep.subr.mxu0 0.0
      %1011 = vmatpush1.msra.mxu0 0.0
      %1012 = vmatprep.subr.mxu0 0.0
      %1013 = vmatpush1.msra.mxu0 0.0
      %1014 = vmatprep.subr.mxu0 0.0
      %1015 = vmatpush1.msra.mxu0 0.0
      %1016 = vmatprep.subr.mxu0 0.0
      %1017 = vmatpush1.msra.mxu0 0.0
      %1018 = vmatprep.subr.mxu0 0.0
      %1019 = vmatpush1.msra.mxu0 0.0
      %1020 = vmatprep.subr.mxu0 0.0
      %1021 = vmatpush1.msra.mxu0 0.0
      %1022 = vmatprep.subr.mxu0 0.0
      %1023 = vmatpush1.msra.mxu0 0.0
      %1024 = vmatprep.subr.mxu0 0.0
      %1025 = vmatpush1.msra.mxu0 0.0
      %1026 = vmatprep.subr.mxu0 0.0
      %1027 = vmatpush1.msra.mxu0 0.0
      %1028 = vmatprep.subr.mxu0 0.0
      %1029 = vmatpush1.msra.mxu0 0.0
      %1030 = vmatprep.subr.mxu0 0.0
      %1031 = vmatpush1.msra.mxu0 0.0
      %1032 = vmatprep.subr.mxu0 0.0
      %1033 = vmatpush1.msra.mxu0 0.0
      %1034 = vmatprep.subr.mxu0 0.0
      %1035 = vmatpush1.msra.mxu0 0.0
      %1036 = vmatprep.subr.mxu0 0.0
      %1037 = vmatpush1.msra.mxu0 0.0
      %1038 = vmatprep.subr.mxu0 0.0
      %1039 = vmatpush1.msra.mxu0 0.0
      %1040 = vmatprep.subr.mxu0 0.0
      %1041 = vmatpush1.msra.mxu0 0.0
      %1042 = vmatprep.subr.mxu0 0.0
      %1043 = vmatpush1.msra.mxu0 0.0
      %1044 = vmatprep.subr.mxu0 0.0
      %1045 = vmatpush1.msra.mxu0 0.0
      %1046 = vmatprep.subr.mxu0 0.0
      %1047 = vmatpush1.msra.mxu0 0.0
      %1048 = vmatprep.subr.mxu0 0.0
      %1049 = vmatpush1.msra.mxu0 0.0
      %1050 = vmatprep.subr.mxu0 0.0
      %1051 = vmatpush1.msra.mxu0 0.0
      %1052 = vmatprep.subr.mxu0 0.0
      %1053 = vmatpush1.msra.mxu0 0.0
      %1054 = vmatprep.subr.mxu0 0.0
      %1055 = vmatpush1.msra.mxu0 0.0
      %1056 = vmatprep.subr.mxu0 0.0
      %1057 = vmatpush1.msra.mxu0 0.0
      %1058 = vmatprep.subr.mxu0 0.0
      %1059 = vmatpush1.msra.mxu0 0.0
      %1060 = vmatprep.subr.mxu0 0.0
      %1061 = vmatpush1.msra.mxu0 0.0
      %1062 = vmatprep.subr.mxu0 0.0
      %1063 = vmatpush1.msra.mxu0 0.0
      %1064 = vmatprep.mubr.f32.mxu0 0.0
      %1065 = vmatmul.mubr.f32.gmra.mrb[0].mxu0 %v998
      %v1066 = vpop.f32.mrb[0].mxu0
      %v1067 = vadd.f32 0.0, %v1066
      %v1068 = vpop.f32.mrb[0].mxu0
      %1069 = vdwg.mxu0
      %s1070 = scalar_lea.vmem %s4, 32
      %v1071 = vld [vmem:[%s1070] sm:$0xff]
      %v1072 = vld [vmem:[%s1070 + $0x8] sm:$0x1]
      %v1074 = vsel %vm842, %v1067, 0
      %v1077 = vsel %vm596, %v1072, 0
      %1079 = vmatprep.subr.mxu0 0.0
      %1080 = vmatpush1.msra.mxu0 %v1071
      %1081 = vmatprep.subr.mxu0 0.0
      %1082 = vmatpush1.msra.mxu0 %v1077
      %1083 = vmatprep.subr.mxu0 0.0
      %1084 = vmatpush1.msra.mxu0 0.0
      %1085 = vmatprep.subr.mxu0 0.0
      %1086 = vmatpush1.msra.mxu0 0.0
      %1087 = vmatprep.subr.mxu0 0.0
      %1088 = vmatpush1.msra.mxu0 0.0
      %1089 = vmatprep.subr.mxu0 0.0
      %1090 = vmatpush1.msra.mxu0 0.0
      %1091 = vmatprep.subr.mxu0 0.0
      %1092 = vmatpush1.msra.mxu0 0.0
      %1093 = vmatprep.subr.mxu0 0.0
      %1094 = vmatpush1.msra.mxu0 0.0
      %1095 = vmatprep.subr.mxu0 0.0
      %1096 = vmatpush1.msra.mxu0 0.0
      %1097 = vmatprep.subr.mxu0 0.0
      %1098 = vmatpush1.msra.mxu0 0.0
      %1099 = vmatprep.subr.mxu0 0.0
      %1100 = vmatpush1.msra.mxu0 0.0
      %1101 = vmatprep.subr.mxu0 0.0
      %1102 = vmatpush1.msra.mxu0 0.0
      %1103 = vmatprep.subr.mxu0 0.0
      %1104 = vmatpush1.msra.mxu0 0.0
      %1105 = vmatprep.subr.mxu0 0.0
      %1106 = vmatpush1.msra.mxu0 0.0
      %1107 = vmatprep.subr.mxu0 0.0
      %1108 = vmatpush1.msra.mxu0 0.0
      %1109 = vmatprep.subr.mxu0 0.0
      %1110 = vmatpush1.msra.mxu0 0.0
      %1111 = vmatprep.subr.mxu0 0.0
      %1112 = vmatpush1.msra.mxu0 0.0
      %1113 = vmatprep.subr.mxu0 0.0
      %1114 = vmatpush1.msra.mxu0 0.0
      %1115 = vmatprep.subr.mxu0 0.0
      %1116 = vmatpush1.msra.mxu0 0.0
      %1117 = vmatprep.subr.mxu0 0.0
      %1118 = vmatpush1.msra.mxu0 0.0
      %1119 = vmatprep.subr.mxu0 0.0
      %1120 = vmatpush1.msra.mxu0 0.0
      %1121 = vmatprep.subr.mxu0 0.0
      %1122 = vmatpush1.msra.mxu0 0.0
      %1123 = vmatprep.subr.mxu0 0.0
      %1124 = vmatpush1.msra.mxu0 0.0
      %1125 = vmatprep.subr.mxu0 0.0
      %1126 = vmatpush1.msra.mxu0 0.0
      %1127 = vmatprep.subr.mxu0 0.0
      %1128 = vmatpush1.msra.mxu0 0.0
      %1129 = vmatprep.subr.mxu0 0.0
      %1130 = vmatpush1.msra.mxu0 0.0
      %1131 = vmatprep.subr.mxu0 0.0
      %1132 = vmatpush1.msra.mxu0 0.0
      %1133 = vmatprep.subr.mxu0 0.0
      %1134 = vmatpush1.msra.mxu0 0.0
      %1135 = vmatprep.subr.mxu0 0.0
      %1136 = vmatpush1.msra.mxu0 0.0
      %1137 = vmatprep.subr.mxu0 0.0
      %1138 = vmatpush1.msra.mxu0 0.0
      %1139 = vmatprep.subr.mxu0 0.0
      %1140 = vmatpush1.msra.mxu0 0.0
      %1141 = vmatprep.subr.mxu0 0.0
      %1142 = vmatpush1.msra.mxu0 0.0
      %1143 = vmatprep.mubr.f32.mxu0 0.0
      %1144 = vmatmul.mubr.f32.gmra.mrb[0].mxu0 %v1074
      %v1145 = vpop.f32.mrb[0].mxu0
      %v1146 = vadd.f32 0.0, %v1145
      %v1147 = vpop.f32.mrb[0].mxu0
      %1148 = vdwg.mxu0
      %v1149 = vadd.f32 %v992, %v1146
      %s1150 = scalar_lea.vmem %s5, 12
      %v1151 = vld [vmem:[%s1150] sm:$0xf]
      %v1153 = vsel %vm685, %v1151, 0
      %1155 = vmatprep.subr.mxu0 0.0
      %1156 = vmatpush1.msra.mxu0 %v690
      %1157 = vmatprep.subr.mxu0 0.0
      %1158 = vmatpush1.msra.mxu0 0.0
      %1159 = vmatprep.subr.mxu0 0.0
      %1160 = vmatpush1.msra.mxu0 0.0
      %1161 = vmatprep.subr.mxu0 0.0
      %1162 = vmatpush1.msra.mxu0 0.0
      %1163 = vmatprep.subr.mxu0 0.0
      %1164 = vmatpush1.msra.mxu0 0.0
      %1165 = vmatprep.subr.mxu0 0.0
      %1166 = vmatpush1.msra.mxu0 0.0
      %1167 = vmatprep.subr.mxu0 0.0
      %1168 = vmatpush1.msra.mxu0 0.0
      %1169 = vmatprep.subr.mxu0 0.0
      %1170 = vmatpush1.msra.mxu0 0.0
      %1171 = vmatprep.subr.mxu0 0.0
      %1172 = vmatpush1.msra.mxu0 0.0
      %1173 = vmatprep.subr.mxu0 0.0
      %1174 = vmatpush1.msra.mxu0 0.0
      %1175 = vmatprep.subr.mxu0 0.0
      %1176 = vmatpush1.msra.mxu0 0.0
      %1177 = vmatprep.subr.mxu0 0.0
      %1178 = vmatpush1.msra.mxu0 0.0
      %1179 = vmatprep.subr.mxu0 0.0
      %1180 = vmatpush1.msra.mxu0 0.0
      %1181 = vmatprep.subr.mxu0 0.0
      %1182 = vmatpush1.msra.mxu0 0.0
      %1183 = vmatprep.subr.mxu0 0.0
      %1184 = vmatpush1.msra.mxu0 0.0
      %1185 = vmatprep.subr.mxu0 0.0
      %1186 = vmatpush1.msra.mxu0 0.0
      %1187 = vmatprep.subr.mxu0 0.0
      %1188 = vmatpush1.msra.mxu0 0.0
      %1189 = vmatprep.subr.mxu0 0.0
      %1190 = vmatpush1.msra.mxu0 0.0
      %1191 = vmatprep.subr.mxu0 0.0
      %1192 = vmatpush1.msra.mxu0 0.0
      %1193 = vmatprep.subr.mxu0 0.0
      %1194 = vmatpush1.msra.mxu0 0.0
      %1195 = vmatprep.subr.mxu0 0.0
      %1196 = vmatpush1.msra.mxu0 0.0
      %1197 = vmatprep.subr.mxu0 0.0
      %1198 = vmatpush1.msra.mxu0 0.0
      %1199 = vmatprep.subr.mxu0 0.0
      %1200 = vmatpush1.msra.mxu0 0.0
      %1201 = vmatprep.subr.mxu0 0.0
      %1202 = vmatpush1.msra.mxu0 0.0
      %1203 = vmatprep.subr.mxu0 0.0
      %1204 = vmatpush1.msra.mxu0 0.0
      %1205 = vmatprep.subr.mxu0 0.0
      %1206 = vmatpush1.msra.mxu0 0.0
      %1207 = vmatprep.subr.mxu0 0.0
      %1208 = vmatpush1.msra.mxu0 0.0
      %1209 = vmatprep.subr.mxu0 0.0
      %1210 = vmatpush1.msra.mxu0 0.0
      %1211 = vmatprep.subr.mxu0 0.0
      %1212 = vmatpush1.msra.mxu0 0.0
      %1213 = vmatprep.subr.mxu0 0.0
      %1214 = vmatpush1.msra.mxu0 0.0
      %1215 = vmatprep.subr.mxu0 0.0
      %1216 = vmatpush1.msra.mxu0 0.0
      %1217 = vmatprep.subr.mxu0 0.0
      %1218 = vmatpush1.msra.mxu0 0.0
      %1219 = vmatprep.mubr.f32.mxu0 0.0
      %1220 = vmatmul.mubr.f32.gmra.mrb[0].mxu0 %v1153
      %v1221 = vpop.f32.mrb[0].mxu0
      %v1222 = vadd.f32 0.0, %v1221
      %v1223 = vpop.f32.mrb[0].mxu0
      %1224 = vdwg.mxu0
      %s1225 = scalar_lea.vmem %s4, 48
      %v1226 = vld [vmem:[%s1225] sm:$0xff]
      %v1227 = vld [vmem:[%s1225 + $0x8] sm:$0x1]
      %v1229 = vsel %vm842, %v1222, 0
      %v1232 = vsel %vm596, %v1227, 0
      %1234 = vmatprep.subr.mxu0 0.0
      %1235 = vmatpush1.msra.mxu0 %v1226
      %1236 = vmatprep.subr.mxu0 0.0
      %1237 = vmatpush1.msra.mxu0 %v1232
      %1238 = vmatprep.subr.mxu0 0.0
      %1239 = vmatpush1.msra.mxu0 0.0
      %1240 = vmatprep.subr.mxu0 0.0
      %1241 = vmatpush1.msra.mxu0 0.0
      %1242 = vmatprep.subr.mxu0 0.0
      %1243 = vmatpush1.msra.mxu0 0.0
      %1244 = vmatprep.subr.mxu0 0.0
      %1245 = vmatpush1.msra.mxu0 0.0
      %1246 = vmatprep.subr.mxu0 0.0
      %1247 = vmatpush1.msra.mxu0 0.0
      %1248 = vmatprep.subr.mxu0 0.0
      %1249 = vmatpush1.msra.mxu0 0.0
      %1250 = vmatprep.subr.mxu0 0.0
      %1251 = vmatpush1.msra.mxu0 0.0
      %1252 = vmatprep.subr.mxu0 0.0
      %1253 = vmatpush1.msra.mxu0 0.0
      %1254 = vmatprep.subr.mxu0 0.0
      %1255 = vmatpush1.msra.mxu0 0.0
      %1256 = vmatprep.subr.mxu0 0.0
      %1257 = vmatpush1.msra.mxu0 0.0
      %1258 = vmatprep.subr.mxu0 0.0
      %1259 = vmatpush1.msra.mxu0 0.0
      %1260 = vmatprep.subr.mxu0 0.0
      %1261 = vmatpush1.msra.mxu0 0.0
      %1262 = vmatprep.subr.mxu0 0.0
      %1263 = vmatpush1.msra.mxu0 0.0
      %1264 = vmatprep.subr.mxu0 0.0
      %1265 = vmatpush1.msra.mxu0 0.0
      %1266 = vmatprep.subr.mxu0 0.0
      %1267 = vmatpush1.msra.mxu0 0.0
      %1268 = vmatprep.subr.mxu0 0.0
      %1269 = vmatpush1.msra.mxu0 0.0
      %1270 = vmatprep.subr.mxu0 0.0
      %1271 = vmatpush1.msra.mxu0 0.0
      %1272 = vmatprep.subr.mxu0 0.0
      %1273 = vmatpush1.msra.mxu0 0.0
      %1274 = vmatprep.subr.mxu0 0.0
      %1275 = vmatpush1.msra.mxu0 0.0
      %1276 = vmatprep.subr.mxu0 0.0
      %1277 = vmatpush1.msra.mxu0 0.0
      %1278 = vmatprep.subr.mxu0 0.0
      %1279 = vmatpush1.msra.mxu0 0.0
      %1280 = vmatprep.subr.mxu0 0.0
      %1281 = vmatpush1.msra.mxu0 0.0
      %1282 = vmatprep.subr.mxu0 0.0
      %1283 = vmatpush1.msra.mxu0 0.0
      %1284 = vmatprep.subr.mxu0 0.0
      %1285 = vmatpush1.msra.mxu0 0.0
      %1286 = vmatprep.subr.mxu0 0.0
      %1287 = vmatpush1.msra.mxu0 0.0
      %1288 = vmatprep.subr.mxu0 0.0
      %1289 = vmatpush1.msra.mxu0 0.0
      %1290 = vmatprep.subr.mxu0 0.0
      %1291 = vmatpush1.msra.mxu0 0.0
      %1292 = vmatprep.subr.mxu0 0.0
      %1293 = vmatpush1.msra.mxu0 0.0
      %1294 = vmatprep.subr.mxu0 0.0
      %1295 = vmatpush1.msra.mxu0 0.0
      %1296 = vmatprep.subr.mxu0 0.0
      %1297 = vmatpush1.msra.mxu0 0.0
      %1298 = vmatprep.mubr.f32.mxu0 0.0
      %1299 = vmatmul.mubr.f32.gmra.mrb[0].mxu0 %v1229
      %v1300 = vpop.f32.mrb[0].mxu0
      %v1301 = vadd.f32 0.0, %v1300
      %v1302 = vpop.f32.mrb[0].mxu0
      %1303 = vdwg.mxu0
      %v1304 = vadd.f32 %v1149, %v1301
      %s1305 = scalar_lea.vmem %s5, 16
      %v1306 = vld [vmem:[%s1305] sm:$0xf]
      %v1308 = vsel %vm685, %v1306, 0
      %1310 = vmatprep.subr.mxu0 0.0
      %1311 = vmatpush1.msra.mxu0 %v690
      %1312 = vmatprep.subr.mxu0 0.0
      %1313 = vmatpush1.msra.mxu0 0.0
      %1314 = vmatprep.subr.mxu0 0.0
      %1315 = vmatpush1.msra.mxu0 0.0
      %1316 = vmatprep.subr.mxu0 0.0
      %1317 = vmatpush1.msra.mxu0 0.0
      %1318 = vmatprep.subr.mxu0 0.0
      %1319 = vmatpush1.msra.mxu0 0.0
      %1320 = vmatprep.subr.mxu0 0.0
      %1321 = vmatpush1.msra.mxu0 0.0
      %1322 = vmatprep.subr.mxu0 0.0
      %1323 = vmatpush1.msra.mxu0 0.0
      %1324 = vmatprep.subr.mxu0 0.0
      %1325 = vmatpush1.msra.mxu0 0.0
      %1326 = vmatprep.subr.mxu0 0.0
      %1327 = vmatpush1.msra.mxu0 0.0
      %1328 = vmatprep.subr.mxu0 0.0
      %1329 = vmatpush1.msra.mxu0 0.0
      %1330 = vmatprep.subr.mxu0 0.0
      %1331 = vmatpush1.msra.mxu0 0.0
      %1332 = vmatprep.subr.mxu0 0.0
      %1333 = vmatpush1.msra.mxu0 0.0
      %1334 = vmatprep.subr.mxu0 0.0
      %1335 = vmatpush1.msra.mxu0 0.0
      %1336 = vmatprep.subr.mxu0 0.0
      %1337 = vmatpush1.msra.mxu0 0.0
      %1338 = vmatprep.subr.mxu0 0.0
      %1339 = vmatpush1.msra.mxu0 0.0
      %1340 = vmatprep.subr.mxu0 0.0
      %1341 = vmatpush1.msra.mxu0 0.0
      %1342 = vmatprep.subr.mxu0 0.0
      %1343 = vmatpush1.msra.mxu0 0.0
      %1344 = vmatprep.subr.mxu0 0.0
      %1345 = vmatpush1.msra.mxu0 0.0
      %1346 = vmatprep.subr.mxu0 0.0
      %1347 = vmatpush1.msra.mxu0 0.0
      %1348 = vmatprep.subr.mxu0 0.0
      %1349 = vmatpush1.msra.mxu0 0.0
      %1350 = vmatprep.subr.mxu0 0.0
      %1351 = vmatpush1.msra.mxu0 0.0
      %1352 = vmatprep.subr.mxu0 0.0
      %1353 = vmatpush1.msra.mxu0 0.0
      %1354 = vmatprep.subr.mxu0 0.0
      %1355 = vmatpush1.msra.mxu0 0.0
      %1356 = vmatprep.subr.mxu0 0.0
      %1357 = vmatpush1.msra.mxu0 0.0
      %1358 = vmatprep.subr.mxu0 0.0
      %1359 = vmatpush1.msra.mxu0 0.0
      %1360 = vmatprep.subr.mxu0 0.0
      %1361 = vmatpush1.msra.mxu0 0.0
      %1362 = vmatprep.subr.mxu0 0.0
      %1363 = vmatpush1.msra.mxu0 0.0
      %1364 = vmatprep.subr.mxu0 0.0
      %1365 = vmatpush1.msra.mxu0 0.0
      %1366 = vmatprep.subr.mxu0 0.0
      %1367 = vmatpush1.msra.mxu0 0.0
      %1368 = vmatprep.subr.mxu0 0.0
      %1369 = vmatpush1.msra.mxu0 0.0
      %1370 = vmatprep.subr.mxu0 0.0
      %1371 = vmatpush1.msra.mxu0 0.0
      %1372 = vmatprep.subr.mxu0 0.0
      %1373 = vmatpush1.msra.mxu0 0.0
      %1374 = vmatprep.mubr.f32.mxu0 0.0
      %1375 = vmatmul.mubr.f32.gmra.mrb[0].mxu0 %v1308
      %v1376 = vpop.f32.mrb[0].mxu0
      %v1377 = vadd.f32 0.0, %v1376
      %v1378 = vpop.f32.mrb[0].mxu0
      %1379 = vdwg.mxu0
      %s1380 = scalar_lea.vmem %s4, 64
      %v1381 = vld [vmem:[%s1380] sm:$0xff]
      %v1382 = vld [vmem:[%s1380 + $0x8] sm:$0x1]
      %v1384 = vsel %vm842, %v1377, 0
      %v1387 = vsel %vm596, %v1382, 0
      %1389 = vmatprep.subr.mxu0 0.0
      %1390 = vmatpush1.msra.mxu0 %v1381
      %1391 = vmatprep.subr.mxu0 0.0
      %1392 = vmatpush1.msra.mxu0 %v1387
      %1393 = vmatprep.subr.mxu0 0.0
      %1394 = vmatpush1.msra.mxu0 0.0
      %1395 = vmatprep.subr.mxu0 0.0
      %1396 = vmatpush1.msra.mxu0 0.0
      %1397 = vmatprep.subr.mxu0 0.0
      %1398 = vmatpush1.msra.mxu0 0.0
      %1399 = vmatprep.subr.mxu0 0.0
      %1400 = vmatpush1.msra.mxu0 0.0
      %1401 = vmatprep.subr.mxu0 0.0
      %1402 = vmatpush1.msra.mxu0 0.0
      %1403 = vmatprep.subr.mxu0 0.0
      %1404 = vmatpush1.msra.mxu0 0.0
      %1405 = vmatprep.subr.mxu0 0.0
      %1406 = vmatpush1.msra.mxu0 0.0
      %1407 = vmatprep.subr.mxu0 0.0
      %1408 = vmatpush1.msra.mxu0 0.0
      %1409 = vmatprep.subr.mxu0 0.0
      %1410 = vmatpush1.msra.mxu0 0.0
      %1411 = vmatprep.subr.mxu0 0.0
      %1412 = vmatpush1.msra.mxu0 0.0
      %1413 = vmatprep.subr.mxu0 0.0
      %1414 = vmatpush1.msra.mxu0 0.0
      %1415 = vmatprep.subr.mxu0 0.0
      %1416 = vmatpush1.msra.mxu0 0.0
      %1417 = vmatprep.subr.mxu0 0.0
      %1418 = vmatpush1.msra.mxu0 0.0
      %1419 = vmatprep.subr.mxu0 0.0
      %1420 = vmatpush1.msra.mxu0 0.0
      %1421 = vmatprep.subr.mxu0 0.0
      %1422 = vmatpush1.msra.mxu0 0.0
      %1423 = vmatprep.subr.mxu0 0.0
      %1424 = vmatpush1.msra.mxu0 0.0
      %1425 = vmatprep.subr.mxu0 0.0
      %1426 = vmatpush1.msra.mxu0 0.0
      %1427 = vmatprep.subr.mxu0 0.0
      %1428 = vmatpush1.msra.mxu0 0.0
      %1429 = vmatprep.subr.mxu0 0.0
      %1430 = vmatpush1.msra.mxu0 0.0
      %1431 = vmatprep.subr.mxu0 0.0
      %1432 = vmatpush1.msra.mxu0 0.0
      %1433 = vmatprep.subr.mxu0 0.0
      %1434 = vmatpush1.msra.mxu0 0.0
      %1435 = vmatprep.subr.mxu0 0.0
      %1436 = vmatpush1.msra.mxu0 0.0
      %1437 = vmatprep.subr.mxu0 0.0
      %1438 = vmatpush1.msra.mxu0 0.0
      %1439 = vmatprep.subr.mxu0 0.0
      %1440 = vmatpush1.msra.mxu0 0.0
      %1441 = vmatprep.subr.mxu0 0.0
      %1442 = vmatpush1.msra.mxu0 0.0
      %1443 = vmatprep.subr.mxu0 0.0
      %1444 = vmatpush1.msra.mxu0 0.0
      %1445 = vmatprep.subr.mxu0 0.0
      %1446 = vmatpush1.msra.mxu0 0.0
      %1447 = vmatprep.subr.mxu0 0.0
      %1448 = vmatpush1.msra.mxu0 0.0
      %1449 = vmatprep.subr.mxu0 0.0
      %1450 = vmatpush1.msra.mxu0 0.0
      %1451 = vmatprep.subr.mxu0 0.0
      %1452 = vmatpush1.msra.mxu0 0.0
      %1453 = vmatprep.mubr.f32.mxu0 0.0
      %1454 = vmatmul.mubr.f32.gmra.mrb[0].mxu0 %v1384
      %v1455 = vpop.f32.mrb[0].mxu0
      %v1456 = vadd.f32 0.0, %v1455
      %v1457 = vpop.f32.mrb[0].mxu0
      %1458 = vdwg.mxu0
      %v1459 = vadd.f32 %v1304, %v1456
      %s1460 = scalar_lea.vmem %s5, 20
      %v1461 = vld [vmem:[%s1460] sm:$0xf]
      %v1463 = vsel %vm685, %v1461, 0
      %1465 = vmatprep.subr.mxu0 0.0
      %1466 = vmatpush1.msra.mxu0 %v690
      %1467 = vmatprep.subr.mxu0 0.0
      %1468 = vmatpush1.msra.mxu0 0.0
      %1469 = vmatprep.subr.mxu0 0.0
      %1470 = vmatpush1.msra.mxu0 0.0
      %1471 = vmatprep.subr.mxu0 0.0
      %1472 = vmatpush1.msra.mxu0 0.0
      %1473 = vmatprep.subr.mxu0 0.0
      %1474 = vmatpush1.msra.mxu0 0.0
      %1475 = vmatprep.subr.mxu0 0.0
      %1476 = vmatpush1.msra.mxu0 0.0
      %1477 = vmatprep.subr.mxu0 0.0
      %1478 = vmatpush1.msra.mxu0 0.0
      %1479 = vmatprep.subr.mxu0 0.0
      %1480 = vmatpush1.msra.mxu0 0.0
      %1481 = vmatprep.subr.mxu0 0.0
      %1482 = vmatpush1.msra.mxu0 0.0
      %1483 = vmatprep.subr.mxu0 0.0
      %1484 = vmatpush1.msra.mxu0 0.0
      %1485 = vmatprep.subr.mxu0 0.0
      %1486 = vmatpush1.msra.mxu0 0.0
      %1487 = vmatprep.subr.mxu0 0.0
      %1488 = vmatpush1.msra.mxu0 0.0
      %1489 = vmatprep.subr.mxu0 0.0
      %1490 = vmatpush1.msra.mxu0 0.0
      %1491 = vmatprep.subr.mxu0 0.0
      %1492 = vmatpush1.msra.mxu0 0.0
      %1493 = vmatprep.subr.mxu0 0.0
      %1494 = vmatpush1.msra.mxu0 0.0
      %1495 = vmatprep.subr.mxu0 0.0
      %1496 = vmatpush1.msra.mxu0 0.0
      %1497 = vmatprep.subr.mxu0 0.0
      %1498 = vmatpush1.msra.mxu0 0.0
      %1499 = vmatprep.subr.mxu0 0.0
      %1500 = vmatpush1.msra.mxu0 0.0
      %1501 = vmatprep.subr.mxu0 0.0
      %1502 = vmatpush1.msra.mxu0 0.0
      %1503 = vmatprep.subr.mxu0 0.0
      %1504 = vmatpush1.msra.mxu0 0.0
      %1505 = vmatprep.subr.mxu0 0.0
      %1506 = vmatpush1.msra.mxu0 0.0
      %1507 = vmatprep.subr.mxu0 0.0
      %1508 = vmatpush1.msra.mxu0 0.0
      %1509 = vmatprep.subr.mxu0 0.0
      %1510 = vmatpush1.msra.mxu0 0.0
      %1511 = vmatprep.subr.mxu0 0.0
      %1512 = vmatpush1.msra.mxu0 0.0
      %1513 = vmatprep.subr.mxu0 0.0
      %1514 = vmatpush1.msra.mxu0 0.0
      %1515 = vmatprep.subr.mxu0 0.0
      %1516 = vmatpush1.msra.mxu0 0.0
      %1517 = vmatprep.subr.mxu0 0.0
      %1518 = vmatpush1.msra.mxu0 0.0
      %1519 = vmatprep.subr.mxu0 0.0
      %1520 = vmatpush1.msra.mxu0 0.0
      %1521 = vmatprep.subr.mxu0 0.0
      %1522 = vmatpush1.msra.mxu0 0.0
      %1523 = vmatprep.subr.mxu0 0.0
      %1524 = vmatpush1.msra.mxu0 0.0
      %1525 = vmatprep.subr.mxu0 0.0
      %1526 = vmatpush1.msra.mxu0 0.0
      %1527 = vmatprep.subr.mxu0 0.0
      %1528 = vmatpush1.msra.mxu0 0.0
      %1529 = vmatprep.mubr.f32.mxu0 0.0
      %1530 = vmatmul.mubr.f32.gmra.mrb[0].mxu0 %v1463
      %v1531 = vpop.f32.mrb[0].mxu0
      %v1532 = vadd.f32 0.0, %v1531
      %v1533 = vpop.f32.mrb[0].mxu0
      %1534 = vdwg.mxu0
      %s1535 = scalar_lea.vmem %s4, 80
      %v1536 = vld [vmem:[%s1535] sm:$0xff]
      %v1537 = vld [vmem:[%s1535 + $0x8] sm:$0x1]
      %v1539 = vsel %vm842, %v1532, 0
      %v1542 = vsel %vm596, %v1537, 0
      %1544 = vmatprep.subr.mxu0 0.0
      %1545 = vmatpush1.msra.mxu0 %v1536
      %1546 = vmatprep.subr.mxu0 0.0
      %1547 = vmatpush1.msra.mxu0 %v1542
      %1548 = vmatprep.subr.mxu0 0.0
      %1549 = vmatpush1.msra.mxu0 0.0
      %1550 = vmatprep.subr.mxu0 0.0
      %1551 = vmatpush1.msra.mxu0 0.0
      %1552 = vmatprep.subr.mxu0 0.0
      %1553 = vmatpush1.msra.mxu0 0.0
      %1554 = vmatprep.subr.mxu0 0.0
      %1555 = vmatpush1.msra.mxu0 0.0
      %1556 = vmatprep.subr.mxu0 0.0
      %1557 = vmatpush1.msra.mxu0 0.0
      %1558 = vmatprep.subr.mxu0 0.0
      %1559 = vmatpush1.msra.mxu0 0.0
      %1560 = vmatprep.subr.mxu0 0.0
      %1561 = vmatpush1.msra.mxu0 0.0
      %1562 = vmatprep.subr.mxu0 0.0
      %1563 = vmatpush1.msra.mxu0 0.0
      %1564 = vmatprep.subr.mxu0 0.0
      %1565 = vmatpush1.msra.mxu0 0.0
      %1566 = vmatprep.subr.mxu0 0.0
      %1567 = vmatpush1.msra.mxu0 0.0
      %1568 = vmatprep.subr.mxu0 0.0
      %1569 = vmatpush1.msra.mxu0 0.0
      %1570 = vmatprep.subr.mxu0 0.0
      %1571 = vmatpush1.msra.mxu0 0.0
      %1572 = vmatprep.subr.mxu0 0.0
      %1573 = vmatpush1.msra.mxu0 0.0
      %1574 = vmatprep.subr.mxu0 0.0
      %1575 = vmatpush1.msra.mxu0 0.0
      %1576 = vmatprep.subr.mxu0 0.0
      %1577 = vmatpush1.msra.mxu0 0.0
      %1578 = vmatprep.subr.mxu0 0.0
      %1579 = vmatpush1.msra.mxu0 0.0
      %1580 = vmatprep.subr.mxu0 0.0
      %1581 = vmatpush1.msra.mxu0 0.0
      %1582 = vmatprep.subr.mxu0 0.0
      %1583 = vmatpush1.msra.mxu0 0.0
      %1584 = vmatprep.subr.mxu0 0.0
      %1585 = vmatpush1.msra.mxu0 0.0
      %1586 = vmatprep.subr.mxu0 0.0
      %1587 = vmatpush1.msra.mxu0 0.0
      %1588 = vmatprep.subr.mxu0 0.0
      %1589 = vmatpush1.msra.mxu0 0.0
      %1590 = vmatprep.subr.mxu0 0.0
      %1591 = vmatpush1.msra.mxu0 0.0
      %1592 = vmatprep.subr.mxu0 0.0
      %1593 = vmatpush1.msra.mxu0 0.0
      %1594 = vmatprep.subr.mxu0 0.0
      %1595 = vmatpush1.msra.mxu0 0.0
      %1596 = vmatprep.subr.mxu0 0.0
      %1597 = vmatpush1.msra.mxu0 0.0
      %1598 = vmatprep.subr.mxu0 0.0
      %1599 = vmatpush1.msra.mxu0 0.0
      %1600 = vmatprep.subr.mxu0 0.0
      %1601 = vmatpush1.msra.mxu0 0.0
      %1602 = vmatprep.subr.mxu0 0.0
      %1603 = vmatpush1.msra.mxu0 0.0
      %1604 = vmatprep.subr.mxu0 0.0
      %1605 = vmatpush1.msra.mxu0 0.0
      %1606 = vmatprep.subr.mxu0 0.0
      %1607 = vmatpush1.msra.mxu0 0.0
      %1608 = vmatprep.mubr.f32.mxu0 0.0
      %1609 = vmatmul.mubr.f32.gmra.mrb[0].mxu0 %v1539
      %v1610 = vpop.f32.mrb[0].mxu0
      %v1611 = vadd.f32 0.0, %v1610
      %v1612 = vpop.f32.mrb[0].mxu0
      %1613 = vdwg.mxu0
      %v1614 = vadd.f32 %v1459, %v1611
      %s1615 = scalar_lea.vmem %s5, 24
      %v1616 = vld [vmem:[%s1615] sm:$0xf]
      %v1618 = vsel %vm685, %v1616, 0
      %1620 = vmatprep.subr.mxu0 0.0
      %1621 = vmatpush1.msra.mxu0 %v690
      %1622 = vmatprep.subr.mxu0 0.0
      %1623 = vmatpush1.msra.mxu0 0.0
      %1624 = vmatprep.subr.mxu0 0.0
      %1625 = vmatpush1.msra.mxu0 0.0
      %1626 = vmatprep.subr.mxu0 0.0
      %1627 = vmatpush1.msra.mxu0 0.0
      %1628 = vmatprep.subr.mxu0 0.0
      %1629 = vmatpush1.msra.mxu0 0.0
      %1630 = vmatprep.subr.mxu0 0.0
      %1631 = vmatpush1.msra.mxu0 0.0
      %1632 = vmatprep.subr.mxu0 0.0
      %1633 = vmatpush1.msra.mxu0 0.0
      %1634 = vmatprep.subr.mxu0 0.0
      %1635 = vmatpush1.msra.mxu0 0.0
      %1636 = vmatprep.subr.mxu0 0.0
      %1637 = vmatpush1.msra.mxu0 0.0
      %1638 = vmatprep.subr.mxu0 0.0
      %1639 = vmatpush1.msra.mxu0 0.0
      %1640 = vmatprep.subr.mxu0 0.0
      %1641 = vmatpush1.msra.mxu0 0.0
      %1642 = vmatprep.subr.mxu0 0.0
      %1643 = vmatpush1.msra.mxu0 0.0
      %1644 = vmatprep.subr.mxu0 0.0
      %1645 = vmatpush1.msra.mxu0 0.0
      %1646 = vmatprep.subr.mxu0 0.0
      %1647 = vmatpush1.msra.mxu0 0.0
      %1648 = vmatprep.subr.mxu0 0.0
      %1649 = vmatpush1.msra.mxu0 0.0
      %1650 = vmatprep.subr.mxu0 0.0
      %1651 = vmatpush1.msra.mxu0 0.0
      %1652 = vmatprep.subr.mxu0 0.0
      %1653 = vmatpush1.msra.mxu0 0.0
      %1654 = vmatprep.subr.mxu0 0.0
      %1655 = vmatpush1.msra.mxu0 0.0
      %1656 = vmatprep.subr.mxu0 0.0
      %1657 = vmatpush1.msra.mxu0 0.0
      %1658 = vmatprep.subr.mxu0 0.0
      %1659 = vmatpush1.msra.mxu0 0.0
      %1660 = vmatprep.subr.mxu0 0.0
      %1661 = vmatpush1.msra.mxu0 0.0
      %1662 = vmatprep.subr.mxu0 0.0
      %1663 = vmatpush1.msra.mxu0 0.0
      %1664 = vmatprep.subr.mxu0 0.0
      %1665 = vmatpush1.msra.mxu0 0.0
      %1666 = vmatprep.subr.mxu0 0.0
      %1667 = vmatpush1.msra.mxu0 0.0
      %1668 = vmatprep.subr.mxu0 0.0
      %1669 = vmatpush1.msra.mxu0 0.0
      %1670 = vmatprep.subr.mxu0 0.0
      %1671 = vmatpush1.msra.mxu0 0.0
      %1672 = vmatprep.subr.mxu0 0.0
      %1673 = vmatpush1.msra.mxu0 0.0
      %1674 = vmatprep.subr.mxu0 0.0
      %1675 = vmatpush1.msra.mxu0 0.0
      %1676 = vmatprep.subr.mxu0 0.0
      %1677 = vmatpush1.msra.mxu0 0.0
      %1678 = vmatprep.subr.mxu0 0.0
      %1679 = vmatpush1.msra.mxu0 0.0
      %1680 = vmatprep.subr.mxu0 0.0
      %1681 = vmatpush1.msra.mxu0 0.0
      %1682 = vmatprep.subr.mxu0 0.0
      %1683 = vmatpush1.msra.mxu0 0.0
      %1684 = vmatprep.mubr.f32.mxu0 0.0
      %1685 = vmatmul.mubr.f32.gmra.mrb[0].mxu0 %v1618
      %v1686 = vpop.f32.mrb[0].mxu0
      %v1687 = vadd.f32 0.0, %v1686
      %v1688 = vpop.f32.mrb[0].mxu0
      %1689 = vdwg.mxu0
      %s1690 = scalar_lea.vmem %s4, 96
      %v1691 = vld [vmem:[%s1690] sm:$0xff]
      %v1692 = vld [vmem:[%s1690 + $0x8] sm:$0x1]
      %v1694 = vsel %vm842, %v1687, 0
      %v1697 = vsel %vm596, %v1692, 0
      %1699 = vmatprep.subr.mxu0 0.0
      %1700 = vmatpush1.msra.mxu0 %v1691
      %1701 = vmatprep.subr.mxu0 0.0
      %1702 = vmatpush1.msra.mxu0 %v1697
      %1703 = vmatprep.subr.mxu0 0.0
      %1704 = vmatpush1.msra.mxu0 0.0
      %1705 = vmatprep.subr.mxu0 0.0
      %1706 = vmatpush1.msra.mxu0 0.0
      %1707 = vmatprep.subr.mxu0 0.0
      %1708 = vmatpush1.msra.mxu0 0.0
      %1709 = vmatprep.subr.mxu0 0.0
      %1710 = vmatpush1.msra.mxu0 0.0
      %1711 = vmatprep.subr.mxu0 0.0
      %1712 = vmatpush1.msra.mxu0 0.0
      %1713 = vmatprep.subr.mxu0 0.0
      %1714 = vmatpush1.msra.mxu0 0.0
      %1715 = vmatprep.subr.mxu0 0.0
      %1716 = vmatpush1.msra.mxu0 0.0
      %1717 = vmatprep.subr.mxu0 0.0
      %1718 = vmatpush1.msra.mxu0 0.0
      %1719 = vmatprep.subr.mxu0 0.0
      %1720 = vmatpush1.msra.mxu0 0.0
      %1721 = vmatprep.subr.mxu0 0.0
      %1722 = vmatpush1.msra.mxu0 0.0
      %1723 = vmatprep.subr.mxu0 0.0
      %1724 = vmatpush1.msra.mxu0 0.0
      %1725 = vmatprep.subr.mxu0 0.0
      %1726 = vmatpush1.msra.mxu0 0.0
      %1727 = vmatprep.subr.mxu0 0.0
      %1728 = vmatpush1.msra.mxu0 0.0
      %1729 = vmatprep.subr.mxu0 0.0
      %1730 = vmatpush1.msra.mxu0 0.0
      %1731 = vmatprep.subr.mxu0 0.0
      %1732 = vmatpush1.msra.mxu0 0.0
      %1733 = vmatprep.subr.mxu0 0.0
      %1734 = vmatpush1.msra.mxu0 0.0
      %1735 = vmatprep.subr.mxu0 0.0
      %1736 = vmatpush1.msra.mxu0 0.0
      %1737 = vmatprep.subr.mxu0 0.0
      %1738 = vmatpush1.msra.mxu0 0.0
      %1739 = vmatprep.subr.mxu0 0.0
      %1740 = vmatpush1.msra.mxu0 0.0
      %1741 = vmatprep.subr.mxu0 0.0
      %1742 = vmatpush1.msra.mxu0 0.0
      %1743 = vmatprep.subr.mxu0 0.0
      %1744 = vmatpush1.msra.mxu0 0.0
      %1745 = vmatprep.subr.mxu0 0.0
      %1746 = vmatpush1.msra.mxu0 0.0
      %1747 = vmatprep.subr.mxu0 0.0
      %1748 = vmatpush1.msra.mxu0 0.0
      %1749 = vmatprep.subr.mxu0 0.0
      %1750 = vmatpush1.msra.mxu0 0.0
      %1751 = vmatprep.subr.mxu0 0.0
      %1752 = vmatpush1.msra.mxu0 0.0
      %1753 = vmatprep.subr.mxu0 0.0
      %1754 = vmatpush1.msra.mxu0 0.0
      %1755 = vmatprep.subr.mxu0 0.0
      %1756 = vmatpush1.msra.mxu0 0.0
      %1757 = vmatprep.subr.mxu0 0.0
      %1758 = vmatpush1.msra.mxu0 0.0
      %1759 = vmatprep.subr.mxu0 0.0
      %1760 = vmatpush1.msra.mxu0 0.0
      %1761 = vmatprep.subr.mxu0 0.0
      %1762 = vmatpush1.msra.mxu0 0.0
      %1763 = vmatprep.mubr.f32.mxu0 0.0
      %1764 = vmatmul.mubr.f32.gmra.mrb[0].mxu0 %v1694
      %v1765 = vpop.f32.mrb[0].mxu0
      %v1766 = vadd.f32 0.0, %v1765
      %v1767 = vpop.f32.mrb[0].mxu0
      %1768 = vdwg.mxu0
      %v1769 = vadd.f32 %v1614, %v1766
      %s1770 = scalar_lea.vmem %s5, 28
      %v1771 = vld [vmem:[%s1770] sm:$0xf]
      %v1773 = vsel %vm685, %v1771, 0
      %1775 = vmatprep.subr.mxu0 0.0
      %1776 = vmatpush1.msra.mxu0 %v690
      %1777 = vmatprep.subr.mxu0 0.0
      %1778 = vmatpush1.msra.mxu0 0.0
      %1779 = vmatprep.subr.mxu0 0.0
      %1780 = vmatpush1.msra.mxu0 0.0
      %1781 = vmatprep.subr.mxu0 0.0
      %1782 = vmatpush1.msra.mxu0 0.0
      %1783 = vmatprep.subr.mxu0 0.0
      %1784 = vmatpush1.msra.mxu0 0.0
      %1785 = vmatprep.subr.mxu0 0.0
      %1786 = vmatpush1.msra.mxu0 0.0
      %1787 = vmatprep.subr.mxu0 0.0
      %1788 = vmatpush1.msra.mxu0 0.0
      %1789 = vmatprep.subr.mxu0 0.0
      %1790 = vmatpush1.msra.mxu0 0.0
      %1791 = vmatprep.subr.mxu0 0.0
      %1792 = vmatpush1.msra.mxu0 0.0
      %1793 = vmatprep.subr.mxu0 0.0
      %1794 = vmatpush1.msra.mxu0 0.0
      %1795 = vmatprep.subr.mxu0 0.0
      %1796 = vmatpush1.msra.mxu0 0.0
      %1797 = vmatprep.subr.mxu0 0.0
      %1798 = vmatpush1.msra.mxu0 0.0
      %1799 = vmatprep.subr.mxu0 0.0
      %1800 = vmatpush1.msra.mxu0 0.0
      %1801 = vmatprep.subr.mxu0 0.0
      %1802 = vmatpush1.msra.mxu0 0.0
      %1803 = vmatprep.subr.mxu0 0.0
      %1804 = vmatpush1.msra.mxu0 0.0
      %1805 = vmatprep.subr.mxu0 0.0
      %1806 = vmatpush1.msra.mxu0 0.0
      %1807 = vmatprep.subr.mxu0 0.0
      %1808 = vmatpush1.msra.mxu0 0.0
      %1809 = vmatprep.subr.mxu0 0.0
      %1810 = vmatpush1.msra.mxu0 0.0
      %1811 = vmatprep.subr.mxu0 0.0
      %1812 = vmatpush1.msra.mxu0 0.0
      %1813 = vmatprep.subr.mxu0 0.0
      %1814 = vmatpush1.msra.mxu0 0.0
      %1815 = vmatprep.subr.mxu0 0.0
      %1816 = vmatpush1.msra.mxu0 0.0
      %1817 = vmatprep.subr.mxu0 0.0
      %1818 = vmatpush1.msra.mxu0 0.0
      %1819 = vmatprep.subr.mxu0 0.0
      %1820 = vmatpush1.msra.mxu0 0.0
      %1821 = vmatprep.subr.mxu0 0.0
      %1822 = vmatpush1.msra.mxu0 0.0
      %1823 = vmatprep.subr.mxu0 0.0
      %1824 = vmatpush1.msra.mxu0 0.0
      %1825 = vmatprep.subr.mxu0 0.0
      %1826 = vmatpush1.msra.mxu0 0.0
      %1827 = vmatprep.subr.mxu0 0.0
      %1828 = vmatpush1.msra.mxu0 0.0
      %1829 = vmatprep.subr.mxu0 0.0
      %1830 = vmatpush1.msra.mxu0 0.0
      %1831 = vmatprep.subr.mxu0 0.0
      %1832 = vmatpush1.msra.mxu0 0.0
      %1833 = vmatprep.subr.mxu0 0.0
      %1834 = vmatpush1.msra.mxu0 0.0
      %1835 = vmatprep.subr.mxu0 0.0
      %1836 = vmatpush1.msra.mxu0 0.0
      %1837 = vmatprep.subr.mxu0 0.0
      %1838 = vmatpush1.msra.mxu0 0.0
      %1839 = vmatprep.mubr.f32.mxu0 0.0
      %1840 = vmatmul.mubr.f32.gmra.mrb[0].mxu0 %v1773
      %v1841 = vpop.f32.mrb[0].mxu0
      %v1842 = vadd.f32 0.0, %v1841
      %v1843 = vpop.f32.mrb[0].mxu0
      %1844 = vdwg.mxu0
      %s1845 = scalar_lea.vmem %s4, 112
      %v1846 = vld [vmem:[%s1845] sm:$0xff]
      %v1847 = vld [vmem:[%s1845 + $0x8] sm:$0x1]
      %v1849 = vsel %vm842, %v1842, 0
      %v1852 = vsel %vm596, %v1847, 0
      %1854 = vmatprep.subr.mxu0 0.0
      %1855 = vmatpush1.msra.mxu0 %v1846
      %1856 = vmatprep.subr.mxu0 0.0
      %1857 = vmatpush1.msra.mxu0 %v1852
      %1858 = vmatprep.subr.mxu0 0.0
      %1859 = vmatpush1.msra.mxu0 0.0
      %1860 = vmatprep.subr.mxu0 0.0
      %1861 = vmatpush1.msra.mxu0 0.0
      %1862 = vmatprep.subr.mxu0 0.0
      %1863 = vmatpush1.msra.mxu0 0.0
      %1864 = vmatprep.subr.mxu0 0.0
      %1865 = vmatpush1.msra.mxu0 0.0
      %1866 = vmatprep.subr.mxu0 0.0
      %1867 = vmatpush1.msra.mxu0 0.0
      %1868 = vmatprep.subr.mxu0 0.0
      %1869 = vmatpush1.msra.mxu0 0.0
      %1870 = vmatprep.subr.mxu0 0.0
      %1871 = vmatpush1.msra.mxu0 0.0
      %1872 = vmatprep.subr.mxu0 0.0
      %1873 = vmatpush1.msra.mxu0 0.0
      %1874 = vmatprep.subr.mxu0 0.0
      %1875 = vmatpush1.msra.mxu0 0.0
      %1876 = vmatprep.subr.mxu0 0.0
      %1877 = vmatpush1.msra.mxu0 0.0
      %1878 = vmatprep.subr.mxu0 0.0
      %1879 = vmatpush1.msra.mxu0 0.0
      %1880 = vmatprep.subr.mxu0 0.0
      %1881 = vmatpush1.msra.mxu0 0.0
      %1882 = vmatprep.subr.mxu0 0.0
      %1883 = vmatpush1.msra.mxu0 0.0
      %1884 = vmatprep.subr.mxu0 0.0
      %1885 = vmatpush1.msra.mxu0 0.0
      %1886 = vmatprep.subr.mxu0 0.0
      %1887 = vmatpush1.msra.mxu0 0.0
      %1888 = vmatprep.subr.mxu0 0.0
      %1889 = vmatpush1.msra.mxu0 0.0
      %1890 = vmatprep.subr.mxu0 0.0
      %1891 = vmatpush1.msra.mxu0 0.0
      %1892 = vmatprep.subr.mxu0 0.0
      %1893 = vmatpush1.msra.mxu0 0.0
      %1894 = vmatprep.subr.mxu0 0.0
      %1895 = vmatpush1.msra.mxu0 0.0
      %1896 = vmatprep.subr.mxu0 0.0
      %1897 = vmatpush1.msra.mxu0 0.0
      %1898 = vmatprep.subr.mxu0 0.0
      %1899 = vmatpush1.msra.mxu0 0.0
      %1900 = vmatprep.subr.mxu0 0.0
      %1901 = vmatpush1.msra.mxu0 0.0
      %1902 = vmatprep.subr.mxu0 0.0
      %1903 = vmatpush1.msra.mxu0 0.0
      %1904 = vmatprep.subr.mxu0 0.0
      %1905 = vmatpush1.msra.mxu0 0.0
      %1906 = vmatprep.subr.mxu0 0.0
      %1907 = vmatpush1.msra.mxu0 0.0
      %1908 = vmatprep.subr.mxu0 0.0
      %1909 = vmatpush1.msra.mxu0 0.0
      %1910 = vmatprep.subr.mxu0 0.0
      %1911 = vmatpush1.msra.mxu0 0.0
      %1912 = vmatprep.subr.mxu0 0.0
      %1913 = vmatpush1.msra.mxu0 0.0
      %1914 = vmatprep.subr.mxu0 0.0
      %1915 = vmatpush1.msra.mxu0 0.0
      %1916 = vmatprep.subr.mxu0 0.0
      %1917 = vmatpush1.msra.mxu0 0.0
      %1918 = vmatprep.mubr.f32.mxu0 0.0
      %1919 = vmatmul.mubr.f32.gmra.mrb[0].mxu0 %v1849
      %v1920 = vpop.f32.mrb[0].mxu0
      %v1921 = vadd.f32 0.0, %v1920
      %v1922 = vpop.f32.mrb[0].mxu0
      %1923 = vdwg.mxu0
      %v1924 = vadd.f32 %v1769, %v1921
      %s1925 = scalar_lea.vmem %s5, 32
      %v1926 = vld [vmem:[%s1925] sm:$0xf]
      %v1928 = vsel %vm685, %v1926, 0
      %1930 = vmatprep.subr.mxu0 0.0
      %1931 = vmatpush1.msra.mxu0 %v690
      %1932 = vmatprep.subr.mxu0 0.0
      %1933 = vmatpush1.msra.mxu0 0.0
      %1934 = vmatprep.subr.mxu0 0.0
      %1935 = vmatpush1.msra.mxu0 0.0
      %1936 = vmatprep.subr.mxu0 0.0
      %1937 = vmatpush1.msra.mxu0 0.0
      %1938 = vmatprep.subr.mxu0 0.0
      %1939 = vmatpush1.msra.mxu0 0.0
      %1940 = vmatprep.subr.mxu0 0.0
      %1941 = vmatpush1.msra.mxu0 0.0
      %1942 = vmatprep.subr.mxu0 0.0
      %1943 = vmatpush1.msra.mxu0 0.0
      %1944 = vmatprep.subr.mxu0 0.0
      %1945 = vmatpush1.msra.mxu0 0.0
      %1946 = vmatprep.subr.mxu0 0.0
      %1947 = vmatpush1.msra.mxu0 0.0
      %1948 = vmatprep.subr.mxu0 0.0
      %1949 = vmatpush1.msra.mxu0 0.0
      %1950 = vmatprep.subr.mxu0 0.0
      %1951 = vmatpush1.msra.mxu0 0.0
      %1952 = vmatprep.subr.mxu0 0.0
      %1953 = vmatpush1.msra.mxu0 0.0
      %1954 = vmatprep.subr.mxu0 0.0
      %1955 = vmatpush1.msra.mxu0 0.0
      %1956 = vmatprep.subr.mxu0 0.0
      %1957 = vmatpush1.msra.mxu0 0.0
      %1958 = vmatprep.subr.mxu0 0.0
      %1959 = vmatpush1.msra.mxu0 0.0
      %1960 = vmatprep.subr.mxu0 0.0
      %1961 = vmatpush1.msra.mxu0 0.0
      %1962 = vmatprep.subr.mxu0 0.0
      %1963 = vmatpush1.msra.mxu0 0.0
      %1964 = vmatprep.subr.mxu0 0.0
      %1965 = vmatpush1.msra.mxu0 0.0
      %1966 = vmatprep.subr.mxu0 0.0
      %1967 = vmatpush1.msra.mxu0 0.0
      %1968 = vmatprep.subr.mxu0 0.0
      %1969 = vmatpush1.msra.mxu0 0.0
      %1970 = vmatprep.subr.mxu0 0.0
      %1971 = vmatpush1.msra.mxu0 0.0
      %1972 = vmatprep.subr.mxu0 0.0
      %1973 = vmatpush1.msra.mxu0 0.0
      %1974 = vmatprep.subr.mxu0 0.0
      %1975 = vmatpush1.msra.mxu0 0.0
      %1976 = vmatprep.subr.mxu0 0.0
      %1977 = vmatpush1.msra.mxu0 0.0
      %1978 = vmatprep.subr.mxu0 0.0
      %1979 = vmatpush1.msra.mxu0 0.0
      %1980 = vmatprep.subr.mxu0 0.0
      %1981 = vmatpush1.msra.mxu0 0.0
      %1982 = vmatprep.subr.mxu0 0.0
      %1983 = vmatpush1.msra.mxu0 0.0
      %1984 = vmatprep.subr.mxu0 0.0
      %1985 = vmatpush1.msra.mxu0 0.0
      %1986 = vmatprep.subr.mxu0 0.0
      %1987 = vmatpush1.msra.mxu0 0.0
      %1988 = vmatprep.subr.mxu0 0.0
      %1989 = vmatpush1.msra.mxu0 0.0
      %1990 = vmatprep.subr.mxu0 0.0
      %1991 = vmatpush1.msra.mxu0 0.0
      %1992 = vmatprep.subr.mxu0 0.0
      %1993 = vmatpush1.msra.mxu0 0.0
      %1994 = vmatprep.mubr.f32.mxu0 0.0
      %1995 = vmatmul.mubr.f32.gmra.mrb[0].mxu0 %v1928
      %v1996 = vpop.f32.mrb[0].mxu0
      %v1997 = vadd.f32 0.0, %v1996
      %v1998 = vpop.f32.mrb[0].mxu0
      %1999 = vdwg.mxu0
      %s2000 = scalar_lea.vmem %s4, 128
      %v2001 = vld [vmem:[%s2000] sm:$0xff]
      %v2002 = vld [vmem:[%s2000 + $0x8] sm:$0x1]
      %v2004 = vsel %vm842, %v1997, 0
      %v2007 = vsel %vm596, %v2002, 0
      %2009 = vmatprep.subr.mxu0 0.0
      %2010 = vmatpush1.msra.mxu0 %v2001
      %2011 = vmatprep.subr.mxu0 0.0
      %2012 = vmatpush1.msra.mxu0 %v2007
      %2013 = vmatprep.subr.mxu0 0.0
      %2014 = vmatpush1.msra.mxu0 0.0
      %2015 = vmatprep.subr.mxu0 0.0
      %2016 = vmatpush1.msra.mxu0 0.0
      %2017 = vmatprep.subr.mxu0 0.0
      %2018 = vmatpush1.msra.mxu0 0.0
      %2019 = vmatprep.subr.mxu0 0.0
      %2020 = vmatpush1.msra.mxu0 0.0
      %2021 = vmatprep.subr.mxu0 0.0
      %2022 = vmatpush1.msra.mxu0 0.0
      %2023 = vmatprep.subr.mxu0 0.0
      %2024 = vmatpush1.msra.mxu0 0.0
      %2025 = vmatprep.subr.mxu0 0.0
      %2026 = vmatpush1.msra.mxu0 0.0
      %2027 = vmatprep.subr.mxu0 0.0
      %2028 = vmatpush1.msra.mxu0 0.0
      %2029 = vmatprep.subr.mxu0 0.0
      %2030 = vmatpush1.msra.mxu0 0.0
      %2031 = vmatprep.subr.mxu0 0.0
      %2032 = vmatpush1.msra.mxu0 0.0
      %2033 = vmatprep.subr.mxu0 0.0
      %2034 = vmatpush1.msra.mxu0 0.0
      %2035 = vmatprep.subr.mxu0 0.0
      %2036 = vmatpush1.msra.mxu0 0.0
      %2037 = vmatprep.subr.mxu0 0.0
      %2038 = vmatpush1.msra.mxu0 0.0
      %2039 = vmatprep.subr.mxu0 0.0
      %2040 = vmatpush1.msra.mxu0 0.0
      %2041 = vmatprep.subr.mxu0 0.0
      %2042 = vmatpush1.msra.mxu0 0.0
      %2043 = vmatprep.subr.mxu0 0.0
      %2044 = vmatpush1.msra.mxu0 0.0
      %2045 = vmatprep.subr.mxu0 0.0
      %2046 = vmatpush1.msra.mxu0 0.0
      %2047 = vmatprep.subr.mxu0 0.0
      %2048 = vmatpush1.msra.mxu0 0.0
      %2049 = vmatprep.subr.mxu0 0.0
      %2050 = vmatpush1.msra.mxu0 0.0
      %2051 = vmatprep.subr.mxu0 0.0
      %2052 = vmatpush1.msra.mxu0 0.0
      %2053 = vmatprep.subr.mxu0 0.0
      %2054 = vmatpush1.msra.mxu0 0.0
      %2055 = vmatprep.subr.mxu0 0.0
      %2056 = vmatpush1.msra.mxu0 0.0
      %2057 = vmatprep.subr.mxu0 0.0
      %2058 = vmatpush1.msra.mxu0 0.0
      %2059 = vmatprep.subr.mxu0 0.0
      %2060 = vmatpush1.msra.mxu0 0.0
      %2061 = vmatprep.subr.mxu0 0.0
      %2062 = vmatpush1.msra.mxu0 0.0
      %2063 = vmatprep.subr.mxu0 0.0
      %2064 = vmatpush1.msra.mxu0 0.0
      %2065 = vmatprep.subr.mxu0 0.0
      %2066 = vmatpush1.msra.mxu0 0.0
      %2067 = vmatprep.subr.mxu0 0.0
      %2068 = vmatpush1.msra.mxu0 0.0
      %2069 = vmatprep.subr.mxu0 0.0
      %2070 = vmatpush1.msra.mxu0 0.0
      %2071 = vmatprep.subr.mxu0 0.0
      %2072 = vmatpush1.msra.mxu0 0.0
      %2073 = vmatprep.mubr.f32.mxu0 0.0
      %2074 = vmatmul.mubr.f32.gmra.mrb[0].mxu0 %v2004
      %v2075 = vpop.f32.mrb[0].mxu0
      %v2076 = vadd.f32 0.0, %v2075
      %v2077 = vpop.f32.mrb[0].mxu0
      %2078 = vdwg.mxu0
      %v2079 = vadd.f32 %v1924, %v2076
      %v2080 = vld [vmem:[%s6] sm:$0xf]
      %2082 = vset.pattern.permute.xlu0 0
      %2083 = vperm.xlu0 %2082, %v2080
      %v2084 = vpop.permute.xlu0 %2083
      %v2086 = vadd.f32 %v2079, %v2084
      %v2087 = vmax.f32 %v2086, 0.0
      %v2088 = vld [vmem:[%s7] sm:$0xf]
      %v2090 = vsel %vm685, %v2088, 0
      %v2093 = vsel %vm689, %v2087, 0
      %2095 = vmatprep.subr.mxu0 0.0
      %2096 = vmatpush1.msra.mxu0 %v2093
      %2097 = vmatprep.subr.mxu0 0.0
      %2098 = vmatpush1.msra.mxu0 0.0
      %2099 = vmatprep.subr.mxu0 0.0
      %2100 = vmatpush1.msra.mxu0 0.0
      %2101 = vmatprep.subr.mxu0 0.0
      %2102 = vmatpush1.msra.mxu0 0.0
      %2103 = vmatprep.subr.mxu0 0.0
      %2104 = vmatpush1.msra.mxu0 0.0
      %2105 = vmatprep.subr.mxu0 0.0
      %2106 = vmatpush1.msra.mxu0 0.0
      %2107 = vmatprep.subr.mxu0 0.0
      %2108 = vmatpush1.msra.mxu0 0.0
      %2109 = vmatprep.subr.mxu0 0.0
      %2110 = vmatpush1.msra.mxu0 0.0
      %2111 = vmatprep.subr.mxu0 0.0
      %2112 = vmatpush1.msra.mxu0 0.0
      %2113 = vmatprep.subr.mxu0 0.0
      %2114 = vmatpush1.msra.mxu0 0.0
      %2115 = vmatprep.subr.mxu0 0.0
      %2116 = vmatpush1.msra.mxu0 0.0
      %2117 = vmatprep.subr.mxu0 0.0
      %2118 = vmatpush1.msra.mxu0 0.0
      %2119 = vmatprep.subr.mxu0 0.0
      %2120 = vmatpush1.msra.mxu0 0.0
      %2121 = vmatprep.subr.mxu0 0.0
      %2122 = vmatpush1.msra.mxu0 0.0
      %2123 = vmatprep.subr.mxu0 0.0
      %2124 = vmatpush1.msra.mxu0 0.0
      %2125 = vmatprep.subr.mxu0 0.0
      %2126 = vmatpush1.msra.mxu0 0.0
      %2127 = vmatprep.subr.mxu0 0.0
      %2128 = vmatpush1.msra.mxu0 0.0
      %2129 = vmatprep.subr.mxu0 0.0
      %2130 = vmatpush1.msra.mxu0 0.0
      %2131 = vmatprep.subr.mxu0 0.0
      %2132 = vmatpush1.msra.mxu0 0.0
      %2133 = vmatprep.subr.mxu0 0.0
      %2134 = vmatpush1.msra.mxu0 0.0
      %2135 = vmatprep.subr.mxu0 0.0
      %2136 = vmatpush1.msra.mxu0 0.0
      %2137 = vmatprep.subr.mxu0 0.0
      %2138 = vmatpush1.msra.mxu0 0.0
      %2139 = vmatprep.subr.mxu0 0.0
      %2140 = vmatpush1.msra.mxu0 0.0
      %2141 = vmatprep.subr.mxu0 0.0
      %2142 = vmatpush1.msra.mxu0 0.0
      %2143 = vmatprep.subr.mxu0 0.0
      %2144 = vmatpush1.msra.mxu0 0.0
      %2145 = vmatprep.subr.mxu0 0.0
      %2146 = vmatpush1.msra.mxu0 0.0
      %2147 = vmatprep.subr.mxu0 0.0
      %2148 = vmatpush1.msra.mxu0 0.0
      %2149 = vmatprep.subr.mxu0 0.0
      %2150 = vmatpush1.msra.mxu0 0.0
      %2151 = vmatprep.subr.mxu0 0.0
      %2152 = vmatpush1.msra.mxu0 0.0
      %2153 = vmatprep.subr.mxu0 0.0
      %2154 = vmatpush1.msra.mxu0 0.0
      %2155 = vmatprep.subr.mxu0 0.0
      %2156 = vmatpush1.msra.mxu0 0.0
      %2157 = vmatprep.subr.mxu0 0.0
      %2158 = vmatpush1.msra.mxu0 0.0
      %2159 = vmatprep.mubr.f32.mxu0 0.0
      %2160 = vmatmul.mubr.f32.gmra.mrb[0].mxu0 %v2090
      %v2161 = vpop.f32.mrb[0].mxu0
      %v2162 = vadd.f32 0.0, %v2161
      %v2163 = vpop.f32.mrb[0].mxu0
      %2164 = vdwg.mxu0
      %s2165 = scalar_lea.vmem %s7, 4
      %v2166 = vld [vmem:[%s2165] sm:$0xf]
      %v2168 = vsel %vm685, %v2166, 0
      %2170 = vmatprep.subr.mxu0 0.0
      %2171 = vmatpush1.msra.mxu0 %v2093
      %2172 = vmatprep.subr.mxu0 0.0
      %2173 = vmatpush1.msra.mxu0 0.0
      %2174 = vmatprep.subr.mxu0 0.0
      %2175 = vmatpush1.msra.mxu0 0.0
      %2176 = vmatprep.subr.mxu0 0.0
      %2177 = vmatpush1.msra.mxu0 0.0
      %2178 = vmatprep.subr.mxu0 0.0
      %2179 = vmatpush1.msra.mxu0 0.0
      %2180 = vmatprep.subr.mxu0 0.0
      %2181 = vmatpush1.msra.mxu0 0.0
      %2182 = vmatprep.subr.mxu0 0.0
      %2183 = vmatpush1.msra.mxu0 0.0
      %2184 = vmatprep.subr.mxu0 0.0
      %2185 = vmatpush1.msra.mxu0 0.0
      %2186 = vmatprep.subr.mxu0 0.0
      %2187 = vmatpush1.msra.mxu0 0.0
      %2188 = vmatprep.subr.mxu0 0.0
      %2189 = vmatpush1.msra.mxu0 0.0
      %2190 = vmatprep.subr.mxu0 0.0
      %2191 = vmatpush1.msra.mxu0 0.0
      %2192 = vmatprep.subr.mxu0 0.0
      %2193 = vmatpush1.msra.mxu0 0.0
      %2194 = vmatprep.subr.mxu0 0.0
      %2195 = vmatpush1.msra.mxu0 0.0
      %2196 = vmatprep.subr.mxu0 0.0
      %2197 = vmatpush1.msra.mxu0 0.0
      %2198 = vmatprep.subr.mxu0 0.0
      %2199 = vmatpush1.msra.mxu0 0.0
      %2200 = vmatprep.subr.mxu0 0.0
      %2201 = vmatpush1.msra.mxu0 0.0
      %2202 = vmatprep.subr.mxu0 0.0
      %2203 = vmatpush1.msra.mxu0 0.0
      %2204 = vmatprep.subr.mxu0 0.0
      %2205 = vmatpush1.msra.mxu0 0.0
      %2206 = vmatprep.subr.mxu0 0.0
      %2207 = vmatpush1.msra.mxu0 0.0
      %2208 = vmatprep.subr.mxu0 0.0
      %2209 = vmatpush1.msra.mxu0 0.0
      %2210 = vmatprep.subr.mxu0 0.0
      %2211 = vmatpush1.msra.mxu0 0.0
      %2212 = vmatprep.subr.mxu0 0.0
      %2213 = vmatpush1.msra.mxu0 0.0
      %2214 = vmatprep.subr.mxu0 0.0
      %2215 = vmatpush1.msra.mxu0 0.0
      %2216 = vmatprep.subr.mxu0 0.0
      %2217 = vmatpush1.msra.mxu0 0.0
      %2218 = vmatprep.subr.mxu0 0.0
      %2219 = vmatpush1.msra.mxu0 0.0
      %2220 = vmatprep.subr.mxu0 0.0
      %2221 = vmatpush1.msra.mxu0 0.0
      %2222 = vmatprep.subr.mxu0 0.0
      %2223 = vmatpush1.msra.mxu0 0.0
      %2224 = vmatprep.subr.mxu0 0.0
      %2225 = vmatpush1.msra.mxu0 0.0
      %2226 = vmatprep.subr.mxu0 0.0
      %2227 = vmatpush1.msra.mxu0 0.0
      %2228 = vmatprep.subr.mxu0 0.0
      %2229 = vmatpush1.msra.mxu0 0.0
      %2230 = vmatprep.subr.mxu0 0.0
      %2231 = vmatpush1.msra.mxu0 0.0
      %2232 = vmatprep.subr.mxu0 0.0
      %2233 = vmatpush1.msra.mxu0 0.0
      %2234 = vmatprep.mubr.f32.mxu0 0.0
      %2235 = vmatmul.mubr.f32.gmra.mrb[0].mxu0 %v2168
      %v2236 = vpop.f32.mrb[0].mxu0
      %v2237 = vadd.f32 0.0, %v2236
      %v2238 = vpop.f32.mrb[0].mxu0
      %2239 = vdwg.mxu0
      %v2241 = vsel %vm842, %v2237, 0
      %2243 = vmatprep.subr.mxu0 0.0
      %2244 = vmatpush1.msra.mxu0 %v840
      %2245 = vmatprep.subr.mxu0 0.0
      %2246 = vmatpush1.msra.mxu0 %v847
      %2247 = vmatprep.subr.mxu0 0.0
      %2248 = vmatpush1.msra.mxu0 0.0
      %2249 = vmatprep.subr.mxu0 0.0
      %2250 = vmatpush1.msra.mxu0 0.0
      %2251 = vmatprep.subr.mxu0 0.0
      %2252 = vmatpush1.msra.mxu0 0.0
      %2253 = vmatprep.subr.mxu0 0.0
      %2254 = vmatpush1.msra.mxu0 0.0
      %2255 = vmatprep.subr.mxu0 0.0
      %2256 = vmatpush1.msra.mxu0 0.0
      %2257 = vmatprep.subr.mxu0 0.0
      %2258 = vmatpush1.msra.mxu0 0.0
      %2259 = vmatprep.subr.mxu0 0.0
      %2260 = vmatpush1.msra.mxu0 0.0
      %2261 = vmatprep.subr.mxu0 0.0
      %2262 = vmatpush1.msra.mxu0 0.0
      %2263 = vmatprep.subr.mxu0 0.0
      %2264 = vmatpush1.msra.mxu0 0.0
      %2265 = vmatprep.subr.mxu0 0.0
      %2266 = vmatpush1.msra.mxu0 0.0
      %2267 = vmatprep.subr.mxu0 0.0
      %2268 = vmatpush1.msra.mxu0 0.0
      %2269 = vmatprep.subr.mxu0 0.0
      %2270 = vmatpush1.msra.mxu0 0.0
      %2271 = vmatprep.subr.mxu0 0.0
      %2272 = vmatpush1.msra.mxu0 0.0
      %2273 = vmatprep.subr.mxu0 0.0
      %2274 = vmatpush1.msra.mxu0 0.0
      %2275 = vmatprep.subr.mxu0 0.0
      %2276 = vmatpush1.msra.mxu0 0.0
      %2277 = vmatprep.subr.mxu0 0.0
      %2278 = vmatpush1.msra.mxu0 0.0
      %2279 = vmatprep.subr.mxu0 0.0
      %2280 = vmatpush1.msra.mxu0 0.0
      %2281 = vmatprep.subr.mxu0 0.0
      %2282 = vmatpush1.msra.mxu0 0.0
      %2283 = vmatprep.subr.mxu0 0.0
      %2284 = vmatpush1.msra.mxu0 0.0
      %2285 = vmatprep.subr.mxu0 0.0
      %2286 = vmatpush1.msra.mxu0 0.0
      %2287 = vmatprep.subr.mxu0 0.0
      %2288 = vmatpush1.msra.mxu0 0.0
      %2289 = vmatprep.subr.mxu0 0.0
      %2290 = vmatpush1.msra.mxu0 0.0
      %2291 = vmatprep.subr.mxu0 0.0
      %2292 = vmatpush1.msra.mxu0 0.0
      %2293 = vmatprep.subr.mxu0 0.0
      %2294 = vmatpush1.msra.mxu0 0.0
      %2295 = vmatprep.subr.mxu0 0.0
      %2296 = vmatpush1.msra.mxu0 0.0
      %2297 = vmatprep.subr.mxu0 0.0
      %2298 = vmatpush1.msra.mxu0 0.0
      %2299 = vmatprep.subr.mxu0 0.0
      %2300 = vmatpush1.msra.mxu0 0.0
      %2301 = vmatprep.subr.mxu0 0.0
      %2302 = vmatpush1.msra.mxu0 0.0
      %2303 = vmatprep.subr.mxu0 0.0
      %2304 = vmatpush1.msra.mxu0 0.0
      %2305 = vmatprep.subr.mxu0 0.0
      %2306 = vmatpush1.msra.mxu0 0.0
      %2307 = vmatprep.mubr.f32.mxu0 0.0
      %2308 = vmatmul.mubr.f32.gmra.mrb[0].mxu0 %v2241
      %v2309 = vpop.f32.mrb[0].mxu0
      %v2310 = vadd.f32 0.0, %v2309
      %v2311 = vpop.f32.mrb[0].mxu0
      %2312 = vdwg.mxu0
      %v2314 = vsel %vm842, %v2162, 0
      %2316 = vmatprep.subr.mxu0 0.0
      %2317 = vmatpush1.msra.mxu0 %v762
      %2318 = vmatprep.subr.mxu0 0.0
      %2319 = vmatpush1.msra.mxu0 %v923
      %2320 = vmatprep.subr.mxu0 0.0
      %2321 = vmatpush1.msra.mxu0 0.0
      %2322 = vmatprep.subr.mxu0 0.0
      %2323 = vmatpush1.msra.mxu0 0.0
      %2324 = vmatprep.subr.mxu0 0.0
      %2325 = vmatpush1.msra.mxu0 0.0
      %2326 = vmatprep.subr.mxu0 0.0
      %2327 = vmatpush1.msra.mxu0 0.0
      %2328 = vmatprep.subr.mxu0 0.0
      %2329 = vmatpush1.msra.mxu0 0.0
      %2330 = vmatprep.subr.mxu0 0.0
      %2331 = vmatpush1.msra.mxu0 0.0
      %2332 = vmatprep.subr.mxu0 0.0
      %2333 = vmatpush1.msra.mxu0 0.0
      %2334 = vmatprep.subr.mxu0 0.0
      %2335 = vmatpush1.msra.mxu0 0.0
      %2336 = vmatprep.subr.mxu0 0.0
      %2337 = vmatpush1.msra.mxu0 0.0
      %2338 = vmatprep.subr.mxu0 0.0
      %2339 = vmatpush1.msra.mxu0 0.0
      %2340 = vmatprep.subr.mxu0 0.0
      %2341 = vmatpush1.msra.mxu0 0.0
      %2342 = vmatprep.subr.mxu0 0.0
      %2343 = vmatpush1.msra.mxu0 0.0
      %2344 = vmatprep.subr.mxu0 0.0
      %2345 = vmatpush1.msra.mxu0 0.0
      %2346 = vmatprep.subr.mxu0 0.0
      %2347 = vmatpush1.msra.mxu0 0.0
      %2348 = vmatprep.subr.mxu0 0.0
      %2349 = vmatpush1.msra.mxu0 0.0
      %2350 = vmatprep.subr.mxu0 0.0
      %2351 = vmatpush1.msra.mxu0 0.0
      %2352 = vmatprep.subr.mxu0 0.0
      %2353 = vmatpush1.msra.mxu0 0.0
      %2354 = vmatprep.subr.mxu0 0.0
      %2355 = vmatpush1.msra.mxu0 0.0
      %2356 = vmatprep.subr.mxu0 0.0
      %2357 = vmatpush1.msra.mxu0 0.0
      %2358 = vmatprep.subr.mxu0 0.0
      %2359 = vmatpush1.msra.mxu0 0.0
      %2360 = vmatprep.subr.mxu0 0.0
      %2361 = vmatpush1.msra.mxu0 0.0
      %2362 = vmatprep.subr.mxu0 0.0
      %2363 = vmatpush1.msra.mxu0 0.0
      %2364 = vmatprep.subr.mxu0 0.0
      %2365 = vmatpush1.msra.mxu0 0.0
      %2366 = vmatprep.subr.mxu0 0.0
      %2367 = vmatpush1.msra.mxu0 0.0
      %2368 = vmatprep.subr.mxu0 0.0
      %2369 = vmatpush1.msra.mxu0 0.0
      %2370 = vmatprep.subr.mxu0 0.0
      %2371 = vmatpush1.msra.mxu0 0.0
      %2372 = vmatprep.subr.mxu0 0.0
      %2373 = vmatpush1.msra.mxu0 0.0
      %2374 = vmatprep.subr.mxu0 0.0
      %2375 = vmatpush1.msra.mxu0 0.0
      %2376 = vmatprep.subr.mxu0 0.0
      %2377 = vmatpush1.msra.mxu0 0.0
      %2378 = vmatprep.subr.mxu0 0.0
      %2379 = vmatpush1.msra.mxu0 0.0
      %2380 = vmatprep.mubr.f32.mxu0 0.0
      %2381 = vmatmul.mubr.f32.gmra.mrb[0].mxu0 %v2314
      %v2382 = vpop.f32.mrb[0].mxu0
      %v2383 = vadd.f32 %v2310, %v2382
      %v2384 = vpop.f32.mrb[0].mxu0
      %2385 = vdwg.mxu0
      %s2386 = scalar_lea.vmem %s7, 8
      %v2387 = vld [vmem:[%s2386] sm:$0xf]
      %v2389 = vsel %vm685, %v2387, 0
      %2391 = vmatprep.subr.mxu0 0.0
      %2392 = vmatpush1.msra.mxu0 %v2093
      %2393 = vmatprep.subr.mxu0 0.0
      %2394 = vmatpush1.msra.mxu0 0.0
      %2395 = vmatprep.subr.mxu0 0.0
      %2396 = vmatpush1.msra.mxu0 0.0
      %2397 = vmatprep.subr.mxu0 0.0
      %2398 = vmatpush1.msra.mxu0 0.0
      %2399 = vmatprep.subr.mxu0 0.0
      %2400 = vmatpush1.msra.mxu0 0.0
      %2401 = vmatprep.subr.mxu0 0.0
      %2402 = vmatpush1.msra.mxu0 0.0
      %2403 = vmatprep.subr.mxu0 0.0
      %2404 = vmatpush1.msra.mxu0 0.0
      %2405 = vmatprep.subr.mxu0 0.0
      %2406 = vmatpush1.msra.mxu0 0.0
      %2407 = vmatprep.subr.mxu0 0.0
      %2408 = vmatpush1.msra.mxu0 0.0
      %2409 = vmatprep.subr.mxu0 0.0
      %2410 = vmatpush1.msra.mxu0 0.0
      %2411 = vmatprep.subr.mxu0 0.0
      %2412 = vmatpush1.msra.mxu0 0.0
      %2413 = vmatprep.subr.mxu0 0.0
      %2414 = vmatpush1.msra.mxu0 0.0
      %2415 = vmatprep.subr.mxu0 0.0
      %2416 = vmatpush1.msra.mxu0 0.0
      %2417 = vmatprep.subr.mxu0 0.0
      %2418 = vmatpush1.msra.mxu0 0.0
      %2419 = vmatprep.subr.mxu0 0.0
      %2420 = vmatpush1.msra.mxu0 0.0
      %2421 = vmatprep.subr.mxu0 0.0
      %2422 = vmatpush1.msra.mxu0 0.0
      %2423 = vmatprep.subr.mxu0 0.0
      %2424 = vmatpush1.msra.mxu0 0.0
      %2425 = vmatprep.subr.mxu0 0.0
      %2426 = vmatpush1.msra.mxu0 0.0
      %2427 = vmatprep.subr.mxu0 0.0
      %2428 = vmatpush1.msra.mxu0 0.0
      %2429 = vmatprep.subr.mxu0 0.0
      %2430 = vmatpush1.msra.mxu0 0.0
      %2431 = vmatprep.subr.mxu0 0.0
      %2432 = vmatpush1.msra.mxu0 0.0
      %2433 = vmatprep.subr.mxu0 0.0
      %2434 = vmatpush1.msra.mxu0 0.0
      %2435 = vmatprep.subr.mxu0 0.0
      %2436 = vmatpush1.msra.mxu0 0.0
      %2437 = vmatprep.subr.mxu0 0.0
      %2438 = vmatpush1.msra.mxu0 0.0
      %2439 = vmatprep.subr.mxu0 0.0
      %2440 = vmatpush1.msra.mxu0 0.0
      %2441 = vmatprep.subr.mxu0 0.0
      %2442 = vmatpush1.msra.mxu0 0.0
      %2443 = vmatprep.subr.mxu0 0.0
      %2444 = vmatpush1.msra.mxu0 0.0
      %2445 = vmatprep.subr.mxu0 0.0
      %2446 = vmatpush1.msra.mxu0 0.0
      %2447 = vmatprep.subr.mxu0 0.0
      %2448 = vmatpush1.msra.mxu0 0.0
      %2449 = vmatprep.subr.mxu0 0.0
      %2450 = vmatpush1.msra.mxu0 0.0
      %2451 = vmatprep.subr.mxu0 0.0
      %2452 = vmatpush1.msra.mxu0 0.0
      %2453 = vmatprep.subr.mxu0 0.0
      %2454 = vmatpush1.msra.mxu0 0.0
      %2455 = vmatprep.mubr.f32.mxu0 0.0
      %2456 = vmatmul.mubr.f32.gmra.mrb[0].mxu0 %v2389
      %v2457 = vpop.f32.mrb[0].mxu0
      %v2458 = vadd.f32 0.0, %v2457
      %v2459 = vpop.f32.mrb[0].mxu0
      %2460 = vdwg.mxu0
      %v2462 = vsel %vm842, %v2458, 0
      %2464 = vmatprep.subr.mxu0 0.0
      %2465 = vmatpush1.msra.mxu0 %v1071
      %2466 = vmatprep.subr.mxu0 0.0
      %2467 = vmatpush1.msra.mxu0 %v1077
      %2468 = vmatprep.subr.mxu0 0.0
      %2469 = vmatpush1.msra.mxu0 0.0
      %2470 = vmatprep.subr.mxu0 0.0
      %2471 = vmatpush1.msra.mxu0 0.0
      %2472 = vmatprep.subr.mxu0 0.0
      %2473 = vmatpush1.msra.mxu0 0.0
      %2474 = vmatprep.subr.mxu0 0.0
      %2475 = vmatpush1.msra.mxu0 0.0
      %2476 = vmatprep.subr.mxu0 0.0
      %2477 = vmatpush1.msra.mxu0 0.0
      %2478 = vmatprep.subr.mxu0 0.0
      %2479 = vmatpush1.msra.mxu0 0.0
      %2480 = vmatprep.subr.mxu0 0.0
      %2481 = vmatpush1.msra.mxu0 0.0
      %2482 = vmatprep.subr.mxu0 0.0
      %2483 = vmatpush1.msra.mxu0 0.0
      %2484 = vmatprep.subr.mxu0 0.0
      %2485 = vmatpush1.msra.mxu0 0.0
      %2486 = vmatprep.subr.mxu0 0.0
      %2487 = vmatpush1.msra.mxu0 0.0
      %2488 = vmatprep.subr.mxu0 0.0
      %2489 = vmatpush1.msra.mxu0 0.0
      %2490 = vmatprep.subr.mxu0 0.0
      %2491 = vmatpush1.msra.mxu0 0.0
      %2492 = vmatprep.subr.mxu0 0.0
      %2493 = vmatpush1.msra.mxu0 0.0
      %2494 = vmatprep.subr.mxu0 0.0
      %2495 = vmatpush1.msra.mxu0 0.0
      %2496 = vmatprep.subr.mxu0 0.0
      %2497 = vmatpush1.msra.mxu0 0.0
      %2498 = vmatprep.subr.mxu0 0.0
      %2499 = vmatpush1.msra.mxu0 0.0
      %2500 = vmatprep.subr.mxu0 0.0
      %2501 = vmatpush1.msra.mxu0 0.0
      %2502 = vmatprep.subr.mxu0 0.0
      %2503 = vmatpush1.msra.mxu0 0.0
      %2504 = vmatprep.subr.mxu0 0.0
      %2505 = vmatpush1.msra.mxu0 0.0
      %2506 = vmatprep.subr.mxu0 0.0
      %2507 = vmatpush1.msra.mxu0 0.0
      %2508 = vmatprep.subr.mxu0 0.0
      %2509 = vmatpush1.msra.mxu0 0.0
      %2510 = vmatprep.subr.mxu0 0.0
      %2511 = vmatpush1.msra.mxu0 0.0
      %2512 = vmatprep.subr.mxu0 0.0
      %2513 = vmatpush1.msra.mxu0 0.0
      %2514 = vmatprep.subr.mxu0 0.0
      %2515 = vmatpush1.msra.mxu0 0.0
      %2516 = vmatprep.subr.mxu0 0.0
      %2517 = vmatpush1.msra.mxu0 0.0
      %2518 = vmatprep.subr.mxu0 0.0
      %2519 = vmatpush1.msra.mxu0 0.0
      %2520 = vmatprep.subr.mxu0 0.0
      %2521 = vmatpush1.msra.mxu0 0.0
      %2522 = vmatprep.subr.mxu0 0.0
      %2523 = vmatpush1.msra.mxu0 0.0
      %2524 = vmatprep.subr.mxu0 0.0
      %2525 = vmatpush1.msra.mxu0 0.0
      %2526 = vmatprep.subr.mxu0 0.0
      %2527 = vmatpush1.msra.mxu0 0.0
      %2528 = vmatprep.mubr.f32.mxu0 0.0
      %2529 = vmatmul.mubr.f32.gmra.mrb[0].mxu0 %v2462
      %v2530 = vpop.f32.mrb[0].mxu0
      %v2531 = vadd.f32 0.0, %v2530
      %v2532 = vpop.f32.mrb[0].mxu0
      %2533 = vdwg.mxu0
      %v2534 = vadd.f32 %v2383, %v2531
      %s2535 = scalar_lea.vmem %s7, 12
      %v2536 = vld [vmem:[%s2535] sm:$0xf]
      %v2538 = vsel %vm685, %v2536, 0
      %2540 = vmatprep.subr.mxu0 0.0
      %2541 = vmatpush1.msra.mxu0 %v2093
      %2542 = vmatprep.subr.mxu0 0.0
      %2543 = vmatpush1.msra.mxu0 0.0
      %2544 = vmatprep.subr.mxu0 0.0
      %2545 = vmatpush1.msra.mxu0 0.0
      %2546 = vmatprep.subr.mxu0 0.0
      %2547 = vmatpush1.msra.mxu0 0.0
      %2548 = vmatprep.subr.mxu0 0.0
      %2549 = vmatpush1.msra.mxu0 0.0
      %2550 = vmatprep.subr.mxu0 0.0
      %2551 = vmatpush1.msra.mxu0 0.0
      %2552 = vmatprep.subr.mxu0 0.0
      %2553 = vmatpush1.msra.mxu0 0.0
      %2554 = vmatprep.subr.mxu0 0.0
      %2555 = vmatpush1.msra.mxu0 0.0
      %2556 = vmatprep.subr.mxu0 0.0
      %2557 = vmatpush1.msra.mxu0 0.0
      %2558 = vmatprep.subr.mxu0 0.0
      %2559 = vmatpush1.msra.mxu0 0.0
      %2560 = vmatprep.subr.mxu0 0.0
      %2561 = vmatpush1.msra.mxu0 0.0
      %2562 = vmatprep.subr.mxu0 0.0
      %2563 = vmatpush1.msra.mxu0 0.0
      %2564 = vmatprep.subr.mxu0 0.0
      %2565 = vmatpush1.msra.mxu0 0.0
      %2566 = vmatprep.subr.mxu0 0.0
      %2567 = vmatpush1.msra.mxu0 0.0
      %2568 = vmatprep.subr.mxu0 0.0
      %2569 = vmatpush1.msra.mxu0 0.0
      %2570 = vmatprep.subr.mxu0 0.0
      %2571 = vmatpush1.msra.mxu0 0.0
      %2572 = vmatprep.subr.mxu0 0.0
      %2573 = vmatpush1.msra.mxu0 0.0
      %2574 = vmatprep.subr.mxu0 0.0
      %2575 = vmatpush1.msra.mxu0 0.0
      %2576 = vmatprep.subr.mxu0 0.0
      %2577 = vmatpush1.msra.mxu0 0.0
      %2578 = vmatprep.subr.mxu0 0.0
      %2579 = vmatpush1.msra.mxu0 0.0
      %2580 = vmatprep.subr.mxu0 0.0
      %2581 = vmatpush1.msra.mxu0 0.0
      %2582 = vmatprep.subr.mxu0 0.0
      %2583 = vmatpush1.msra.mxu0 0.0
      %2584 = vmatprep.subr.mxu0 0.0
      %2585 = vmatpush1.msra.mxu0 0.0
      %2586 = vmatprep.subr.mxu0 0.0
      %2587 = vmatpush1.msra.mxu0 0.0
      %2588 = vmatprep.subr.mxu0 0.0
      %2589 = vmatpush1.msra.mxu0 0.0
      %2590 = vmatprep.subr.mxu0 0.0
      %2591 = vmatpush1.msra.mxu0 0.0
      %2592 = vmatprep.subr.mxu0 0.0
      %2593 = vmatpush1.msra.mxu0 0.0
      %2594 = vmatprep.subr.mxu0 0.0
      %2595 = vmatpush1.msra.mxu0 0.0
      %2596 = vmatprep.subr.mxu0 0.0
      %2597 = vmatpush1.msra.mxu0 0.0
      %2598 = vmatprep.subr.mxu0 0.0
      %2599 = vmatpush1.msra.mxu0 0.0
      %2600 = vmatprep.subr.mxu0 0.0
      %2601 = vmatpush1.msra.mxu0 0.0
      %2602 = vmatprep.subr.mxu0 0.0
      %2603 = vmatpush1.msra.mxu0 0.0
      %2604 = vmatprep.mubr.f32.mxu0 0.0
      %2605 = vmatmul.mubr.f32.gmra.mrb[0].mxu0 %v2538
      %v2606 = vpop.f32.mrb[0].mxu0
      %v2607 = vadd.f32 0.0, %v2606
      %v2608 = vpop.f32.mrb[0].mxu0
      %2609 = vdwg.mxu0
      %v2611 = vsel %vm842, %v2607, 0
      %2613 = vmatprep.subr.mxu0 0.0
      %2614 = vmatpush1.msra.mxu0 %v1226
      %2615 = vmatprep.subr.mxu0 0.0
      %2616 = vmatpush1.msra.mxu0 %v1232
      %2617 = vmatprep.subr.mxu0 0.0
      %2618 = vmatpush1.msra.mxu0 0.0
      %2619 = vmatprep.subr.mxu0 0.0
      %2620 = vmatpush1.msra.mxu0 0.0
      %2621 = vmatprep.subr.mxu0 0.0
      %2622 = vmatpush1.msra.mxu0 0.0
      %2623 = vmatprep.subr.mxu0 0.0
      %2624 = vmatpush1.msra.mxu0 0.0
      %2625 = vmatprep.subr.mxu0 0.0
      %2626 = vmatpush1.msra.mxu0 0.0
      %2627 = vmatprep.subr.mxu0 0.0
      %2628 = vmatpush1.msra.mxu0 0.0
      %2629 = vmatprep.subr.mxu0 0.0
      %2630 = vmatpush1.msra.mxu0 0.0
      %2631 = vmatprep.subr.mxu0 0.0
      %2632 = vmatpush1.msra.mxu0 0.0
      %2633 = vmatprep.subr.mxu0 0.0
      %2634 = vmatpush1.msra.mxu0 0.0
      %2635 = vmatprep.subr.mxu0 0.0
      %2636 = vmatpush1.msra.mxu0 0.0
      %2637 = vmatprep.subr.mxu0 0.0
      %2638 = vmatpush1.msra.mxu0 0.0
      %2639 = vmatprep.subr.mxu0 0.0
      %2640 = vmatpush1.msra.mxu0 0.0
      %2641 = vmatprep.subr.mxu0 0.0
      %2642 = vmatpush1.msra.mxu0 0.0
      %2643 = vmatprep.subr.mxu0 0.0
      %2644 = vmatpush1.msra.mxu0 0.0
      %2645 = vmatprep.subr.mxu0 0.0
      %2646 = vmatpush1.msra.mxu0 0.0
      %2647 = vmatprep.subr.mxu0 0.0
      %2648 = vmatpush1.msra.mxu0 0.0
      %2649 = vmatprep.subr.mxu0 0.0
      %2650 = vmatpush1.msra.mxu0 0.0
      %2651 = vmatprep.subr.mxu0 0.0
      %2652 = vmatpush1.msra.mxu0 0.0
      %2653 = vmatprep.subr.mxu0 0.0
      %2654 = vmatpush1.msra.mxu0 0.0
      %2655 = vmatprep.subr.mxu0 0.0
      %2656 = vmatpush1.msra.mxu0 0.0
      %2657 = vmatprep.subr.mxu0 0.0
      %2658 = vmatpush1.msra.mxu0 0.0
      %2659 = vmatprep.subr.mxu0 0.0
      %2660 = vmatpush1.msra.mxu0 0.0
      %2661 = vmatprep.subr.mxu0 0.0
      %2662 = vmatpush1.msra.mxu0 0.0
      %2663 = vmatprep.subr.mxu0 0.0
      %2664 = vmatpush1.msra.mxu0 0.0
      %2665 = vmatprep.subr.mxu0 0.0
      %2666 = vmatpush1.msra.mxu0 0.0
      %2667 = vmatprep.subr.mxu0 0.0
      %2668 = vmatpush1.msra.mxu0 0.0
      %2669 = vmatprep.subr.mxu0 0.0
      %2670 = vmatpush1.msra.mxu0 0.0
      %2671 = vmatprep.subr.mxu0 0.0
      %2672 = vmatpush1.msra.mxu0 0.0
      %2673 = vmatprep.subr.mxu0 0.0
      %2674 = vmatpush1.msra.mxu0 0.0
      %2675 = vmatprep.subr.mxu0 0.0
      %2676 = vmatpush1.msra.mxu0 0.0
      %2677 = vmatprep.mubr.f32.mxu0 0.0
      %2678 = vmatmul.mubr.f32.gmra.mrb[0].mxu0 %v2611
      %v2679 = vpop.f32.mrb[0].mxu0
      %v2680 = vadd.f32 0.0, %v2679
      %v2681 = vpop.f32.mrb[0].mxu0
      %2682 = vdwg.mxu0
      %v2683 = vadd.f32 %v2534, %v2680
      %s2684 = scalar_lea.vmem %s7, 16
      %v2685 = vld [vmem:[%s2684] sm:$0xf]
      %v2687 = vsel %vm685, %v2685, 0
      %2689 = vmatprep.subr.mxu0 0.0
      %2690 = vmatpush1.msra.mxu0 %v2093
      %2691 = vmatprep.subr.mxu0 0.0
      %2692 = vmatpush1.msra.mxu0 0.0
      %2693 = vmatprep.subr.mxu0 0.0
      %2694 = vmatpush1.msra.mxu0 0.0
      %2695 = vmatprep.subr.mxu0 0.0
      %2696 = vmatpush1.msra.mxu0 0.0
      %2697 = vmatprep.subr.mxu0 0.0
      %2698 = vmatpush1.msra.mxu0 0.0
      %2699 = vmatprep.subr.mxu0 0.0
      %2700 = vmatpush1.msra.mxu0 0.0
      %2701 = vmatprep.subr.mxu0 0.0
      %2702 = vmatpush1.msra.mxu0 0.0
      %2703 = vmatprep.subr.mxu0 0.0
      %2704 = vmatpush1.msra.mxu0 0.0
      %2705 = vmatprep.subr.mxu0 0.0
      %2706 = vmatpush1.msra.mxu0 0.0
      %2707 = vmatprep.subr.mxu0 0.0
      %2708 = vmatpush1.msra.mxu0 0.0
      %2709 = vmatprep.subr.mxu0 0.0
      %2710 = vmatpush1.msra.mxu0 0.0
      %2711 = vmatprep.subr.mxu0 0.0
      %2712 = vmatpush1.msra.mxu0 0.0
      %2713 = vmatprep.subr.mxu0 0.0
      %2714 = vmatpush1.msra.mxu0 0.0
      %2715 = vmatprep.subr.mxu0 0.0
      %2716 = vmatpush1.msra.mxu0 0.0
      %2717 = vmatprep.subr.mxu0 0.0
      %2718 = vmatpush1.msra.mxu0 0.0
      %2719 = vmatprep.subr.mxu0 0.0
      %2720 = vmatpush1.msra.mxu0 0.0
      %2721 = vmatprep.subr.mxu0 0.0
      %2722 = vmatpush1.msra.mxu0 0.0
      %2723 = vmatprep.subr.mxu0 0.0
      %2724 = vmatpush1.msra.mxu0 0.0
      %2725 = vmatprep.subr.mxu0 0.0
      %2726 = vmatpush1.msra.mxu0 0.0
      %2727 = vmatprep.subr.mxu0 0.0
      %2728 = vmatpush1.msra.mxu0 0.0
      %2729 = vmatprep.subr.mxu0 0.0
      %2730 = vmatpush1.msra.mxu0 0.0
      %2731 = vmatprep.subr.mxu0 0.0
      %2732 = vmatpush1.msra.mxu0 0.0
      %2733 = vmatprep.subr.mxu0 0.0
      %2734 = vmatpush1.msra.mxu0 0.0
      %2735 = vmatprep.subr.mxu0 0.0
      %2736 = vmatpush1.msra.mxu0 0.0
      %2737 = vmatprep.subr.mxu0 0.0
      %2738 = vmatpush1.msra.mxu0 0.0
      %2739 = vmatprep.subr.mxu0 0.0
      %2740 = vmatpush1.msra.mxu0 0.0
      %2741 = vmatprep.subr.mxu0 0.0
      %2742 = vmatpush1.msra.mxu0 0.0
      %2743 = vmatprep.subr.mxu0 0.0
      %2744 = vmatpush1.msra.mxu0 0.0
      %2745 = vmatprep.subr.mxu0 0.0
      %2746 = vmatpush1.msra.mxu0 0.0
      %2747 = vmatprep.subr.mxu0 0.0
      %2748 = vmatpush1.msra.mxu0 0.0
      %2749 = vmatprep.subr.mxu0 0.0
      %2750 = vmatpush1.msra.mxu0 0.0
      %2751 = vmatprep.subr.mxu0 0.0
      %2752 = vmatpush1.msra.mxu0 0.0
      %2753 = vmatprep.mubr.f32.mxu0 0.0
      %2754 = vmatmul.mubr.f32.gmra.mrb[0].mxu0 %v2687
      %v2755 = vpop.f32.mrb[0].mxu0
      %v2756 = vadd.f32 0.0, %v2755
      %v2757 = vpop.f32.mrb[0].mxu0
      %2758 = vdwg.mxu0
      %v2760 = vsel %vm842, %v2756, 0
      %2762 = vmatprep.subr.mxu0 0.0
      %2763 = vmatpush1.msra.mxu0 %v1381
      %2764 = vmatprep.subr.mxu0 0.0
      %2765 = vmatpush1.msra.mxu0 %v1387
      %2766 = vmatprep.subr.mxu0 0.0
      %2767 = vmatpush1.msra.mxu0 0.0
      %2768 = vmatprep.subr.mxu0 0.0
      %2769 = vmatpush1.msra.mxu0 0.0
      %2770 = vmatprep.subr.mxu0 0.0
      %2771 = vmatpush1.msra.mxu0 0.0
      %2772 = vmatprep.subr.mxu0 0.0
      %2773 = vmatpush1.msra.mxu0 0.0
      %2774 = vmatprep.subr.mxu0 0.0
      %2775 = vmatpush1.msra.mxu0 0.0
      %2776 = vmatprep.subr.mxu0 0.0
      %2777 = vmatpush1.msra.mxu0 0.0
      %2778 = vmatprep.subr.mxu0 0.0
      %2779 = vmatpush1.msra.mxu0 0.0
      %2780 = vmatprep.subr.mxu0 0.0
      %2781 = vmatpush1.msra.mxu0 0.0
      %2782 = vmatprep.subr.mxu0 0.0
      %2783 = vmatpush1.msra.mxu0 0.0
      %2784 = vmatprep.subr.mxu0 0.0
      %2785 = vmatpush1.msra.mxu0 0.0
      %2786 = vmatprep.subr.mxu0 0.0
      %2787 = vmatpush1.msra.mxu0 0.0
      %2788 = vmatprep.subr.mxu0 0.0
      %2789 = vmatpush1.msra.mxu0 0.0
      %2790 = vmatprep.subr.mxu0 0.0
      %2791 = vmatpush1.msra.mxu0 0.0
      %2792 = vmatprep.subr.mxu0 0.0
      %2793 = vmatpush1.msra.mxu0 0.0
      %2794 = vmatprep.subr.mxu0 0.0
      %2795 = vmatpush1.msra.mxu0 0.0
      %2796 = vmatprep.subr.mxu0 0.0
      %2797 = vmatpush1.msra.mxu0 0.0
      %2798 = vmatprep.subr.mxu0 0.0
      %2799 = vmatpush1.msra.mxu0 0.0
      %2800 = vmatprep.subr.mxu0 0.0
      %2801 = vmatpush1.msra.mxu0 0.0
      %2802 = vmatprep.subr.mxu0 0.0
      %2803 = vmatpush1.msra.mxu0 0.0
      %2804 = vmatprep.subr.mxu0 0.0
      %2805 = vmatpush1.msra.mxu0 0.0
      %2806 = vmatprep.subr.mxu0 0.0
      %2807 = vmatpush1.msra.mxu0 0.0
      %2808 = vmatprep.subr.mxu0 0.0
      %2809 = vmatpush1.msra.mxu0 0.0
      %2810 = vmatprep.subr.mxu0 0.0
      %2811 = vmatpush1.msra.mxu0 0.0
      %2812 = vmatprep.subr.mxu0 0.0
      %2813 = vmatpush1.msra.mxu0 0.0
      %2814 = vmatprep.subr.mxu0 0.0
      %2815 = vmatpush1.msra.mxu0 0.0
      %2816 = vmatprep.subr.mxu0 0.0
      %2817 = vmatpush1.msra.mxu0 0.0
      %2818 = vmatprep.subr.mxu0 0.0
      %2819 = vmatpush1.msra.mxu0 0.0
      %2820 = vmatprep.subr.mxu0 0.0
      %2821 = vmatpush1.msra.mxu0 0.0
      %2822 = vmatprep.subr.mxu0 0.0
      %2823 = vmatpush1.msra.mxu0 0.0
      %2824 = vmatprep.subr.mxu0 0.0
      %2825 = vmatpush1.msra.mxu0 0.0
      %2826 = vmatprep.mubr.f32.mxu0 0.0
      %2827 = vmatmul.mubr.f32.gmra.mrb[0].mxu0 %v2760
      %v2828 = vpop.f32.mrb[0].mxu0
      %v2829 = vadd.f32 0.0, %v2828
      %v2830 = vpop.f32.mrb[0].mxu0
      %2831 = vdwg.mxu0
      %v2832 = vadd.f32 %v2683, %v2829
      %s2833 = scalar_lea.vmem %s7, 20
      %v2834 = vld [vmem:[%s2833] sm:$0xf]
      %v2836 = vsel %vm685, %v2834, 0
      %2838 = vmatprep.subr.mxu0 0.0
      %2839 = vmatpush1.msra.mxu0 %v2093
      %2840 = vmatprep.subr.mxu0 0.0
      %2841 = vmatpush1.msra.mxu0 0.0
      %2842 = vmatprep.subr.mxu0 0.0
      %2843 = vmatpush1.msra.mxu0 0.0
      %2844 = vmatprep.subr.mxu0 0.0
      %2845 = vmatpush1.msra.mxu0 0.0
      %2846 = vmatprep.subr.mxu0 0.0
      %2847 = vmatpush1.msra.mxu0 0.0
      %2848 = vmatprep.subr.mxu0 0.0
      %2849 = vmatpush1.msra.mxu0 0.0
      %2850 = vmatprep.subr.mxu0 0.0
      %2851 = vmatpush1.msra.mxu0 0.0
      %2852 = vmatprep.subr.mxu0 0.0
      %2853 = vmatpush1.msra.mxu0 0.0
      %2854 = vmatprep.subr.mxu0 0.0
      %2855 = vmatpush1.msra.mxu0 0.0
      %2856 = vmatprep.subr.mxu0 0.0
      %2857 = vmatpush1.msra.mxu0 0.0
      %2858 = vmatprep.subr.mxu0 0.0
      %2859 = vmatpush1.msra.mxu0 0.0
      %2860 = vmatprep.subr.mxu0 0.0
      %2861 = vmatpush1.msra.mxu0 0.0
      %2862 = vmatprep.subr.mxu0 0.0
      %2863 = vmatpush1.msra.mxu0 0.0
      %2864 = vmatprep.subr.mxu0 0.0
      %2865 = vmatpush1.msra.mxu0 0.0
      %2866 = vmatprep.subr.mxu0 0.0
      %2867 = vmatpush1.msra.mxu0 0.0
      %2868 = vmatprep.subr.mxu0 0.0
      %2869 = vmatpush1.msra.mxu0 0.0
      %2870 = vmatprep.subr.mxu0 0.0
      %2871 = vmatpush1.msra.mxu0 0.0
      %2872 = vmatprep.subr.mxu0 0.0
      %2873 = vmatpush1.msra.mxu0 0.0
      %2874 = vmatprep.subr.mxu0 0.0
      %2875 = vmatpush1.msra.mxu0 0.0
      %2876 = vmatprep.subr.mxu0 0.0
      %2877 = vmatpush1.msra.mxu0 0.0
      %2878 = vmatprep.subr.mxu0 0.0
      %2879 = vmatpush1.msra.mxu0 0.0
      %2880 = vmatprep.subr.mxu0 0.0
      %2881 = vmatpush1.msra.mxu0 0.0
      %2882 = vmatprep.subr.mxu0 0.0
      %2883 = vmatpush1.msra.mxu0 0.0
      %2884 = vmatprep.subr.mxu0 0.0
      %2885 = vmatpush1.msra.mxu0 0.0
      %2886 = vmatprep.subr.mxu0 0.0
      %2887 = vmatpush1.msra.mxu0 0.0
      %2888 = vmatprep.subr.mxu0 0.0
      %2889 = vmatpush1.msra.mxu0 0.0
      %2890 = vmatprep.subr.mxu0 0.0
      %2891 = vmatpush1.msra.mxu0 0.0
      %2892 = vmatprep.subr.mxu0 0.0
      %2893 = vmatpush1.msra.mxu0 0.0
      %2894 = vmatprep.subr.mxu0 0.0
      %2895 = vmatpush1.msra.mxu0 0.0
      %2896 = vmatprep.subr.mxu0 0.0
      %2897 = vmatpush1.msra.mxu0 0.0
      %2898 = vmatprep.subr.mxu0 0.0
      %2899 = vmatpush1.msra.mxu0 0.0
      %2900 = vmatprep.subr.mxu0 0.0
      %2901 = vmatpush1.msra.mxu0 0.0
      %2902 = vmatprep.mubr.f32.mxu0 0.0
      %2903 = vmatmul.mubr.f32.gmra.mrb[0].mxu0 %v2836
      %v2904 = vpop.f32.mrb[0].mxu0
      %v2905 = vadd.f32 0.0, %v2904
      %v2906 = vpop.f32.mrb[0].mxu0
      %2907 = vdwg.mxu0
      %v2909 = vsel %vm842, %v2905, 0
      %2911 = vmatprep.subr.mxu0 0.0
      %2912 = vmatpush1.msra.mxu0 %v1536
      %2913 = vmatprep.subr.mxu0 0.0
      %2914 = vmatpush1.msra.mxu0 %v1542
      %2915 = vmatprep.subr.mxu0 0.0
      %2916 = vmatpush1.msra.mxu0 0.0
      %2917 = vmatprep.subr.mxu0 0.0
      %2918 = vmatpush1.msra.mxu0 0.0
      %2919 = vmatprep.subr.mxu0 0.0
      %2920 = vmatpush1.msra.mxu0 0.0
      %2921 = vmatprep.subr.mxu0 0.0
      %2922 = vmatpush1.msra.mxu0 0.0
      %2923 = vmatprep.subr.mxu0 0.0
      %2924 = vmatpush1.msra.mxu0 0.0
      %2925 = vmatprep.subr.mxu0 0.0
      %2926 = vmatpush1.msra.mxu0 0.0
      %2927 = vmatprep.subr.mxu0 0.0
      %2928 = vmatpush1.msra.mxu0 0.0
      %2929 = vmatprep.subr.mxu0 0.0
      %2930 = vmatpush1.msra.mxu0 0.0
      %2931 = vmatprep.subr.mxu0 0.0
      %2932 = vmatpush1.msra.mxu0 0.0
      %2933 = vmatprep.subr.mxu0 0.0
      %2934 = vmatpush1.msra.mxu0 0.0
      %2935 = vmatprep.subr.mxu0 0.0
      %2936 = vmatpush1.msra.mxu0 0.0
      %2937 = vmatprep.subr.mxu0 0.0
      %2938 = vmatpush1.msra.mxu0 0.0
      %2939 = vmatprep.subr.mxu0 0.0
      %2940 = vmatpush1.msra.mxu0 0.0
      %2941 = vmatprep.subr.mxu0 0.0
      %2942 = vmatpush1.msra.mxu0 0.0
      %2943 = vmatprep.subr.mxu0 0.0
      %2944 = vmatpush1.msra.mxu0 0.0
      %2945 = vmatprep.subr.mxu0 0.0
      %2946 = vmatpush1.msra.mxu0 0.0
      %2947 = vmatprep.subr.mxu0 0.0
      %2948 = vmatpush1.msra.mxu0 0.0
      %2949 = vmatprep.subr.mxu0 0.0
      %2950 = vmatpush1.msra.mxu0 0.0
      %2951 = vmatprep.subr.mxu0 0.0
      %2952 = vmatpush1.msra.mxu0 0.0
      %2953 = vmatprep.subr.mxu0 0.0
      %2954 = vmatpush1.msra.mxu0 0.0
      %2955 = vmatprep.subr.mxu0 0.0
      %2956 = vmatpush1.msra.mxu0 0.0
      %2957 = vmatprep.subr.mxu0 0.0
      %2958 = vmatpush1.msra.mxu0 0.0
      %2959 = vmatprep.subr.mxu0 0.0
      %2960 = vmatpush1.msra.mxu0 0.0
      %2961 = vmatprep.subr.mxu0 0.0
      %2962 = vmatpush1.msra.mxu0 0.0
      %2963 = vmatprep.subr.mxu0 0.0
      %2964 = vmatpush1.msra.mxu0 0.0
      %2965 = vmatprep.subr.mxu0 0.0
      %2966 = vmatpush1.msra.mxu0 0.0
      %2967 = vmatprep.subr.mxu0 0.0
      %2968 = vmatpush1.msra.mxu0 0.0
      %2969 = vmatprep.subr.mxu0 0.0
      %2970 = vmatpush1.msra.mxu0 0.0
      %2971 = vmatprep.subr.mxu0 0.0
      %2972 = vmatpush1.msra.mxu0 0.0
      %2973 = vmatprep.subr.mxu0 0.0
      %2974 = vmatpush1.msra.mxu0 0.0
      %2975 = vmatprep.mubr.f32.mxu0 0.0
      %2976 = vmatmul.mubr.f32.gmra.mrb[0].mxu0 %v2909
      %v2977 = vpop.f32.mrb[0].mxu0
      %v2978 = vadd.f32 0.0, %v2977
      %v2979 = vpop.f32.mrb[0].mxu0
      %2980 = vdwg.mxu0
      %v2981 = vadd.f32 %v2832, %v2978
      %s2982 = scalar_lea.vmem %s7, 24
      %v2983 = vld [vmem:[%s2982] sm:$0xf]
      %v2985 = vsel %vm685, %v2983, 0
      %2987 = vmatprep.subr.mxu0 0.0
      %2988 = vmatpush1.msra.mxu0 %v2093
      %2989 = vmatprep.subr.mxu0 0.0
      %2990 = vmatpush1.msra.mxu0 0.0
      %2991 = vmatprep.subr.mxu0 0.0
      %2992 = vmatpush1.msra.mxu0 0.0
      %2993 = vmatprep.subr.mxu0 0.0
      %2994 = vmatpush1.msra.mxu0 0.0
      %2995 = vmatprep.subr.mxu0 0.0
      %2996 = vmatpush1.msra.mxu0 0.0
      %2997 = vmatprep.subr.mxu0 0.0
      %2998 = vmatpush1.msra.mxu0 0.0
      %2999 = vmatprep.subr.mxu0 0.0
      %3000 = vmatpush1.msra.mxu0 0.0
      %3001 = vmatprep.subr.mxu0 0.0
      %3002 = vmatpush1.msra.mxu0 0.0
      %3003 = vmatprep.subr.mxu0 0.0
      %3004 = vmatpush1.msra.mxu0 0.0
      %3005 = vmatprep.subr.mxu0 0.0
      %3006 = vmatpush1.msra.mxu0 0.0
      %3007 = vmatprep.subr.mxu0 0.0
      %3008 = vmatpush1.msra.mxu0 0.0
      %3009 = vmatprep.subr.mxu0 0.0
      %3010 = vmatpush1.msra.mxu0 0.0
      %3011 = vmatprep.subr.mxu0 0.0
      %3012 = vmatpush1.msra.mxu0 0.0
      %3013 = vmatprep.subr.mxu0 0.0
      %3014 = vmatpush1.msra.mxu0 0.0
      %3015 = vmatprep.subr.mxu0 0.0
      %3016 = vmatpush1.msra.mxu0 0.0
      %3017 = vmatprep.subr.mxu0 0.0
      %3018 = vmatpush1.msra.mxu0 0.0
      %3019 = vmatprep.subr.mxu0 0.0
      %3020 = vmatpush1.msra.mxu0 0.0
      %3021 = vmatprep.subr.mxu0 0.0
      %3022 = vmatpush1.msra.mxu0 0.0
      %3023 = vmatprep.subr.mxu0 0.0
      %3024 = vmatpush1.msra.mxu0 0.0
      %3025 = vmatprep.subr.mxu0 0.0
      %3026 = vmatpush1.msra.mxu0 0.0
      %3027 = vmatprep.subr.mxu0 0.0
      %3028 = vmatpush1.msra.mxu0 0.0
      %3029 = vmatprep.subr.mxu0 0.0
      %3030 = vmatpush1.msra.mxu0 0.0
      %3031 = vmatprep.subr.mxu0 0.0
      %3032 = vmatpush1.msra.mxu0 0.0
      %3033 = vmatprep.subr.mxu0 0.0
      %3034 = vmatpush1.msra.mxu0 0.0
      %3035 = vmatprep.subr.mxu0 0.0
      %3036 = vmatpush1.msra.mxu0 0.0
      %3037 = vmatprep.subr.mxu0 0.0
      %3038 = vmatpush1.msra.mxu0 0.0
      %3039 = vmatprep.subr.mxu0 0.0
      %3040 = vmatpush1.msra.mxu0 0.0
      %3041 = vmatprep.subr.mxu0 0.0
      %3042 = vmatpush1.msra.mxu0 0.0
      %3043 = vmatprep.subr.mxu0 0.0
      %3044 = vmatpush1.msra.mxu0 0.0
      %3045 = vmatprep.subr.mxu0 0.0
      %3046 = vmatpush1.msra.mxu0 0.0
      %3047 = vmatprep.subr.mxu0 0.0
      %3048 = vmatpush1.msra.mxu0 0.0
      %3049 = vmatprep.subr.mxu0 0.0
      %3050 = vmatpush1.msra.mxu0 0.0
      %3051 = vmatprep.mubr.f32.mxu0 0.0
      %3052 = vmatmul.mubr.f32.gmra.mrb[0].mxu0 %v2985
      %v3053 = vpop.f32.mrb[0].mxu0
      %v3054 = vadd.f32 0.0, %v3053
      %v3055 = vpop.f32.mrb[0].mxu0
      %3056 = vdwg.mxu0
      %v3058 = vsel %vm842, %v3054, 0
      %3060 = vmatprep.subr.mxu0 0.0
      %3061 = vmatpush1.msra.mxu0 %v1691
      %3062 = vmatprep.subr.mxu0 0.0
      %3063 = vmatpush1.msra.mxu0 %v1697
      %3064 = vmatprep.subr.mxu0 0.0
      %3065 = vmatpush1.msra.mxu0 0.0
      %3066 = vmatprep.subr.mxu0 0.0
      %3067 = vmatpush1.msra.mxu0 0.0
      %3068 = vmatprep.subr.mxu0 0.0
      %3069 = vmatpush1.msra.mxu0 0.0
      %3070 = vmatprep.subr.mxu0 0.0
      %3071 = vmatpush1.msra.mxu0 0.0
      %3072 = vmatprep.subr.mxu0 0.0
      %3073 = vmatpush1.msra.mxu0 0.0
      %3074 = vmatprep.subr.mxu0 0.0
      %3075 = vmatpush1.msra.mxu0 0.0
      %3076 = vmatprep.subr.mxu0 0.0
      %3077 = vmatpush1.msra.mxu0 0.0
      %3078 = vmatprep.subr.mxu0 0.0
      %3079 = vmatpush1.msra.mxu0 0.0
      %3080 = vmatprep.subr.mxu0 0.0
      %3081 = vmatpush1.msra.mxu0 0.0
      %3082 = vmatprep.subr.mxu0 0.0
      %3083 = vmatpush1.msra.mxu0 0.0
      %3084 = vmatprep.subr.mxu0 0.0
      %3085 = vmatpush1.msra.mxu0 0.0
      %3086 = vmatprep.subr.mxu0 0.0
      %3087 = vmatpush1.msra.mxu0 0.0
      %3088 = vmatprep.subr.mxu0 0.0
      %3089 = vmatpush1.msra.mxu0 0.0
      %3090 = vmatprep.subr.mxu0 0.0
      %3091 = vmatpush1.msra.mxu0 0.0
      %3092 = vmatprep.subr.mxu0 0.0
      %3093 = vmatpush1.msra.mxu0 0.0
      %3094 = vmatprep.subr.mxu0 0.0
      %3095 = vmatpush1.msra.mxu0 0.0
      %3096 = vmatprep.subr.mxu0 0.0
      %3097 = vmatpush1.msra.mxu0 0.0
      %3098 = vmatprep.subr.mxu0 0.0
      %3099 = vmatpush1.msra.mxu0 0.0
      %3100 = vmatprep.subr.mxu0 0.0
      %3101 = vmatpush1.msra.mxu0 0.0
      %3102 = vmatprep.subr.mxu0 0.0
      %3103 = vmatpush1.msra.mxu0 0.0
      %3104 = vmatprep.subr.mxu0 0.0
      %3105 = vmatpush1.msra.mxu0 0.0
      %3106 = vmatprep.subr.mxu0 0.0
      %3107 = vmatpush1.msra.mxu0 0.0
      %3108 = vmatprep.subr.mxu0 0.0
      %3109 = vmatpush1.msra.mxu0 0.0
      %3110 = vmatprep.subr.mxu0 0.0
      %3111 = vmatpush1.msra.mxu0 0.0
      %3112 = vmatprep.subr.mxu0 0.0
      %3113 = vmatpush1.msra.mxu0 0.0
      %3114 = vmatprep.subr.mxu0 0.0
      %3115 = vmatpush1.msra.mxu0 0.0
      %3116 = vmatprep.subr.mxu0 0.0
      %3117 = vmatpush1.msra.mxu0 0.0
      %3118 = vmatprep.subr.mxu0 0.0
      %3119 = vmatpush1.msra.mxu0 0.0
      %3120 = vmatprep.subr.mxu0 0.0
      %3121 = vmatpush1.msra.mxu0 0.0
      %3122 = vmatprep.subr.mxu0 0.0
      %3123 = vmatpush1.msra.mxu0 0.0
      %3124 = vmatprep.mubr.f32.mxu0 0.0
      %3125 = vmatmul.mubr.f32.gmra.mrb[0].mxu0 %v3058
      %v3126 = vpop.f32.mrb[0].mxu0
      %v3127 = vadd.f32 0.0, %v3126
      %v3128 = vpop.f32.mrb[0].mxu0
      %3129 = vdwg.mxu0
      %v3130 = vadd.f32 %v2981, %v3127
      %s3131 = scalar_lea.vmem %s7, 28
      %v3132 = vld [vmem:[%s3131] sm:$0xf]
      %v3134 = vsel %vm685, %v3132, 0
      %3136 = vmatprep.subr.mxu0 0.0
      %3137 = vmatpush1.msra.mxu0 %v2093
      %3138 = vmatprep.subr.mxu0 0.0
      %3139 = vmatpush1.msra.mxu0 0.0
      %3140 = vmatprep.subr.mxu0 0.0
      %3141 = vmatpush1.msra.mxu0 0.0
      %3142 = vmatprep.subr.mxu0 0.0
      %3143 = vmatpush1.msra.mxu0 0.0
      %3144 = vmatprep.subr.mxu0 0.0
      %3145 = vmatpush1.msra.mxu0 0.0
      %3146 = vmatprep.subr.mxu0 0.0
      %3147 = vmatpush1.msra.mxu0 0.0
      %3148 = vmatprep.subr.mxu0 0.0
      %3149 = vmatpush1.msra.mxu0 0.0
      %3150 = vmatprep.subr.mxu0 0.0
      %3151 = vmatpush1.msra.mxu0 0.0
      %3152 = vmatprep.subr.mxu0 0.0
      %3153 = vmatpush1.msra.mxu0 0.0
      %3154 = vmatprep.subr.mxu0 0.0
      %3155 = vmatpush1.msra.mxu0 0.0
      %3156 = vmatprep.subr.mxu0 0.0
      %3157 = vmatpush1.msra.mxu0 0.0
      %3158 = vmatprep.subr.mxu0 0.0
      %3159 = vmatpush1.msra.mxu0 0.0
      %3160 = vmatprep.subr.mxu0 0.0
      %3161 = vmatpush1.msra.mxu0 0.0
      %3162 = vmatprep.subr.mxu0 0.0
      %3163 = vmatpush1.msra.mxu0 0.0
      %3164 = vmatprep.subr.mxu0 0.0
      %3165 = vmatpush1.msra.mxu0 0.0
      %3166 = vmatprep.subr.mxu0 0.0
      %3167 = vmatpush1.msra.mxu0 0.0
      %3168 = vmatprep.subr.mxu0 0.0
      %3169 = vmatpush1.msra.mxu0 0.0
      %3170 = vmatprep.subr.mxu0 0.0
      %3171 = vmatpush1.msra.mxu0 0.0
      %3172 = vmatprep.subr.mxu0 0.0
      %3173 = vmatpush1.msra.mxu0 0.0
      %3174 = vmatprep.subr.mxu0 0.0
      %3175 = vmatpush1.msra.mxu0 0.0
      %3176 = vmatprep.subr.mxu0 0.0
      %3177 = vmatpush1.msra.mxu0 0.0
      %3178 = vmatprep.subr.mxu0 0.0
      %3179 = vmatpush1.msra.mxu0 0.0
      %3180 = vmatprep.subr.mxu0 0.0
      %3181 = vmatpush1.msra.mxu0 0.0
      %3182 = vmatprep.subr.mxu0 0.0
      %3183 = vmatpush1.msra.mxu0 0.0
      %3184 = vmatprep.subr.mxu0 0.0
      %3185 = vmatpush1.msra.mxu0 0.0
      %3186 = vmatprep.subr.mxu0 0.0
      %3187 = vmatpush1.msra.mxu0 0.0
      %3188 = vmatprep.subr.mxu0 0.0
      %3189 = vmatpush1.msra.mxu0 0.0
      %3190 = vmatprep.subr.mxu0 0.0
      %3191 = vmatpush1.msra.mxu0 0.0
      %3192 = vmatprep.subr.mxu0 0.0
      %3193 = vmatpush1.msra.mxu0 0.0
      %3194 = vmatprep.subr.mxu0 0.0
      %3195 = vmatpush1.msra.mxu0 0.0
      %3196 = vmatprep.subr.mxu0 0.0
      %3197 = vmatpush1.msra.mxu0 0.0
      %3198 = vmatprep.subr.mxu0 0.0
      %3199 = vmatpush1.msra.mxu0 0.0
      %3200 = vmatprep.mubr.f32.mxu0 0.0
      %3201 = vmatmul.mubr.f32.gmra.mrb[0].mxu0 %v3134
      %v3202 = vpop.f32.mrb[0].mxu0
      %v3203 = vadd.f32 0.0, %v3202
      %v3204 = vpop.f32.mrb[0].mxu0
      %3205 = vdwg.mxu0
      %v3207 = vsel %vm842, %v3203, 0
      %3209 = vmatprep.subr.mxu0 0.0
      %3210 = vmatpush1.msra.mxu0 %v1846
      %3211 = vmatprep.subr.mxu0 0.0
      %3212 = vmatpush1.msra.mxu0 %v1852
      %3213 = vmatprep.subr.mxu0 0.0
      %3214 = vmatpush1.msra.mxu0 0.0
      %3215 = vmatprep.subr.mxu0 0.0
      %3216 = vmatpush1.msra.mxu0 0.0
      %3217 = vmatprep.subr.mxu0 0.0
      %3218 = vmatpush1.msra.mxu0 0.0
      %3219 = vmatprep.subr.mxu0 0.0
      %3220 = vmatpush1.msra.mxu0 0.0
      %3221 = vmatprep.subr.mxu0 0.0
      %3222 = vmatpush1.msra.mxu0 0.0
      %3223 = vmatprep.subr.mxu0 0.0
      %3224 = vmatpush1.msra.mxu0 0.0
      %3225 = vmatprep.subr.mxu0 0.0
      %3226 = vmatpush1.msra.mxu0 0.0
      %3227 = vmatprep.subr.mxu0 0.0
      %3228 = vmatpush1.msra.mxu0 0.0
      %3229 = vmatprep.subr.mxu0 0.0
      %3230 = vmatpush1.msra.mxu0 0.0
      %3231 = vmatprep.subr.mxu0 0.0
      %3232 = vmatpush1.msra.mxu0 0.0
      %3233 = vmatprep.subr.mxu0 0.0
      %3234 = vmatpush1.msra.mxu0 0.0
      %3235 = vmatprep.subr.mxu0 0.0
      %3236 = vmatpush1.msra.mxu0 0.0
      %3237 = vmatprep.subr.mxu0 0.0
      %3238 = vmatpush1.msra.mxu0 0.0
      %3239 = vmatprep.subr.mxu0 0.0
      %3240 = vmatpush1.msra.mxu0 0.0
      %3241 = vmatprep.subr.mxu0 0.0
      %3242 = vmatpush1.msra.mxu0 0.0
      %3243 = vmatprep.subr.mxu0 0.0
      %3244 = vmatpush1.msra.mxu0 0.0
      %3245 = vmatprep.subr.mxu0 0.0
      %3246 = vmatpush1.msra.mxu0 0.0
      %3247 = vmatprep.subr.mxu0 0.0
      %3248 = vmatpush1.msra.mxu0 0.0
      %3249 = vmatprep.subr.mxu0 0.0
      %3250 = vmatpush1.msra.mxu0 0.0
      %3251 = vmatprep.subr.mxu0 0.0
      %3252 = vmatpush1.msra.mxu0 0.0
      %3253 = vmatprep.subr.mxu0 0.0
      %3254 = vmatpush1.msra.mxu0 0.0
      %3255 = vmatprep.subr.mxu0 0.0
      %3256 = vmatpush1.msra.mxu0 0.0
      %3257 = vmatprep.subr.mxu0 0.0
      %3258 = vmatpush1.msra.mxu0 0.0
      %3259 = vmatprep.subr.mxu0 0.0
      %3260 = vmatpush1.msra.mxu0 0.0
      %3261 = vmatprep.subr.mxu0 0.0
      %3262 = vmatpush1.msra.mxu0 0.0
      %3263 = vmatprep.subr.mxu0 0.0
      %3264 = vmatpush1.msra.mxu0 0.0
      %3265 = vmatprep.subr.mxu0 0.0
      %3266 = vmatpush1.msra.mxu0 0.0
      %3267 = vmatprep.subr.mxu0 0.0
      %3268 = vmatpush1.msra.mxu0 0.0
      %3269 = vmatprep.subr.mxu0 0.0
      %3270 = vmatpush1.msra.mxu0 0.0
      %3271 = vmatprep.subr.mxu0 0.0
      %3272 = vmatpush1.msra.mxu0 0.0
      %3273 = vmatprep.mubr.f32.mxu0 0.0
      %3274 = vmatmul.mubr.f32.gmra.mrb[0].mxu0 %v3207
      %v3275 = vpop.f32.mrb[0].mxu0
      %v3276 = vadd.f32 0.0, %v3275
      %v3277 = vpop.f32.mrb[0].mxu0
      %3278 = vdwg.mxu0
      %v3279 = vadd.f32 %v3130, %v3276
      %s3280 = scalar_lea.vmem %s7, 32
      %v3281 = vld [vmem:[%s3280] sm:$0xf]
      %v3283 = vsel %vm685, %v3281, 0
      %3285 = vmatprep.subr.mxu0 0.0
      %3286 = vmatpush1.msra.mxu0 %v2093
      %3287 = vmatprep.subr.mxu0 0.0
      %3288 = vmatpush1.msra.mxu0 0.0
      %3289 = vmatprep.subr.mxu0 0.0
      %3290 = vmatpush1.msra.mxu0 0.0
      %3291 = vmatprep.subr.mxu0 0.0
      %3292 = vmatpush1.msra.mxu0 0.0
      %3293 = vmatprep.subr.mxu0 0.0
      %3294 = vmatpush1.msra.mxu0 0.0
      %3295 = vmatprep.subr.mxu0 0.0
      %3296 = vmatpush1.msra.mxu0 0.0
      %3297 = vmatprep.subr.mxu0 0.0
      %3298 = vmatpush1.msra.mxu0 0.0
      %3299 = vmatprep.subr.mxu0 0.0
      %3300 = vmatpush1.msra.mxu0 0.0
      %3301 = vmatprep.subr.mxu0 0.0
      %3302 = vmatpush1.msra.mxu0 0.0
      %3303 = vmatprep.subr.mxu0 0.0
      %3304 = vmatpush1.msra.mxu0 0.0
      %3305 = vmatprep.subr.mxu0 0.0
      %3306 = vmatpush1.msra.mxu0 0.0
      %3307 = vmatprep.subr.mxu0 0.0
      %3308 = vmatpush1.msra.mxu0 0.0
      %3309 = vmatprep.subr.mxu0 0.0
      %3310 = vmatpush1.msra.mxu0 0.0
      %3311 = vmatprep.subr.mxu0 0.0
      %3312 = vmatpush1.msra.mxu0 0.0
      %3313 = vmatprep.subr.mxu0 0.0
      %3314 = vmatpush1.msra.mxu0 0.0
      %3315 = vmatprep.subr.mxu0 0.0
      %3316 = vmatpush1.msra.mxu0 0.0
      %3317 = vmatprep.subr.mxu0 0.0
      %3318 = vmatpush1.msra.mxu0 0.0
      %3319 = vmatprep.subr.mxu0 0.0
      %3320 = vmatpush1.msra.mxu0 0.0
      %3321 = vmatprep.subr.mxu0 0.0
      %3322 = vmatpush1.msra.mxu0 0.0
      %3323 = vmatprep.subr.mxu0 0.0
      %3324 = vmatpush1.msra.mxu0 0.0
      %3325 = vmatprep.subr.mxu0 0.0
      %3326 = vmatpush1.msra.mxu0 0.0
      %3327 = vmatprep.subr.mxu0 0.0
      %3328 = vmatpush1.msra.mxu0 0.0
      %3329 = vmatprep.subr.mxu0 0.0
      %3330 = vmatpush1.msra.mxu0 0.0
      %3331 = vmatprep.subr.mxu0 0.0
      %3332 = vmatpush1.msra.mxu0 0.0
      %3333 = vmatprep.subr.mxu0 0.0
      %3334 = vmatpush1.msra.mxu0 0.0
      %3335 = vmatprep.subr.mxu0 0.0
      %3336 = vmatpush1.msra.mxu0 0.0
      %3337 = vmatprep.subr.mxu0 0.0
      %3338 = vmatpush1.msra.mxu0 0.0
      %3339 = vmatprep.subr.mxu0 0.0
      %3340 = vmatpush1.msra.mxu0 0.0
      %3341 = vmatprep.subr.mxu0 0.0
      %3342 = vmatpush1.msra.mxu0 0.0
      %3343 = vmatprep.subr.mxu0 0.0
      %3344 = vmatpush1.msra.mxu0 0.0
      %3345 = vmatprep.subr.mxu0 0.0
      %3346 = vmatpush1.msra.mxu0 0.0
      %3347 = vmatprep.subr.mxu0 0.0
      %3348 = vmatpush1.msra.mxu0 0.0
      %3349 = vmatprep.mubr.f32.mxu0 0.0
      %3350 = vmatmul.mubr.f32.gmra.mrb[0].mxu0 %v3283
      %v3351 = vpop.f32.mrb[0].mxu0
      %v3352 = vadd.f32 0.0, %v3351
      %v3353 = vpop.f32.mrb[0].mxu0
      %3354 = vdwg.mxu0
      %v3356 = vsel %vm842, %v3352, 0
      %3358 = vmatprep.subr.mxu0 0.0
      %3359 = vmatpush1.msra.mxu0 %v2001
      %3360 = vmatprep.subr.mxu0 0.0
      %3361 = vmatpush1.msra.mxu0 %v2007
      %3362 = vmatprep.subr.mxu0 0.0
      %3363 = vmatpush1.msra.mxu0 0.0
      %3364 = vmatprep.subr.mxu0 0.0
      %3365 = vmatpush1.msra.mxu0 0.0
      %3366 = vmatprep.subr.mxu0 0.0
      %3367 = vmatpush1.msra.mxu0 0.0
      %3368 = vmatprep.subr.mxu0 0.0
      %3369 = vmatpush1.msra.mxu0 0.0
      %3370 = vmatprep.subr.mxu0 0.0
      %3371 = vmatpush1.msra.mxu0 0.0
      %3372 = vmatprep.subr.mxu0 0.0
      %3373 = vmatpush1.msra.mxu0 0.0
      %3374 = vmatprep.subr.mxu0 0.0
      %3375 = vmatpush1.msra.mxu0 0.0
      %3376 = vmatprep.subr.mxu0 0.0
      %3377 = vmatpush1.msra.mxu0 0.0
      %3378 = vmatprep.subr.mxu0 0.0
      %3379 = vmatpush1.msra.mxu0 0.0
      %3380 = vmatprep.subr.mxu0 0.0
      %3381 = vmatpush1.msra.mxu0 0.0
      %3382 = vmatprep.subr.mxu0 0.0
      %3383 = vmatpush1.msra.mxu0 0.0
      %3384 = vmatprep.subr.mxu0 0.0
      %3385 = vmatpush1.msra.mxu0 0.0
      %3386 = vmatprep.subr.mxu0 0.0
      %3387 = vmatpush1.msra.mxu0 0.0
      %3388 = vmatprep.subr.mxu0 0.0
      %3389 = vmatpush1.msra.mxu0 0.0
      %3390 = vmatprep.subr.mxu0 0.0
      %3391 = vmatpush1.msra.mxu0 0.0
      %3392 = vmatprep.subr.mxu0 0.0
      %3393 = vmatpush1.msra.mxu0 0.0
      %3394 = vmatprep.subr.mxu0 0.0
      %3395 = vmatpush1.msra.mxu0 0.0
      %3396 = vmatprep.subr.mxu0 0.0
      %3397 = vmatpush1.msra.mxu0 0.0
      %3398 = vmatprep.subr.mxu0 0.0
      %3399 = vmatpush1.msra.mxu0 0.0
      %3400 = vmatprep.subr.mxu0 0.0
      %3401 = vmatpush1.msra.mxu0 0.0
      %3402 = vmatprep.subr.mxu0 0.0
      %3403 = vmatpush1.msra.mxu0 0.0
      %3404 = vmatprep.subr.mxu0 0.0
      %3405 = vmatpush1.msra.mxu0 0.0
      %3406 = vmatprep.subr.mxu0 0.0
      %3407 = vmatpush1.msra.mxu0 0.0
      %3408 = vmatprep.subr.mxu0 0.0
      %3409 = vmatpush1.msra.mxu0 0.0
      %3410 = vmatprep.subr.mxu0 0.0
      %3411 = vmatpush1.msra.mxu0 0.0
      %3412 = vmatprep.subr.mxu0 0.0
      %3413 = vmatpush1.msra.mxu0 0.0
      %3414 = vmatprep.subr.mxu0 0.0
      %3415 = vmatpush1.msra.mxu0 0.0
      %3416 = vmatprep.subr.mxu0 0.0
      %3417 = vmatpush1.msra.mxu0 0.0
      %3418 = vmatprep.subr.mxu0 0.0
      %3419 = vmatpush1.msra.mxu0 0.0
      %3420 = vmatprep.subr.mxu0 0.0
      %3421 = vmatpush1.msra.mxu0 0.0
      %3422 = vmatprep.mubr.f32.mxu0 0.0
      %3423 = vmatmul.mubr.f32.gmra.mrb[0].mxu0 %v3356
      %v3424 = vpop.f32.mrb[0].mxu0
      %v3425 = vadd.f32 0.0, %v3424
      %v3426 = vpop.f32.mrb[0].mxu0
      %3427 = vdwg.mxu0
      %v3428 = vadd.f32 %v3279, %v3425
      %v3429 = vld [vmem:[%s8] sm:$0xf]
      %3431 = vset.pattern.permute.xlu0 0
      %3432 = vperm.xlu0 %3431, %v3429
      %v3433 = vpop.permute.xlu0 %3432
      %v3435 = vadd.f32 %v3428, %v3433
      %v3436 = vmax.f32 %v3435, 0.0
      %v3437 = vld [vmem:[%s9] sm:$0xf]
      %v3439 = vsel %vm685, %v3437, 0
      %v3442 = vsel %vm689, %v3436, 0
      %3444 = vmatprep.subr.mxu0 0.0
      %3445 = vmatpush1.msra.mxu0 %v3442
      %3446 = vmatprep.subr.mxu0 0.0
      %3447 = vmatpush1.msra.mxu0 0.0
      %3448 = vmatprep.subr.mxu0 0.0
      %3449 = vmatpush1.msra.mxu0 0.0
      %3450 = vmatprep.subr.mxu0 0.0
      %3451 = vmatpush1.msra.mxu0 0.0
      %3452 = vmatprep.subr.mxu0 0.0
      %3453 = vmatpush1.msra.mxu0 0.0
      %3454 = vmatprep.subr.mxu0 0.0
      %3455 = vmatpush1.msra.mxu0 0.0
      %3456 = vmatprep.subr.mxu0 0.0
      %3457 = vmatpush1.msra.mxu0 0.0
      %3458 = vmatprep.subr.mxu0 0.0
      %3459 = vmatpush1.msra.mxu0 0.0
      %3460 = vmatprep.subr.mxu0 0.0
      %3461 = vmatpush1.msra.mxu0 0.0
      %3462 = vmatprep.subr.mxu0 0.0
      %3463 = vmatpush1.msra.mxu0 0.0
      %3464 = vmatprep.subr.mxu0 0.0
      %3465 = vmatpush1.msra.mxu0 0.0
      %3466 = vmatprep.subr.mxu0 0.0
      %3467 = vmatpush1.msra.mxu0 0.0
      %3468 = vmatprep.subr.mxu0 0.0
      %3469 = vmatpush1.msra.mxu0 0.0
      %3470 = vmatprep.subr.mxu0 0.0
      %3471 = vmatpush1.msra.mxu0 0.0
      %3472 = vmatprep.subr.mxu0 0.0
      %3473 = vmatpush1.msra.mxu0 0.0
      %3474 = vmatprep.subr.mxu0 0.0
      %3475 = vmatpush1.msra.mxu0 0.0
      %3476 = vmatprep.subr.mxu0 0.0
      %3477 = vmatpush1.msra.mxu0 0.0
      %3478 = vmatprep.subr.mxu0 0.0
      %3479 = vmatpush1.msra.mxu0 0.0
      %3480 = vmatprep.subr.mxu0 0.0
      %3481 = vmatpush1.msra.mxu0 0.0
      %3482 = vmatprep.subr.mxu0 0.0
      %3483 = vmatpush1.msra.mxu0 0.0
      %3484 = vmatprep.subr.mxu0 0.0
      %3485 = vmatpush1.msra.mxu0 0.0
      %3486 = vmatprep.subr.mxu0 0.0
      %3487 = vmatpush1.msra.mxu0 0.0
      %3488 = vmatprep.subr.mxu0 0.0
      %3489 = vmatpush1.msra.mxu0 0.0
      %3490 = vmatprep.subr.mxu0 0.0
      %3491 = vmatpush1.msra.mxu0 0.0
      %3492 = vmatprep.subr.mxu0 0.0
      %3493 = vmatpush1.msra.mxu0 0.0
      %3494 = vmatprep.subr.mxu0 0.0
      %3495 = vmatpush1.msra.mxu0 0.0
      %3496 = vmatprep.subr.mxu0 0.0
      %3497 = vmatpush1.msra.mxu0 0.0
      %3498 = vmatprep.subr.mxu0 0.0
      %3499 = vmatpush1.msra.mxu0 0.0
      %3500 = vmatprep.subr.mxu0 0.0
      %3501 = vmatpush1.msra.mxu0 0.0
      %3502 = vmatprep.subr.mxu0 0.0
      %3503 = vmatpush1.msra.mxu0 0.0
      %3504 = vmatprep.subr.mxu0 0.0
      %3505 = vmatpush1.msra.mxu0 0.0
      %3506 = vmatprep.subr.mxu0 0.0
      %3507 = vmatpush1.msra.mxu0 0.0
      %3508 = vmatprep.mubr.f32.mxu0 0.0
      %3509 = vmatmul.mubr.f32.gmra.mrb[0].mxu0 %v3439
      %v3510 = vpop.f32.mrb[0].mxu0
      %v3511 = vadd.f32 0.0, %v3510
      %v3512 = vpop.f32.mrb[0].mxu0
      %3513 = vdwg.mxu0
      %s3514 = scalar_lea.vmem %s9, 4
      %v3515 = vld [vmem:[%s3514] sm:$0xf]
      %v3517 = vsel %vm685, %v3515, 0
      %3519 = vmatprep.subr.mxu0 0.0
      %3520 = vmatpush1.msra.mxu0 %v3442
      %3521 = vmatprep.subr.mxu0 0.0
      %3522 = vmatpush1.msra.mxu0 0.0
      %3523 = vmatprep.subr.mxu0 0.0
      %3524 = vmatpush1.msra.mxu0 0.0
      %3525 = vmatprep.subr.mxu0 0.0
      %3526 = vmatpush1.msra.mxu0 0.0
      %3527 = vmatprep.subr.mxu0 0.0
      %3528 = vmatpush1.msra.mxu0 0.0
      %3529 = vmatprep.subr.mxu0 0.0
      %3530 = vmatpush1.msra.mxu0 0.0
      %3531 = vmatprep.subr.mxu0 0.0
      %3532 = vmatpush1.msra.mxu0 0.0
      %3533 = vmatprep.subr.mxu0 0.0
      %3534 = vmatpush1.msra.mxu0 0.0
      %3535 = vmatprep.subr.mxu0 0.0
      %3536 = vmatpush1.msra.mxu0 0.0
      %3537 = vmatprep.subr.mxu0 0.0
      %3538 = vmatpush1.msra.mxu0 0.0
      %3539 = vmatprep.subr.mxu0 0.0
      %3540 = vmatpush1.msra.mxu0 0.0
      %3541 = vmatprep.subr.mxu0 0.0
      %3542 = vmatpush1.msra.mxu0 0.0
      %3543 = vmatprep.subr.mxu0 0.0
      %3544 = vmatpush1.msra.mxu0 0.0
      %3545 = vmatprep.subr.mxu0 0.0
      %3546 = vmatpush1.msra.mxu0 0.0
      %3547 = vmatprep.subr.mxu0 0.0
      %3548 = vmatpush1.msra.mxu0 0.0
      %3549 = vmatprep.subr.mxu0 0.0
      %3550 = vmatpush1.msra.mxu0 0.0
      %3551 = vmatprep.subr.mxu0 0.0
      %3552 = vmatpush1.msra.mxu0 0.0
      %3553 = vmatprep.subr.mxu0 0.0
      %3554 = vmatpush1.msra.mxu0 0.0
      %3555 = vmatprep.subr.mxu0 0.0
      %3556 = vmatpush1.msra.mxu0 0.0
      %3557 = vmatprep.subr.mxu0 0.0
      %3558 = vmatpush1.msra.mxu0 0.0
      %3559 = vmatprep.subr.mxu0 0.0
      %3560 = vmatpush1.msra.mxu0 0.0
      %3561 = vmatprep.subr.mxu0 0.0
      %3562 = vmatpush1.msra.mxu0 0.0
      %3563 = vmatprep.subr.mxu0 0.0
      %3564 = vmatpush1.msra.mxu0 0.0
      %3565 = vmatprep.subr.mxu0 0.0
      %3566 = vmatpush1.msra.mxu0 0.0
      %3567 = vmatprep.subr.mxu0 0.0
      %3568 = vmatpush1.msra.mxu0 0.0
      %3569 = vmatprep.subr.mxu0 0.0
      %3570 = vmatpush1.msra.mxu0 0.0
      %3571 = vmatprep.subr.mxu0 0.0
      %3572 = vmatpush1.msra.mxu0 0.0
      %3573 = vmatprep.subr.mxu0 0.0
      %3574 = vmatpush1.msra.mxu0 0.0
      %3575 = vmatprep.subr.mxu0 0.0
      %3576 = vmatpush1.msra.mxu0 0.0
      %3577 = vmatprep.subr.mxu0 0.0
      %3578 = vmatpush1.msra.mxu0 0.0
      %3579 = vmatprep.subr.mxu0 0.0
      %3580 = vmatpush1.msra.mxu0 0.0
      %3581 = vmatprep.subr.mxu0 0.0
      %3582 = vmatpush1.msra.mxu0 0.0
      %3583 = vmatprep.mubr.f32.mxu0 0.0
      %3584 = vmatmul.mubr.f32.gmra.mrb[0].mxu0 %v3517
      %v3585 = vpop.f32.mrb[0].mxu0
      %v3586 = vadd.f32 0.0, %v3585
      %v3587 = vpop.f32.mrb[0].mxu0
      %3588 = vdwg.mxu0
      %v3590 = vsel %vm842, %v3586, 0
      %3592 = vmatprep.subr.mxu0 0.0
      %3593 = vmatpush1.msra.mxu0 %v840
      %3594 = vmatprep.subr.mxu0 0.0
      %3595 = vmatpush1.msra.mxu0 %v847
      %3596 = vmatprep.subr.mxu0 0.0
      %3597 = vmatpush1.msra.mxu0 0.0
      %3598 = vmatprep.subr.mxu0 0.0
      %3599 = vmatpush1.msra.mxu0 0.0
      %3600 = vmatprep.subr.mxu0 0.0
      %3601 = vmatpush1.msra.mxu0 0.0
      %3602 = vmatprep.subr.mxu0 0.0
      %3603 = vmatpush1.msra.mxu0 0.0
      %3604 = vmatprep.subr.mxu0 0.0
      %3605 = vmatpush1.msra.mxu0 0.0
      %3606 = vmatprep.subr.mxu0 0.0
      %3607 = vmatpush1.msra.mxu0 0.0
      %3608 = vmatprep.subr.mxu0 0.0
      %3609 = vmatpush1.msra.mxu0 0.0
      %3610 = vmatprep.subr.mxu0 0.0
      %3611 = vmatpush1.msra.mxu0 0.0
      %3612 = vmatprep.subr.mxu0 0.0
      %3613 = vmatpush1.msra.mxu0 0.0
      %3614 = vmatprep.subr.mxu0 0.0
      %3615 = vmatpush1.msra.mxu0 0.0
      %3616 = vmatprep.subr.mxu0 0.0
      %3617 = vmatpush1.msra.mxu0 0.0
      %3618 = vmatprep.subr.mxu0 0.0
      %3619 = vmatpush1.msra.mxu0 0.0
      %3620 = vmatprep.subr.mxu0 0.0
      %3621 = vmatpush1.msra.mxu0 0.0
      %3622 = vmatprep.subr.mxu0 0.0
      %3623 = vmatpush1.msra.mxu0 0.0
      %3624 = vmatprep.subr.mxu0 0.0
      %3625 = vmatpush1.msra.mxu0 0.0
      %3626 = vmatprep.subr.mxu0 0.0
      %3627 = vmatpush1.msra.mxu0 0.0
      %3628 = vmatprep.subr.mxu0 0.0
      %3629 = vmatpush1.msra.mxu0 0.0
      %3630 = vmatprep.subr.mxu0 0.0
      %3631 = vmatpush1.msra.mxu0 0.0
      %3632 = vmatprep.subr.mxu0 0.0
      %3633 = vmatpush1.msra.mxu0 0.0
      %3634 = vmatprep.subr.mxu0 0.0
      %3635 = vmatpush1.msra.mxu0 0.0
      %3636 = vmatprep.subr.mxu0 0.0
      %3637 = vmatpush1.msra.mxu0 0.0
      %3638 = vmatprep.subr.mxu0 0.0
      %3639 = vmatpush1.msra.mxu0 0.0
      %3640 = vmatprep.subr.mxu0 0.0
      %3641 = vmatpush1.msra.mxu0 0.0
      %3642 = vmatprep.subr.mxu0 0.0
      %3643 = vmatpush1.msra.mxu0 0.0
      %3644 = vmatprep.subr.mxu0 0.0
      %3645 = vmatpush1.msra.mxu0 0.0
      %3646 = vmatprep.subr.mxu0 0.0
      %3647 = vmatpush1.msra.mxu0 0.0
      %3648 = vmatprep.subr.mxu0 0.0
      %3649 = vmatpush1.msra.mxu0 0.0
      %3650 = vmatprep.subr.mxu0 0.0
      %3651 = vmatpush1.msra.mxu0 0.0
      %3652 = vmatprep.subr.mxu0 0.0
      %3653 = vmatpush1.msra.mxu0 0.0
      %3654 = vmatprep.subr.mxu0 0.0
      %3655 = vmatpush1.msra.mxu0 0.0
      %3656 = vmatprep.mubr.f32.mxu0 0.0
      %3657 = vmatmul.mubr.f32.gmra.mrb[0].mxu0 %v3590
      %v3658 = vpop.f32.mrb[0].mxu0
      %v3659 = vadd.f32 0.0, %v3658
      %v3660 = vpop.f32.mrb[0].mxu0
      %3661 = vdwg.mxu0
      %v3663 = vsel %vm842, %v3511, 0
      %3665 = vmatprep.subr.mxu0 0.0
      %3666 = vmatpush1.msra.mxu0 %v762
      %3667 = vmatprep.subr.mxu0 0.0
      %3668 = vmatpush1.msra.mxu0 %v923
      %3669 = vmatprep.subr.mxu0 0.0
      %3670 = vmatpush1.msra.mxu0 0.0
      %3671 = vmatprep.subr.mxu0 0.0
      %3672 = vmatpush1.msra.mxu0 0.0
      %3673 = vmatprep.subr.mxu0 0.0
      %3674 = vmatpush1.msra.mxu0 0.0
      %3675 = vmatprep.subr.mxu0 0.0
      %3676 = vmatpush1.msra.mxu0 0.0
      %3677 = vmatprep.subr.mxu0 0.0
      %3678 = vmatpush1.msra.mxu0 0.0
      %3679 = vmatprep.subr.mxu0 0.0
      %3680 = vmatpush1.msra.mxu0 0.0
      %3681 = vmatprep.subr.mxu0 0.0
      %3682 = vmatpush1.msra.mxu0 0.0
      %3683 = vmatprep.subr.mxu0 0.0
      %3684 = vmatpush1.msra.mxu0 0.0
      %3685 = vmatprep.subr.mxu0 0.0
      %3686 = vmatpush1.msra.mxu0 0.0
      %3687 = vmatprep.subr.mxu0 0.0
      %3688 = vmatpush1.msra.mxu0 0.0
      %3689 = vmatprep.subr.mxu0 0.0
      %3690 = vmatpush1.msra.mxu0 0.0
      %3691 = vmatprep.subr.mxu0 0.0
      %3692 = vmatpush1.msra.mxu0 0.0
      %3693 = vmatprep.subr.mxu0 0.0
      %3694 = vmatpush1.msra.mxu0 0.0
      %3695 = vmatprep.subr.mxu0 0.0
      %3696 = vmatpush1.msra.mxu0 0.0
      %3697 = vmatprep.subr.mxu0 0.0
      %3698 = vmatpush1.msra.mxu0 0.0
      %3699 = vmatprep.subr.mxu0 0.0
      %3700 = vmatpush1.msra.mxu0 0.0
      %3701 = vmatprep.subr.mxu0 0.0
      %3702 = vmatpush1.msra.mxu0 0.0
      %3703 = vmatprep.subr.mxu0 0.0
      %3704 = vmatpush1.msra.mxu0 0.0
      %3705 = vmatprep.subr.mxu0 0.0
      %3706 = vmatpush1.msra.mxu0 0.0
      %3707 = vmatprep.subr.mxu0 0.0
      %3708 = vmatpush1.msra.mxu0 0.0
      %3709 = vmatprep.subr.mxu0 0.0
      %3710 = vmatpush1.msra.mxu0 0.0
      %3711 = vmatprep.subr.mxu0 0.0
      %3712 = vmatpush1.msra.mxu0 0.0
      %3713 = vmatprep.subr.mxu0 0.0
      %3714 = vmatpush1.msra.mxu0 0.0
      %3715 = vmatprep.subr.mxu0 0.0
      %3716 = vmatpush1.msra.mxu0 0.0
      %3717 = vmatprep.subr.mxu0 0.0
      %3718 = vmatpush1.msra.mxu0 0.0
      %3719 = vmatprep.subr.mxu0 0.0
      %3720 = vmatpush1.msra.mxu0 0.0
      %3721 = vmatprep.subr.mxu0 0.0
      %3722 = vmatpush1.msra.mxu0 0.0
      %3723 = vmatprep.subr.mxu0 0.0
      %3724 = vmatpush1.msra.mxu0 0.0
      %3725 = vmatprep.subr.mxu0 0.0
      %3726 = vmatpush1.msra.mxu0 0.0
      %3727 = vmatprep.subr.mxu0 0.0
      %3728 = vmatpush1.msra.mxu0 0.0
      %3729 = vmatprep.mubr.f32.mxu0 0.0
      %3730 = vmatmul.mubr.f32.gmra.mrb[0].mxu0 %v3663
      %v3731 = vpop.f32.mrb[0].mxu0
      %v3732 = vadd.f32 %v3659, %v3731
      %v3733 = vpop.f32.mrb[0].mxu0
      %3734 = vdwg.mxu0
      %s3735 = scalar_lea.vmem %s9, 8
      %v3736 = vld [vmem:[%s3735] sm:$0xf]
      %v3738 = vsel %vm685, %v3736, 0
      %3740 = vmatprep.subr.mxu0 0.0
      %3741 = vmatpush1.msra.mxu0 %v3442
      %3742 = vmatprep.subr.mxu0 0.0
      %3743 = vmatpush1.msra.mxu0 0.0
      %3744 = vmatprep.subr.mxu0 0.0
      %3745 = vmatpush1.msra.mxu0 0.0
      %3746 = vmatprep.subr.mxu0 0.0
      %3747 = vmatpush1.msra.mxu0 0.0
      %3748 = vmatprep.subr.mxu0 0.0
      %3749 = vmatpush1.msra.mxu0 0.0
      %3750 = vmatprep.subr.mxu0 0.0
      %3751 = vmatpush1.msra.mxu0 0.0
      %3752 = vmatprep.subr.mxu0 0.0
      %3753 = vmatpush1.msra.mxu0 0.0
      %3754 = vmatprep.subr.mxu0 0.0
      %3755 = vmatpush1.msra.mxu0 0.0
      %3756 = vmatprep.subr.mxu0 0.0
      %3757 = vmatpush1.msra.mxu0 0.0
      %3758 = vmatprep.subr.mxu0 0.0
      %3759 = vmatpush1.msra.mxu0 0.0
      %3760 = vmatprep.subr.mxu0 0.0
      %3761 = vmatpush1.msra.mxu0 0.0
      %3762 = vmatprep.subr.mxu0 0.0
      %3763 = vmatpush1.msra.mxu0 0.0
      %3764 = vmatprep.subr.mxu0 0.0
      %3765 = vmatpush1.msra.mxu0 0.0
      %3766 = vmatprep.subr.mxu0 0.0
      %3767 = vmatpush1.msra.mxu0 0.0
      %3768 = vmatprep.subr.mxu0 0.0
      %3769 = vmatpush1.msra.mxu0 0.0
      %3770 = vmatprep.subr.mxu0 0.0
      %3771 = vmatpush1.msra.mxu0 0.0
      %3772 = vmatprep.subr.mxu0 0.0
      %3773 = vmatpush1.msra.mxu0 0.0
      %3774 = vmatprep.subr.mxu0 0.0
      %3775 = vmatpush1.msra.mxu0 0.0
      %3776 = vmatprep.subr.mxu0 0.0
      %3777 = vmatpush1.msra.mxu0 0.0
      %3778 = vmatprep.subr.mxu0 0.0
      %3779 = vmatpush1.msra.mxu0 0.0
      %3780 = vmatprep.subr.mxu0 0.0
      %3781 = vmatpush1.msra.mxu0 0.0
      %3782 = vmatprep.subr.mxu0 0.0
      %3783 = vmatpush1.msra.mxu0 0.0
      %3784 = vmatprep.subr.mxu0 0.0
      %3785 = vmatpush1.msra.mxu0 0.0
      %3786 = vmatprep.subr.mxu0 0.0
      %3787 = vmatpush1.msra.mxu0 0.0
      %3788 = vmatprep.subr.mxu0 0.0
      %3789 = vmatpush1.msra.mxu0 0.0
      %3790 = vmatprep.subr.mxu0 0.0
      %3791 = vmatpush1.msra.mxu0 0.0
      %3792 = vmatprep.subr.mxu0 0.0
      %3793 = vmatpush1.msra.mxu0 0.0
      %3794 = vmatprep.subr.mxu0 0.0
      %3795 = vmatpush1.msra.mxu0 0.0
      %3796 = vmatprep.subr.mxu0 0.0
      %3797 = vmatpush1.msra.mxu0 0.0
      %3798 = vmatprep.subr.mxu0 0.0
      %3799 = vmatpush1.msra.mxu0 0.0
      %3800 = vmatprep.subr.mxu0 0.0
      %3801 = vmatpush1.msra.mxu0 0.0
      %3802 = vmatprep.subr.mxu0 0.0
      %3803 = vmatpush1.msra.mxu0 0.0
      %3804 = vmatprep.mubr.f32.mxu0 0.0
      %3805 = vmatmul.mubr.f32.gmra.mrb[0].mxu0 %v3738
      %v3806 = vpop.f32.mrb[0].mxu0
      %v3807 = vadd.f32 0.0, %v3806
      %v3808 = vpop.f32.mrb[0].mxu0
      %3809 = vdwg.mxu0
      %v3811 = vsel %vm842, %v3807, 0
      %3813 = vmatprep.subr.mxu0 0.0
      %3814 = vmatpush1.msra.mxu0 %v1071
      %3815 = vmatprep.subr.mxu0 0.0
      %3816 = vmatpush1.msra.mxu0 %v1077
      %3817 = vmatprep.subr.mxu0 0.0
      %3818 = vmatpush1.msra.mxu0 0.0
      %3819 = vmatprep.subr.mxu0 0.0
      %3820 = vmatpush1.msra.mxu0 0.0
      %3821 = vmatprep.subr.mxu0 0.0
      %3822 = vmatpush1.msra.mxu0 0.0
      %3823 = vmatprep.subr.mxu0 0.0
      %3824 = vmatpush1.msra.mxu0 0.0
      %3825 = vmatprep.subr.mxu0 0.0
      %3826 = vmatpush1.msra.mxu0 0.0
      %3827 = vmatprep.subr.mxu0 0.0
      %3828 = vmatpush1.msra.mxu0 0.0
      %3829 = vmatprep.subr.mxu0 0.0
      %3830 = vmatpush1.msra.mxu0 0.0
      %3831 = vmatprep.subr.mxu0 0.0
      %3832 = vmatpush1.msra.mxu0 0.0
      %3833 = vmatprep.subr.mxu0 0.0
      %3834 = vmatpush1.msra.mxu0 0.0
      %3835 = vmatprep.subr.mxu0 0.0
      %3836 = vmatpush1.msra.mxu0 0.0
      %3837 = vmatprep.subr.mxu0 0.0
      %3838 = vmatpush1.msra.mxu0 0.0
      %3839 = vmatprep.subr.mxu0 0.0
      %3840 = vmatpush1.msra.mxu0 0.0
      %3841 = vmatprep.subr.mxu0 0.0
      %3842 = vmatpush1.msra.mxu0 0.0
      %3843 = vmatprep.subr.mxu0 0.0
      %3844 = vmatpush1.msra.mxu0 0.0
      %3845 = vmatprep.subr.mxu0 0.0
      %3846 = vmatpush1.msra.mxu0 0.0
      %3847 = vmatprep.subr.mxu0 0.0
      %3848 = vmatpush1.msra.mxu0 0.0
      %3849 = vmatprep.subr.mxu0 0.0
      %3850 = vmatpush1.msra.mxu0 0.0
      %3851 = vmatprep.subr.mxu0 0.0
      %3852 = vmatpush1.msra.mxu0 0.0
      %3853 = vmatprep.subr.mxu0 0.0
      %3854 = vmatpush1.msra.mxu0 0.0
      %3855 = vmatprep.subr.mxu0 0.0
      %3856 = vmatpush1.msra.mxu0 0.0
      %3857 = vmatprep.subr.mxu0 0.0
      %3858 = vmatpush1.msra.mxu0 0.0
      %3859 = vmatprep.subr.mxu0 0.0
      %3860 = vmatpush1.msra.mxu0 0.0
      %3861 = vmatprep.subr.mxu0 0.0
      %3862 = vmatpush1.msra.mxu0 0.0
      %3863 = vmatprep.subr.mxu0 0.0
      %3864 = vmatpush1.msra.mxu0 0.0
      %3865 = vmatprep.subr.mxu0 0.0
      %3866 = vmatpush1.msra.mxu0 0.0
      %3867 = vmatprep.subr.mxu0 0.0
      %3868 = vmatpush1.msra.mxu0 0.0
      %3869 = vmatprep.subr.mxu0 0.0
      %3870 = vmatpush1.msra.mxu0 0.0
      %3871 = vmatprep.subr.mxu0 0.0
      %3872 = vmatpush1.msra.mxu0 0.0
      %3873 = vmatprep.subr.mxu0 0.0
      %3874 = vmatpush1.msra.mxu0 0.0
      %3875 = vmatprep.subr.mxu0 0.0
      %3876 = vmatpush1.msra.mxu0 0.0
      %3877 = vmatprep.mubr.f32.mxu0 0.0
      %3878 = vmatmul.mubr.f32.gmra.mrb[0].mxu0 %v3811
      %v3879 = vpop.f32.mrb[0].mxu0
      %v3880 = vadd.f32 0.0, %v3879
      %v3881 = vpop.f32.mrb[0].mxu0
      %3882 = vdwg.mxu0
      %v3883 = vadd.f32 %v3732, %v3880
      %s3884 = scalar_lea.vmem %s9, 12
      %v3885 = vld [vmem:[%s3884] sm:$0xf]
      %v3887 = vsel %vm685, %v3885, 0
      %3889 = vmatprep.subr.mxu0 0.0
      %3890 = vmatpush1.msra.mxu0 %v3442
      %3891 = vmatprep.subr.mxu0 0.0
      %3892 = vmatpush1.msra.mxu0 0.0
      %3893 = vmatprep.subr.mxu0 0.0
      %3894 = vmatpush1.msra.mxu0 0.0
      %3895 = vmatprep.subr.mxu0 0.0
      %3896 = vmatpush1.msra.mxu0 0.0
      %3897 = vmatprep.subr.mxu0 0.0
      %3898 = vmatpush1.msra.mxu0 0.0
      %3899 = vmatprep.subr.mxu0 0.0
      %3900 = vmatpush1.msra.mxu0 0.0
      %3901 = vmatprep.subr.mxu0 0.0
      %3902 = vmatpush1.msra.mxu0 0.0
      %3903 = vmatprep.subr.mxu0 0.0
      %3904 = vmatpush1.msra.mxu0 0.0
      %3905 = vmatprep.subr.mxu0 0.0
      %3906 = vmatpush1.msra.mxu0 0.0
      %3907 = vmatprep.subr.mxu0 0.0
      %3908 = vmatpush1.msra.mxu0 0.0
      %3909 = vmatprep.subr.mxu0 0.0
      %3910 = vmatpush1.msra.mxu0 0.0
      %3911 = vmatprep.subr.mxu0 0.0
      %3912 = vmatpush1.msra.mxu0 0.0
      %3913 = vmatprep.subr.mxu0 0.0
      %3914 = vmatpush1.msra.mxu0 0.0
      %3915 = vmatprep.subr.mxu0 0.0
      %3916 = vmatpush1.msra.mxu0 0.0
      %3917 = vmatprep.subr.mxu0 0.0
      %3918 = vmatpush1.msra.mxu0 0.0
      %3919 = vmatprep.subr.mxu0 0.0
      %3920 = vmatpush1.msra.mxu0 0.0
      %3921 = vmatprep.subr.mxu0 0.0
      %3922 = vmatpush1.msra.mxu0 0.0
      %3923 = vmatprep.subr.mxu0 0.0
      %3924 = vmatpush1.msra.mxu0 0.0
      %3925 = vmatprep.subr.mxu0 0.0
      %3926 = vmatpush1.msra.mxu0 0.0
      %3927 = vmatprep.subr.mxu0 0.0
      %3928 = vmatpush1.msra.mxu0 0.0
      %3929 = vmatprep.subr.mxu0 0.0
      %3930 = vmatpush1.msra.mxu0 0.0
      %3931 = vmatprep.subr.mxu0 0.0
      %3932 = vmatpush1.msra.mxu0 0.0
      %3933 = vmatprep.subr.mxu0 0.0
      %3934 = vmatpush1.msra.mxu0 0.0
      %3935 = vmatprep.subr.mxu0 0.0
      %3936 = vmatpush1.msra.mxu0 0.0
      %3937 = vmatprep.subr.mxu0 0.0
      %3938 = vmatpush1.msra.mxu0 0.0
      %3939 = vmatprep.subr.mxu0 0.0
      %3940 = vmatpush1.msra.mxu0 0.0
      %3941 = vmatprep.subr.mxu0 0.0
      %3942 = vmatpush1.msra.mxu0 0.0
      %3943 = vmatprep.subr.mxu0 0.0
      %3944 = vmatpush1.msra.mxu0 0.0
      %3945 = vmatprep.subr.mxu0 0.0
      %3946 = vmatpush1.msra.mxu0 0.0
      %3947 = vmatprep.subr.mxu0 0.0
      %3948 = vmatpush1.msra.mxu0 0.0
      %3949 = vmatprep.subr.mxu0 0.0
      %3950 = vmatpush1.msra.mxu0 0.0
      %3951 = vmatprep.subr.mxu0 0.0
      %3952 = vmatpush1.msra.mxu0 0.0
      %3953 = vmatprep.mubr.f32.mxu0 0.0
      %3954 = vmatmul.mubr.f32.gmra.mrb[0].mxu0 %v3887
      %v3955 = vpop.f32.mrb[0].mxu0
      %v3956 = vadd.f32 0.0, %v3955
      %v3957 = vpop.f32.mrb[0].mxu0
      %3958 = vdwg.mxu0
      %v3960 = vsel %vm842, %v3956, 0
      %3962 = vmatprep.subr.mxu0 0.0
      %3963 = vmatpush1.msra.mxu0 %v1226
      %3964 = vmatprep.subr.mxu0 0.0
      %3965 = vmatpush1.msra.mxu0 %v1232
      %3966 = vmatprep.subr.mxu0 0.0
      %3967 = vmatpush1.msra.mxu0 0.0
      %3968 = vmatprep.subr.mxu0 0.0
      %3969 = vmatpush1.msra.mxu0 0.0
      %3970 = vmatprep.subr.mxu0 0.0
      %3971 = vmatpush1.msra.mxu0 0.0
      %3972 = vmatprep.subr.mxu0 0.0
      %3973 = vmatpush1.msra.mxu0 0.0
      %3974 = vmatprep.subr.mxu0 0.0
      %3975 = vmatpush1.msra.mxu0 0.0
      %3976 = vmatprep.subr.mxu0 0.0
      %3977 = vmatpush1.msra.mxu0 0.0
      %3978 = vmatprep.subr.mxu0 0.0
      %3979 = vmatpush1.msra.mxu0 0.0
      %3980 = vmatprep.subr.mxu0 0.0
      %3981 = vmatpush1.msra.mxu0 0.0
      %3982 = vmatprep.subr.mxu0 0.0
      %3983 = vmatpush1.msra.mxu0 0.0
      %3984 = vmatprep.subr.mxu0 0.0
      %3985 = vmatpush1.msra.mxu0 0.0
      %3986 = vmatprep.subr.mxu0 0.0
      %3987 = vmatpush1.msra.mxu0 0.0
      %3988 = vmatprep.subr.mxu0 0.0
      %3989 = vmatpush1.msra.mxu0 0.0
      %3990 = vmatprep.subr.mxu0 0.0
      %3991 = vmatpush1.msra.mxu0 0.0
      %3992 = vmatprep.subr.mxu0 0.0
      %3993 = vmatpush1.msra.mxu0 0.0
      %3994 = vmatprep.subr.mxu0 0.0
      %3995 = vmatpush1.msra.mxu0 0.0
      %3996 = vmatprep.subr.mxu0 0.0
      %3997 = vmatpush1.msra.mxu0 0.0
      %3998 = vmatprep.subr.mxu0 0.0
      %3999 = vmatpush1.msra.mxu0 0.0
      %4000 = vmatprep.subr.mxu0 0.0
      %4001 = vmatpush1.msra.mxu0 0.0
      %4002 = vmatprep.subr.mxu0 0.0
      %4003 = vmatpush1.msra.mxu0 0.0
      %4004 = vmatprep.subr.mxu0 0.0
      %4005 = vmatpush1.msra.mxu0 0.0
      %4006 = vmatprep.subr.mxu0 0.0
      %4007 = vmatpush1.msra.mxu0 0.0
      %4008 = vmatprep.subr.mxu0 0.0
      %4009 = vmatpush1.msra.mxu0 0.0
      %4010 = vmatprep.subr.mxu0 0.0
      %4011 = vmatpush1.msra.mxu0 0.0
      %4012 = vmatprep.subr.mxu0 0.0
      %4013 = vmatpush1.msra.mxu0 0.0
      %4014 = vmatprep.subr.mxu0 0.0
      %4015 = vmatpush1.msra.mxu0 0.0
      %4016 = vmatprep.subr.mxu0 0.0
      %4017 = vmatpush1.msra.mxu0 0.0
      %4018 = vmatprep.subr.mxu0 0.0
      %4019 = vmatpush1.msra.mxu0 0.0
      %4020 = vmatprep.subr.mxu0 0.0
      %4021 = vmatpush1.msra.mxu0 0.0
      %4022 = vmatprep.subr.mxu0 0.0
      %4023 = vmatpush1.msra.mxu0 0.0
      %4024 = vmatprep.subr.mxu0 0.0
      %4025 = vmatpush1.msra.mxu0 0.0
      %4026 = vmatprep.mubr.f32.mxu0 0.0
      %4027 = vmatmul.mubr.f32.gmra.mrb[0].mxu0 %v3960
      %v4028 = vpop.f32.mrb[0].mxu0
      %v4029 = vadd.f32 0.0, %v4028
      %v4030 = vpop.f32.mrb[0].mxu0
      %4031 = vdwg.mxu0
      %v4032 = vadd.f32 %v3883, %v4029
      %s4033 = scalar_lea.vmem %s9, 16
      %v4034 = vld [vmem:[%s4033] sm:$0xf]
      %v4036 = vsel %vm685, %v4034, 0
      %4038 = vmatprep.subr.mxu0 0.0
      %4039 = vmatpush1.msra.mxu0 %v3442
      %4040 = vmatprep.subr.mxu0 0.0
      %4041 = vmatpush1.msra.mxu0 0.0
      %4042 = vmatprep.subr.mxu0 0.0
      %4043 = vmatpush1.msra.mxu0 0.0
      %4044 = vmatprep.subr.mxu0 0.0
      %4045 = vmatpush1.msra.mxu0 0.0
      %4046 = vmatprep.subr.mxu0 0.0
      %4047 = vmatpush1.msra.mxu0 0.0
      %4048 = vmatprep.subr.mxu0 0.0
      %4049 = vmatpush1.msra.mxu0 0.0
      %4050 = vmatprep.subr.mxu0 0.0
      %4051 = vmatpush1.msra.mxu0 0.0
      %4052 = vmatprep.subr.mxu0 0.0
      %4053 = vmatpush1.msra.mxu0 0.0
      %4054 = vmatprep.subr.mxu0 0.0
      %4055 = vmatpush1.msra.mxu0 0.0
      %4056 = vmatprep.subr.mxu0 0.0
      %4057 = vmatpush1.msra.mxu0 0.0
      %4058 = vmatprep.subr.mxu0 0.0
      %4059 = vmatpush1.msra.mxu0 0.0
      %4060 = vmatprep.subr.mxu0 0.0
      %4061 = vmatpush1.msra.mxu0 0.0
      %4062 = vmatprep.subr.mxu0 0.0
      %4063 = vmatpush1.msra.mxu0 0.0
      %4064 = vmatprep.subr.mxu0 0.0
      %4065 = vmatpush1.msra.mxu0 0.0
      %4066 = vmatprep.subr.mxu0 0.0
      %4067 = vmatpush1.msra.mxu0 0.0
      %4068 = vmatprep.subr.mxu0 0.0
      %4069 = vmatpush1.msra.mxu0 0.0
      %4070 = vmatprep.subr.mxu0 0.0
      %4071 = vmatpush1.msra.mxu0 0.0
      %4072 = vmatprep.subr.mxu0 0.0
      %4073 = vmatpush1.msra.mxu0 0.0
      %4074 = vmatprep.subr.mxu0 0.0
      %4075 = vmatpush1.msra.mxu0 0.0
      %4076 = vmatprep.subr.mxu0 0.0
      %4077 = vmatpush1.msra.mxu0 0.0
      %4078 = vmatprep.subr.mxu0 0.0
      %4079 = vmatpush1.msra.mxu0 0.0
      %4080 = vmatprep.subr.mxu0 0.0
      %4081 = vmatpush1.msra.mxu0 0.0
      %4082 = vmatprep.subr.mxu0 0.0
      %4083 = vmatpush1.msra.mxu0 0.0
      %4084 = vmatprep.subr.mxu0 0.0
      %4085 = vmatpush1.msra.mxu0 0.0
      %4086 = vmatprep.subr.mxu0 0.0
      %4087 = vmatpush1.msra.mxu0 0.0
      %4088 = vmatprep.subr.mxu0 0.0
      %4089 = vmatpush1.msra.mxu0 0.0
      %4090 = vmatprep.subr.mxu0 0.0
      %4091 = vmatpush1.msra.mxu0 0.0
      %4092 = vmatprep.subr.mxu0 0.0
      %4093 = vmatpush1.msra.mxu0 0.0
      %4094 = vmatprep.subr.mxu0 0.0
      %4095 = vmatpush1.msra.mxu0 0.0
      %4096 = vmatprep.subr.mxu0 0.0
      %4097 = vmatpush1.msra.mxu0 0.0
      %4098 = vmatprep.subr.mxu0 0.0
      %4099 = vmatpush1.msra.mxu0 0.0
      %4100 = vmatprep.subr.mxu0 0.0
      %4101 = vmatpush1.msra.mxu0 0.0
      %4102 = vmatprep.mubr.f32.mxu0 0.0
      %4103 = vmatmul.mubr.f32.gmra.mrb[0].mxu0 %v4036
      %v4104 = vpop.f32.mrb[0].mxu0
      %v4105 = vadd.f32 0.0, %v4104
      %v4106 = vpop.f32.mrb[0].mxu0
      %4107 = vdwg.mxu0
      %v4109 = vsel %vm842, %v4105, 0
      %4111 = vmatprep.subr.mxu0 0.0
      %4112 = vmatpush1.msra.mxu0 %v1381
      %4113 = vmatprep.subr.mxu0 0.0
      %4114 = vmatpush1.msra.mxu0 %v1387
      %4115 = vmatprep.subr.mxu0 0.0
      %4116 = vmatpush1.msra.mxu0 0.0
      %4117 = vmatprep.subr.mxu0 0.0
      %4118 = vmatpush1.msra.mxu0 0.0
      %4119 = vmatprep.subr.mxu0 0.0
      %4120 = vmatpush1.msra.mxu0 0.0
      %4121 = vmatprep.subr.mxu0 0.0
      %4122 = vmatpush1.msra.mxu0 0.0
      %4123 = vmatprep.subr.mxu0 0.0
      %4124 = vmatpush1.msra.mxu0 0.0
      %4125 = vmatprep.subr.mxu0 0.0
      %4126 = vmatpush1.msra.mxu0 0.0
      %4127 = vmatprep.subr.mxu0 0.0
      %4128 = vmatpush1.msra.mxu0 0.0
      %4129 = vmatprep.subr.mxu0 0.0
      %4130 = vmatpush1.msra.mxu0 0.0
      %4131 = vmatprep.subr.mxu0 0.0
      %4132 = vmatpush1.msra.mxu0 0.0
      %4133 = vmatprep.subr.mxu0 0.0
      %4134 = vmatpush1.msra.mxu0 0.0
      %4135 = vmatprep.subr.mxu0 0.0
      %4136 = vmatpush1.msra.mxu0 0.0
      %4137 = vmatprep.subr.mxu0 0.0
      %4138 = vmatpush1.msra.mxu0 0.0
      %4139 = vmatprep.subr.mxu0 0.0
      %4140 = vmatpush1.msra.mxu0 0.0
      %4141 = vmatprep.subr.mxu0 0.0
      %4142 = vmatpush1.msra.mxu0 0.0
      %4143 = vmatprep.subr.mxu0 0.0
      %4144 = vmatpush1.msra.mxu0 0.0
      %4145 = vmatprep.subr.mxu0 0.0
      %4146 = vmatpush1.msra.mxu0 0.0
      %4147 = vmatprep.subr.mxu0 0.0
      %4148 = vmatpush1.msra.mxu0 0.0
      %4149 = vmatprep.subr.mxu0 0.0
      %4150 = vmatpush1.msra.mxu0 0.0
      %4151 = vmatprep.subr.mxu0 0.0
      %4152 = vmatpush1.msra.mxu0 0.0
      %4153 = vmatprep.subr.mxu0 0.0
      %4154 = vmatpush1.msra.mxu0 0.0
      %4155 = vmatprep.subr.mxu0 0.0
      %4156 = vmatpush1.msra.mxu0 0.0
      %4157 = vmatprep.subr.mxu0 0.0
      %4158 = vmatpush1.msra.mxu0 0.0
      %4159 = vmatprep.subr.mxu0 0.0
      %4160 = vmatpush1.msra.mxu0 0.0
      %4161 = vmatprep.subr.mxu0 0.0
      %4162 = vmatpush1.msra.mxu0 0.0
      %4163 = vmatprep.subr.mxu0 0.0
      %4164 = vmatpush1.msra.mxu0 0.0
      %4165 = vmatprep.subr.mxu0 0.0
      %4166 = vmatpush1.msra.mxu0 0.0
      %4167 = vmatprep.subr.mxu0 0.0
      %4168 = vmatpush1.msra.mxu0 0.0
      %4169 = vmatprep.subr.mxu0 0.0
      %4170 = vmatpush1.msra.mxu0 0.0
      %4171 = vmatprep.subr.mxu0 0.0
      %4172 = vmatpush1.msra.mxu0 0.0
      %4173 = vmatprep.subr.mxu0 0.0
      %4174 = vmatpush1.msra.mxu0 0.0
      %4175 = vmatprep.mubr.f32.mxu0 0.0
      %4176 = vmatmul.mubr.f32.gmra.mrb[0].mxu0 %v4109
      %v4177 = vpop.f32.mrb[0].mxu0
      %v4178 = vadd.f32 0.0, %v4177
      %v4179 = vpop.f32.mrb[0].mxu0
      %4180 = vdwg.mxu0
      %v4181 = vadd.f32 %v4032, %v4178
      %s4182 = scalar_lea.vmem %s9, 20
      %v4183 = vld [vmem:[%s4182] sm:$0xf]
      %v4185 = vsel %vm685, %v4183, 0
      %4187 = vmatprep.subr.mxu0 0.0
      %4188 = vmatpush1.msra.mxu0 %v3442
      %4189 = vmatprep.subr.mxu0 0.0
      %4190 = vmatpush1.msra.mxu0 0.0
      %4191 = vmatprep.subr.mxu0 0.0
      %4192 = vmatpush1.msra.mxu0 0.0
      %4193 = vmatprep.subr.mxu0 0.0
      %4194 = vmatpush1.msra.mxu0 0.0
      %4195 = vmatprep.subr.mxu0 0.0
      %4196 = vmatpush1.msra.mxu0 0.0
      %4197 = vmatprep.subr.mxu0 0.0
      %4198 = vmatpush1.msra.mxu0 0.0
      %4199 = vmatprep.subr.mxu0 0.0
      %4200 = vmatpush1.msra.mxu0 0.0
      %4201 = vmatprep.subr.mxu0 0.0
      %4202 = vmatpush1.msra.mxu0 0.0
      %4203 = vmatprep.subr.mxu0 0.0
      %4204 = vmatpush1.msra.mxu0 0.0
      %4205 = vmatprep.subr.mxu0 0.0
      %4206 = vmatpush1.msra.mxu0 0.0
      %4207 = vmatprep.subr.mxu0 0.0
      %4208 = vmatpush1.msra.mxu0 0.0
      %4209 = vmatprep.subr.mxu0 0.0
      %4210 = vmatpush1.msra.mxu0 0.0
      %4211 = vmatprep.subr.mxu0 0.0
      %4212 = vmatpush1.msra.mxu0 0.0
      %4213 = vmatprep.subr.mxu0 0.0
      %4214 = vmatpush1.msra.mxu0 0.0
      %4215 = vmatprep.subr.mxu0 0.0
      %4216 = vmatpush1.msra.mxu0 0.0
      %4217 = vmatprep.subr.mxu0 0.0
      %4218 = vmatpush1.msra.mxu0 0.0
      %4219 = vmatprep.subr.mxu0 0.0
      %4220 = vmatpush1.msra.mxu0 0.0
      %4221 = vmatprep.subr.mxu0 0.0
      %4222 = vmatpush1.msra.mxu0 0.0
      %4223 = vmatprep.subr.mxu0 0.0
      %4224 = vmatpush1.msra.mxu0 0.0
      %4225 = vmatprep.subr.mxu0 0.0
      %4226 = vmatpush1.msra.mxu0 0.0
      %4227 = vmatprep.subr.mxu0 0.0
      %4228 = vmatpush1.msra.mxu0 0.0
      %4229 = vmatprep.subr.mxu0 0.0
      %4230 = vmatpush1.msra.mxu0 0.0
      %4231 = vmatprep.subr.mxu0 0.0
      %4232 = vmatpush1.msra.mxu0 0.0
      %4233 = vmatprep.subr.mxu0 0.0
      %4234 = vmatpush1.msra.mxu0 0.0
      %4235 = vmatprep.subr.mxu0 0.0
      %4236 = vmatpush1.msra.mxu0 0.0
      %4237 = vmatprep.subr.mxu0 0.0
      %4238 = vmatpush1.msra.mxu0 0.0
      %4239 = vmatprep.subr.mxu0 0.0
      %4240 = vmatpush1.msra.mxu0 0.0
      %4241 = vmatprep.subr.mxu0 0.0
      %4242 = vmatpush1.msra.mxu0 0.0
      %4243 = vmatprep.subr.mxu0 0.0
      %4244 = vmatpush1.msra.mxu0 0.0
      %4245 = vmatprep.subr.mxu0 0.0
      %4246 = vmatpush1.msra.mxu0 0.0
      %4247 = vmatprep.subr.mxu0 0.0
      %4248 = vmatpush1.msra.mxu0 0.0
      %4249 = vmatprep.subr.mxu0 0.0
      %4250 = vmatpush1.msra.mxu0 0.0
      %4251 = vmatprep.mubr.f32.mxu0 0.0
      %4252 = vmatmul.mubr.f32.gmra.mrb[0].mxu0 %v4185
      %v4253 = vpop.f32.mrb[0].mxu0
      %v4254 = vadd.f32 0.0, %v4253
      %v4255 = vpop.f32.mrb[0].mxu0
      %4256 = vdwg.mxu0
      %v4258 = vsel %vm842, %v4254, 0
      %4260 = vmatprep.subr.mxu0 0.0
      %4261 = vmatpush1.msra.mxu0 %v1536
      %4262 = vmatprep.subr.mxu0 0.0
      %4263 = vmatpush1.msra.mxu0 %v1542
      %4264 = vmatprep.subr.mxu0 0.0
      %4265 = vmatpush1.msra.mxu0 0.0
      %4266 = vmatprep.subr.mxu0 0.0
      %4267 = vmatpush1.msra.mxu0 0.0
      %4268 = vmatprep.subr.mxu0 0.0
      %4269 = vmatpush1.msra.mxu0 0.0
      %4270 = vmatprep.subr.mxu0 0.0
      %4271 = vmatpush1.msra.mxu0 0.0
      %4272 = vmatprep.subr.mxu0 0.0
      %4273 = vmatpush1.msra.mxu0 0.0
      %4274 = vmatprep.subr.mxu0 0.0
      %4275 = vmatpush1.msra.mxu0 0.0
      %4276 = vmatprep.subr.mxu0 0.0
      %4277 = vmatpush1.msra.mxu0 0.0
      %4278 = vmatprep.subr.mxu0 0.0
      %4279 = vmatpush1.msra.mxu0 0.0
      %4280 = vmatprep.subr.mxu0 0.0
      %4281 = vmatpush1.msra.mxu0 0.0
      %4282 = vmatprep.subr.mxu0 0.0
      %4283 = vmatpush1.msra.mxu0 0.0
      %4284 = vmatprep.subr.mxu0 0.0
      %4285 = vmatpush1.msra.mxu0 0.0
      %4286 = vmatprep.subr.mxu0 0.0
      %4287 = vmatpush1.msra.mxu0 0.0
      %4288 = vmatprep.subr.mxu0 0.0
      %4289 = vmatpush1.msra.mxu0 0.0
      %4290 = vmatprep.subr.mxu0 0.0
      %4291 = vmatpush1.msra.mxu0 0.0
      %4292 = vmatprep.subr.mxu0 0.0
      %4293 = vmatpush1.msra.mxu0 0.0
      %4294 = vmatprep.subr.mxu0 0.0
      %4295 = vmatpush1.msra.mxu0 0.0
      %4296 = vmatprep.subr.mxu0 0.0
      %4297 = vmatpush1.msra.mxu0 0.0
      %4298 = vmatprep.subr.mxu0 0.0
      %4299 = vmatpush1.msra.mxu0 0.0
      %4300 = vmatprep.subr.mxu0 0.0
      %4301 = vmatpush1.msra.mxu0 0.0
      %4302 = vmatprep.subr.mxu0 0.0
      %4303 = vmatpush1.msra.mxu0 0.0
      %4304 = vmatprep.subr.mxu0 0.0
      %4305 = vmatpush1.msra.mxu0 0.0
      %4306 = vmatprep.subr.mxu0 0.0
      %4307 = vmatpush1.msra.mxu0 0.0
      %4308 = vmatprep.subr.mxu0 0.0
      %4309 = vmatpush1.msra.mxu0 0.0
      %4310 = vmatprep.subr.mxu0 0.0
      %4311 = vmatpush1.msra.mxu0 0.0
      %4312 = vmatprep.subr.mxu0 0.0
      %4313 = vmatpush1.msra.mxu0 0.0
      %4314 = vmatprep.subr.mxu0 0.0
      %4315 = vmatpush1.msra.mxu0 0.0
      %4316 = vmatprep.subr.mxu0 0.0
      %4317 = vmatpush1.msra.mxu0 0.0
      %4318 = vmatprep.subr.mxu0 0.0
      %4319 = vmatpush1.msra.mxu0 0.0
      %4320 = vmatprep.subr.mxu0 0.0
      %4321 = vmatpush1.msra.mxu0 0.0
      %4322 = vmatprep.subr.mxu0 0.0
      %4323 = vmatpush1.msra.mxu0 0.0
      %4324 = vmatprep.mubr.f32.mxu0 0.0
      %4325 = vmatmul.mubr.f32.gmra.mrb[0].mxu0 %v4258
      %v4326 = vpop.f32.mrb[0].mxu0
      %v4327 = vadd.f32 0.0, %v4326
      %v4328 = vpop.f32.mrb[0].mxu0
      %4329 = vdwg.mxu0
      %v4330 = vadd.f32 %v4181, %v4327
      %s4331 = scalar_lea.vmem %s9, 24
      %v4332 = vld [vmem:[%s4331] sm:$0xf]
      %v4334 = vsel %vm685, %v4332, 0
      %4336 = vmatprep.subr.mxu0 0.0
      %4337 = vmatpush1.msra.mxu0 %v3442
      %4338 = vmatprep.subr.mxu0 0.0
      %4339 = vmatpush1.msra.mxu0 0.0
      %4340 = vmatprep.subr.mxu0 0.0
      %4341 = vmatpush1.msra.mxu0 0.0
      %4342 = vmatprep.subr.mxu0 0.0
      %4343 = vmatpush1.msra.mxu0 0.0
      %4344 = vmatprep.subr.mxu0 0.0
      %4345 = vmatpush1.msra.mxu0 0.0
      %4346 = vmatprep.subr.mxu0 0.0
      %4347 = vmatpush1.msra.mxu0 0.0
      %4348 = vmatprep.subr.mxu0 0.0
      %4349 = vmatpush1.msra.mxu0 0.0
      %4350 = vmatprep.subr.mxu0 0.0
      %4351 = vmatpush1.msra.mxu0 0.0
      %4352 = vmatprep.subr.mxu0 0.0
      %4353 = vmatpush1.msra.mxu0 0.0
      %4354 = vmatprep.subr.mxu0 0.0
      %4355 = vmatpush1.msra.mxu0 0.0
      %4356 = vmatprep.subr.mxu0 0.0
      %4357 = vmatpush1.msra.mxu0 0.0
      %4358 = vmatprep.subr.mxu0 0.0
      %4359 = vmatpush1.msra.mxu0 0.0
      %4360 = vmatprep.subr.mxu0 0.0
      %4361 = vmatpush1.msra.mxu0 0.0
      %4362 = vmatprep.subr.mxu0 0.0
      %4363 = vmatpush1.msra.mxu0 0.0
      %4364 = vmatprep.subr.mxu0 0.0
      %4365 = vmatpush1.msra.mxu0 0.0
      %4366 = vmatprep.subr.mxu0 0.0
      %4367 = vmatpush1.msra.mxu0 0.0
      %4368 = vmatprep.subr.mxu0 0.0
      %4369 = vmatpush1.msra.mxu0 0.0
      %4370 = vmatprep.subr.mxu0 0.0
      %4371 = vmatpush1.msra.mxu0 0.0
      %4372 = vmatprep.subr.mxu0 0.0
      %4373 = vmatpush1.msra.mxu0 0.0
      %4374 = vmatprep.subr.mxu0 0.0
      %4375 = vmatpush1.msra.mxu0 0.0
      %4376 = vmatprep.subr.mxu0 0.0
      %4377 = vmatpush1.msra.mxu0 0.0
      %4378 = vmatprep.subr.mxu0 0.0
      %4379 = vmatpush1.msra.mxu0 0.0
      %4380 = vmatprep.subr.mxu0 0.0
      %4381 = vmatpush1.msra.mxu0 0.0
      %4382 = vmatprep.subr.mxu0 0.0
      %4383 = vmatpush1.msra.mxu0 0.0
      %4384 = vmatprep.subr.mxu0 0.0
      %4385 = vmatpush1.msra.mxu0 0.0
      %4386 = vmatprep.subr.mxu0 0.0
      %4387 = vmatpush1.msra.mxu0 0.0
      %4388 = vmatprep.subr.mxu0 0.0
      %4389 = vmatpush1.msra.mxu0 0.0
      %4390 = vmatprep.subr.mxu0 0.0
      %4391 = vmatpush1.msra.mxu0 0.0
      %4392 = vmatprep.subr.mxu0 0.0
      %4393 = vmatpush1.msra.mxu0 0.0
      %4394 = vmatprep.subr.mxu0 0.0
      %4395 = vmatpush1.msra.mxu0 0.0
      %4396 = vmatprep.subr.mxu0 0.0
      %4397 = vmatpush1.msra.mxu0 0.0
      %4398 = vmatprep.subr.mxu0 0.0
      %4399 = vmatpush1.msra.mxu0 0.0
      %4400 = vmatprep.mubr.f32.mxu0 0.0
      %4401 = vmatmul.mubr.f32.gmra.mrb[0].mxu0 %v4334
      %v4402 = vpop.f32.mrb[0].mxu0
      %v4403 = vadd.f32 0.0, %v4402
      %v4404 = vpop.f32.mrb[0].mxu0
      %4405 = vdwg.mxu0
      %v4407 = vsel %vm842, %v4403, 0
      %4409 = vmatprep.subr.mxu0 0.0
      %4410 = vmatpush1.msra.mxu0 %v1691
      %4411 = vmatprep.subr.mxu0 0.0
      %4412 = vmatpush1.msra.mxu0 %v1697
      %4413 = vmatprep.subr.mxu0 0.0
      %4414 = vmatpush1.msra.mxu0 0.0
      %4415 = vmatprep.subr.mxu0 0.0
      %4416 = vmatpush1.msra.mxu0 0.0
      %4417 = vmatprep.subr.mxu0 0.0
      %4418 = vmatpush1.msra.mxu0 0.0
      %4419 = vmatprep.subr.mxu0 0.0
      %4420 = vmatpush1.msra.mxu0 0.0
      %4421 = vmatprep.subr.mxu0 0.0
      %4422 = vmatpush1.msra.mxu0 0.0
      %4423 = vmatprep.subr.mxu0 0.0
      %4424 = vmatpush1.msra.mxu0 0.0
      %4425 = vmatprep.subr.mxu0 0.0
      %4426 = vmatpush1.msra.mxu0 0.0
      %4427 = vmatprep.subr.mxu0 0.0
      %4428 = vmatpush1.msra.mxu0 0.0
      %4429 = vmatprep.subr.mxu0 0.0
      %4430 = vmatpush1.msra.mxu0 0.0
      %4431 = vmatprep.subr.mxu0 0.0
      %4432 = vmatpush1.msra.mxu0 0.0
      %4433 = vmatprep.subr.mxu0 0.0
      %4434 = vmatpush1.msra.mxu0 0.0
      %4435 = vmatprep.subr.mxu0 0.0
      %4436 = vmatpush1.msra.mxu0 0.0
      %4437 = vmatprep.subr.mxu0 0.0
      %4438 = vmatpush1.msra.mxu0 0.0
      %4439 = vmatprep.subr.mxu0 0.0
      %4440 = vmatpush1.msra.mxu0 0.0
      %4441 = vmatprep.subr.mxu0 0.0
      %4442 = vmatpush1.msra.mxu0 0.0
      %4443 = vmatprep.subr.mxu0 0.0
      %4444 = vmatpush1.msra.mxu0 0.0
      %4445 = vmatprep.subr.mxu0 0.0
      %4446 = vmatpush1.msra.mxu0 0.0
      %4447 = vmatprep.subr.mxu0 0.0
      %4448 = vmatpush1.msra.mxu0 0.0
      %4449 = vmatprep.subr.mxu0 0.0
      %4450 = vmatpush1.msra.mxu0 0.0
      %4451 = vmatprep.subr.mxu0 0.0
      %4452 = vmatpush1.msra.mxu0 0.0
      %4453 = vmatprep.subr.mxu0 0.0
      %4454 = vmatpush1.msra.mxu0 0.0
      %4455 = vmatprep.subr.mxu0 0.0
      %4456 = vmatpush1.msra.mxu0 0.0
      %4457 = vmatprep.subr.mxu0 0.0
      %4458 = vmatpush1.msra.mxu0 0.0
      %4459 = vmatprep.subr.mxu0 0.0
      %4460 = vmatpush1.msra.mxu0 0.0
      %4461 = vmatprep.subr.mxu0 0.0
      %4462 = vmatpush1.msra.mxu0 0.0
      %4463 = vmatprep.subr.mxu0 0.0
      %4464 = vmatpush1.msra.mxu0 0.0
      %4465 = vmatprep.subr.mxu0 0.0
      %4466 = vmatpush1.msra.mxu0 0.0
      %4467 = vmatprep.subr.mxu0 0.0
      %4468 = vmatpush1.msra.mxu0 0.0
      %4469 = vmatprep.subr.mxu0 0.0
      %4470 = vmatpush1.msra.mxu0 0.0
      %4471 = vmatprep.subr.mxu0 0.0
      %4472 = vmatpush1.msra.mxu0 0.0
      %4473 = vmatprep.mubr.f32.mxu0 0.0
      %4474 = vmatmul.mubr.f32.gmra.mrb[0].mxu0 %v4407
      %v4475 = vpop.f32.mrb[0].mxu0
      %v4476 = vadd.f32 0.0, %v4475
      %v4477 = vpop.f32.mrb[0].mxu0
      %4478 = vdwg.mxu0
      %v4479 = vadd.f32 %v4330, %v4476
      %s4480 = scalar_lea.vmem %s9, 28
      %v4481 = vld [vmem:[%s4480] sm:$0xf]
      %v4483 = vsel %vm685, %v4481, 0
      %4485 = vmatprep.subr.mxu0 0.0
      %4486 = vmatpush1.msra.mxu0 %v3442
      %4487 = vmatprep.subr.mxu0 0.0
      %4488 = vmatpush1.msra.mxu0 0.0
      %4489 = vmatprep.subr.mxu0 0.0
      %4490 = vmatpush1.msra.mxu0 0.0
      %4491 = vmatprep.subr.mxu0 0.0
      %4492 = vmatpush1.msra.mxu0 0.0
      %4493 = vmatprep.subr.mxu0 0.0
      %4494 = vmatpush1.msra.mxu0 0.0
      %4495 = vmatprep.subr.mxu0 0.0
      %4496 = vmatpush1.msra.mxu0 0.0
      %4497 = vmatprep.subr.mxu0 0.0
      %4498 = vmatpush1.msra.mxu0 0.0
      %4499 = vmatprep.subr.mxu0 0.0
      %4500 = vmatpush1.msra.mxu0 0.0
      %4501 = vmatprep.subr.mxu0 0.0
      %4502 = vmatpush1.msra.mxu0 0.0
      %4503 = vmatprep.subr.mxu0 0.0
      %4504 = vmatpush1.msra.mxu0 0.0
      %4505 = vmatprep.subr.mxu0 0.0
      %4506 = vmatpush1.msra.mxu0 0.0
      %4507 = vmatprep.subr.mxu0 0.0
      %4508 = vmatpush1.msra.mxu0 0.0
      %4509 = vmatprep.subr.mxu0 0.0
      %4510 = vmatpush1.msra.mxu0 0.0
      %4511 = vmatprep.subr.mxu0 0.0
      %4512 = vmatpush1.msra.mxu0 0.0
      %4513 = vmatprep.subr.mxu0 0.0
      %4514 = vmatpush1.msra.mxu0 0.0
      %4515 = vmatprep.subr.mxu0 0.0
      %4516 = vmatpush1.msra.mxu0 0.0
      %4517 = vmatprep.subr.mxu0 0.0
      %4518 = vmatpush1.msra.mxu0 0.0
      %4519 = vmatprep.subr.mxu0 0.0
      %4520 = vmatpush1.msra.mxu0 0.0
      %4521 = vmatprep.subr.mxu0 0.0
      %4522 = vmatpush1.msra.mxu0 0.0
      %4523 = vmatprep.subr.mxu0 0.0
      %4524 = vmatpush1.msra.mxu0 0.0
      %4525 = vmatprep.subr.mxu0 0.0
      %4526 = vmatpush1.msra.mxu0 0.0
      %4527 = vmatprep.subr.mxu0 0.0
      %4528 = vmatpush1.msra.mxu0 0.0
      %4529 = vmatprep.subr.mxu0 0.0
      %4530 = vmatpush1.msra.mxu0 0.0
      %4531 = vmatprep.subr.mxu0 0.0
      %4532 = vmatpush1.msra.mxu0 0.0
      %4533 = vmatprep.subr.mxu0 0.0
      %4534 = vmatpush1.msra.mxu0 0.0
      %4535 = vmatprep.subr.mxu0 0.0
      %4536 = vmatpush1.msra.mxu0 0.0
      %4537 = vmatprep.subr.mxu0 0.0
      %4538 = vmatpush1.msra.mxu0 0.0
      %4539 = vmatprep.subr.mxu0 0.0
      %4540 = vmatpush1.msra.mxu0 0.0
      %4541 = vmatprep.subr.mxu0 0.0
      %4542 = vmatpush1.msra.mxu0 0.0
      %4543 = vmatprep.subr.mxu0 0.0
      %4544 = vmatpush1.msra.mxu0 0.0
      %4545 = vmatprep.subr.mxu0 0.0
      %4546 = vmatpush1.msra.mxu0 0.0
      %4547 = vmatprep.subr.mxu0 0.0
      %4548 = vmatpush1.msra.mxu0 0.0
      %4549 = vmatprep.mubr.f32.mxu0 0.0
      %4550 = vmatmul.mubr.f32.gmra.mrb[0].mxu0 %v4483
      %v4551 = vpop.f32.mrb[0].mxu0
      %v4552 = vadd.f32 0.0, %v4551
      %v4553 = vpop.f32.mrb[0].mxu0
      %4554 = vdwg.mxu0
      %v4556 = vsel %vm842, %v4552, 0
      %4558 = vmatprep.subr.mxu0 0.0
      %4559 = vmatpush1.msra.mxu0 %v1846
      %4560 = vmatprep.subr.mxu0 0.0
      %4561 = vmatpush1.msra.mxu0 %v1852
      %4562 = vmatprep.subr.mxu0 0.0
      %4563 = vmatpush1.msra.mxu0 0.0
      %4564 = vmatprep.subr.mxu0 0.0
      %4565 = vmatpush1.msra.mxu0 0.0
      %4566 = vmatprep.subr.mxu0 0.0
      %4567 = vmatpush1.msra.mxu0 0.0
      %4568 = vmatprep.subr.mxu0 0.0
      %4569 = vmatpush1.msra.mxu0 0.0
      %4570 = vmatprep.subr.mxu0 0.0
      %4571 = vmatpush1.msra.mxu0 0.0
      %4572 = vmatprep.subr.mxu0 0.0
      %4573 = vmatpush1.msra.mxu0 0.0
      %4574 = vmatprep.subr.mxu0 0.0
      %4575 = vmatpush1.msra.mxu0 0.0
      %4576 = vmatprep.subr.mxu0 0.0
      %4577 = vmatpush1.msra.mxu0 0.0
      %4578 = vmatprep.subr.mxu0 0.0
      %4579 = vmatpush1.msra.mxu0 0.0
      %4580 = vmatprep.subr.mxu0 0.0
      %4581 = vmatpush1.msra.mxu0 0.0
      %4582 = vmatprep.subr.mxu0 0.0
      %4583 = vmatpush1.msra.mxu0 0.0
      %4584 = vmatprep.subr.mxu0 0.0
      %4585 = vmatpush1.msra.mxu0 0.0
      %4586 = vmatprep.subr.mxu0 0.0
      %4587 = vmatpush1.msra.mxu0 0.0
      %4588 = vmatprep.subr.mxu0 0.0
      %4589 = vmatpush1.msra.mxu0 0.0
      %4590 = vmatprep.subr.mxu0 0.0
      %4591 = vmatpush1.msra.mxu0 0.0
      %4592 = vmatprep.subr.mxu0 0.0
      %4593 = vmatpush1.msra.mxu0 0.0
      %4594 = vmatprep.subr.mxu0 0.0
      %4595 = vmatpush1.msra.mxu0 0.0
      %4596 = vmatprep.subr.mxu0 0.0
      %4597 = vmatpush1.msra.mxu0 0.0
      %4598 = vmatprep.subr.mxu0 0.0
      %4599 = vmatpush1.msra.mxu0 0.0
      %4600 = vmatprep.subr.mxu0 0.0
      %4601 = vmatpush1.msra.mxu0 0.0
      %4602 = vmatprep.subr.mxu0 0.0
      %4603 = vmatpush1.msra.mxu0 0.0
      %4604 = vmatprep.subr.mxu0 0.0
      %4605 = vmatpush1.msra.mxu0 0.0
      %4606 = vmatprep.subr.mxu0 0.0
      %4607 = vmatpush1.msra.mxu0 0.0
      %4608 = vmatprep.subr.mxu0 0.0
      %4609 = vmatpush1.msra.mxu0 0.0
      %4610 = vmatprep.subr.mxu0 0.0
      %4611 = vmatpush1.msra.mxu0 0.0
      %4612 = vmatprep.subr.mxu0 0.0
      %4613 = vmatpush1.msra.mxu0 0.0
      %4614 = vmatprep.subr.mxu0 0.0
      %4615 = vmatpush1.msra.mxu0 0.0
      %4616 = vmatprep.subr.mxu0 0.0
      %4617 = vmatpush1.msra.mxu0 0.0
      %4618 = vmatprep.subr.mxu0 0.0
      %4619 = vmatpush1.msra.mxu0 0.0
      %4620 = vmatprep.subr.mxu0 0.0
      %4621 = vmatpush1.msra.mxu0 0.0
      %4622 = vmatprep.mubr.f32.mxu0 0.0
      %4623 = vmatmul.mubr.f32.gmra.mrb[0].mxu0 %v4556
      %v4624 = vpop.f32.mrb[0].mxu0
      %v4625 = vadd.f32 0.0, %v4624
      %v4626 = vpop.f32.mrb[0].mxu0
      %4627 = vdwg.mxu0
      %v4628 = vadd.f32 %v4479, %v4625
      %s4629 = scalar_lea.vmem %s9, 32
      %v4630 = vld [vmem:[%s4629] sm:$0xf]
      %v4632 = vsel %vm685, %v4630, 0
      %4634 = vmatprep.subr.mxu0 0.0
      %4635 = vmatpush1.msra.mxu0 %v3442
      %4636 = vmatprep.subr.mxu0 0.0
      %4637 = vmatpush1.msra.mxu0 0.0
      %4638 = vmatprep.subr.mxu0 0.0
      %4639 = vmatpush1.msra.mxu0 0.0
      %4640 = vmatprep.subr.mxu0 0.0
      %4641 = vmatpush1.msra.mxu0 0.0
      %4642 = vmatprep.subr.mxu0 0.0
      %4643 = vmatpush1.msra.mxu0 0.0
      %4644 = vmatprep.subr.mxu0 0.0
      %4645 = vmatpush1.msra.mxu0 0.0
      %4646 = vmatprep.subr.mxu0 0.0
      %4647 = vmatpush1.msra.mxu0 0.0
      %4648 = vmatprep.subr.mxu0 0.0
      %4649 = vmatpush1.msra.mxu0 0.0
      %4650 = vmatprep.subr.mxu0 0.0
      %4651 = vmatpush1.msra.mxu0 0.0
      %4652 = vmatprep.subr.mxu0 0.0
      %4653 = vmatpush1.msra.mxu0 0.0
      %4654 = vmatprep.subr.mxu0 0.0
      %4655 = vmatpush1.msra.mxu0 0.0
      %4656 = vmatprep.subr.mxu0 0.0
      %4657 = vmatpush1.msra.mxu0 0.0
      %4658 = vmatprep.subr.mxu0 0.0
      %4659 = vmatpush1.msra.mxu0 0.0
      %4660 = vmatprep.subr.mxu0 0.0
      %4661 = vmatpush1.msra.mxu0 0.0
      %4662 = vmatprep.subr.mxu0 0.0
      %4663 = vmatpush1.msra.mxu0 0.0
      %4664 = vmatprep.subr.mxu0 0.0
      %4665 = vmatpush1.msra.mxu0 0.0
      %4666 = vmatprep.subr.mxu0 0.0
      %4667 = vmatpush1.msra.mxu0 0.0
      %4668 = vmatprep.subr.mxu0 0.0
      %4669 = vmatpush1.msra.mxu0 0.0
      %4670 = vmatprep.subr.mxu0 0.0
      %4671 = vmatpush1.msra.mxu0 0.0
      %4672 = vmatprep.subr.mxu0 0.0
      %4673 = vmatpush1.msra.mxu0 0.0
      %4674 = vmatprep.subr.mxu0 0.0
      %4675 = vmatpush1.msra.mxu0 0.0
      %4676 = vmatprep.subr.mxu0 0.0
      %4677 = vmatpush1.msra.mxu0 0.0
      %4678 = vmatprep.subr.mxu0 0.0
      %4679 = vmatpush1.msra.mxu0 0.0
      %4680 = vmatprep.subr.mxu0 0.0
      %4681 = vmatpush1.msra.mxu0 0.0
      %4682 = vmatprep.subr.mxu0 0.0
      %4683 = vmatpush1.msra.mxu0 0.0
      %4684 = vmatprep.subr.mxu0 0.0
      %4685 = vmatpush1.msra.mxu0 0.0
      %4686 = vmatprep.subr.mxu0 0.0
      %4687 = vmatpush1.msra.mxu0 0.0
      %4688 = vmatprep.subr.mxu0 0.0
      %4689 = vmatpush1.msra.mxu0 0.0
      %4690 = vmatprep.subr.mxu0 0.0
      %4691 = vmatpush1.msra.mxu0 0.0
      %4692 = vmatprep.subr.mxu0 0.0
      %4693 = vmatpush1.msra.mxu0 0.0
      %4694 = vmatprep.subr.mxu0 0.0
      %4695 = vmatpush1.msra.mxu0 0.0
      %4696 = vmatprep.subr.mxu0 0.0
      %4697 = vmatpush1.msra.mxu0 0.0
      %4698 = vmatprep.mubr.f32.mxu0 0.0
      %4699 = vmatmul.mubr.f32.gmra.mrb[0].mxu0 %v4632
      %v4700 = vpop.f32.mrb[0].mxu0
      %v4701 = vadd.f32 0.0, %v4700
      %v4702 = vpop.f32.mrb[0].mxu0
      %4703 = vdwg.mxu0
      %v4705 = vsel %vm842, %v4701, 0
      %4707 = vmatprep.subr.mxu0 0.0
      %4708 = vmatpush1.msra.mxu0 %v2001
      %4709 = vmatprep.subr.mxu0 0.0
      %4710 = vmatpush1.msra.mxu0 %v2007
      %4711 = vmatprep.subr.mxu0 0.0
      %4712 = vmatpush1.msra.mxu0 0.0
      %4713 = vmatprep.subr.mxu0 0.0
      %4714 = vmatpush1.msra.mxu0 0.0
      %4715 = vmatprep.subr.mxu0 0.0
      %4716 = vmatpush1.msra.mxu0 0.0
      %4717 = vmatprep.subr.mxu0 0.0
      %4718 = vmatpush1.msra.mxu0 0.0
      %4719 = vmatprep.subr.mxu0 0.0
      %4720 = vmatpush1.msra.mxu0 0.0
      %4721 = vmatprep.subr.mxu0 0.0
      %4722 = vmatpush1.msra.mxu0 0.0
      %4723 = vmatprep.subr.mxu0 0.0
      %4724 = vmatpush1.msra.mxu0 0.0
      %4725 = vmatprep.subr.mxu0 0.0
      %4726 = vmatpush1.msra.mxu0 0.0
      %4727 = vmatprep.subr.mxu0 0.0
      %4728 = vmatpush1.msra.mxu0 0.0
      %4729 = vmatprep.subr.mxu0 0.0
      %4730 = vmatpush1.msra.mxu0 0.0
      %4731 = vmatprep.subr.mxu0 0.0
      %4732 = vmatpush1.msra.mxu0 0.0
      %4733 = vmatprep.subr.mxu0 0.0
      %4734 = vmatpush1.msra.mxu0 0.0
      %4735 = vmatprep.subr.mxu0 0.0
      %4736 = vmatpush1.msra.mxu0 0.0
      %4737 = vmatprep.subr.mxu0 0.0
      %4738 = vmatpush1.msra.mxu0 0.0
      %4739 = vmatprep.subr.mxu0 0.0
      %4740 = vmatpush1.msra.mxu0 0.0
      %4741 = vmatprep.subr.mxu0 0.0
      %4742 = vmatpush1.msra.mxu0 0.0
      %4743 = vmatprep.subr.mxu0 0.0
      %4744 = vmatpush1.msra.mxu0 0.0
      %4745 = vmatprep.subr.mxu0 0.0
      %4746 = vmatpush1.msra.mxu0 0.0
      %4747 = vmatprep.subr.mxu0 0.0
      %4748 = vmatpush1.msra.mxu0 0.0
      %4749 = vmatprep.subr.mxu0 0.0
      %4750 = vmatpush1.msra.mxu0 0.0
      %4751 = vmatprep.subr.mxu0 0.0
      %4752 = vmatpush1.msra.mxu0 0.0
      %4753 = vmatprep.subr.mxu0 0.0
      %4754 = vmatpush1.msra.mxu0 0.0
      %4755 = vmatprep.subr.mxu0 0.0
      %4756 = vmatpush1.msra.mxu0 0.0
      %4757 = vmatprep.subr.mxu0 0.0
      %4758 = vmatpush1.msra.mxu0 0.0
      %4759 = vmatprep.subr.mxu0 0.0
      %4760 = vmatpush1.msra.mxu0 0.0
      %4761 = vmatprep.subr.mxu0 0.0
      %4762 = vmatpush1.msra.mxu0 0.0
      %4763 = vmatprep.subr.mxu0 0.0
      %4764 = vmatpush1.msra.mxu0 0.0
      %4765 = vmatprep.subr.mxu0 0.0
      %4766 = vmatpush1.msra.mxu0 0.0
      %4767 = vmatprep.subr.mxu0 0.0
      %4768 = vmatpush1.msra.mxu0 0.0
      %4769 = vmatprep.subr.mxu0 0.0
      %4770 = vmatpush1.msra.mxu0 0.0
      %4771 = vmatprep.mubr.f32.mxu0 0.0
      %4772 = vmatmul.mubr.f32.gmra.mrb[0].mxu0 %v4705
      %v4773 = vpop.f32.mrb[0].mxu0
      %v4774 = vadd.f32 0.0, %v4773
      %v4775 = vpop.f32.mrb[0].mxu0
      %4776 = vdwg.mxu0
      %v4777 = vadd.f32 %v4628, %v4774
      %v4778 = vld [vmem:[%s10] sm:$0xf]
      %4780 = vset.pattern.permute.xlu0 0
      %4781 = vperm.xlu0 %4780, %v4778
      %v4782 = vpop.permute.xlu0 %4781
      %v4784 = vadd.f32 %v4777, %v4782
      %vm4785 = vcmask 68608
      %4786 = vst.msk [vmem:[%s384] sm:$0xf] %vm4785, %v4784
      %p4787 = scmp.lt.s32.totalorder %s22, 1
      %s4788 = scalar_select %p4787, %s22, 1
      %s4789 = smul.addr %s4788, 4
      %s4790 = scalar_lea.vmem %s11, %s4789
      // Predicated region
      $region65: #{esa_forward.2} parent=63 // pred_check
        %p4791 = pneg %p276
      $region66: #{esa_forward.2} parent=63 // pred_check_branch
        %4793 = sbr.rel (%p4791) target = $region68
      $region67: #{esa_forward.2} parent=63 // pred_region
        _
      $region68: #{esa_forward.2} parent=63 // pred_fallthru
        _
    $region64: #{esa_forward.2} parent=5 // pred_fallthru
      _
    %p4794 = scmp.le.s32.totalorder 2, %s17
    // Predicated region
    $region69: #{esa_forward.2} parent=5 // pred_check
      %p4795 = pneg %p4794
    $region70: #{esa_forward.2} parent=5 // pred_check_branch
      %4797 = sbr.rel (%p4795) target = $region72
    $region71: #{esa_forward.2} parent=5 // pred_region
      %s4798 = ssub.s32 %s17, 2
      // Predicated region
      $region73: #{esa_forward.2} parent=71 // pred_check
        %p4799 = pneg %p282
      $region74: #{esa_forward.2} parent=71 // pred_check_branch
        %4801 = sbr.rel (%p4799) target = $region76
      $region75: #{esa_forward.2} parent=71 // pred_region
        %p4802 = scmp.lt.s32.totalorder %s23, 1
        %s4803 = scalar_select %p4802, %s23, 1
        %s4804 = smul.addr %s4803, 4
        %s4805 = scalar_lea.vmem %s11, %s4804
      $region76: #{esa_forward.2} parent=71 // pred_fallthru
        _
    $region72: #{esa_forward.2} parent=5 // pred_fallthru
      _
  $region6: #{esa_forward.2} parent=0 // loop_footer
    %s21 = sadd.s32 1, %s17
  $region7: #{esa_forward.2} parent=0 // loop_footer_branch
    %16 = sbr.rel target = $region3
  $region8: #{esa_forward.2} parent=0 // loop_exit
    _

</llo_original>
